<compile_context>
chip_gen: v5e
topology: v5e:2x2
jax: 0.10.0
libtpu: 0.0.40
codegen_flags: <defaults>
</compile_context>

<pallas_src>
import jax
import jax.numpy as jnp
from jax.experimental import pallas as pl
from jax.experimental.pallas import tpu as pltpu

# ------------------------- module hyper-parameters --------------------------
CONV_CH = [32, 64, 128, 256]          # ch1..ch4
CONV_K = [5, 3, 3, 3]                 # k1..k4 (square)
CONV_S = [2, 2, 2, 2]                 # s1..s4 (square), padding = 0
FC_HIDDEN1 = 512
FC_HIDDEN2 = 512
CNN_EMBED_DIM = 300
DROP_P = 0.3                          # eval-mode dropout == identity
BN_EPS = 1e-5
LANE = 128
VMEM_LIMIT = 32 * 1024 * 1024
CONV_TM = 512                         # row tile for conv GEMMs
HEAD_TM = 256                         # row tile for the fc head


def round_up(x, m):
    return (x + m - 1) // m * m


def conv_out_size(sz, k, s):
    return (sz - k) // s + 1


# ---------------------------------------------------------------------------
# Kernel 1: conv layer as lane-padded GEMM over M row tiles
#   patch_ref : (TM, Kp)  bf16   im2col patches (all frames folded into M)
#   w_ref     : (Kp, Cp)  bf16   BN folded in
#   b_ref     : (1, Cp)   f32    BN folded in
#   out_ref   : (TM, Cp)  bf16   post-ReLU activations (channels 128-padded)
# ---------------------------------------------------------------------------
def conv_gemm_kernel(patch_ref, w_ref, b_ref, out_ref):
    h = jnp.dot(patch_ref[...], w_ref[...], preferred_element_type=jnp.float32)
    out_ref[...] = jnp.maximum(h + b_ref[...], 0.0).astype(out_ref.dtype)


# ---------------------------------------------------------------------------
# Kernel 2: fused fc head  fc1 -> relu -> fc2 -> relu -> dropout(id) -> fc3
#   Runs over row tiles of the (B*T, D) feature matrix; emits embeddings only.
# ---------------------------------------------------------------------------
def head_kernel(x_ref, w1_ref, b1_ref, w2_ref, b2_ref, w3_ref, b3_ref, out_ref):
    x = x_ref[...]                                                   # (TM, D) bf16
    h1 = jnp.dot(x, w1_ref[...], preferred_element_type=jnp.float32) + b1_ref[...]
    h1 = jnp.maximum(h1, 0.0)
    h2 = jnp.dot(h1.astype(jnp.bfloat16), w2_ref[...],
                 preferred_element_type=jnp.float32) + b2_ref[...]
    h2 = jnp.maximum(h2, 0.0)
    # TODO(synk): F.dropout is identity in eval mode; training-mode RNG mask not implemented.
    out_ref[...] = jnp.dot(h2.astype(jnp.bfloat16), w3_ref[...],
                           preferred_element_type=jnp.float32) + b3_ref[...]


# ---------------------------------------------------------------------------
# Kernel 3: tiny fc1+relu on the last-time-step frames only (module's "y").
# ---------------------------------------------------------------------------
def fc1_relu_kernel(x_ref, w_ref, b_ref, out_ref):
    h = jnp.dot(x_ref[...], w_ref[...], preferred_element_type=jnp.float32)
    out_ref[...] = jnp.maximum(h + b_ref[...], 0.0)


# ---------------------------------------------------------------------------
# Plain-XLA glue: im2col (valid conv, stride s) of an NHWC activation tensor.
# ---------------------------------------------------------------------------
def _im2col(x, k, s):
    n, h, w, c = x.shape
    ho = conv_out_size(h, k, s)
    wo = conv_out_size(w, k, s)
    cols = []
    for dy in range(k):
        for dx in range(k):
            cols.append(x[:, dy:dy + s * (ho - 1) + 1:s,
                          dx:dx + s * (wo - 1) + 1:s, :])            # (n, ho, wo, c)
    p = jnp.stack(cols, axis=3)                                      # (n, ho, wo, k*k, c)
    return p.reshape(n, ho * wo, k * k * c), ho, wo


def conv_bn_relu(x, w_m, b_m, k, s):
    """One conv+BN(eval)+ReLU layer: one Pallas GEMM over M = n*hw row tiles."""
    n = x.shape[0]
    patches, ho, wo = _im2col(x, k, s)                # (n, hw, k*k*C_real) bf16
    kk_c = patches.shape[-1]
    k_pad, c_out_pad = w_m.shape
    m = n * ho * wo
    patches = patches.reshape(m, kk_c)
    if kk_c < k_pad:                                  # pad contraction dim to 128-multiple
        patches = jnp.pad(patches, ((0, 0), (0, k_pad - kk_c)))
    tm = CONV_TM if m >= CONV_TM else round_up(m, 8)
    m_pad = round_up(m, tm)
    if m_pad > m:
        patches = jnp.pad(patches, ((0, m_pad - m), (0, 0)))

    out = pl.pallas_call(
        conv_gemm_kernel,
        out_shape=jax.ShapeDtypeStruct((m_pad, c_out_pad), jnp.bfloat16),
        grid=(m_pad // tm,),
        in_specs=[
            pl.BlockSpec((tm, k_pad), lambda i: (i, 0)),
            pl.BlockSpec((k_pad, c_out_pad), lambda i: (0, 0)),
            pl.BlockSpec((1, c_out_pad), lambda i: (0, 0)),
        ],
        out_specs=pl.BlockSpec((tm, c_out_pad), lambda i: (i, 0)),
        compiler_params=pltpu.CompilerParams(
            dimension_semantics=("parallel",),
            vmem_limit_bytes=VMEM_LIMIT,
        ),
    )(patches, w_m, b_m)
    return out[:m].reshape(n, ho, wo, c_out_pad)


# ---------------------------------------------------------------------------
# Parameter init (PyTorch layouts) and BN/pad folding into matmul layouts.
# ---------------------------------------------------------------------------
def init_raw_params(key, img_x, img_y):
    params = {}
    keys = iter(jax.random.split(key, 64))
    c_in = 3
    for i, (c_out, k) in enumerate(zip(CONV_CH, CONV_K)):
        fan_in = c_in * k * k
        params[f"conv{i}_w"] = jax.random.normal(
            next(keys), (c_out, c_in, k, k), jnp.float32) * (2.0 / fan_in) ** 0.5
        params[f"conv{i}_b"] = 0.01 * jax.random.normal(next(keys), (c_out,), jnp.float32)
        params[f"bn{i}_g"] = 1.0 + 0.1 * jax.random.normal(next(keys), (c_out,), jnp.float32)
        params[f"bn{i}_b"] = 0.1 * jax.random.normal(next(keys), (c_out,), jnp.float32)
        params[f"bn{i}_m"] = 0.1 * jax.random.normal(next(keys), (c_out,), jnp.float32)
        params[f"bn{i}_v"] = 0.5 + jax.random.uniform(next(keys), (c_out,), jnp.float32)
        c_in = c_out
    hx, hy = img_x, img_y
    for k, s in zip(CONV_K, CONV_S):
        hx, hy = conv_out_size(hx, k, s), conv_out_size(hy, k, s)
    d = CONV_CH[-1] * hx * hy                         # fc1.in_features (NCHW flatten)
    dims = [d, FC_HIDDEN1, FC_HIDDEN2, CNN_EMBED_DIM]
    for i in range(3):
        params[f"fc{i}_w"] = jax.random.normal(
            next(keys), (dims[i + 1], dims[i]), jnp.float32) * (1.0 / dims[i]) ** 0.5
        params[f"fc{i}_b"] = 0.01 * jax.random.normal(next(keys), (dims[i + 1],), jnp.float32)
    return params


def fold_params(raw):
    """Fold eval-mode BN into conv weights, pad to lane-dense shapes,
    cast matmul operands to bf16 (biases stay f32)."""
    # TODO(synk): training-mode BatchNorm (batch statistics) not implemented; eval running stats folded.
    fp = {}
    c_ins = [3] + CONV_CH[:-1]                        # REAL input channels per layer
    for i, c_out in enumerate(CONV_CH):
        k = CONV_K[i]
        w, b = raw[f"conv{i}_w"], raw[f"conv{i}_b"]
        g, be = raw[f"bn{i}_g"], raw[f"bn{i}_b"]
        m, v = raw[f"bn{i}_m"], raw[f"bn{i}_v"]
        scale = g / jnp.sqrt(v + BN_EPS)              # eval-mode BN fold
        w = w * scale[:, None, None, None]
        b = (b - m) * scale + be
        c_in = c_ins[i]
        c_out_pad = round_up(c_out, LANE)
        k_real = k * k * c_in
        k_pad = round_up(k_real, LANE)                # contraction padded over REAL Cin only
        wt = jnp.transpose(w, (2, 3, 1, 0)).reshape(k_real, c_out)   # (dy,dx,c) x Cout
        wt = jnp.pad(wt, ((0, k_pad - k_real), (0, c_out_pad - c_out)))
        fp[f"cw{i}"] = wt.astype(jnp.bfloat16)
        fp[f"cb{i}"] = jnp.pad(b, (0, c_out_pad - c_out)).reshape(1, c_out_pad).astype(jnp.float32)
    out_pads = [FC_HIDDEN1, FC_HIDDEN2, round_up(CNN_EMBED_DIM, LANE)]
    for i in range(3):
        w, b = raw[f"fc{i}_w"], raw[f"fc{i}_b"]
        o = w.shape[0]
        op = out_pads[i]
        fp[f"fw{i}"] = jnp.pad(w.T, ((0, 0), (0, op - o))).astype(jnp.bfloat16)
        fp[f"fb{i}"] = jnp.pad(b, (0, op - o)).reshape(1, op).astype(jnp.float32)
    return fp


# ---------------------------------------------------------------------------
# Full forward:  (B, T, 3, H, W)  ->  (cnn_embed_seq (B, T, 300), y (B, 512))
# ---------------------------------------------------------------------------
@jax.jit
def encoder_cnn_forward(x_3d, fp):
    b, t, c, h, w = x_3d.shape
    n = b * t
    # All (b, t) frames are independent -> one batched pass, bf16 before im2col.
    x = x_3d.reshape(n, c, h, w).transpose(0, 2, 3, 1).astype(jnp.bfloat16)   # NHWC
    for i in range(4):
        x = conv_bn_relu(x, fp[f"cw{i}"], fp[f"cb{i}"], CONV_K[i], CONV_S[i])
        x = x[..., :CONV_CH[i]]                       # drop channel padding before next contraction
    feat = x.transpose(0, 3, 1, 2).reshape(n, -1)     # NCHW flatten == x.view(B, -1)
    feat = feat.astype(jnp.bfloat16)
    d = feat.shape[1]                                 # 256*h4*w4, always a multiple of 128

    # ---- fused fc head over row tiles (embeddings only) ----
    tm_h = HEAD_TM if n >= HEAD_TM else round_up(n, 8)
    n_pad = round_up(n, tm_h)
    feat_p = jnp.pad(feat, ((0, n_pad - n), (0, 0))) if n_pad > n else feat
    e_pad = fp["fw2"].shape[1]
    emb_pad = pl.pallas_call(
        head_kernel,
        out_shape=jax.ShapeDtypeStruct((n_pad, e_pad), jnp.float32),
        grid=(n_pad // tm_h,),
        in_specs=[
            pl.BlockSpec((tm_h, d), lambda i: (i, 0)),
            pl.BlockSpec(fp["fw0"].shape, lambda i: (0, 0)),
            pl.BlockSpec((1, FC_HIDDEN1), lambda i: (0, 0)),
            pl.BlockSpec(fp["fw1"].shape, lambda i: (0, 0)),
            pl.BlockSpec((1, FC_HIDDEN2), lambda i: (0, 0)),
            pl.BlockSpec(fp["fw2"].shape, lambda i: (0, 0)),
            pl.BlockSpec((1, e_pad), lambda i: (0, 0)),
        ],
        out_specs=pl.BlockSpec((tm_h, e_pad), lambda i: (i, 0)),
        compiler_params=pltpu.CompilerParams(
            dimension_semantics=("parallel",),
            vmem_limit_bytes=VMEM_LIMIT,
        ),
    )(feat_p, fp["fw0"], fp["fb0"], fp["fw1"], fp["fb1"], fp["fw2"], fp["fb2"])
    emb = emb_pad[:n, :CNN_EMBED_DIM].reshape(b, t, CNN_EMBED_DIM)

    # ---- "y" = relu(fc1) at the last time step only (no (B*T,512) writeback) ----
    feat_last = feat.reshape(b, t, d)[:, -1, :]       # (B, D) bf16
    rpad = round_up(b, 8)
    feat_last_p = jnp.pad(feat_last, ((0, rpad - b), (0, 0))) if rpad > b else feat_last
    y_pad = pl.pallas_call(
        fc1_relu_kernel,
        out_shape=jax.ShapeDtypeStruct((rpad, FC_HIDDEN1), jnp.float32),
        compiler_params=pltpu.CompilerParams(vmem_limit_bytes=VMEM_LIMIT),
    )(feat_last_p, fp["fw0"], fp["fb0"])
    y = y_pad[:b]
    return emb, y


if __name__ == "__main__":
    key = jax.random.PRNGKey(0)
    k_x, k_p = jax.random.split(key)

    B, T, C, IMG_X, IMG_Y = 2, 2, 3, 64, 64
    x_3d = jax.random.normal(k_x, (B, T, C, IMG_X, IMG_Y), jnp.float32)

    raw = init_raw_params(k_p, IMG_X, IMG_Y)
    fp = fold_params(raw)

    emb, y = encoder_cnn_forward(x_3d, fp)
    emb = jax.block_until_ready(emb)
    y = jax.block_until_ready(y)

    assert emb.shape == (B, T, CNN_EMBED_DIM), emb.shape
    assert y.shape == (B, FC_HIDDEN1), y.shape
    assert bool(jnp.all(jnp.isfinite(emb))) and bool(jnp.all(jnp.isfinite(y)))
    print("KERNEL_OK")
</pallas_src>

<mosaic_0001>
module attributes {stable_mosaic.version = 11 : i64} {
  func.func @conv_gemm_kernel(%arg0: i32, %arg1: memref<512x128xbf16, #tpu.memory_space<vmem>>, %arg2: memref<128x128xbf16, #tpu.memory_space<vmem>>, %arg3: memref<1x128xf32, #tpu.memory_space<vmem>>, %arg4: memref<512x128xbf16, #tpu.memory_space<vmem>>) attributes {dimension_semantics = [#tpu.dimension_semantics<parallel>], iteration_bounds = array<i64: 8>, scalar_prefetch = 0 : i64, scratch_operands = 0 : i64, tpu.core_type = #tpu.core_type<tc>, window_params = [{transform_indices = @transform_0, window_bounds = array<i64: 512, 128>}, {pipeline_mode = #tpu.pipeline_mode<synchronous>, transform_indices = @transform_1, window_bounds = array<i64: 128, 128>}, {pipeline_mode = #tpu.pipeline_mode<synchronous>, transform_indices = @transform_2, window_bounds = array<i64: 1, 128>}, {transform_indices = @transform_3, window_bounds = array<i64: 512, 128>}]} {
    %c0 = arith.constant 0 : index
    %c0_0 = arith.constant 0 : index
    %0 = vector.load %arg1[%c0, %c0_0] : memref<512x128xbf16, #tpu.memory_space<vmem>>, vector<512x128xbf16>
    %c0_1 = arith.constant 0 : index
    %c0_2 = arith.constant 0 : index
    %1 = vector.load %arg2[%c0_1, %c0_2] : memref<128x128xbf16, #tpu.memory_space<vmem>>, vector<128x128xbf16>
    %cst = arith.constant dense<0.000000e+00> : vector<512x128xf32>
    %2 = tpu.matmul %0, %1, %cst {dimension_numbers = #tpu.dot_dimension_numbers<[1], [0], [0], [1], [0, 0, 1, 1], [], []>} : vector<512x128xbf16>, vector<128x128xbf16>, vector<512x128xf32> -> vector<512x128xf32>
    %c0_3 = arith.constant 0 : index
    %c0_4 = arith.constant 0 : index
    %3 = vector.load %arg3[%c0_3, %c0_4] : memref<1x128xf32, #tpu.memory_space<vmem>>, vector<1x128xf32>
    %4 = vector.broadcast %3 : vector<1x128xf32> to vector<512x128xf32>
    %5 = arith.addf %2, %4 : vector<512x128xf32>
    %cst_5 = arith.constant 0.000000e+00 : f32
    %6 = vector.broadcast %cst_5 : f32 to vector<512x128xf32>
    %7 = arith.maximumf %5, %6 : vector<512x128xf32>
    %8 = arith.truncf %7 : vector<512x128xf32> to vector<512x128xbf16>
    %c0_6 = arith.constant 0 : index
    %c0_7 = arith.constant 0 : index
    %9 = vector.load %arg4[%c0_6, %c0_7] : memref<512x128xbf16, #tpu.memory_space<vmem>>, vector<512x128xbf16>
    tpu.vector_store %arg4[%c0_6, %c0_7], %8 {strides = array<i32>} : memref<512x128xbf16, #tpu.memory_space<vmem>>, vector<512x128xbf16>,
    return
  }
  func.func @transform_0(%arg0: i32) -> (i32, i32) {
    %c0_i32 = arith.constant 0 : i32
    %c0_i32_0 = arith.constant 0 : i32
    return %arg0, %c0_i32 : i32, i32
  }
  func.func @transform_1(%arg0: i32) -> (i32, i32) {
    %c0_i32 = arith.constant 0 : i32
    %c0_i32_0 = arith.constant 0 : i32
    %c0_i32_1 = arith.constant 0 : i32
    return %c0_i32, %c0_i32_0 : i32, i32
  }
  func.func @transform_2(%arg0: i32) -> (i32, i32) {
    %c0_i32 = arith.constant 0 : i32
    %c0_i32_0 = arith.constant 0 : i32
    %c0_i32_1 = arith.constant 0 : i32
    return %c0_i32, %c0_i32_0 : i32, i32
  }
  func.func @transform_3(%arg0: i32) -> (i32, i32) {
    %c0_i32 = arith.constant 0 : i32
    %c0_i32_0 = arith.constant 0 : i32
    return %arg0, %c0_i32 : i32, i32
  }
}

module attributes {stable_mosaic.version = 11 : i64} {
  func.func @conv_gemm_kernel(%arg0: i32, %arg1: memref<512x384xbf16, #tpu.memory_space<vmem>>, %arg2: memref<384x128xbf16, #tpu.memory_space<vmem>>, %arg3: memref<1x128xf32, #tpu.memory_space<vmem>>, %arg4: memref<512x128xbf16, #tpu.memory_space<vmem>>) attributes {dimension_semantics = [#tpu.dimension_semantics<parallel>], iteration_bounds = array<i64: 2>, scalar_prefetch = 0 : i64, scratch_operands = 0 : i64, tpu.core_type = #tpu.core_type<tc>, window_params = [{transform_indices = @transform_0, window_bounds = array<i64: 512, 384>}, {pipeline_mode = #tpu.pipeline_mode<synchronous>, transform_indices = @transform_1, window_bounds = array<i64: 384, 128>}, {pipeline_mode = #tpu.pipeline_mode<synchronous>, transform_indices = @transform_2, window_bounds = array<i64: 1, 128>}, {transform_indices = @transform_3, window_bounds = array<i64: 512, 128>}]} {
    %c0 = arith.constant 0 : index
    %c0_0 = arith.constant 0 : index
    %0 = vector.load %arg1[%c0, %c0_0] : memref<512x384xbf16, #tpu.memory_space<vmem>>, vector<512x384xbf16>
    %c0_1 = arith.constant 0 : index
    %c0_2 = arith.constant 0 : index
    %1 = vector.load %arg2[%c0_1, %c0_2] : memref<384x128xbf16, #tpu.memory_space<vmem>>, vector<384x128xbf16>
    %cst = arith.constant dense<0.000000e+00> : vector<512x128xf32>
    %2 = tpu.matmul %0, %1, %cst {dimension_numbers = #tpu.dot_dimension_numbers<[1], [0], [0], [1], [0, 0, 1, 1], [], []>} : vector<512x384xbf16>, vector<384x128xbf16>, vector<512x128xf32> -> vector<512x128xf32>
    %c0_3 = arith.constant 0 : index
    %c0_4 = arith.constant 0 : index
    %3 = vector.load %arg3[%c0_3, %c0_4] : memref<1x128xf32, #tpu.memory_space<vmem>>, vector<1x128xf32>
    %4 = vector.broadcast %3 : vector<1x128xf32> to vector<512x128xf32>
    %5 = arith.addf %2, %4 : vector<512x128xf32>
    %cst_5 = arith.constant 0.000000e+00 : f32
    %6 = vector.broadcast %cst_5 : f32 to vector<512x128xf32>
    %7 = arith.maximumf %5, %6 : vector<512x128xf32>
    %8 = arith.truncf %7 : vector<512x128xf32> to vector<512x128xbf16>
    %c0_6 = arith.constant 0 : index
    %c0_7 = arith.constant 0 : index
    %9 = vector.load %arg4[%c0_6, %c0_7] : memref<512x128xbf16, #tpu.memory_space<vmem>>, vector<512x128xbf16>
    tpu.vector_store %arg4[%c0_6, %c0_7], %8 {strides = array<i32>} : memref<512x128xbf16, #tpu.memory_space<vmem>>, vector<512x128xbf16>,
    return
  }
  func.func @transform_0(%arg0: i32) -> (i32, i32) {
    %c0_i32 = arith.constant 0 : i32
    %c0_i32_0 = arith.constant 0 : i32
    return %arg0, %c0_i32 : i32, i32
  }
  func.func @transform_1(%arg0: i32) -> (i32, i32) {
    %c0_i32 = arith.constant 0 : i32
    %c0_i32_0 = arith.constant 0 : i32
    %c0_i32_1 = arith.constant 0 : i32
    return %c0_i32, %c0_i32_0 : i32, i32
  }
  func.func @transform_2(%arg0: i32) -> (i32, i32) {
    %c0_i32 = arith.constant 0 : i32
    %c0_i32_0 = arith.constant 0 : i32
    %c0_i32_1 = arith.constant 0 : i32
    return %c0_i32, %c0_i32_0 : i32, i32
  }
  func.func @transform_3(%arg0: i32) -> (i32, i32) {
    %c0_i32 = arith.constant 0 : i32
    %c0_i32_0 = arith.constant 0 : i32
    return %arg0, %c0_i32 : i32, i32
  }
}

module attributes {stable_mosaic.version = 11 : i64} {
  func.func @conv_gemm_kernel(%arg0: i32, %arg1: memref<144x640xbf16, #tpu.memory_space<vmem>>, %arg2: memref<640x128xbf16, #tpu.memory_space<vmem>>, %arg3: memref<1x128xf32, #tpu.memory_space<vmem>>, %arg4: memref<144x128xbf16, #tpu.memory_space<vmem>>) attributes {dimension_semantics = [#tpu.dimension_semantics<parallel>], iteration_bounds = array<i64: 1>, scalar_prefetch = 0 : i64, scratch_operands = 0 : i64, tpu.core_type = #tpu.core_type<tc>, window_params = [{transform_indices = @transform_0, window_bounds = array<i64: 144, 640>}, {pipeline_mode = #tpu.pipeline_mode<synchronous>, transform_indices = @transform_1, window_bounds = array<i64: 640, 128>}, {pipeline_mode = #tpu.pipeline_mode<synchronous>, transform_indices = @transform_2, window_bounds = array<i64: 1, 128>}, {transform_indices = @transform_3, window_bounds = array<i64: 144, 128>}]} {
    %c0 = arith.constant 0 : index
    %c0_0 = arith.constant 0 : index
    %0 = vector.load %arg1[%c0, %c0_0] : memref<144x640xbf16, #tpu.memory_space<vmem>>, vector<144x640xbf16>
    %c0_1 = arith.constant 0 : index
    %c0_2 = arith.constant 0 : index
    %1 = vector.load %arg2[%c0_1, %c0_2] : memref<640x128xbf16, #tpu.memory_space<vmem>>, vector<640x128xbf16>
    %cst = arith.constant dense<0.000000e+00> : vector<144x128xf32>
    %2 = tpu.matmul %0, %1, %cst {dimension_numbers = #tpu.dot_dimension_numbers<[1], [0], [0], [1], [0, 0, 1, 1], [], []>} : vector<144x640xbf16>, vector<640x128xbf16>, vector<144x128xf32> -> vector<144x128xf32>
    %c0_3 = arith.constant 0 : index
    %c0_4 = arith.constant 0 : index
    %3 = vector.load %arg3[%c0_3, %c0_4] : memref<1x128xf32, #tpu.memory_space<vmem>>, vector<1x128xf32>
    %4 = vector.broadcast %3 : vector<1x128xf32> to vector<144x128xf32>
    %5 = arith.addf %2, %4 : vector<144x128xf32>
    %cst_5 = arith.constant 0.000000e+00 : f32
    %6 = vector.broadcast %cst_5 : f32 to vector<144x128xf32>
    %7 = arith.maximumf %5, %6 : vector<144x128xf32>
    %8 = arith.truncf %7 : vector<144x128xf32> to vector<144x128xbf16>
    %c0_6 = arith.constant 0 : index
    %c0_7 = arith.constant 0 : index
    %9 = vector.load %arg4[%c0_6, %c0_7] : memref<144x128xbf16, #tpu.memory_space<vmem>>, vector<144x128xbf16>
    tpu.vector_store %arg4[%c0_6, %c0_7], %8 {strides = array<i32>} : memref<144x128xbf16, #tpu.memory_space<vmem>>, vector<144x128xbf16>,
    return
  }
  func.func @transform_0(%arg0: i32) -> (i32, i32) {
    %c0_i32 = arith.constant 0 : i32
    %c0_i32_0 = arith.constant 0 : i32
    return %arg0, %c0_i32 : i32, i32
  }
  func.func @transform_1(%arg0: i32) -> (i32, i32) {
    %c0_i32 = arith.constant 0 : i32
    %c0_i32_0 = arith.constant 0 : i32
    %c0_i32_1 = arith.constant 0 : i32
    return %c0_i32, %c0_i32_0 : i32, i32
  }
  func.func @transform_2(%arg0: i32) -> (i32, i32) {
    %c0_i32 = arith.constant 0 : i32
    %c0_i32_0 = arith.constant 0 : i32
    %c0_i32_1 = arith.constant 0 : i32
    return %c0_i32, %c0_i32_0 : i32, i32
  }
  func.func @transform_3(%arg0: i32) -> (i32, i32) {
    %c0_i32 = arith.constant 0 : i32
    %c0_i32_0 = arith.constant 0 : i32
    return %arg0, %c0_i32 : i32, i32
  }
}

module attributes {stable_mosaic.version = 11 : i64} {
  func.func @conv_gemm_kernel(%arg0: i32, %arg1: memref<16x1152xbf16, #tpu.memory_space<vmem>>, %arg2: memref<1152x256xbf16, #tpu.memory_space<vmem>>, %arg3: memref<1x256xf32, #tpu.memory_space<vmem>>, %arg4: memref<16x256xbf16, #tpu.memory_space<vmem>>) attributes {dimension_semantics = [#tpu.dimension_semantics<parallel>], iteration_bounds = array<i64: 1>, scalar_prefetch = 0 : i64, scratch_operands = 0 : i64, tpu.core_type = #tpu.core_type<tc>, window_params = [{transform_indices = @transform_0, window_bounds = array<i64: 16, 1152>}, {pipeline_mode = #tpu.pipeline_mode<synchronous>, transform_indices = @transform_1, window_bounds = array<i64: 1152, 256>}, {pipeline_mode = #tpu.pipeline_mode<synchronous>, transform_indices = @transform_2, window_bounds = array<i64: 1, 256>}, {transform_indices = @transform_3, window_bounds = array<i64: 16, 256>}]} {
    %c0 = arith.constant 0 : index
    %c0_0 = arith.constant 0 : index
    %0 = vector.load %arg1[%c0, %c0_0] : memref<16x1152xbf16, #tpu.memory_space<vmem>>, vector<16x1152xbf16>
    %c0_1 = arith.constant 0 : index
    %c0_2 = arith.constant 0 : index
    %1 = vector.load %arg2[%c0_1, %c0_2] : memref<1152x256xbf16, #tpu.memory_space<vmem>>, vector<1152x256xbf16>
    %cst = arith.constant dense<0.000000e+00> : vector<16x256xf32>
    %2 = tpu.matmul %0, %1, %cst {dimension_numbers = #tpu.dot_dimension_numbers<[1], [0], [0], [1], [0, 0, 1, 1], [], []>} : vector<16x1152xbf16>, vector<1152x256xbf16>, vector<16x256xf32> -> vector<16x256xf32>
    %c0_3 = arith.constant 0 : index
    %c0_4 = arith.constant 0 : index
    %3 = vector.load %arg3[%c0_3, %c0_4] : memref<1x256xf32, #tpu.memory_space<vmem>>, vector<1x256xf32>
    %4 = vector.broadcast %3 : vector<1x256xf32> to vector<16x256xf32>
    %5 = arith.addf %2, %4 : vector<16x256xf32>
    %cst_5 = arith.constant 0.000000e+00 : f32
    %6 = vector.broadcast %cst_5 : f32 to vector<16x256xf32>
    %7 = arith.maximumf %5, %6 : vector<16x256xf32>
    %8 = arith.truncf %7 : vector<16x256xf32> to vector<16x256xbf16>
    %c0_6 = arith.constant 0 : index
    %c0_7 = arith.constant 0 : index
    %9 = vector.load %arg4[%c0_6, %c0_7] : memref<16x256xbf16, #tpu.memory_space<vmem>>, vector<16x256xbf16>
    tpu.vector_store %arg4[%c0_6, %c0_7], %8 {strides = array<i32>} : memref<16x256xbf16, #tpu.memory_space<vmem>>, vector<16x256xbf16>,
    return
  }
  func.func @transform_0(%arg0: i32) -> (i32, i32) {
    %c0_i32 = arith.constant 0 : i32
    %c0_i32_0 = arith.constant 0 : i32
    return %arg0, %c0_i32 : i32, i32
  }
  func.func @transform_1(%arg0: i32) -> (i32, i32) {
    %c0_i32 = arith.constant 0 : i32
    %c0_i32_0 = arith.constant 0 : i32
    %c0_i32_1 = arith.constant 0 : i32
    return %c0_i32, %c0_i32_0 : i32, i32
  }
  func.func @transform_2(%arg0: i32) -> (i32, i32) {
    %c0_i32 = arith.constant 0 : i32
    %c0_i32_0 = arith.constant 0 : i32
    %c0_i32_1 = arith.constant 0 : i32
    return %c0_i32, %c0_i32_0 : i32, i32
  }
  func.func @transform_3(%arg0: i32) -> (i32, i32) {
    %c0_i32 = arith.constant 0 : i32
    %c0_i32_0 = arith.constant 0 : i32
    return %arg0, %c0_i32 : i32, i32
  }
}

module attributes {stable_mosaic.version = 11 : i64} {
  func.func @fc1_relu_kernel(%arg0: memref<8x1024xbf16, #tpu.memory_space<vmem>>, %arg1: memref<1024x512xbf16, #tpu.memory_space<vmem>>, %arg2: memref<1x512xf32, #tpu.memory_space<vmem>>, %arg3: memref<8x512xf32, #tpu.memory_space<vmem>>) attributes {dimension_semantics = [], scalar_prefetch = 0 : i64, scratch_operands = 0 : i64, tpu.core_type = #tpu.core_type<tc>} {
    %c0 = arith.constant 0 : index
    %c0_0 = arith.constant 0 : index
    %0 = vector.load %arg0[%c0, %c0_0] : memref<8x1024xbf16, #tpu.memory_space<vmem>>, vector<8x1024xbf16>
    %c0_1 = arith.constant 0 : index
    %c0_2 = arith.constant 0 : index
    %1 = vector.load %arg1[%c0_1, %c0_2] : memref<1024x512xbf16, #tpu.memory_space<vmem>>, vector<1024x512xbf16>
    %cst = arith.constant dense<0.000000e+00> : vector<8x512xf32>
    %2 = tpu.matmul %0, %1, %cst {dimension_numbers = #tpu.dot_dimension_numbers<[1], [0], [0], [1], [0, 0, 1, 1], [], []>} : vector<8x1024xbf16>, vector<1024x512xbf16>, vector<8x512xf32> -> vector<8x512xf32>
    %c0_3 = arith.constant 0 : index
    %c0_4 = arith.constant 0 : index
    %3 = vector.load %arg2[%c0_3, %c0_4] : memref<1x512xf32, #tpu.memory_space<vmem>>, vector<1x512xf32>
    %4 = vector.broadcast %3 : vector<1x512xf32> to vector<8x512xf32>
    %5 = arith.addf %2, %4 : vector<8x512xf32>
    %cst_5 = arith.constant 0.000000e+00 : f32
    %6 = vector.broadcast %cst_5 : f32 to vector<8x512xf32>
    %7 = arith.maximumf %5, %6 : vector<8x512xf32>
    %c0_6 = arith.constant 0 : index
    %c0_7 = arith.constant 0 : index
    %8 = vector.load %arg3[%c0_6, %c0_7] : memref<8x512xf32, #tpu.memory_space<vmem>>, vector<8x512xf32>
    tpu.vector_store %arg3[%c0_6, %c0_7], %7 {strides = array<i32>} : memref<8x512xf32, #tpu.memory_space<vmem>>, vector<8x512xf32>,
    return
  }
}

module attributes {stable_mosaic.version = 11 : i64} {
  func.func @head_kernel(%arg0: i32, %arg1: memref<8x1024xbf16, #tpu.memory_space<vmem>>, %arg2: memref<1024x512xbf16, #tpu.memory_space<vmem>>, %arg3: memref<1x512xf32, #tpu.memory_space<vmem>>, %arg4: memref<512x512xbf16, #tpu.memory_space<vmem>>, %arg5: memref<1x512xf32, #tpu.memory_space<vmem>>, %arg6: memref<512x384xbf16, #tpu.memory_space<vmem>>, %arg7: memref<1x384xf32, #tpu.memory_space<vmem>>, %arg8: memref<8x384xf32, #tpu.memory_space<vmem>>) attributes {dimension_semantics = [#tpu.dimension_semantics<parallel>], iteration_bounds = array<i64: 1>, scalar_prefetch = 0 : i64, scratch_operands = 0 : i64, tpu.core_type = #tpu.core_type<tc>, window_params = [{transform_indices = @transform_0, window_bounds = array<i64: 8, 1024>}, {pipeline_mode = #tpu.pipeline_mode<synchronous>, transform_indices = @transform_1, window_bounds = array<i64: 1024, 512>}, {pipeline_mode = #tpu.pipeline_mode<synchronous>, transform_indices = @transform_2, window_bounds = array<i64: 1, 512>}, {pipeline_mode = #tpu.pipeline_mode<synchronous>, transform_indices = @transform_3, window_bounds = array<i64: 512, 512>}, {pipeline_mode = #tpu.pipeline_mode<synchronous>, transform_indices = @transform_4, window_bounds = array<i64: 1, 512>}, {pipeline_mode = #tpu.pipeline_mode<synchronous>, transform_indices = @transform_5, window_bounds = array<i64: 512, 384>}, {pipeline_mode = #tpu.pipeline_mode<synchronous>, transform_indices = @transform_6, window_bounds = array<i64: 1, 384>}, {transform_indices = @transform_7, window_bounds = array<i64: 8, 384>}]} {
    %c0 = arith.constant 0 : index
    %c0_0 = arith.constant 0 : index
    %0 = vector.load %arg1[%c0, %c0_0] : memref<8x1024xbf16, #tpu.memory_space<vmem>>, vector<8x1024xbf16>
    %c0_1 = arith.constant 0 : index
    %c0_2 = arith.constant 0 : index
    %1 = vector.load %arg2[%c0_1, %c0_2] : memref<1024x512xbf16, #tpu.memory_space<vmem>>, vector<1024x512xbf16>
    %cst = arith.constant dense<0.000000e+00> : vector<8x512xf32>
    %2 = tpu.matmul %0, %1, %cst {dimension_numbers = #tpu.dot_dimension_numbers<[1], [0], [0], [1], [0, 0, 1, 1], [], []>} : vector<8x1024xbf16>, vector<1024x512xbf16>, vector<8x512xf32> -> vector<8x512xf32>
    %c0_3 = arith.constant 0 : index
    %c0_4 = arith.constant 0 : index
    %3 = vector.load %arg3[%c0_3, %c0_4] : memref<1x512xf32, #tpu.memory_space<vmem>>, vector<1x512xf32>
    %4 = vector.broadcast %3 : vector<1x512xf32> to vector<8x512xf32>
    %5 = arith.addf %2, %4 : vector<8x512xf32>
    %cst_5 = arith.constant 0.000000e+00 : f32
    %6 = vector.broadcast %cst_5 : f32 to vector<8x512xf32>
    %7 = arith.maximumf %5, %6 : vector<8x512xf32>
    %8 = arith.truncf %7 : vector<8x512xf32> to vector<8x512xbf16>
    %c0_6 = arith.constant 0 : index
    %c0_7 = arith.constant 0 : index
    %9 = vector.load %arg4[%c0_6, %c0_7] : memref<512x512xbf16, #tpu.memory_space<vmem>>, vector<512x512xbf16>
    %cst_8 = arith.constant dense<0.000000e+00> : vector<8x512xf32>
    %10 = tpu.matmul %8, %9, %cst_8 {dimension_numbers = #tpu.dot_dimension_numbers<[1], [0], [0], [1], [0, 0, 1, 1], [], []>} : vector<8x512xbf16>, vector<512x512xbf16>, vector<8x512xf32> -> vector<8x512xf32>
    %c0_9 = arith.constant 0 : index
    %c0_10 = arith.constant 0 : index
    %11 = vector.load %arg5[%c0_9, %c0_10] : memref<1x512xf32, #tpu.memory_space<vmem>>, vector<1x512xf32>
    %12 = vector.broadcast %11 : vector<1x512xf32> to vector<8x512xf32>
    %13 = arith.addf %10, %12 : vector<8x512xf32>
    %cst_11 = arith.constant 0.000000e+00 : f32
    %14 = vector.broadcast %cst_11 : f32 to vector<8x512xf32>
    %15 = arith.maximumf %13, %14 : vector<8x512xf32>
    %16 = arith.truncf %15 : vector<8x512xf32> to vector<8x512xbf16>
    %c0_12 = arith.constant 0 : index
    %c0_13 = arith.constant 0 : index
    %17 = vector.load %arg6[%c0_12, %c0_13] : memref<512x384xbf16, #tpu.memory_space<vmem>>, vector<512x384xbf16>
    %cst_14 = arith.constant dense<0.000000e+00> : vector<8x384xf32>
    %18 = tpu.matmul %16, %17, %cst_14 {dimension_numbers = #tpu.dot_dimension_numbers<[1], [0], [0], [1], [0, 0, 1, 1], [], []>} : vector<8x512xbf16>, vector<512x384xbf16>, vector<8x384xf32> -> vector<8x384xf32>
    %c0_15 = arith.constant 0 : index
    %c0_16 = arith.constant 0 : index
    %19 = vector.load %arg7[%c0_15, %c0_16] : memref<1x384xf32, #tpu.memory_space<vmem>>, vector<1x384xf32>
    %20 = vector.broadcast %19 : vector<1x384xf32> to vector<8x384xf32>
    %21 = arith.addf %18, %20 : vector<8x384xf32>
    %c0_17 = arith.constant 0 : index
    %c0_18 = arith.constant 0 : index
    %22 = vector.load %arg8[%c0_17, %c0_18] : memref<8x384xf32, #tpu.memory_space<vmem>>, vector<8x384xf32>
    tpu.vector_store %arg8[%c0_17, %c0_18], %21 {strides = array<i32>} : memref<8x384xf32, #tpu.memory_space<vmem>>, vector<8x384xf32>,
    return
  }
  func.func @transform_0(%arg0: i32) -> (i32, i32) {
    %c0_i32 = arith.constant 0 : i32
    %c0_i32_0 = arith.constant 0 : i32
    return %arg0, %c0_i32 : i32, i32
  }
  func.func @transform_1(%arg0: i32) -> (i32, i32) {
    %c0_i32 = arith.constant 0 : i32
    %c0_i32_0 = arith.constant 0 : i32
    %c0_i32_1 = arith.constant 0 : i32
    return %c0_i32, %c0_i32_0 : i32, i32
  }
  func.func @transform_2(%arg0: i32) -> (i32, i32) {
    %c0_i32 = arith.constant 0 : i32
    %c0_i32_0 = arith.constant 0 : i32
    %c0_i32_1 = arith.constant 0 : i32
    return %c0_i32, %c0_i32_0 : i32, i32
  }
  func.func @transform_3(%arg0: i32) -> (i32, i32) {
    %c0_i32 = arith.constant 0 : i32
    %c0_i32_0 = arith.constant 0 : i32
    %c0_i32_1 = arith.constant 0 : i32
    return %c0_i32, %c0_i32_0 : i32, i32
  }
  func.func @transform_4(%arg0: i32) -> (i32, i32) {
    %c0_i32 = arith.constant 0 : i32
    %c0_i32_0 = arith.constant 0 : i32
    %c0_i32_1 = arith.constant 0 : i32
    return %c0_i32, %c0_i32_0 : i32, i32
  }
  func.func @transform_5(%arg0: i32) -> (i32, i32) {
    %c0_i32 = arith.constant 0 : i32
    %c0_i32_0 = arith.constant 0 : i32
    %c0_i32_1 = arith.constant 0 : i32
    return %c0_i32, %c0_i32_0 : i32, i32
  }
  func.func @transform_6(%arg0: i32) -> (i32, i32) {
    %c0_i32 = arith.constant 0 : i32
    %c0_i32_0 = arith.constant 0 : i32
    %c0_i32_1 = arith.constant 0 : i32
    return %c0_i32, %c0_i32_0 : i32, i32
  }
  func.func @transform_7(%arg0: i32) -> (i32, i32) {
    %c0_i32 = arith.constant 0 : i32
    %c0_i32_0 = arith.constant 0 : i32
    return %arg0, %c0_i32 : i32, i32
  }
}

</mosaic_0001>

<llo_original>
// kernel: encoder_cnn_forward.6
$region0: #{encoder_cnn_forward.6}
  #allocation0 [shape = 'u32[]', space=smem, size = 0x4, offset = 0x4, fixed_abs, tag = 'smem constant byte address 0x4 - core index']
  #allocation1 [shape = 'u32[72,128]{1,0:T(1,128)}', space=vmem, size = 0x9000, scoped, tag = 'internal scratch']
  %s0 = inlined_call_operand.vmem [shape: bf16[4096,128], index: 0, kind: input, shape index: {}]
  %s1 = inlined_call_operand.vmem [shape: bf16[128,128], index: 1, kind: input, shape index: {}]
  %s2 = inlined_call_operand.vmem [shape: f32[1,128], index: 2, kind: input, shape index: {}]
  %s3 = inlined_call_operand.vmem [shape: bf16[4096,128], index: 3, kind: output, shape index: {}]
  %s4 = sld [smem:[#allocation0]]
  $region45: #{encoder_cnn_forward.6} parent=0
    _
  %s6 = ssub.s32 1, %s4
  %s7 = scalar_select 0, %s6, %s4
  loop: start=0, step=1, limit=10
  $region2: #{encoder_cnn_forward.6} parent=0 // loop_pre_header
    _
  $region3: #{encoder_cnn_forward.6} parent=0 // loop_header
    %s9 = sphi 0, %s13
    %p10 = scmp.ge.s32.totalorder %s9, 10
    %s19 = sphi 0, %s21
    %s22 = sphi 0, %s19
    %s23 = sphi 0, %s22
    %s39 = sphi 0, %s23
    %s43 = sphi 0, %s43
    %s45 = sphi 0, %s43
    %s46 = sphi 0, %s45
    %s60 = sphi 0, %s46
    %s64 = sphi 0, %s64
    %s66 = sphi 0, %s64
    %s67 = sphi 0, %s66
    %s81 = sphi 0, %s67
    %s87 = sphi 0, %s89
    %s90 = sphi 0, %s87
    %s91 = sphi 0, %s90
    %s107 = sphi 0, %s91
  $region4: #{encoder_cnn_forward.6} parent=0 // loop_header_branch
    %12 = sbr.rel (%p10) target = $region8
  $region5: #{encoder_cnn_forward.6} parent=0 // loop_body
    %s14 = ssub.s32 %s9, 1
    %s15 = ssub.s32 %s9, 2
    %s16 = sadd.s32 %s9, 1
    %s17 = ssub.s32 %s9, %s16
    %p18 = scmp.eq.s32.totalorder %s17, 0
    %s20 = sadd.s32 %s19, 1
    %s21 = scalar_select %p18, %s19, %s20
    %p24 = pneg %p18
    %p25 = scmp.eq.s32.totalorder %s9, 7
    %p26 = por %p24, %p25
    %p27 = scmp.ne.s32.totalorder %s19, %s22
    %p28 = scmp.eq.s32.totalorder %s9, 0
    %p29 = por %p27, %p28
    %p30 = scmp.ne.s32.totalorder %s19, %s22
    %p31 = scmp.eq.s32.totalorder %s14, 7
    %p32 = por %p30, %p31
    %p33 = scmp.ne.s32.totalorder %s22, %s23
    %p34 = scmp.eq.s32.totalorder %s14, 0
    %p35 = por %p33, %p34
    %p36 = scmp.ne.s32.totalorder %s22, %s23
    %p37 = scmp.eq.s32.totalorder %s15, 7
    %p38 = por %p36, %p37
    %p40 = scmp.ne.s32.totalorder %s23, %s39
    %p41 = scmp.eq.s32.totalorder %s15, 0
    %p42 = por %p40, %p41
    %s44 = sadd.s32 %s43, 1
    %p47 = scmp.eq.s32.totalorder %s9, 7
    %p48 = scmp.ne.s32.totalorder %s43, %s45
    %p49 = scmp.eq.s32.totalorder %s9, 0
    %p50 = por %p48, %p49
    %p51 = scmp.ne.s32.totalorder %s43, %s45
    %p52 = scmp.eq.s32.totalorder %s14, 7
    %p53 = por %p51, %p52
    %p54 = scmp.ne.s32.totalorder %s45, %s46
    %p55 = scmp.eq.s32.totalorder %s14, 0
    %p56 = por %p54, %p55
    %p57 = scmp.ne.s32.totalorder %s45, %s46
    %p58 = scmp.eq.s32.totalorder %s15, 7
    %p59 = por %p57, %p58
    %p61 = scmp.ne.s32.totalorder %s46, %s60
    %p62 = scmp.eq.s32.totalorder %s15, 0
    %p63 = por %p61, %p62
    %s65 = sadd.s32 %s64, 1
    %p68 = scmp.eq.s32.totalorder %s9, 7
    %p69 = scmp.ne.s32.totalorder %s64, %s66
    %p70 = scmp.eq.s32.totalorder %s9, 0
    %p71 = por %p69, %p70
    %p72 = scmp.ne.s32.totalorder %s64, %s66
    %p73 = scmp.eq.s32.totalorder %s14, 7
    %p74 = por %p72, %p73
    %p75 = scmp.ne.s32.totalorder %s66, %s67
    %p76 = scmp.eq.s32.totalorder %s14, 0
    %p77 = por %p75, %p76
    %p78 = scmp.ne.s32.totalorder %s66, %s67
    %p79 = scmp.eq.s32.totalorder %s15, 7
    %p80 = por %p78, %p79
    %p82 = scmp.ne.s32.totalorder %s67, %s81
    %p83 = scmp.eq.s32.totalorder %s15, 0
    %p84 = por %p82, %p83
    %s85 = ssub.s32 %s9, %s16
    %p86 = scmp.eq.s32.totalorder %s85, 0
    %s88 = sadd.s32 %s87, 1
    %s89 = scalar_select %p86, %s87, %s88
    %p92 = pneg %p86
    %p93 = scmp.eq.s32.totalorder %s9, 7
    %p94 = por %p92, %p93
    %p95 = scmp.ne.s32.totalorder %s87, %s90
    %p96 = scmp.eq.s32.totalorder %s9, 0
    %p97 = por %p95, %p96
    %p98 = scmp.ne.s32.totalorder %s87, %s90
    %p99 = scmp.eq.s32.totalorder %s14, 7
    %p100 = por %p98, %p99
    %p101 = scmp.ne.s32.totalorder %s90, %s91
    %p102 = scmp.eq.s32.totalorder %s14, 0
    %p103 = por %p101, %p102
    %p104 = scmp.ne.s32.totalorder %s90, %s91
    %p105 = scmp.eq.s32.totalorder %s15, 7
    %p106 = por %p104, %p105
    %p108 = scmp.ne.s32.totalorder %s91, %s107
    %p109 = scmp.eq.s32.totalorder %s15, 0
    %p110 = por %p108, %p109
    %p111 = scmp.le.s32.totalorder 1, %s9
    %p112 = scmp.lt.s32.totalorder %s9, 9
    %p113 = pnand %p111, %p112
    %p114 = pneg %p113
    // Predicated region
    $region9: #{encoder_cnn_forward.6} parent=5 // pred_check
      _
    $region10: #{encoder_cnn_forward.6} parent=5 // pred_check_branch
      %116 = sbr.rel (%p113) target = $region12
    $region11: #{encoder_cnn_forward.6} parent=5 // pred_region
      %s117 = ssub.s32 %s9, 1
      // Predicated region
      $region13: #{encoder_cnn_forward.6} parent=11 // pred_check
        %p118 = pneg %p56
      $region14: #{encoder_cnn_forward.6} parent=11 // pred_check_branch
        %120 = sbr.rel (%p118) target = $region16
      $region15: #{encoder_cnn_forward.6} parent=11 // pred_region
        _
      $region16: #{encoder_cnn_forward.6} parent=11 // pred_fallthru
        _
      // Predicated region
      $region17: #{encoder_cnn_forward.6} parent=11 // pred_check
        %p121 = pneg %p77
      $region18: #{encoder_cnn_forward.6} parent=11 // pred_check_branch
        %123 = sbr.rel (%p121) target = $region20
      $region19: #{encoder_cnn_forward.6} parent=11 // pred_region
        _
      $region20: #{encoder_cnn_forward.6} parent=11 // pred_fallthru
        _
    $region12: #{encoder_cnn_forward.6} parent=5 // pred_fallthru
      _
    %p124 = scmp.lt.s32.totalorder %s9, 8
    // Predicated region
    $region21: #{encoder_cnn_forward.6} parent=5 // pred_check
      %p125 = pneg %p124
    $region22: #{encoder_cnn_forward.6} parent=5 // pred_check_branch
      %127 = sbr.rel (%p125) target = $region24
    $region23: #{encoder_cnn_forward.6} parent=5 // pred_region
      // Predicated region
      $region25: #{encoder_cnn_forward.6} parent=23 // pred_check
        %p128 = pneg %p29
      $region26: #{encoder_cnn_forward.6} parent=23 // pred_check_branch
        %130 = sbr.rel (%p128) target = $region28
      $region27: #{encoder_cnn_forward.6} parent=23 // pred_region
        %s131 = smul.u32 64, %s9
        %p132 = scmp.lt.s32.totalorder %s131, 511
        %s133 = scalar_select %p132, %s131, 511
        %s134 = smul.addr %s133, 4
        %s135 = scalar_lea.vmem %s0, %s134
        %s136 = smul.u32 64, %s9
      $region28: #{encoder_cnn_forward.6} parent=23 // pred_fallthru
        _
    $region24: #{encoder_cnn_forward.6} parent=5 // pred_fallthru
      _
    %p137 = scmp.le.s32.totalorder 1, %s9
    %p138 = scmp.lt.s32.totalorder %s9, 9
    %p139 = pnand %p137, %p138
    %p140 = pneg %p139
    // Predicated region
    $region29: #{encoder_cnn_forward.6} parent=5 // pred_check
      _
    $region30: #{encoder_cnn_forward.6} parent=5 // pred_check_branch
      %142 = sbr.rel (%p139) target = $region32
    $region31: #{encoder_cnn_forward.6} parent=5 // pred_region
      %s143 = ssub.s32 %s9, 1
      %s144 = smul.u32 64, %s14
      %p145 = scmp.lt.s32.totalorder %s144, 511
      %s146 = scalar_select %p145, %s144, 511
      %s147 = smul.addr %s146, 4
      %s148 = scalar_lea.vmem %s0, %s147
      %p149 = pneg %p35
      %p150 = pneg %p32
      %p151 = pneg %p56
      %p152 = pneg %p53
      %p153 = pneg %p77
      %p154 = pneg %p74
      %p155 = pneg %p103
      %p156 = pneg %p100
      %s157 = smul.u32 64, %s14
      %p158 = scmp.lt.s32.totalorder %s157, 511
      %s159 = scalar_select %p158, %s157, 511
      %s160 = smul.addr %s159, 4
      %s161 = scalar_lea.vmem %s3, %s160
      %s162 = smul.u32 64, %s14
      %p163 = scmp.lt.s32.totalorder %s162, 511
      %s164 = scalar_select %p163, %s162, 511
      %s165 = smul.addr %s164, 4
      %s166 = scalar_lea.vmem %s0, %s165
      %s167 = smul.u32 64, %s14
      %s168 = smul.u32 64, %s14
      %p169 = scmp.lt.s32.totalorder %s168, 511
      %s170 = scalar_select %p169, %s168, 511
      %s171 = smul.addr %s170, 4
      %s172 = scalar_lea.vmem %s3, %s171
      %s173 = smul.u32 64, %s14
      %v174 = vld [vmem:[%s166] sm:$0xf]
      %v175 = vld [vmem:[%s166 + $0x4] sm:$0xf]
      %v176 = vld [vmem:[%s166 + $0x8] sm:$0xf]
      %v177 = vld [vmem:[%s166 + $0xc] sm:$0xf]
      %v178 = vld [vmem:[%s166 + $0x10] sm:$0xf]
      %v179 = vld [vmem:[%s166 + $0x14] sm:$0xf]
      %v180 = vld [vmem:[%s166 + $0x18] sm:$0xf]
      %v181 = vld [vmem:[%s166 + $0x1c] sm:$0xf]
      %v182 = vld [vmem:[%s166 + $0x20] sm:$0xf]
      %v183 = vld [vmem:[%s166 + $0x24] sm:$0xf]
      %v184 = vld [vmem:[%s166 + $0x28] sm:$0xf]
      %v185 = vld [vmem:[%s166 + $0x2c] sm:$0xf]
      %v186 = vld [vmem:[%s166 + $0x30] sm:$0xf]
      %v187 = vld [vmem:[%s166 + $0x34] sm:$0xf]
      %v188 = vld [vmem:[%s166 + $0x38] sm:$0xf]
      %v189 = vld [vmem:[%s166 + $0x3c] sm:$0xf]
      %v190 = vld [vmem:[%s166 + $0x40] sm:$0xf]
      %v191 = vld [vmem:[%s166 + $0x44] sm:$0xf]
      %v192 = vld [vmem:[%s166 + $0x48] sm:$0xf]
      %v193 = vld [vmem:[%s166 + $0x4c] sm:$0xf]
      %v194 = vld [vmem:[%s166 + $0x50] sm:$0xf]
      %v195 = vld [vmem:[%s166 + $0x54] sm:$0xf]
      %v196 = vld [vmem:[%s166 + $0x58] sm:$0xf]
      %v197 = vld [vmem:[%s166 + $0x5c] sm:$0xf]
      %v198 = vld [vmem:[%s166 + $0x60] sm:$0xf]
      %v199 = vld [vmem:[%s166 + $0x64] sm:$0xf]
      %v200 = vld [vmem:[%s166 + $0x68] sm:$0xf]
      %v201 = vld [vmem:[%s166 + $0x6c] sm:$0xf]
      %v202 = vld [vmem:[%s166 + $0x70] sm:$0xf]
      %v203 = vld [vmem:[%s166 + $0x74] sm:$0xf]
      %v204 = vld [vmem:[%s166 + $0x78] sm:$0xf]
      %v205 = vld [vmem:[%s166 + $0x7c] sm:$0xf]
      %v206 = vld [vmem:[%s166 + $0x80] sm:$0xf]
      %v207 = vld [vmem:[%s166 + $0x84] sm:$0xf]
      %v208 = vld [vmem:[%s166 + $0x88] sm:$0xf]
      %v209 = vld [vmem:[%s166 + $0x8c] sm:$0xf]
      %v210 = vld [vmem:[%s166 + $0x90] sm:$0xf]
      %v211 = vld [vmem:[%s166 + $0x94] sm:$0xf]
      %v212 = vld [vmem:[%s166 + $0x98] sm:$0xf]
      %v213 = vld [vmem:[%s166 + $0x9c] sm:$0xf]
      %v214 = vld [vmem:[%s166 + $0xa0] sm:$0xf]
      %v215 = vld [vmem:[%s166 + $0xa4] sm:$0xf]
      %v216 = vld [vmem:[%s166 + $0xa8] sm:$0xf]
      %v217 = vld [vmem:[%s166 + $0xac] sm:$0xf]
      %v218 = vld [vmem:[%s166 + $0xb0] sm:$0xf]
      %v219 = vld [vmem:[%s166 + $0xb4] sm:$0xf]
      %v220 = vld [vmem:[%s166 + $0xb8] sm:$0xf]
      %v221 = vld [vmem:[%s166 + $0xbc] sm:$0xf]
      %v222 = vld [vmem:[%s166 + $0xc0] sm:$0xf]
      %v223 = vld [vmem:[%s166 + $0xc4] sm:$0xf]
      %v224 = vld [vmem:[%s166 + $0xc8] sm:$0xf]
      %v225 = vld [vmem:[%s166 + $0xcc] sm:$0xf]
      %v226 = vld [vmem:[%s166 + $0xd0] sm:$0xf]
      %v227 = vld [vmem:[%s166 + $0xd4] sm:$0xf]
      %v228 = vld [vmem:[%s166 + $0xd8] sm:$0xf]
      %v229 = vld [vmem:[%s166 + $0xdc] sm:$0xf]
      %v230 = vld [vmem:[%s166 + $0xe0] sm:$0xf]
      %v231 = vld [vmem:[%s166 + $0xe4] sm:$0xf]
      %v232 = vld [vmem:[%s166 + $0xe8] sm:$0xf]
      %v233 = vld [vmem:[%s166 + $0xec] sm:$0xf]
      %v234 = vld [vmem:[%s166 + $0xf0] sm:$0xf]
      %v235 = vld [vmem:[%s166 + $0xf4] sm:$0xf]
      %v236 = vld [vmem:[%s166 + $0xf8] sm:$0xf]
      %v237 = vld [vmem:[%s166 + $0xfc] sm:$0xf]
      %v238 = vld [vmem:[%s1] sm:$0xf]
      %v239 = vld [vmem:[%s1 + $0x4] sm:$0xf]
      %v240 = vld [vmem:[%s1 + $0x8] sm:$0xf]
      %v241 = vld [vmem:[%s1 + $0xc] sm:$0xf]
      %v242 = vld [vmem:[%s1 + $0x10] sm:$0xf]
      %v243 = vld [vmem:[%s1 + $0x14] sm:$0xf]
      %v244 = vld [vmem:[%s1 + $0x18] sm:$0xf]
      %v245 = vld [vmem:[%s1 + $0x1c] sm:$0xf]
      %v246 = vld [vmem:[%s1 + $0x20] sm:$0xf]
      %v247 = vld [vmem:[%s1 + $0x24] sm:$0xf]
      %v248 = vld [vmem:[%s1 + $0x28] sm:$0xf]
      %v249 = vld [vmem:[%s1 + $0x2c] sm:$0xf]
      %v250 = vld [vmem:[%s1 + $0x30] sm:$0xf]
      %v251 = vld [vmem:[%s1 + $0x34] sm:$0xf]
      %v252 = vld [vmem:[%s1 + $0x38] sm:$0xf]
      %v253 = vld [vmem:[%s1 + $0x3c] sm:$0xf]
      %v254 = vld [vmem:[%s2] sm:$0x1]
      %v256 = vperm.slane %v254, 0
      %v322 = vunpack.c.l.b16 %v174
      %v323 = vunpack.c.l.b16 %v175
      %v324 = vunpack.c.l.b16 %v176
      %v325 = vunpack.c.l.b16 %v177
      %v326 = vunpack.c.l.b16 %v178
      %v327 = vunpack.c.l.b16 %v179
      %v328 = vunpack.c.l.b16 %v180
      %v329 = vunpack.c.l.b16 %v181
      %v330 = vunpack.c.l.b16 %v182
      %v331 = vunpack.c.l.b16 %v183
      %v332 = vunpack.c.l.b16 %v184
      %v333 = vunpack.c.l.b16 %v185
      %v334 = vunpack.c.l.b16 %v186
      %v335 = vunpack.c.l.b16 %v187
      %v336 = vunpack.c.l.b16 %v188
      %v337 = vunpack.c.l.b16 %v189
      %v338 = vunpack.c.l.b16 %v190
      %v339 = vunpack.c.l.b16 %v191
      %v340 = vunpack.c.l.b16 %v192
      %v341 = vunpack.c.l.b16 %v193
      %v342 = vunpack.c.l.b16 %v194
      %v343 = vunpack.c.l.b16 %v195
      %v344 = vunpack.c.l.b16 %v196
      %v345 = vunpack.c.l.b16 %v197
      %v346 = vunpack.c.l.b16 %v198
      %v347 = vunpack.c.l.b16 %v199
      %v348 = vunpack.c.l.b16 %v200
      %v349 = vunpack.c.l.b16 %v201
      %v350 = vunpack.c.l.b16 %v202
      %v351 = vunpack.c.l.b16 %v203
      %v352 = vunpack.c.l.b16 %v204
      %v353 = vunpack.c.l.b16 %v205
      %v354 = vunpack.c.l.b16 %v206
      %v355 = vunpack.c.l.b16 %v207
      %v356 = vunpack.c.l.b16 %v208
      %v357 = vunpack.c.l.b16 %v209
      %v358 = vunpack.c.l.b16 %v210
      %v359 = vunpack.c.l.b16 %v211
      %v360 = vunpack.c.l.b16 %v212
      %v361 = vunpack.c.l.b16 %v213
      %v362 = vunpack.c.l.b16 %v214
      %v363 = vunpack.c.l.b16 %v215
      %v364 = vunpack.c.l.b16 %v216
      %v365 = vunpack.c.l.b16 %v217
      %v366 = vunpack.c.l.b16 %v218
      %v367 = vunpack.c.l.b16 %v219
      %v368 = vunpack.c.l.b16 %v220
      %v369 = vunpack.c.l.b16 %v221
      %v370 = vunpack.c.l.b16 %v222
      %v371 = vunpack.c.l.b16 %v223
      %v372 = vunpack.c.l.b16 %v224
      %v373 = vunpack.c.l.b16 %v225
      %v374 = vunpack.c.l.b16 %v226
      %v375 = vunpack.c.l.b16 %v227
      %v376 = vunpack.c.l.b16 %v228
      %v377 = vunpack.c.l.b16 %v229
      %v378 = vunpack.c.l.b16 %v230
      %v379 = vunpack.c.l.b16 %v231
      %v380 = vunpack.c.l.b16 %v232
      %v381 = vunpack.c.l.b16 %v233
      %v382 = vunpack.c.l.b16 %v234
      %v383 = vunpack.c.l.b16 %v235
      %v384 = vunpack.c.l.b16 %v236
      %v385 = vunpack.c.l.b16 %v237
      %v386 = vpack.c.b16 %v323, %v322
      %v387 = vpack.c.b16 %v325, %v324
      %v388 = vpack.c.b16 %v327, %v326
      %v389 = vpack.c.b16 %v329, %v328
      %v390 = vpack.c.b16 %v331, %v330
      %v391 = vpack.c.b16 %v333, %v332
      %v392 = vpack.c.b16 %v335, %v334
      %v393 = vpack.c.b16 %v337, %v336
      %v394 = vpack.c.b16 %v339, %v338
      %v395 = vpack.c.b16 %v341, %v340
      %v396 = vpack.c.b16 %v343, %v342
      %v397 = vpack.c.b16 %v345, %v344
      %v398 = vpack.c.b16 %v347, %v346
      %v399 = vpack.c.b16 %v349, %v348
      %v400 = vpack.c.b16 %v351, %v350
      %v401 = vpack.c.b16 %v353, %v352
      %v402 = vpack.c.b16 %v355, %v354
      %v403 = vpack.c.b16 %v357, %v356
      %v404 = vpack.c.b16 %v359, %v358
      %v405 = vpack.c.b16 %v361, %v360
      %v406 = vpack.c.b16 %v363, %v362
      %v407 = vpack.c.b16 %v365, %v364
      %v408 = vpack.c.b16 %v367, %v366
      %v409 = vpack.c.b16 %v369, %v368
      %v410 = vpack.c.b16 %v371, %v370
      %v411 = vpack.c.b16 %v373, %v372
      %v412 = vpack.c.b16 %v375, %v374
      %v413 = vpack.c.b16 %v377, %v376
      %v414 = vpack.c.b16 %v379, %v378
      %v415 = vpack.c.b16 %v381, %v380
      %v416 = vpack.c.b16 %v383, %v382
      %v417 = vpack.c.b16 %v385, %v384
      %v466 = vunpack.c.l.b16 %v238
      %v467 = vunpack.c.l.b16 %v239
      %v468 = vunpack.c.l.b16 %v240
      %v469 = vunpack.c.l.b16 %v241
      %v470 = vunpack.c.l.b16 %v242
      %v471 = vunpack.c.l.b16 %v243
      %v472 = vunpack.c.l.b16 %v244
      %v473 = vunpack.c.l.b16 %v245
      %v474 = vunpack.c.l.b16 %v246
      %v475 = vunpack.c.l.b16 %v247
      %v476 = vunpack.c.l.b16 %v248
      %v477 = vunpack.c.l.b16 %v249
      %v478 = vunpack.c.l.b16 %v250
      %v479 = vunpack.c.l.b16 %v251
      %v480 = vunpack.c.l.b16 %v252
      %v481 = vunpack.c.l.b16 %v253
      %v482 = vpack.c.b16 %v467, %v466
      %v483 = vpack.c.b16 %v469, %v468
      %v484 = vpack.c.b16 %v471, %v470
      %v485 = vpack.c.b16 %v473, %v472
      %v486 = vpack.c.b16 %v475, %v474
      %v487 = vpack.c.b16 %v477, %v476
      %v488 = vpack.c.b16 %v479, %v478
      %v489 = vpack.c.b16 %v481, %v480
      %498 = vmatpush.bf16.msra.mxu0 %v489
      %499 = vmatpush.bf16.msra.mxu0 %v488
      %500 = vmatpush.bf16.msra.mxu0 %v487
      %501 = vmatpush.bf16.msra.mxu0 %v486
      %502 = vmatpush.bf16.msra.mxu0 %v485
      %503 = vmatpush.bf16.msra.mxu0 %v484
      %504 = vmatpush.bf16.msra.mxu0 %v483
      %505 = vmatpush.bf16.msra.mxu0 %v482
      %506 = vmatmul.bf16.gmra.mxu0 %v386
      %v507 = vpop.f32.mrf.mxu0
      %v508 = vadd.f32 %v256, %v507
      %v509 = vpop.f32.mrf.mxu0
      %v510 = vadd.f32 %v256, %v509
      %511 = vmatmul.bf16.gmra.mxu0 %v387
      %v512 = vpop.f32.mrf.mxu0
      %v513 = vadd.f32 %v256, %v512
      %v514 = vpop.f32.mrf.mxu0
      %v515 = vadd.f32 %v256, %v514
      %516 = vmatmul.bf16.gmra.mxu0 %v388
      %v517 = vpop.f32.mrf.mxu0
      %v518 = vadd.f32 %v256, %v517
      %v519 = vpop.f32.mrf.mxu0
      %v520 = vadd.f32 %v256, %v519
      %521 = vmatmul.bf16.gmra.mxu0 %v389
      %v522 = vpop.f32.mrf.mxu0
      %v523 = vadd.f32 %v256, %v522
      %v524 = vpop.f32.mrf.mxu0
      %v525 = vadd.f32 %v256, %v524
      %526 = vmatmul.bf16.gmra.mxu0 %v390
      %v527 = vpop.f32.mrf.mxu0
      %v528 = vadd.f32 %v256, %v527
      %v529 = vpop.f32.mrf.mxu0
      %v530 = vadd.f32 %v256, %v529
      %531 = vmatmul.bf16.gmra.mxu0 %v391
      %v532 = vpop.f32.mrf.mxu0
      %v533 = vadd.f32 %v256, %v532
      %v534 = vpop.f32.mrf.mxu0
      %v535 = vadd.f32 %v256, %v534
      %536 = vmatmul.bf16.gmra.mxu0 %v392
      %v537 = vpop.f32.mrf.mxu0
      %v538 = vadd.f32 %v256, %v537
      %v539 = vpop.f32.mrf.mxu0
      %v540 = vadd.f32 %v256, %v539
      %541 = vmatmul.bf16.gmra.mxu0 %v393
      %v542 = vpop.f32.mrf.mxu0
      %v543 = vadd.f32 %v256, %v542
      %v544 = vpop.f32.mrf.mxu0
      %v545 = vadd.f32 %v256, %v544
      %546 = vmatmul.bf16.gmra.mxu0 %v394
      %v547 = vpop.f32.mrf.mxu0
      %v548 = vadd.f32 %v256, %v547
      %v549 = vpop.f32.mrf.mxu0
      %v550 = vadd.f32 %v256, %v549
      %551 = vmatmul.bf16.gmra.mxu0 %v395
      %v552 = vpop.f32.mrf.mxu0
      %v553 = vadd.f32 %v256, %v552
      %v554 = vpop.f32.mrf.mxu0
      %v555 = vadd.f32 %v256, %v554
      %556 = vmatmul.bf16.gmra.mxu0 %v396
      %v557 = vpop.f32.mrf.mxu0
      %v558 = vadd.f32 %v256, %v557
      %v559 = vpop.f32.mrf.mxu0
      %v560 = vadd.f32 %v256, %v559
      %561 = vmatmul.bf16.gmra.mxu0 %v397
      %v562 = vpop.f32.mrf.mxu0
      %v563 = vadd.f32 %v256, %v562
      %v564 = vpop.f32.mrf.mxu0
      %v565 = vadd.f32 %v256, %v564
      %566 = vmatmul.bf16.gmra.mxu0 %v398
      %v567 = vpop.f32.mrf.mxu0
      %v568 = vadd.f32 %v256, %v567
      %v569 = vpop.f32.mrf.mxu0
      %v570 = vadd.f32 %v256, %v569
      %571 = vmatmul.bf16.gmra.mxu0 %v399
      %v572 = vpop.f32.mrf.mxu0
      %v573 = vadd.f32 %v256, %v572
      %v574 = vpop.f32.mrf.mxu0
      %v575 = vadd.f32 %v256, %v574
      %576 = vmatmul.bf16.gmra.mxu0 %v400
      %v577 = vpop.f32.mrf.mxu0
      %v578 = vadd.f32 %v256, %v577
      %v579 = vpop.f32.mrf.mxu0
      %v580 = vadd.f32 %v256, %v579
      %581 = vmatmul.bf16.gmra.mxu0 %v401
      %v582 = vpop.f32.mrf.mxu0
      %v583 = vadd.f32 %v256, %v582
      %v584 = vpop.f32.mrf.mxu0
      %v585 = vadd.f32 %v256, %v584
      %586 = vmatmul.bf16.gmra.mxu0 %v402
      %v587 = vpop.f32.mrf.mxu0
      %v588 = vadd.f32 %v256, %v587
      %v589 = vpop.f32.mrf.mxu0
      %v590 = vadd.f32 %v256, %v589
      %591 = vmatmul.bf16.gmra.mxu0 %v403
      %v592 = vpop.f32.mrf.mxu0
      %v593 = vadd.f32 %v256, %v592
      %v594 = vpop.f32.mrf.mxu0
      %v595 = vadd.f32 %v256, %v594
      %596 = vmatmul.bf16.gmra.mxu0 %v404
      %v597 = vpop.f32.mrf.mxu0
      %v598 = vadd.f32 %v256, %v597
      %v599 = vpop.f32.mrf.mxu0
      %v600 = vadd.f32 %v256, %v599
      %601 = vmatmul.bf16.gmra.mxu0 %v405
      %v602 = vpop.f32.mrf.mxu0
      %v603 = vadd.f32 %v256, %v602
      %v604 = vpop.f32.mrf.mxu0
      %v605 = vadd.f32 %v256, %v604
      %606 = vmatmul.bf16.gmra.mxu0 %v406
      %v607 = vpop.f32.mrf.mxu0
      %v608 = vadd.f32 %v256, %v607
      %v609 = vpop.f32.mrf.mxu0
      %v610 = vadd.f32 %v256, %v609
      %611 = vmatmul.bf16.gmra.mxu0 %v407
      %v612 = vpop.f32.mrf.mxu0
      %v613 = vadd.f32 %v256, %v612
      %v614 = vpop.f32.mrf.mxu0
      %v615 = vadd.f32 %v256, %v614
      %616 = vmatmul.bf16.gmra.mxu0 %v408
      %v617 = vpop.f32.mrf.mxu0
      %v618 = vadd.f32 %v256, %v617
      %v619 = vpop.f32.mrf.mxu0
      %v620 = vadd.f32 %v256, %v619
      %621 = vmatmul.bf16.gmra.mxu0 %v409
      %v622 = vpop.f32.mrf.mxu0
      %v623 = vadd.f32 %v256, %v622
      %v624 = vpop.f32.mrf.mxu0
      %v625 = vadd.f32 %v256, %v624
      %626 = vmatmul.bf16.gmra.mxu0 %v410
      %v627 = vpop.f32.mrf.mxu0
      %v628 = vadd.f32 %v256, %v627
      %v629 = vpop.f32.mrf.mxu0
      %v630 = vadd.f32 %v256, %v629
      %631 = vmatmul.bf16.gmra.mxu0 %v411
      %v632 = vpop.f32.mrf.mxu0
      %v633 = vadd.f32 %v256, %v632
      %v634 = vpop.f32.mrf.mxu0
      %v635 = vadd.f32 %v256, %v634
      %636 = vmatmul.bf16.gmra.mxu0 %v412
      %v637 = vpop.f32.mrf.mxu0
      %v638 = vadd.f32 %v256, %v637
      %v639 = vpop.f32.mrf.mxu0
      %v640 = vadd.f32 %v256, %v639
      %641 = vmatmul.bf16.gmra.mxu0 %v413
      %v642 = vpop.f32.mrf.mxu0
      %v643 = vadd.f32 %v256, %v642
      %v644 = vpop.f32.mrf.mxu0
      %v645 = vadd.f32 %v256, %v644
      %646 = vmatmul.bf16.gmra.mxu0 %v414
      %v647 = vpop.f32.mrf.mxu0
      %v648 = vadd.f32 %v256, %v647
      %v649 = vpop.f32.mrf.mxu0
      %v650 = vadd.f32 %v256, %v649
      %651 = vmatmul.bf16.gmra.mxu0 %v415
      %v652 = vpop.f32.mrf.mxu0
      %v653 = vadd.f32 %v256, %v652
      %v654 = vpop.f32.mrf.mxu0
      %v655 = vadd.f32 %v256, %v654
      %656 = vmatmul.bf16.gmra.mxu0 %v416
      %v657 = vpop.f32.mrf.mxu0
      %v658 = vadd.f32 %v256, %v657
      %v659 = vpop.f32.mrf.mxu0
      %v660 = vadd.f32 %v256, %v659
      %661 = vmatmul.bf16.gmra.mxu0 %v417
      %v662 = vpop.f32.mrf.mxu0
      %v663 = vadd.f32 %v256, %v662
      %v664 = vpop.f32.mrf.mxu0
      %v665 = vadd.f32 %v256, %v664
      %666 = vdwg.mxu0
      %v667 = vmax.f32 %v508, 0.0
      %v668 = vmax.f32 %v510, 0.0
      %v669 = vmax.f32 %v513, 0.0
      %v670 = vmax.f32 %v515, 0.0
      %v671 = vmax.f32 %v518, 0.0
      %v672 = vmax.f32 %v520, 0.0
      %v673 = vmax.f32 %v523, 0.0
      %v674 = vmax.f32 %v525, 0.0
      %v675 = vmax.f32 %v528, 0.0
      %v676 = vmax.f32 %v530, 0.0
      %v677 = vmax.f32 %v533, 0.0
      %v678 = vmax.f32 %v535, 0.0
      %v679 = vmax.f32 %v538, 0.0
      %v680 = vmax.f32 %v540, 0.0
      %v681 = vmax.f32 %v543, 0.0
      %v682 = vmax.f32 %v545, 0.0
      %v683 = vmax.f32 %v548, 0.0
      %v684 = vmax.f32 %v550, 0.0
      %v685 = vmax.f32 %v553, 0.0
      %v686 = vmax.f32 %v555, 0.0
      %v687 = vmax.f32 %v558, 0.0
      %v688 = vmax.f32 %v560, 0.0
      %v689 = vmax.f32 %v563, 0.0
      %v690 = vmax.f32 %v565, 0.0
      %v691 = vmax.f32 %v568, 0.0
      %v692 = vmax.f32 %v570, 0.0
      %v693 = vmax.f32 %v573, 0.0
      %v694 = vmax.f32 %v575, 0.0
      %v695 = vmax.f32 %v578, 0.0
      %v696 = vmax.f32 %v580, 0.0
      %v697 = vmax.f32 %v583, 0.0
      %v698 = vmax.f32 %v585, 0.0
      %v699 = vmax.f32 %v588, 0.0
      %v700 = vmax.f32 %v590, 0.0
      %v701 = vmax.f32 %v593, 0.0
      %v702 = vmax.f32 %v595, 0.0
      %v703 = vmax.f32 %v598, 0.0
      %v704 = vmax.f32 %v600, 0.0
      %v705 = vmax.f32 %v603, 0.0
      %v706 = vmax.f32 %v605, 0.0
      %v707 = vmax.f32 %v608, 0.0
      %v708 = vmax.f32 %v610, 0.0
      %v709 = vmax.f32 %v613, 0.0
      %v710 = vmax.f32 %v615, 0.0
      %v711 = vmax.f32 %v618, 0.0
      %v712 = vmax.f32 %v620, 0.0
      %v713 = vmax.f32 %v623, 0.0
      %v714 = vmax.f32 %v625, 0.0
      %v715 = vmax.f32 %v628, 0.0
      %v716 = vmax.f32 %v630, 0.0
      %v717 = vmax.f32 %v633, 0.0
      %v718 = vmax.f32 %v635, 0.0
      %v719 = vmax.f32 %v638, 0.0
      %v720 = vmax.f32 %v640, 0.0
      %v721 = vmax.f32 %v643, 0.0
      %v722 = vmax.f32 %v645, 0.0
      %v723 = vmax.f32 %v648, 0.0
      %v724 = vmax.f32 %v650, 0.0
      %v725 = vmax.f32 %v653, 0.0
      %v726 = vmax.f32 %v655, 0.0
      %v727 = vmax.f32 %v658, 0.0
      %v728 = vmax.f32 %v660, 0.0
      %v729 = vmax.f32 %v663, 0.0
      %v730 = vmax.f32 %v665, 0.0
      %v731 = vpack.c.bf16 %v667, %v667
      %v732 = vpack.c.bf16 %v668, %v668
      %v733 = vpack.c.bf16 %v669, %v669
      %v734 = vpack.c.bf16 %v670, %v670
      %v735 = vpack.c.bf16 %v671, %v671
      %v736 = vpack.c.bf16 %v672, %v672
      %v737 = vpack.c.bf16 %v673, %v673
      %v738 = vpack.c.bf16 %v674, %v674
      %v739 = vpack.c.bf16 %v675, %v675
      %v740 = vpack.c.bf16 %v676, %v676
      %v741 = vpack.c.bf16 %v677, %v677
      %v742 = vpack.c.bf16 %v678, %v678
      %v743 = vpack.c.bf16 %v679, %v679
      %v744 = vpack.c.bf16 %v680, %v680
      %v745 = vpack.c.bf16 %v681, %v681
      %v746 = vpack.c.bf16 %v682, %v682
      %v747 = vpack.c.bf16 %v683, %v683
      %v748 = vpack.c.bf16 %v684, %v684
      %v749 = vpack.c.bf16 %v685, %v685
      %v750 = vpack.c.bf16 %v686, %v686
      %v751 = vpack.c.bf16 %v687, %v687
      %v752 = vpack.c.bf16 %v688, %v688
      %v753 = vpack.c.bf16 %v689, %v689
      %v754 = vpack.c.bf16 %v690, %v690
      %v755 = vpack.c.bf16 %v691, %v691
      %v756 = vpack.c.bf16 %v692, %v692
      %v757 = vpack.c.bf16 %v693, %v693
      %v758 = vpack.c.bf16 %v694, %v694
      %v759 = vpack.c.bf16 %v695, %v695
      %v760 = vpack.c.bf16 %v696, %v696
      %v761 = vpack.c.bf16 %v697, %v697
      %v762 = vpack.c.bf16 %v698, %v698
      %v763 = vpack.c.bf16 %v699, %v699
      %v764 = vpack.c.bf16 %v700, %v700
      %v765 = vpack.c.bf16 %v701, %v701
      %v766 = vpack.c.bf16 %v702, %v702
      %v767 = vpack.c.bf16 %v703, %v703
      %v768 = vpack.c.bf16 %v704, %v704
      %v769 = vpack.c.bf16 %v705, %v705
      %v770 = vpack.c.bf16 %v706, %v706
      %v771 = vpack.c.bf16 %v707, %v707
      %v772 = vpack.c.bf16 %v708, %v708
      %v773 = vpack.c.bf16 %v709, %v709
      %v774 = vpack.c.bf16 %v710, %v710
      %v775 = vpack.c.bf16 %v711, %v711
      %v776 = vpack.c.bf16 %v712, %v712
      %v777 = vpack.c.bf16 %v713, %v713
      %v778 = vpack.c.bf16 %v714, %v714
      %v779 = vpack.c.bf16 %v715, %v715
      %v780 = vpack.c.bf16 %v716, %v716
      %v781 = vpack.c.bf16 %v717, %v717
      %v782 = vpack.c.bf16 %v718, %v718
      %v783 = vpack.c.bf16 %v719, %v719
      %v784 = vpack.c.bf16 %v720, %v720
      %v785 = vpack.c.bf16 %v721, %v721
      %v786 = vpack.c.bf16 %v722, %v722
      %v787 = vpack.c.bf16 %v723, %v723
      %v788 = vpack.c.bf16 %v724, %v724
      %v789 = vpack.c.bf16 %v725, %v725
      %v790 = vpack.c.bf16 %v726, %v726
      %v791 = vpack.c.bf16 %v727, %v727
      %v792 = vpack.c.bf16 %v728, %v728
      %v793 = vpack.c.bf16 %v729, %v729
      %v794 = vpack.c.bf16 %v730, %v730
      %795 = vst [vmem:[%s172] sm:$0xf] %v731
      %796 = vst [vmem:[%s172 + $0x4] sm:$0xf] %v732
      %797 = vst [vmem:[%s172 + $0x8] sm:$0xf] %v733
      %798 = vst [vmem:[%s172 + $0xc] sm:$0xf] %v734
      %799 = vst [vmem:[%s172 + $0x10] sm:$0xf] %v735
      %800 = vst [vmem:[%s172 + $0x14] sm:$0xf] %v736
      %801 = vst [vmem:[%s172 + $0x18] sm:$0xf] %v737
      %802 = vst [vmem:[%s172 + $0x1c] sm:$0xf] %v738
      %803 = vst [vmem:[%s172 + $0x20] sm:$0xf] %v739
      %804 = vst [vmem:[%s172 + $0x24] sm:$0xf] %v740
      %805 = vst [vmem:[%s172 + $0x28] sm:$0xf] %v741
      %806 = vst [vmem:[%s172 + $0x2c] sm:$0xf] %v742
      %807 = vst [vmem:[%s172 + $0x30] sm:$0xf] %v743
      %808 = vst [vmem:[%s172 + $0x34] sm:$0xf] %v744
      %809 = vst [vmem:[%s172 + $0x38] sm:$0xf] %v745
      %810 = vst [vmem:[%s172 + $0x3c] sm:$0xf] %v746
      %811 = vst [vmem:[%s172 + $0x40] sm:$0xf] %v747
      %812 = vst [vmem:[%s172 + $0x44] sm:$0xf] %v748
      %813 = vst [vmem:[%s172 + $0x48] sm:$0xf] %v749
      %814 = vst [vmem:[%s172 + $0x4c] sm:$0xf] %v750
      %815 = vst [vmem:[%s172 + $0x50] sm:$0xf] %v751
      %816 = vst [vmem:[%s172 + $0x54] sm:$0xf] %v752
      %817 = vst [vmem:[%s172 + $0x58] sm:$0xf] %v753
      %818 = vst [vmem:[%s172 + $0x5c] sm:$0xf] %v754
      %819 = vst [vmem:[%s172 + $0x60] sm:$0xf] %v755
      %820 = vst [vmem:[%s172 + $0x64] sm:$0xf] %v756
      %821 = vst [vmem:[%s172 + $0x68] sm:$0xf] %v757
      %822 = vst [vmem:[%s172 + $0x6c] sm:$0xf] %v758
      %823 = vst [vmem:[%s172 + $0x70] sm:$0xf] %v759
      %824 = vst [vmem:[%s172 + $0x74] sm:$0xf] %v760
      %825 = vst [vmem:[%s172 + $0x78] sm:$0xf] %v761
      %826 = vst [vmem:[%s172 + $0x7c] sm:$0xf] %v762
      %827 = vst [vmem:[%s172 + $0x80] sm:$0xf] %v763
      %828 = vst [vmem:[%s172 + $0x84] sm:$0xf] %v764
      %829 = vst [vmem:[%s172 + $0x88] sm:$0xf] %v765
      %830 = vst [vmem:[%s172 + $0x8c] sm:$0xf] %v766
      %831 = vst [vmem:[%s172 + $0x90] sm:$0xf] %v767
      %832 = vst [vmem:[%s172 + $0x94] sm:$0xf] %v768
      %833 = vst [vmem:[%s172 + $0x98] sm:$0xf] %v769
      %834 = vst [vmem:[%s172 + $0x9c] sm:$0xf] %v770
      %835 = vst [vmem:[%s172 + $0xa0] sm:$0xf] %v771
      %836 = vst [vmem:[%s172 + $0xa4] sm:$0xf] %v772
      %837 = vst [vmem:[%s172 + $0xa8] sm:$0xf] %v773
      %838 = vst [vmem:[%s172 + $0xac] sm:$0xf] %v774
      %839 = vst [vmem:[%s172 + $0xb0] sm:$0xf] %v775
      %840 = vst [vmem:[%s172 + $0xb4] sm:$0xf] %v776
      %841 = vst [vmem:[%s172 + $0xb8] sm:$0xf] %v777
      %842 = vst [vmem:[%s172 + $0xbc] sm:$0xf] %v778
      %843 = vst [vmem:[%s172 + $0xc0] sm:$0xf] %v779
      %844 = vst [vmem:[%s172 + $0xc4] sm:$0xf] %v780
      %845 = vst [vmem:[%s172 + $0xc8] sm:$0xf] %v781
      %846 = vst [vmem:[%s172 + $0xcc] sm:$0xf] %v782
      %847 = vst [vmem:[%s172 + $0xd0] sm:$0xf] %v783
      %848 = vst [vmem:[%s172 + $0xd4] sm:$0xf] %v784
      %849 = vst [vmem:[%s172 + $0xd8] sm:$0xf] %v785
      %850 = vst [vmem:[%s172 + $0xdc] sm:$0xf] %v786
      %851 = vst [vmem:[%s172 + $0xe0] sm:$0xf] %v787
      %852 = vst [vmem:[%s172 + $0xe4] sm:$0xf] %v788
      %853 = vst [vmem:[%s172 + $0xe8] sm:$0xf] %v789
      %854 = vst [vmem:[%s172 + $0xec] sm:$0xf] %v790
      %855 = vst [vmem:[%s172 + $0xf0] sm:$0xf] %v791
      %856 = vst [vmem:[%s172 + $0xf4] sm:$0xf] %v792
      %857 = vst [vmem:[%s172 + $0xf8] sm:$0xf] %v793
      %858 = vst [vmem:[%s172 + $0xfc] sm:$0xf] %v794
      %s859 = smul.u32 64, %s14
      %p860 = scmp.lt.s32.totalorder %s859, 511
      %s861 = scalar_select %p860, %s859, 511
      %s862 = smul.addr %s861, 4
      %s863 = scalar_lea.vmem %s3, %s862
      // Predicated region
      $region33: #{encoder_cnn_forward.6} parent=31 // pred_check
        %p864 = pneg %p100
      $region34: #{encoder_cnn_forward.6} parent=31 // pred_check_branch
        %866 = sbr.rel (%p864) target = $region36
      $region35: #{encoder_cnn_forward.6} parent=31 // pred_region
        %s867 = smul.u32 64, %s14
      $region36: #{encoder_cnn_forward.6} parent=31 // pred_fallthru
        _
    $region32: #{encoder_cnn_forward.6} parent=5 // pred_fallthru
      _
    %p868 = scmp.le.s32.totalorder 2, %s9
    // Predicated region
    $region37: #{encoder_cnn_forward.6} parent=5 // pred_check
      %p869 = pneg %p868
    $region38: #{encoder_cnn_forward.6} parent=5 // pred_check_branch
      %871 = sbr.rel (%p869) target = $region40
    $region39: #{encoder_cnn_forward.6} parent=5 // pred_region
      %s872 = ssub.s32 %s9, 2
      // Predicated region
      $region41: #{encoder_cnn_forward.6} parent=39 // pred_check
        %p873 = pneg %p106
      $region42: #{encoder_cnn_forward.6} parent=39 // pred_check_branch
        %875 = sbr.rel (%p873) target = $region44
      $region43: #{encoder_cnn_forward.6} parent=39 // pred_region
        %s876 = smul.u32 64, %s15
        %p877 = scmp.lt.s32.totalorder %s876, 511
        %s878 = scalar_select %p877, %s876, 511
        %s879 = smul.addr %s878, 4
        %s880 = scalar_lea.vmem %s3, %s879
      $region44: #{encoder_cnn_forward.6} parent=39 // pred_fallthru
        _
    $region40: #{encoder_cnn_forward.6} parent=5 // pred_fallthru
      _
  $region6: #{encoder_cnn_forward.6} parent=0 // loop_footer
    %s13 = sadd.s32 1, %s9
  $region7: #{encoder_cnn_forward.6} parent=0 // loop_footer_branch
    %8 = sbr.rel target = $region3
  $region8: #{encoder_cnn_forward.6} parent=0 // loop_exit
    _

// kernel: encoder_cnn_forward.7
$region0: #{encoder_cnn_forward.7}
  #allocation0 [shape = 'u32[]', space=smem, size = 0x4, offset = 0x4, fixed_abs, tag = 'smem constant byte address 0x4 - core index']
  #allocation1 [shape = 'u32[72,128]{1,0:T(1,128)}', space=vmem, size = 0x9000, scoped, tag = 'internal scratch']
  %s0 = inlined_call_operand.vmem [shape: bf16[1024,384], index: 0, kind: input, shape index: {}]
  %s1 = inlined_call_operand.vmem [shape: bf16[384,128], index: 1, kind: input, shape index: {}]
  %s2 = inlined_call_operand.vmem [shape: f32[1,128], index: 2, kind: input, shape index: {}]
  %s3 = inlined_call_operand.vmem [shape: bf16[1024,128], index: 3, kind: output, shape index: {}]
  %s4 = sld [smem:[#allocation0]]
  $region45: #{encoder_cnn_forward.7} parent=0
    _
  %s6 = ssub.s32 1, %s4
  %s7 = scalar_select 0, %s6, %s4
  loop: start=0, step=1, limit=4
  $region2: #{encoder_cnn_forward.7} parent=0 // loop_pre_header
    _
  $region3: #{encoder_cnn_forward.7} parent=0 // loop_header
    %s9 = sphi 0, %s13
    %p10 = scmp.ge.s32.totalorder %s9, 4
    %s19 = sphi 0, %s21
    %s22 = sphi 0, %s19
    %s23 = sphi 0, %s22
    %s39 = sphi 0, %s23
    %s43 = sphi 0, %s43
    %s45 = sphi 0, %s43
    %s46 = sphi 0, %s45
    %s60 = sphi 0, %s46
    %s64 = sphi 0, %s64
    %s66 = sphi 0, %s64
    %s67 = sphi 0, %s66
    %s81 = sphi 0, %s67
    %s87 = sphi 0, %s89
    %s90 = sphi 0, %s87
    %s91 = sphi 0, %s90
    %s107 = sphi 0, %s91
  $region4: #{encoder_cnn_forward.7} parent=0 // loop_header_branch
    %12 = sbr.rel (%p10) target = $region8
  $region5: #{encoder_cnn_forward.7} parent=0 // loop_body
    %s14 = ssub.s32 %s9, 1
    %s15 = ssub.s32 %s9, 2
    %s16 = sadd.s32 %s9, 1
    %s17 = ssub.s32 %s9, %s16
    %p18 = scmp.eq.s32.totalorder %s17, 0
    %s20 = sadd.s32 %s19, 1
    %s21 = scalar_select %p18, %s19, %s20
    %p24 = pneg %p18
    %p25 = scmp.eq.s32.totalorder %s9, 1
    %p26 = por %p24, %p25
    %p27 = scmp.ne.s32.totalorder %s19, %s22
    %p28 = scmp.eq.s32.totalorder %s9, 0
    %p29 = por %p27, %p28
    %p30 = scmp.ne.s32.totalorder %s19, %s22
    %p31 = scmp.eq.s32.totalorder %s14, 1
    %p32 = por %p30, %p31
    %p33 = scmp.ne.s32.totalorder %s22, %s23
    %p34 = scmp.eq.s32.totalorder %s14, 0
    %p35 = por %p33, %p34
    %p36 = scmp.ne.s32.totalorder %s22, %s23
    %p37 = scmp.eq.s32.totalorder %s15, 1
    %p38 = por %p36, %p37
    %p40 = scmp.ne.s32.totalorder %s23, %s39
    %p41 = scmp.eq.s32.totalorder %s15, 0
    %p42 = por %p40, %p41
    %s44 = sadd.s32 %s43, 1
    %p47 = scmp.eq.s32.totalorder %s9, 1
    %p48 = scmp.ne.s32.totalorder %s43, %s45
    %p49 = scmp.eq.s32.totalorder %s9, 0
    %p50 = por %p48, %p49
    %p51 = scmp.ne.s32.totalorder %s43, %s45
    %p52 = scmp.eq.s32.totalorder %s14, 1
    %p53 = por %p51, %p52
    %p54 = scmp.ne.s32.totalorder %s45, %s46
    %p55 = scmp.eq.s32.totalorder %s14, 0
    %p56 = por %p54, %p55
    %p57 = scmp.ne.s32.totalorder %s45, %s46
    %p58 = scmp.eq.s32.totalorder %s15, 1
    %p59 = por %p57, %p58
    %p61 = scmp.ne.s32.totalorder %s46, %s60
    %p62 = scmp.eq.s32.totalorder %s15, 0
    %p63 = por %p61, %p62
    %s65 = sadd.s32 %s64, 1
    %p68 = scmp.eq.s32.totalorder %s9, 1
    %p69 = scmp.ne.s32.totalorder %s64, %s66
    %p70 = scmp.eq.s32.totalorder %s9, 0
    %p71 = por %p69, %p70
    %p72 = scmp.ne.s32.totalorder %s64, %s66
    %p73 = scmp.eq.s32.totalorder %s14, 1
    %p74 = por %p72, %p73
    %p75 = scmp.ne.s32.totalorder %s66, %s67
    %p76 = scmp.eq.s32.totalorder %s14, 0
    %p77 = por %p75, %p76
    %p78 = scmp.ne.s32.totalorder %s66, %s67
    %p79 = scmp.eq.s32.totalorder %s15, 1
    %p80 = por %p78, %p79
    %p82 = scmp.ne.s32.totalorder %s67, %s81
    %p83 = scmp.eq.s32.totalorder %s15, 0
    %p84 = por %p82, %p83
    %s85 = ssub.s32 %s9, %s16
    %p86 = scmp.eq.s32.totalorder %s85, 0
    %s88 = sadd.s32 %s87, 1
    %s89 = scalar_select %p86, %s87, %s88
    %p92 = pneg %p86
    %p93 = scmp.eq.s32.totalorder %s9, 1
    %p94 = por %p92, %p93
    %p95 = scmp.ne.s32.totalorder %s87, %s90
    %p96 = scmp.eq.s32.totalorder %s9, 0
    %p97 = por %p95, %p96
    %p98 = scmp.ne.s32.totalorder %s87, %s90
    %p99 = scmp.eq.s32.totalorder %s14, 1
    %p100 = por %p98, %p99
    %p101 = scmp.ne.s32.totalorder %s90, %s91
    %p102 = scmp.eq.s32.totalorder %s14, 0
    %p103 = por %p101, %p102
    %p104 = scmp.ne.s32.totalorder %s90, %s91
    %p105 = scmp.eq.s32.totalorder %s15, 1
    %p106 = por %p104, %p105
    %p108 = scmp.ne.s32.totalorder %s91, %s107
    %p109 = scmp.eq.s32.totalorder %s15, 0
    %p110 = por %p108, %p109
    %p111 = scmp.le.s32.totalorder 1, %s9
    %p112 = scmp.lt.s32.totalorder %s9, 3
    %p113 = pnand %p111, %p112
    %p114 = pneg %p113
    // Predicated region
    $region9: #{encoder_cnn_forward.7} parent=5 // pred_check
      _
    $region10: #{encoder_cnn_forward.7} parent=5 // pred_check_branch
      %116 = sbr.rel (%p113) target = $region12
    $region11: #{encoder_cnn_forward.7} parent=5 // pred_region
      %s117 = ssub.s32 %s9, 1
      // Predicated region
      $region13: #{encoder_cnn_forward.7} parent=11 // pred_check
        %p118 = pneg %p56
      $region14: #{encoder_cnn_forward.7} parent=11 // pred_check_branch
        %120 = sbr.rel (%p118) target = $region16
      $region15: #{encoder_cnn_forward.7} parent=11 // pred_region
        _
      $region16: #{encoder_cnn_forward.7} parent=11 // pred_fallthru
        _
      // Predicated region
      $region17: #{encoder_cnn_forward.7} parent=11 // pred_check
        %p121 = pneg %p77
      $region18: #{encoder_cnn_forward.7} parent=11 // pred_check_branch
        %123 = sbr.rel (%p121) target = $region20
      $region19: #{encoder_cnn_forward.7} parent=11 // pred_region
        _
      $region20: #{encoder_cnn_forward.7} parent=11 // pred_fallthru
        _
    $region12: #{encoder_cnn_forward.7} parent=5 // pred_fallthru
      _
    %p124 = scmp.lt.s32.totalorder %s9, 2
    // Predicated region
    $region21: #{encoder_cnn_forward.7} parent=5 // pred_check
      %p125 = pneg %p124
    $region22: #{encoder_cnn_forward.7} parent=5 // pred_check_branch
      %127 = sbr.rel (%p125) target = $region24
    $region23: #{encoder_cnn_forward.7} parent=5 // pred_region
      // Predicated region
      $region25: #{encoder_cnn_forward.7} parent=23 // pred_check
        %p128 = pneg %p29
      $region26: #{encoder_cnn_forward.7} parent=23 // pred_check_branch
        %130 = sbr.rel (%p128) target = $region28
      $region27: #{encoder_cnn_forward.7} parent=23 // pred_region
        %s131 = smul.u32 64, %s9
        %p132 = scmp.lt.s32.totalorder %s131, 127
        %s133 = scalar_select %p132, %s131, 127
        %s134 = smul.addr %s133, 3
        %s135 = smul.addr %s134, 4
        %s136 = scalar_lea.vmem %s0, %s135
        %s137 = smul.u32 64, %s9
      $region28: #{encoder_cnn_forward.7} parent=23 // pred_fallthru
        _
    $region24: #{encoder_cnn_forward.7} parent=5 // pred_fallthru
      _
    %p138 = scmp.le.s32.totalorder 1, %s9
    %p139 = scmp.lt.s32.totalorder %s9, 3
    %p140 = pnand %p138, %p139
    %p141 = pneg %p140
    // Predicated region
    $region29: #{encoder_cnn_forward.7} parent=5 // pred_check
      _
    $region30: #{encoder_cnn_forward.7} parent=5 // pred_check_branch
      %143 = sbr.rel (%p140) target = $region32
    $region31: #{encoder_cnn_forward.7} parent=5 // pred_region
      %s144 = ssub.s32 %s9, 1
      %s145 = smul.u32 64, %s14
      %p146 = scmp.lt.s32.totalorder %s145, 127
      %s147 = scalar_select %p146, %s145, 127
      %s148 = smul.addr %s147, 3
      %s149 = smul.addr %s148, 4
      %s150 = scalar_lea.vmem %s0, %s149
      %p151 = pneg %p35
      %p152 = pneg %p32
      %p153 = pneg %p56
      %p154 = pneg %p53
      %p155 = pneg %p77
      %p156 = pneg %p74
      %p157 = pneg %p103
      %p158 = pneg %p100
      %s159 = smul.u32 64, %s14
      %p160 = scmp.lt.s32.totalorder %s159, 127
      %s161 = scalar_select %p160, %s159, 127
      %s162 = smul.addr %s161, 4
      %s163 = scalar_lea.vmem %s3, %s162
      %s164 = smul.u32 64, %s14
      %p165 = scmp.lt.s32.totalorder %s164, 127
      %s166 = scalar_select %p165, %s164, 127
      %s167 = smul.addr %s166, 3
      %s168 = smul.addr %s167, 4
      %s169 = scalar_lea.vmem %s0, %s168
      %s170 = smul.u32 64, %s14
      %s171 = smul.u32 64, %s14
      %p172 = scmp.lt.s32.totalorder %s171, 127
      %s173 = scalar_select %p172, %s171, 127
      %s174 = smul.addr %s173, 4
      %s175 = scalar_lea.vmem %s3, %s174
      %s176 = smul.u32 64, %s14
      %v177 = vld [vmem:[%s169] sm:$0xff]
      %v178 = vld [vmem:[%s169 + $0x8] sm:$0xf]
      %v179 = vld [vmem:[%s169 + $0xc] sm:$0xff]
      %v180 = vld [vmem:[%s169 + $0x14] sm:$0xf]
      %v181 = vld [vmem:[%s169 + $0x18] sm:$0xff]
      %v182 = vld [vmem:[%s169 + $0x20] sm:$0xf]
      %v183 = vld [vmem:[%s169 + $0x24] sm:$0xff]
      %v184 = vld [vmem:[%s169 + $0x2c] sm:$0xf]
      %v185 = vld [vmem:[%s169 + $0x30] sm:$0xff]
      %v186 = vld [vmem:[%s169 + $0x38] sm:$0xf]
      %v187 = vld [vmem:[%s169 + $0x3c] sm:$0xff]
      %v188 = vld [vmem:[%s169 + $0x44] sm:$0xf]
      %v189 = vld [vmem:[%s169 + $0x48] sm:$0xff]
      %v190 = vld [vmem:[%s169 + $0x50] sm:$0xf]
      %v191 = vld [vmem:[%s169 + $0x54] sm:$0xff]
      %v192 = vld [vmem:[%s169 + $0x5c] sm:$0xf]
      %v193 = vld [vmem:[%s169 + $0x60] sm:$0xff]
      %v194 = vld [vmem:[%s169 + $0x68] sm:$0xf]
      %v195 = vld [vmem:[%s169 + $0x6c] sm:$0xff]
      %v196 = vld [vmem:[%s169 + $0x74] sm:$0xf]
      %v197 = vld [vmem:[%s169 + $0x78] sm:$0xff]
      %v198 = vld [vmem:[%s169 + $0x80] sm:$0xf]
      %v199 = vld [vmem:[%s169 + $0x84] sm:$0xff]
      %v200 = vld [vmem:[%s169 + $0x8c] sm:$0xf]
      %v201 = vld [vmem:[%s169 + $0x90] sm:$0xff]
      %v202 = vld [vmem:[%s169 + $0x98] sm:$0xf]
      %v203 = vld [vmem:[%s169 + $0x9c] sm:$0xff]
      %v204 = vld [vmem:[%s169 + $0xa4] sm:$0xf]
      %v205 = vld [vmem:[%s169 + $0xa8] sm:$0xff]
      %v206 = vld [vmem:[%s169 + $0xb0] sm:$0xf]
      %v207 = vld [vmem:[%s169 + $0xb4] sm:$0xff]
      %v208 = vld [vmem:[%s169 + $0xbc] sm:$0xf]
      %v209 = vld [vmem:[%s169 + $0xc0] sm:$0xff]
      %v210 = vld [vmem:[%s169 + $0xc8] sm:$0xf]
      %v211 = vld [vmem:[%s169 + $0xcc] sm:$0xff]
      %v212 = vld [vmem:[%s169 + $0xd4] sm:$0xf]
      %v213 = vld [vmem:[%s169 + $0xd8] sm:$0xff]
      %v214 = vld [vmem:[%s169 + $0xe0] sm:$0xf]
      %v215 = vld [vmem:[%s169 + $0xe4] sm:$0xff]
      %v216 = vld [vmem:[%s169 + $0xec] sm:$0xf]
      %v217 = vld [vmem:[%s169 + $0xf0] sm:$0xff]
      %v218 = vld [vmem:[%s169 + $0xf8] sm:$0xf]
      %v219 = vld [vmem:[%s169 + $0xfc] sm:$0xff]
      %v220 = vld [vmem:[%s169 + $0x104] sm:$0xf]
      %v221 = vld [vmem:[%s169 + $0x108] sm:$0xff]
      %v222 = vld [vmem:[%s169 + $0x110] sm:$0xf]
      %v223 = vld [vmem:[%s169 + $0x114] sm:$0xff]
      %v224 = vld [vmem:[%s169 + $0x11c] sm:$0xf]
      %v225 = vld [vmem:[%s169 + $0x120] sm:$0xff]
      %v226 = vld [vmem:[%s169 + $0x128] sm:$0xf]
      %v227 = vld [vmem:[%s169 + $0x12c] sm:$0xff]
      %v228 = vld [vmem:[%s169 + $0x134] sm:$0xf]
      %v229 = vld [vmem:[%s169 + $0x138] sm:$0xff]
      %v230 = vld [vmem:[%s169 + $0x140] sm:$0xf]
      %v231 = vld [vmem:[%s169 + $0x144] sm:$0xff]
      %v232 = vld [vmem:[%s169 + $0x14c] sm:$0xf]
      %v233 = vld [vmem:[%s169 + $0x150] sm:$0xff]
      %v234 = vld [vmem:[%s169 + $0x158] sm:$0xf]
      %v235 = vld [vmem:[%s169 + $0x15c] sm:$0xff]
      %v236 = vld [vmem:[%s169 + $0x164] sm:$0xf]
      %v237 = vld [vmem:[%s169 + $0x168] sm:$0xff]
      %v238 = vld [vmem:[%s169 + $0x170] sm:$0xf]
      %v239 = vld [vmem:[%s169 + $0x174] sm:$0xff]
      %v240 = vld [vmem:[%s169 + $0x17c] sm:$0xf]
      %v241 = vld [vmem:[%s169 + $0x180] sm:$0xff]
      %v242 = vld [vmem:[%s169 + $0x188] sm:$0xf]
      %v243 = vld [vmem:[%s169 + $0x18c] sm:$0xff]
      %v244 = vld [vmem:[%s169 + $0x194] sm:$0xf]
      %v245 = vld [vmem:[%s169 + $0x198] sm:$0xff]
      %v246 = vld [vmem:[%s169 + $0x1a0] sm:$0xf]
      %v247 = vld [vmem:[%s169 + $0x1a4] sm:$0xff]
      %v248 = vld [vmem:[%s169 + $0x1ac] sm:$0xf]
      %v249 = vld [vmem:[%s169 + $0x1b0] sm:$0xff]
      %v250 = vld [vmem:[%s169 + $0x1b8] sm:$0xf]
      %v251 = vld [vmem:[%s169 + $0x1bc] sm:$0xff]
      %v252 = vld [vmem:[%s169 + $0x1c4] sm:$0xf]
      %v253 = vld [vmem:[%s169 + $0x1c8] sm:$0xff]
      %v254 = vld [vmem:[%s169 + $0x1d0] sm:$0xf]
      %v255 = vld [vmem:[%s169 + $0x1d4] sm:$0xff]
      %v256 = vld [vmem:[%s169 + $0x1dc] sm:$0xf]
      %v257 = vld [vmem:[%s169 + $0x1e0] sm:$0xff]
      %v258 = vld [vmem:[%s169 + $0x1e8] sm:$0xf]
      %v259 = vld [vmem:[%s169 + $0x1ec] sm:$0xff]
      %v260 = vld [vmem:[%s169 + $0x1f4] sm:$0xf]
      %v261 = vld [vmem:[%s169 + $0x1f8] sm:$0xff]
      %v262 = vld [vmem:[%s169 + $0x200] sm:$0xf]
      %v263 = vld [vmem:[%s169 + $0x204] sm:$0xff]
      %v264 = vld [vmem:[%s169 + $0x20c] sm:$0xf]
      %v265 = vld [vmem:[%s169 + $0x210] sm:$0xff]
      %v266 = vld [vmem:[%s169 + $0x218] sm:$0xf]
      %v267 = vld [vmem:[%s169 + $0x21c] sm:$0xff]
      %v268 = vld [vmem:[%s169 + $0x224] sm:$0xf]
      %v269 = vld [vmem:[%s169 + $0x228] sm:$0xff]
      %v270 = vld [vmem:[%s169 + $0x230] sm:$0xf]
      %v271 = vld [vmem:[%s169 + $0x234] sm:$0xff]
      %v272 = vld [vmem:[%s169 + $0x23c] sm:$0xf]
      %v273 = vld [vmem:[%s169 + $0x240] sm:$0xff]
      %v274 = vld [vmem:[%s169 + $0x248] sm:$0xf]
      %v275 = vld [vmem:[%s169 + $0x24c] sm:$0xff]
      %v276 = vld [vmem:[%s169 + $0x254] sm:$0xf]
      %v277 = vld [vmem:[%s169 + $0x258] sm:$0xff]
      %v278 = vld [vmem:[%s169 + $0x260] sm:$0xf]
      %v279 = vld [vmem:[%s169 + $0x264] sm:$0xff]
      %v280 = vld [vmem:[%s169 + $0x26c] sm:$0xf]
      %v281 = vld [vmem:[%s169 + $0x270] sm:$0xff]
      %v282 = vld [vmem:[%s169 + $0x278] sm:$0xf]
      %v283 = vld [vmem:[%s169 + $0x27c] sm:$0xff]
      %v284 = vld [vmem:[%s169 + $0x284] sm:$0xf]
      %v285 = vld [vmem:[%s169 + $0x288] sm:$0xff]
      %v286 = vld [vmem:[%s169 + $0x290] sm:$0xf]
      %v287 = vld [vmem:[%s169 + $0x294] sm:$0xff]
      %v288 = vld [vmem:[%s169 + $0x29c] sm:$0xf]
      %v289 = vld [vmem:[%s169 + $0x2a0] sm:$0xff]
      %v290 = vld [vmem:[%s169 + $0x2a8] sm:$0xf]
      %v291 = vld [vmem:[%s169 + $0x2ac] sm:$0xff]
      %v292 = vld [vmem:[%s169 + $0x2b4] sm:$0xf]
      %v293 = vld [vmem:[%s169 + $0x2b8] sm:$0xff]
      %v294 = vld [vmem:[%s169 + $0x2c0] sm:$0xf]
      %v295 = vld [vmem:[%s169 + $0x2c4] sm:$0xff]
      %v296 = vld [vmem:[%s169 + $0x2cc] sm:$0xf]
      %v297 = vld [vmem:[%s169 + $0x2d0] sm:$0xff]
      %v298 = vld [vmem:[%s169 + $0x2d8] sm:$0xf]
      %v299 = vld [vmem:[%s169 + $0x2dc] sm:$0xff]
      %v300 = vld [vmem:[%s169 + $0x2e4] sm:$0xf]
      %v301 = vld [vmem:[%s169 + $0x2e8] sm:$0xff]
      %v302 = vld [vmem:[%s169 + $0x2f0] sm:$0xf]
      %v303 = vld [vmem:[%s169 + $0x2f4] sm:$0xff]
      %v304 = vld [vmem:[%s169 + $0x2fc] sm:$0xf]
      %v305 = vld [vmem:[%s1] sm:$0xf]
      %v306 = vld [vmem:[%s1 + $0x4] sm:$0xf]
      %v307 = vld [vmem:[%s1 + $0x8] sm:$0xf]
      %v308 = vld [vmem:[%s1 + $0xc] sm:$0xf]
      %v309 = vld [vmem:[%s1 + $0x10] sm:$0xf]
      %v310 = vld [vmem:[%s1 + $0x14] sm:$0xf]
      %v311 = vld [vmem:[%s1 + $0x18] sm:$0xf]
      %v312 = vld [vmem:[%s1 + $0x1c] sm:$0xf]
      %v313 = vld [vmem:[%s1 + $0x20] sm:$0xf]
      %v314 = vld [vmem:[%s1 + $0x24] sm:$0xf]
      %v315 = vld [vmem:[%s1 + $0x28] sm:$0xf]
      %v316 = vld [vmem:[%s1 + $0x2c] sm:$0xf]
      %v317 = vld [vmem:[%s1 + $0x30] sm:$0xf]
      %v318 = vld [vmem:[%s1 + $0x34] sm:$0xf]
      %v319 = vld [vmem:[%s1 + $0x38] sm:$0xf]
      %v320 = vld [vmem:[%s1 + $0x3c] sm:$0xf]
      %v321 = vld [vmem:[%s1 + $0x40] sm:$0xf]
      %v322 = vld [vmem:[%s1 + $0x44] sm:$0xf]
      %v323 = vld [vmem:[%s1 + $0x48] sm:$0xf]
      %v324 = vld [vmem:[%s1 + $0x4c] sm:$0xf]
      %v325 = vld [vmem:[%s1 + $0x50] sm:$0xf]
      %v326 = vld [vmem:[%s1 + $0x54] sm:$0xf]
      %v327 = vld [vmem:[%s1 + $0x58] sm:$0xf]
      %v328 = vld [vmem:[%s1 + $0x5c] sm:$0xf]
      %v329 = vld [vmem:[%s1 + $0x60] sm:$0xf]
      %v330 = vld [vmem:[%s1 + $0x64] sm:$0xf]
      %v331 = vld [vmem:[%s1 + $0x68] sm:$0xf]
      %v332 = vld [vmem:[%s1 + $0x6c] sm:$0xf]
      %v333 = vld [vmem:[%s1 + $0x70] sm:$0xf]
      %v334 = vld [vmem:[%s1 + $0x74] sm:$0xf]
      %v335 = vld [vmem:[%s1 + $0x78] sm:$0xf]
      %v336 = vld [vmem:[%s1 + $0x7c] sm:$0xf]
      %v337 = vld [vmem:[%s1 + $0x80] sm:$0xf]
      %v338 = vld [vmem:[%s1 + $0x84] sm:$0xf]
      %v339 = vld [vmem:[%s1 + $0x88] sm:$0xf]
      %v340 = vld [vmem:[%s1 + $0x8c] sm:$0xf]
      %v341 = vld [vmem:[%s1 + $0x90] sm:$0xf]
      %v342 = vld [vmem:[%s1 + $0x94] sm:$0xf]
      %v343 = vld [vmem:[%s1 + $0x98] sm:$0xf]
      %v344 = vld [vmem:[%s1 + $0x9c] sm:$0xf]
      %v345 = vld [vmem:[%s1 + $0xa0] sm:$0xf]
      %v346 = vld [vmem:[%s1 + $0xa4] sm:$0xf]
      %v347 = vld [vmem:[%s1 + $0xa8] sm:$0xf]
      %v348 = vld [vmem:[%s1 + $0xac] sm:$0xf]
      %v349 = vld [vmem:[%s1 + $0xb0] sm:$0xf]
      %v350 = vld [vmem:[%s1 + $0xb4] sm:$0xf]
      %v351 = vld [vmem:[%s1 + $0xb8] sm:$0xf]
      %v352 = vld [vmem:[%s1 + $0xbc] sm:$0xf]
      %v353 = vld [vmem:[%s2] sm:$0x1]
      %v355 = vperm.slane %v353, 0
      %v485 = vunpack.c.l.b16 %v177
      %v486 = vunpack.c.h.b16 %v177
      %v487 = vunpack.c.l.b16 %v178
      %v488 = vunpack.c.l.b16 %v179
      %v489 = vunpack.c.h.b16 %v179
      %v490 = vunpack.c.l.b16 %v180
      %v491 = vunpack.c.l.b16 %v181
      %v492 = vunpack.c.h.b16 %v181
      %v493 = vunpack.c.l.b16 %v182
      %v494 = vunpack.c.l.b16 %v183
      %v495 = vunpack.c.h.b16 %v183
      %v496 = vunpack.c.l.b16 %v184
      %v497 = vunpack.c.l.b16 %v185
      %v498 = vunpack.c.h.b16 %v185
      %v499 = vunpack.c.l.b16 %v186
      %v500 = vunpack.c.l.b16 %v187
      %v501 = vunpack.c.h.b16 %v187
      %v502 = vunpack.c.l.b16 %v188
      %v503 = vunpack.c.l.b16 %v189
      %v504 = vunpack.c.h.b16 %v189
      %v505 = vunpack.c.l.b16 %v190
      %v506 = vunpack.c.l.b16 %v191
      %v507 = vunpack.c.h.b16 %v191
      %v508 = vunpack.c.l.b16 %v192
      %v509 = vunpack.c.l.b16 %v193
      %v510 = vunpack.c.h.b16 %v193
      %v511 = vunpack.c.l.b16 %v194
      %v512 = vunpack.c.l.b16 %v195
      %v513 = vunpack.c.h.b16 %v195
      %v514 = vunpack.c.l.b16 %v196
      %v515 = vunpack.c.l.b16 %v197
      %v516 = vunpack.c.h.b16 %v197
      %v517 = vunpack.c.l.b16 %v198
      %v518 = vunpack.c.l.b16 %v199
      %v519 = vunpack.c.h.b16 %v199
      %v520 = vunpack.c.l.b16 %v200
      %v521 = vunpack.c.l.b16 %v201
      %v522 = vunpack.c.h.b16 %v201
      %v523 = vunpack.c.l.b16 %v202
      %v524 = vunpack.c.l.b16 %v203
      %v525 = vunpack.c.h.b16 %v203
      %v526 = vunpack.c.l.b16 %v204
      %v527 = vunpack.c.l.b16 %v205
      %v528 = vunpack.c.h.b16 %v205
      %v529 = vunpack.c.l.b16 %v206
      %v530 = vunpack.c.l.b16 %v207
      %v531 = vunpack.c.h.b16 %v207
      %v532 = vunpack.c.l.b16 %v208
      %v533 = vunpack.c.l.b16 %v209
      %v534 = vunpack.c.h.b16 %v209
      %v535 = vunpack.c.l.b16 %v210
      %v536 = vunpack.c.l.b16 %v211
      %v537 = vunpack.c.h.b16 %v211
      %v538 = vunpack.c.l.b16 %v212
      %v539 = vunpack.c.l.b16 %v213
      %v540 = vunpack.c.h.b16 %v213
      %v541 = vunpack.c.l.b16 %v214
      %v542 = vunpack.c.l.b16 %v215
      %v543 = vunpack.c.h.b16 %v215
      %v544 = vunpack.c.l.b16 %v216
      %v545 = vunpack.c.l.b16 %v217
      %v546 = vunpack.c.h.b16 %v217
      %v547 = vunpack.c.l.b16 %v218
      %v548 = vunpack.c.l.b16 %v219
      %v549 = vunpack.c.h.b16 %v219
      %v550 = vunpack.c.l.b16 %v220
      %v551 = vunpack.c.l.b16 %v221
      %v552 = vunpack.c.h.b16 %v221
      %v553 = vunpack.c.l.b16 %v222
      %v554 = vunpack.c.l.b16 %v223
      %v555 = vunpack.c.h.b16 %v223
      %v556 = vunpack.c.l.b16 %v224
      %v557 = vunpack.c.l.b16 %v225
      %v558 = vunpack.c.h.b16 %v225
      %v559 = vunpack.c.l.b16 %v226
      %v560 = vunpack.c.l.b16 %v227
      %v561 = vunpack.c.h.b16 %v227
      %v562 = vunpack.c.l.b16 %v228
      %v563 = vunpack.c.l.b16 %v229
      %v564 = vunpack.c.h.b16 %v229
      %v565 = vunpack.c.l.b16 %v230
      %v566 = vunpack.c.l.b16 %v231
      %v567 = vunpack.c.h.b16 %v231
      %v568 = vunpack.c.l.b16 %v232
      %v569 = vunpack.c.l.b16 %v233
      %v570 = vunpack.c.h.b16 %v233
      %v571 = vunpack.c.l.b16 %v234
      %v572 = vunpack.c.l.b16 %v235
      %v573 = vunpack.c.h.b16 %v235
      %v574 = vunpack.c.l.b16 %v236
      %v575 = vunpack.c.l.b16 %v237
      %v576 = vunpack.c.h.b16 %v237
      %v577 = vunpack.c.l.b16 %v238
      %v578 = vunpack.c.l.b16 %v239
      %v579 = vunpack.c.h.b16 %v239
      %v580 = vunpack.c.l.b16 %v240
      %v581 = vunpack.c.l.b16 %v241
      %v582 = vunpack.c.h.b16 %v241
      %v583 = vunpack.c.l.b16 %v242
      %v584 = vunpack.c.l.b16 %v243
      %v585 = vunpack.c.h.b16 %v243
      %v586 = vunpack.c.l.b16 %v244
      %v587 = vunpack.c.l.b16 %v245
      %v588 = vunpack.c.h.b16 %v245
      %v589 = vunpack.c.l.b16 %v246
      %v590 = vunpack.c.l.b16 %v247
      %v591 = vunpack.c.h.b16 %v247
      %v592 = vunpack.c.l.b16 %v248
      %v593 = vunpack.c.l.b16 %v249
      %v594 = vunpack.c.h.b16 %v249
      %v595 = vunpack.c.l.b16 %v250
      %v596 = vunpack.c.l.b16 %v251
      %v597 = vunpack.c.h.b16 %v251
      %v598 = vunpack.c.l.b16 %v252
      %v599 = vunpack.c.l.b16 %v253
      %v600 = vunpack.c.h.b16 %v253
      %v601 = vunpack.c.l.b16 %v254
      %v602 = vunpack.c.l.b16 %v255
      %v603 = vunpack.c.h.b16 %v255
      %v604 = vunpack.c.l.b16 %v256
      %v605 = vunpack.c.l.b16 %v257
      %v606 = vunpack.c.h.b16 %v257
      %v607 = vunpack.c.l.b16 %v258
      %v608 = vunpack.c.l.b16 %v259
      %v609 = vunpack.c.h.b16 %v259
      %v610 = vunpack.c.l.b16 %v260
      %v611 = vunpack.c.l.b16 %v261
      %v612 = vunpack.c.h.b16 %v261
      %v613 = vunpack.c.l.b16 %v262
      %v614 = vunpack.c.l.b16 %v263
      %v615 = vunpack.c.h.b16 %v263
      %v616 = vunpack.c.l.b16 %v264
      %v617 = vunpack.c.l.b16 %v265
      %v618 = vunpack.c.h.b16 %v265
      %v619 = vunpack.c.l.b16 %v266
      %v620 = vunpack.c.l.b16 %v267
      %v621 = vunpack.c.h.b16 %v267
      %v622 = vunpack.c.l.b16 %v268
      %v623 = vunpack.c.l.b16 %v269
      %v624 = vunpack.c.h.b16 %v269
      %v625 = vunpack.c.l.b16 %v270
      %v626 = vunpack.c.l.b16 %v271
      %v627 = vunpack.c.h.b16 %v271
      %v628 = vunpack.c.l.b16 %v272
      %v629 = vunpack.c.l.b16 %v273
      %v630 = vunpack.c.h.b16 %v273
      %v631 = vunpack.c.l.b16 %v274
      %v632 = vunpack.c.l.b16 %v275
      %v633 = vunpack.c.h.b16 %v275
      %v634 = vunpack.c.l.b16 %v276
      %v635 = vunpack.c.l.b16 %v277
      %v636 = vunpack.c.h.b16 %v277
      %v637 = vunpack.c.l.b16 %v278
      %v638 = vunpack.c.l.b16 %v279
      %v639 = vunpack.c.h.b16 %v279
      %v640 = vunpack.c.l.b16 %v280
      %v641 = vunpack.c.l.b16 %v281
      %v642 = vunpack.c.h.b16 %v281
      %v643 = vunpack.c.l.b16 %v282
      %v644 = vunpack.c.l.b16 %v283
      %v645 = vunpack.c.h.b16 %v283
      %v646 = vunpack.c.l.b16 %v284
      %v647 = vunpack.c.l.b16 %v285
      %v648 = vunpack.c.h.b16 %v285
      %v649 = vunpack.c.l.b16 %v286
      %v650 = vunpack.c.l.b16 %v287
      %v651 = vunpack.c.h.b16 %v287
      %v652 = vunpack.c.l.b16 %v288
      %v653 = vunpack.c.l.b16 %v289
      %v654 = vunpack.c.h.b16 %v289
      %v655 = vunpack.c.l.b16 %v290
      %v656 = vunpack.c.l.b16 %v291
      %v657 = vunpack.c.h.b16 %v291
      %v658 = vunpack.c.l.b16 %v292
      %v659 = vunpack.c.l.b16 %v293
      %v660 = vunpack.c.h.b16 %v293
      %v661 = vunpack.c.l.b16 %v294
      %v662 = vunpack.c.l.b16 %v295
      %v663 = vunpack.c.h.b16 %v295
      %v664 = vunpack.c.l.b16 %v296
      %v665 = vunpack.c.l.b16 %v297
      %v666 = vunpack.c.h.b16 %v297
      %v667 = vunpack.c.l.b16 %v298
      %v668 = vunpack.c.l.b16 %v299
      %v669 = vunpack.c.h.b16 %v299
      %v670 = vunpack.c.l.b16 %v300
      %v671 = vunpack.c.l.b16 %v301
      %v672 = vunpack.c.h.b16 %v301
      %v673 = vunpack.c.l.b16 %v302
      %v674 = vunpack.c.l.b16 %v303
      %v675 = vunpack.c.h.b16 %v303
      %v676 = vunpack.c.l.b16 %v304
      %v677 = vpack.c.b16 %v488, %v485
      %v678 = vpack.c.b16 %v489, %v486
      %v679 = vpack.c.b16 %v490, %v487
      %v680 = vpack.c.b16 %v494, %v491
      %v681 = vpack.c.b16 %v495, %v492
      %v682 = vpack.c.b16 %v496, %v493
      %v683 = vpack.c.b16 %v500, %v497
      %v684 = vpack.c.b16 %v501, %v498
      %v685 = vpack.c.b16 %v502, %v499
      %v686 = vpack.c.b16 %v506, %v503
      %v687 = vpack.c.b16 %v507, %v504
      %v688 = vpack.c.b16 %v508, %v505
      %v689 = vpack.c.b16 %v512, %v509
      %v690 = vpack.c.b16 %v513, %v510
      %v691 = vpack.c.b16 %v514, %v511
      %v692 = vpack.c.b16 %v518, %v515
      %v693 = vpack.c.b16 %v519, %v516
      %v694 = vpack.c.b16 %v520, %v517
      %v695 = vpack.c.b16 %v524, %v521
      %v696 = vpack.c.b16 %v525, %v522
      %v697 = vpack.c.b16 %v526, %v523
      %v698 = vpack.c.b16 %v530, %v527
      %v699 = vpack.c.b16 %v531, %v528
      %v700 = vpack.c.b16 %v532, %v529
      %v701 = vpack.c.b16 %v536, %v533
      %v702 = vpack.c.b16 %v537, %v534
      %v703 = vpack.c.b16 %v538, %v535
      %v704 = vpack.c.b16 %v542, %v539
      %v705 = vpack.c.b16 %v543, %v540
      %v706 = vpack.c.b16 %v544, %v541
      %v707 = vpack.c.b16 %v548, %v545
      %v708 = vpack.c.b16 %v549, %v546
      %v709 = vpack.c.b16 %v550, %v547
      %v710 = vpack.c.b16 %v554, %v551
      %v711 = vpack.c.b16 %v555, %v552
      %v712 = vpack.c.b16 %v556, %v553
      %v713 = vpack.c.b16 %v560, %v557
      %v714 = vpack.c.b16 %v561, %v558
      %v715 = vpack.c.b16 %v562, %v559
      %v716 = vpack.c.b16 %v566, %v563
      %v717 = vpack.c.b16 %v567, %v564
      %v718 = vpack.c.b16 %v568, %v565
      %v719 = vpack.c.b16 %v572, %v569
      %v720 = vpack.c.b16 %v573, %v570
      %v721 = vpack.c.b16 %v574, %v571
      %v722 = vpack.c.b16 %v578, %v575
      %v723 = vpack.c.b16 %v579, %v576
      %v724 = vpack.c.b16 %v580, %v577
      %v725 = vpack.c.b16 %v584, %v581
      %v726 = vpack.c.b16 %v585, %v582
      %v727 = vpack.c.b16 %v586, %v583
      %v728 = vpack.c.b16 %v590, %v587
      %v729 = vpack.c.b16 %v591, %v588
      %v730 = vpack.c.b16 %v592, %v589
      %v731 = vpack.c.b16 %v596, %v593
      %v732 = vpack.c.b16 %v597, %v594
      %v733 = vpack.c.b16 %v598, %v595
      %v734 = vpack.c.b16 %v602, %v599
      %v735 = vpack.c.b16 %v603, %v600
      %v736 = vpack.c.b16 %v604, %v601
      %v737 = vpack.c.b16 %v608, %v605
      %v738 = vpack.c.b16 %v609, %v606
      %v739 = vpack.c.b16 %v610, %v607
      %v740 = vpack.c.b16 %v614, %v611
      %v741 = vpack.c.b16 %v615, %v612
      %v742 = vpack.c.b16 %v616, %v613
      %v743 = vpack.c.b16 %v620, %v617
      %v744 = vpack.c.b16 %v621, %v618
      %v745 = vpack.c.b16 %v622, %v619
      %v746 = vpack.c.b16 %v626, %v623
      %v747 = vpack.c.b16 %v627, %v624
      %v748 = vpack.c.b16 %v628, %v625
      %v749 = vpack.c.b16 %v632, %v629
      %v750 = vpack.c.b16 %v633, %v630
      %v751 = vpack.c.b16 %v634, %v631
      %v752 = vpack.c.b16 %v638, %v635
      %v753 = vpack.c.b16 %v639, %v636
      %v754 = vpack.c.b16 %v640, %v637
      %v755 = vpack.c.b16 %v644, %v641
      %v756 = vpack.c.b16 %v645, %v642
      %v757 = vpack.c.b16 %v646, %v643
      %v758 = vpack.c.b16 %v650, %v647
      %v759 = vpack.c.b16 %v651, %v648
      %v760 = vpack.c.b16 %v652, %v649
      %v761 = vpack.c.b16 %v656, %v653
      %v762 = vpack.c.b16 %v657, %v654
      %v763 = vpack.c.b16 %v658, %v655
      %v764 = vpack.c.b16 %v662, %v659
      %v765 = vpack.c.b16 %v663, %v660
      %v766 = vpack.c.b16 %v664, %v661
      %v767 = vpack.c.b16 %v668, %v665
      %v768 = vpack.c.b16 %v669, %v666
      %v769 = vpack.c.b16 %v670, %v667
      %v770 = vpack.c.b16 %v674, %v671
      %v771 = vpack.c.b16 %v675, %v672
      %v772 = vpack.c.b16 %v676, %v673
      %v917 = vunpack.c.l.b16 %v305
      %v918 = vunpack.c.l.b16 %v306
      %v919 = vunpack.c.l.b16 %v307
      %v920 = vunpack.c.l.b16 %v308
      %v921 = vunpack.c.l.b16 %v309
      %v922 = vunpack.c.l.b16 %v310
      %v923 = vunpack.c.l.b16 %v311
      %v924 = vunpack.c.l.b16 %v312
      %v925 = vunpack.c.l.b16 %v313
      %v926 = vunpack.c.l.b16 %v314
      %v927 = vunpack.c.l.b16 %v315
      %v928 = vunpack.c.l.b16 %v316
      %v929 = vunpack.c.l.b16 %v317
      %v930 = vunpack.c.l.b16 %v318
      %v931 = vunpack.c.l.b16 %v319
      %v932 = vunpack.c.l.b16 %v320
      %v933 = vunpack.c.l.b16 %v321
      %v934 = vunpack.c.l.b16 %v322
      %v935 = vunpack.c.l.b16 %v323
      %v936 = vunpack.c.l.b16 %v324
      %v937 = vunpack.c.l.b16 %v325
      %v938 = vunpack.c.l.b16 %v326
      %v939 = vunpack.c.l.b16 %v327
      %v940 = vunpack.c.l.b16 %v328
      %v941 = vunpack.c.l.b16 %v329
      %v942 = vunpack.c.l.b16 %v330
      %v943 = vunpack.c.l.b16 %v331
      %v944 = vunpack.c.l.b16 %v332
      %v945 = vunpack.c.l.b16 %v333
      %v946 = vunpack.c.l.b16 %v334
      %v947 = vunpack.c.l.b16 %v335
      %v948 = vunpack.c.l.b16 %v336
      %v949 = vunpack.c.l.b16 %v337
      %v950 = vunpack.c.l.b16 %v338
      %v951 = vunpack.c.l.b16 %v339
      %v952 = vunpack.c.l.b16 %v340
      %v953 = vunpack.c.l.b16 %v341
      %v954 = vunpack.c.l.b16 %v342
      %v955 = vunpack.c.l.b16 %v343
      %v956 = vunpack.c.l.b16 %v344
      %v957 = vunpack.c.l.b16 %v345
      %v958 = vunpack.c.l.b16 %v346
      %v959 = vunpack.c.l.b16 %v347
      %v960 = vunpack.c.l.b16 %v348
      %v961 = vunpack.c.l.b16 %v349
      %v962 = vunpack.c.l.b16 %v350
      %v963 = vunpack.c.l.b16 %v351
      %v964 = vunpack.c.l.b16 %v352
      %v965 = vpack.c.b16 %v918, %v917
      %v966 = vpack.c.b16 %v920, %v919
      %v967 = vpack.c.b16 %v922, %v921
      %v968 = vpack.c.b16 %v924, %v923
      %v969 = vpack.c.b16 %v926, %v925
      %v970 = vpack.c.b16 %v928, %v927
      %v971 = vpack.c.b16 %v930, %v929
      %v972 = vpack.c.b16 %v932, %v931
      %v973 = vpack.c.b16 %v934, %v933
      %v974 = vpack.c.b16 %v936, %v935
      %v975 = vpack.c.b16 %v938, %v937
      %v976 = vpack.c.b16 %v940, %v939
      %v977 = vpack.c.b16 %v942, %v941
      %v978 = vpack.c.b16 %v944, %v943
      %v979 = vpack.c.b16 %v946, %v945
      %v980 = vpack.c.b16 %v948, %v947
      %v981 = vpack.c.b16 %v950, %v949
      %v982 = vpack.c.b16 %v952, %v951
      %v983 = vpack.c.b16 %v954, %v953
      %v984 = vpack.c.b16 %v956, %v955
      %v985 = vpack.c.b16 %v958, %v957
      %v986 = vpack.c.b16 %v960, %v959
      %v987 = vpack.c.b16 %v962, %v961
      %v988 = vpack.c.b16 %v964, %v963
      %1013 = vmatpush.bf16.msra.mxu0 %v972
      %1014 = vmatpush.bf16.msra.mxu0 %v971
      %1015 = vmatpush.bf16.msra.mxu0 %v970
      %1016 = vmatpush.bf16.msra.mxu0 %v969
      %1017 = vmatpush.bf16.msra.mxu0 %v968
      %1018 = vmatpush.bf16.msra.mxu0 %v967
      %1019 = vmatpush.bf16.msra.mxu0 %v966
      %1020 = vmatpush.bf16.msra.mxu0 %v965
      %1021 = vmatmul.bf16.gmra.mxu0 %v677
      %v1022 = vpop.f32.mrf.mxu0
      %v1023 = vadd.f32 %v355, %v1022
      %v1024 = vpop.f32.mrf.mxu0
      %v1025 = vadd.f32 %v355, %v1024
      %1026 = vmatmul.bf16.gmra.mxu0 %v680
      %v1027 = vpop.f32.mrf.mxu0
      %v1028 = vadd.f32 %v355, %v1027
      %v1029 = vpop.f32.mrf.mxu0
      %v1030 = vadd.f32 %v355, %v1029
      %1031 = vmatmul.bf16.gmra.mxu0 %v683
      %v1032 = vpop.f32.mrf.mxu0
      %v1033 = vadd.f32 %v355, %v1032
      %v1034 = vpop.f32.mrf.mxu0
      %v1035 = vadd.f32 %v355, %v1034
      %1036 = vmatmul.bf16.gmra.mxu0 %v686
      %v1037 = vpop.f32.mrf.mxu0
      %v1038 = vadd.f32 %v355, %v1037
      %v1039 = vpop.f32.mrf.mxu0
      %v1040 = vadd.f32 %v355, %v1039
      %1041 = vmatmul.bf16.gmra.mxu0 %v689
      %v1042 = vpop.f32.mrf.mxu0
      %v1043 = vadd.f32 %v355, %v1042
      %v1044 = vpop.f32.mrf.mxu0
      %v1045 = vadd.f32 %v355, %v1044
      %1046 = vmatmul.bf16.gmra.mxu0 %v692
      %v1047 = vpop.f32.mrf.mxu0
      %v1048 = vadd.f32 %v355, %v1047
      %v1049 = vpop.f32.mrf.mxu0
      %v1050 = vadd.f32 %v355, %v1049
      %1051 = vmatmul.bf16.gmra.mxu0 %v695
      %v1052 = vpop.f32.mrf.mxu0
      %v1053 = vadd.f32 %v355, %v1052
      %v1054 = vpop.f32.mrf.mxu0
      %v1055 = vadd.f32 %v355, %v1054
      %1056 = vmatmul.bf16.gmra.mxu0 %v698
      %v1057 = vpop.f32.mrf.mxu0
      %v1058 = vadd.f32 %v355, %v1057
      %v1059 = vpop.f32.mrf.mxu0
      %v1060 = vadd.f32 %v355, %v1059
      %1061 = vmatmul.bf16.gmra.mxu0 %v701
      %v1062 = vpop.f32.mrf.mxu0
      %v1063 = vadd.f32 %v355, %v1062
      %v1064 = vpop.f32.mrf.mxu0
      %v1065 = vadd.f32 %v355, %v1064
      %1066 = vmatmul.bf16.gmra.mxu0 %v704
      %v1067 = vpop.f32.mrf.mxu0
      %v1068 = vadd.f32 %v355, %v1067
      %v1069 = vpop.f32.mrf.mxu0
      %v1070 = vadd.f32 %v355, %v1069
      %1071 = vmatmul.bf16.gmra.mxu0 %v707
      %v1072 = vpop.f32.mrf.mxu0
      %v1073 = vadd.f32 %v355, %v1072
      %v1074 = vpop.f32.mrf.mxu0
      %v1075 = vadd.f32 %v355, %v1074
      %1076 = vmatmul.bf16.gmra.mxu0 %v710
      %v1077 = vpop.f32.mrf.mxu0
      %v1078 = vadd.f32 %v355, %v1077
      %v1079 = vpop.f32.mrf.mxu0
      %v1080 = vadd.f32 %v355, %v1079
      %1081 = vmatmul.bf16.gmra.mxu0 %v713
      %v1082 = vpop.f32.mrf.mxu0
      %v1083 = vadd.f32 %v355, %v1082
      %v1084 = vpop.f32.mrf.mxu0
      %v1085 = vadd.f32 %v355, %v1084
      %1086 = vmatmul.bf16.gmra.mxu0 %v716
      %v1087 = vpop.f32.mrf.mxu0
      %v1088 = vadd.f32 %v355, %v1087
      %v1089 = vpop.f32.mrf.mxu0
      %v1090 = vadd.f32 %v355, %v1089
      %1091 = vmatmul.bf16.gmra.mxu0 %v719
      %v1092 = vpop.f32.mrf.mxu0
      %v1093 = vadd.f32 %v355, %v1092
      %v1094 = vpop.f32.mrf.mxu0
      %v1095 = vadd.f32 %v355, %v1094
      %1096 = vmatmul.bf16.gmra.mxu0 %v722
      %v1097 = vpop.f32.mrf.mxu0
      %v1098 = vadd.f32 %v355, %v1097
      %v1099 = vpop.f32.mrf.mxu0
      %v1100 = vadd.f32 %v355, %v1099
      %1101 = vmatmul.bf16.gmra.mxu0 %v725
      %v1102 = vpop.f32.mrf.mxu0
      %v1103 = vadd.f32 %v355, %v1102
      %v1104 = vpop.f32.mrf.mxu0
      %v1105 = vadd.f32 %v355, %v1104
      %1106 = vmatmul.bf16.gmra.mxu0 %v728
      %v1107 = vpop.f32.mrf.mxu0
      %v1108 = vadd.f32 %v355, %v1107
      %v1109 = vpop.f32.mrf.mxu0
      %v1110 = vadd.f32 %v355, %v1109
      %1111 = vmatmul.bf16.gmra.mxu0 %v731
      %v1112 = vpop.f32.mrf.mxu0
      %v1113 = vadd.f32 %v355, %v1112
      %v1114 = vpop.f32.mrf.mxu0
      %v1115 = vadd.f32 %v355, %v1114
      %1116 = vmatmul.bf16.gmra.mxu0 %v734
      %v1117 = vpop.f32.mrf.mxu0
      %v1118 = vadd.f32 %v355, %v1117
      %v1119 = vpop.f32.mrf.mxu0
      %v1120 = vadd.f32 %v355, %v1119
      %1121 = vmatmul.bf16.gmra.mxu0 %v737
      %v1122 = vpop.f32.mrf.mxu0
      %v1123 = vadd.f32 %v355, %v1122
      %v1124 = vpop.f32.mrf.mxu0
      %v1125 = vadd.f32 %v355, %v1124
      %1126 = vmatmul.bf16.gmra.mxu0 %v740
      %v1127 = vpop.f32.mrf.mxu0
      %v1128 = vadd.f32 %v355, %v1127
      %v1129 = vpop.f32.mrf.mxu0
      %v1130 = vadd.f32 %v355, %v1129
      %1131 = vmatmul.bf16.gmra.mxu0 %v743
      %v1132 = vpop.f32.mrf.mxu0
      %v1133 = vadd.f32 %v355, %v1132
      %v1134 = vpop.f32.mrf.mxu0
      %v1135 = vadd.f32 %v355, %v1134
      %1136 = vmatmul.bf16.gmra.mxu0 %v746
      %v1137 = vpop.f32.mrf.mxu0
      %v1138 = vadd.f32 %v355, %v1137
      %v1139 = vpop.f32.mrf.mxu0
      %v1140 = vadd.f32 %v355, %v1139
      %1141 = vmatmul.bf16.gmra.mxu0 %v749
      %v1142 = vpop.f32.mrf.mxu0
      %v1143 = vadd.f32 %v355, %v1142
      %v1144 = vpop.f32.mrf.mxu0
      %v1145 = vadd.f32 %v355, %v1144
      %1146 = vmatmul.bf16.gmra.mxu0 %v752
      %v1147 = vpop.f32.mrf.mxu0
      %v1148 = vadd.f32 %v355, %v1147
      %v1149 = vpop.f32.mrf.mxu0
      %v1150 = vadd.f32 %v355, %v1149
      %1151 = vmatmul.bf16.gmra.mxu0 %v755
      %v1152 = vpop.f32.mrf.mxu0
      %v1153 = vadd.f32 %v355, %v1152
      %v1154 = vpop.f32.mrf.mxu0
      %v1155 = vadd.f32 %v355, %v1154
      %1156 = vmatmul.bf16.gmra.mxu0 %v758
      %v1157 = vpop.f32.mrf.mxu0
      %v1158 = vadd.f32 %v355, %v1157
      %v1159 = vpop.f32.mrf.mxu0
      %v1160 = vadd.f32 %v355, %v1159
      %1161 = vmatmul.bf16.gmra.mxu0 %v761
      %v1162 = vpop.f32.mrf.mxu0
      %v1163 = vadd.f32 %v355, %v1162
      %v1164 = vpop.f32.mrf.mxu0
      %v1165 = vadd.f32 %v355, %v1164
      %1166 = vmatmul.bf16.gmra.mxu0 %v764
      %v1167 = vpop.f32.mrf.mxu0
      %v1168 = vadd.f32 %v355, %v1167
      %v1169 = vpop.f32.mrf.mxu0
      %v1170 = vadd.f32 %v355, %v1169
      %1171 = vmatmul.bf16.gmra.mxu0 %v767
      %v1172 = vpop.f32.mrf.mxu0
      %v1173 = vadd.f32 %v355, %v1172
      %v1174 = vpop.f32.mrf.mxu0
      %v1175 = vadd.f32 %v355, %v1174
      %1176 = vmatmul.bf16.gmra.mxu0 %v770
      %v1177 = vpop.f32.mrf.mxu0
      %v1178 = vadd.f32 %v355, %v1177
      %v1179 = vpop.f32.mrf.mxu0
      %v1180 = vadd.f32 %v355, %v1179
      %1181 = vdwg.mxu0
      %1182 = vmatpush.bf16.msra.mxu0 %v980
      %1183 = vmatpush.bf16.msra.mxu0 %v979
      %1184 = vmatpush.bf16.msra.mxu0 %v978
      %1185 = vmatpush.bf16.msra.mxu0 %v977
      %1186 = vmatpush.bf16.msra.mxu0 %v976
      %1187 = vmatpush.bf16.msra.mxu0 %v975
      %1188 = vmatpush.bf16.msra.mxu0 %v974
      %1189 = vmatpush.bf16.msra.mxu0 %v973
      %1190 = vmatmul.bf16.gmra.mxu0 %v678
      %v1191 = vpop.f32.mrf.mxu0
      %v1192 = vadd.f32 %v1023, %v1191
      %v1193 = vpop.f32.mrf.mxu0
      %v1194 = vadd.f32 %v1025, %v1193
      %1195 = vmatmul.bf16.gmra.mxu0 %v681
      %v1196 = vpop.f32.mrf.mxu0
      %v1197 = vadd.f32 %v1028, %v1196
      %v1198 = vpop.f32.mrf.mxu0
      %v1199 = vadd.f32 %v1030, %v1198
      %1200 = vmatmul.bf16.gmra.mxu0 %v684
      %v1201 = vpop.f32.mrf.mxu0
      %v1202 = vadd.f32 %v1033, %v1201
      %v1203 = vpop.f32.mrf.mxu0
      %v1204 = vadd.f32 %v1035, %v1203
      %1205 = vmatmul.bf16.gmra.mxu0 %v687
      %v1206 = vpop.f32.mrf.mxu0
      %v1207 = vadd.f32 %v1038, %v1206
      %v1208 = vpop.f32.mrf.mxu0
      %v1209 = vadd.f32 %v1040, %v1208
      %1210 = vmatmul.bf16.gmra.mxu0 %v690
      %v1211 = vpop.f32.mrf.mxu0
      %v1212 = vadd.f32 %v1043, %v1211
      %v1213 = vpop.f32.mrf.mxu0
      %v1214 = vadd.f32 %v1045, %v1213
      %1215 = vmatmul.bf16.gmra.mxu0 %v693
      %v1216 = vpop.f32.mrf.mxu0
      %v1217 = vadd.f32 %v1048, %v1216
      %v1218 = vpop.f32.mrf.mxu0
      %v1219 = vadd.f32 %v1050, %v1218
      %1220 = vmatmul.bf16.gmra.mxu0 %v696
      %v1221 = vpop.f32.mrf.mxu0
      %v1222 = vadd.f32 %v1053, %v1221
      %v1223 = vpop.f32.mrf.mxu0
      %v1224 = vadd.f32 %v1055, %v1223
      %1225 = vmatmul.bf16.gmra.mxu0 %v699
      %v1226 = vpop.f32.mrf.mxu0
      %v1227 = vadd.f32 %v1058, %v1226
      %v1228 = vpop.f32.mrf.mxu0
      %v1229 = vadd.f32 %v1060, %v1228
      %1230 = vmatmul.bf16.gmra.mxu0 %v702
      %v1231 = vpop.f32.mrf.mxu0
      %v1232 = vadd.f32 %v1063, %v1231
      %v1233 = vpop.f32.mrf.mxu0
      %v1234 = vadd.f32 %v1065, %v1233
      %1235 = vmatmul.bf16.gmra.mxu0 %v705
      %v1236 = vpop.f32.mrf.mxu0
      %v1237 = vadd.f32 %v1068, %v1236
      %v1238 = vpop.f32.mrf.mxu0
      %v1239 = vadd.f32 %v1070, %v1238
      %1240 = vmatmul.bf16.gmra.mxu0 %v708
      %v1241 = vpop.f32.mrf.mxu0
      %v1242 = vadd.f32 %v1073, %v1241
      %v1243 = vpop.f32.mrf.mxu0
      %v1244 = vadd.f32 %v1075, %v1243
      %1245 = vmatmul.bf16.gmra.mxu0 %v711
      %v1246 = vpop.f32.mrf.mxu0
      %v1247 = vadd.f32 %v1078, %v1246
      %v1248 = vpop.f32.mrf.mxu0
      %v1249 = vadd.f32 %v1080, %v1248
      %1250 = vmatmul.bf16.gmra.mxu0 %v714
      %v1251 = vpop.f32.mrf.mxu0
      %v1252 = vadd.f32 %v1083, %v1251
      %v1253 = vpop.f32.mrf.mxu0
      %v1254 = vadd.f32 %v1085, %v1253
      %1255 = vmatmul.bf16.gmra.mxu0 %v717
      %v1256 = vpop.f32.mrf.mxu0
      %v1257 = vadd.f32 %v1088, %v1256
      %v1258 = vpop.f32.mrf.mxu0
      %v1259 = vadd.f32 %v1090, %v1258
      %1260 = vmatmul.bf16.gmra.mxu0 %v720
      %v1261 = vpop.f32.mrf.mxu0
      %v1262 = vadd.f32 %v1093, %v1261
      %v1263 = vpop.f32.mrf.mxu0
      %v1264 = vadd.f32 %v1095, %v1263
      %1265 = vmatmul.bf16.gmra.mxu0 %v723
      %v1266 = vpop.f32.mrf.mxu0
      %v1267 = vadd.f32 %v1098, %v1266
      %v1268 = vpop.f32.mrf.mxu0
      %v1269 = vadd.f32 %v1100, %v1268
      %1270 = vmatmul.bf16.gmra.mxu0 %v726
      %v1271 = vpop.f32.mrf.mxu0
      %v1272 = vadd.f32 %v1103, %v1271
      %v1273 = vpop.f32.mrf.mxu0
      %v1274 = vadd.f32 %v1105, %v1273
      %1275 = vmatmul.bf16.gmra.mxu0 %v729
      %v1276 = vpop.f32.mrf.mxu0
      %v1277 = vadd.f32 %v1108, %v1276
      %v1278 = vpop.f32.mrf.mxu0
      %v1279 = vadd.f32 %v1110, %v1278
      %1280 = vmatmul.bf16.gmra.mxu0 %v732
      %v1281 = vpop.f32.mrf.mxu0
      %v1282 = vadd.f32 %v1113, %v1281
      %v1283 = vpop.f32.mrf.mxu0
      %v1284 = vadd.f32 %v1115, %v1283
      %1285 = vmatmul.bf16.gmra.mxu0 %v735
      %v1286 = vpop.f32.mrf.mxu0
      %v1287 = vadd.f32 %v1118, %v1286
      %v1288 = vpop.f32.mrf.mxu0
      %v1289 = vadd.f32 %v1120, %v1288
      %1290 = vmatmul.bf16.gmra.mxu0 %v738
      %v1291 = vpop.f32.mrf.mxu0
      %v1292 = vadd.f32 %v1123, %v1291
      %v1293 = vpop.f32.mrf.mxu0
      %v1294 = vadd.f32 %v1125, %v1293
      %1295 = vmatmul.bf16.gmra.mxu0 %v741
      %v1296 = vpop.f32.mrf.mxu0
      %v1297 = vadd.f32 %v1128, %v1296
      %v1298 = vpop.f32.mrf.mxu0
      %v1299 = vadd.f32 %v1130, %v1298
      %1300 = vmatmul.bf16.gmra.mxu0 %v744
      %v1301 = vpop.f32.mrf.mxu0
      %v1302 = vadd.f32 %v1133, %v1301
      %v1303 = vpop.f32.mrf.mxu0
      %v1304 = vadd.f32 %v1135, %v1303
      %1305 = vmatmul.bf16.gmra.mxu0 %v747
      %v1306 = vpop.f32.mrf.mxu0
      %v1307 = vadd.f32 %v1138, %v1306
      %v1308 = vpop.f32.mrf.mxu0
      %v1309 = vadd.f32 %v1140, %v1308
      %1310 = vmatmul.bf16.gmra.mxu0 %v750
      %v1311 = vpop.f32.mrf.mxu0
      %v1312 = vadd.f32 %v1143, %v1311
      %v1313 = vpop.f32.mrf.mxu0
      %v1314 = vadd.f32 %v1145, %v1313
      %1315 = vmatmul.bf16.gmra.mxu0 %v753
      %v1316 = vpop.f32.mrf.mxu0
      %v1317 = vadd.f32 %v1148, %v1316
      %v1318 = vpop.f32.mrf.mxu0
      %v1319 = vadd.f32 %v1150, %v1318
      %1320 = vmatmul.bf16.gmra.mxu0 %v756
      %v1321 = vpop.f32.mrf.mxu0
      %v1322 = vadd.f32 %v1153, %v1321
      %v1323 = vpop.f32.mrf.mxu0
      %v1324 = vadd.f32 %v1155, %v1323
      %1325 = vmatmul.bf16.gmra.mxu0 %v759
      %v1326 = vpop.f32.mrf.mxu0
      %v1327 = vadd.f32 %v1158, %v1326
      %v1328 = vpop.f32.mrf.mxu0
      %v1329 = vadd.f32 %v1160, %v1328
      %1330 = vmatmul.bf16.gmra.mxu0 %v762
      %v1331 = vpop.f32.mrf.mxu0
      %v1332 = vadd.f32 %v1163, %v1331
      %v1333 = vpop.f32.mrf.mxu0
      %v1334 = vadd.f32 %v1165, %v1333
      %1335 = vmatmul.bf16.gmra.mxu0 %v765
      %v1336 = vpop.f32.mrf.mxu0
      %v1337 = vadd.f32 %v1168, %v1336
      %v1338 = vpop.f32.mrf.mxu0
      %v1339 = vadd.f32 %v1170, %v1338
      %1340 = vmatmul.bf16.gmra.mxu0 %v768
      %v1341 = vpop.f32.mrf.mxu0
      %v1342 = vadd.f32 %v1173, %v1341
      %v1343 = vpop.f32.mrf.mxu0
      %v1344 = vadd.f32 %v1175, %v1343
      %1345 = vmatmul.bf16.gmra.mxu0 %v771
      %v1346 = vpop.f32.mrf.mxu0
      %v1347 = vadd.f32 %v1178, %v1346
      %v1348 = vpop.f32.mrf.mxu0
      %v1349 = vadd.f32 %v1180, %v1348
      %1350 = vdwg.mxu0
      %1351 = vmatpush.bf16.msra.mxu0 %v988
      %1352 = vmatpush.bf16.msra.mxu0 %v987
      %1353 = vmatpush.bf16.msra.mxu0 %v986
      %1354 = vmatpush.bf16.msra.mxu0 %v985
      %1355 = vmatpush.bf16.msra.mxu0 %v984
      %1356 = vmatpush.bf16.msra.mxu0 %v983
      %1357 = vmatpush.bf16.msra.mxu0 %v982
      %1358 = vmatpush.bf16.msra.mxu0 %v981
      %1359 = vmatmul.bf16.gmra.mxu0 %v679
      %v1360 = vpop.f32.mrf.mxu0
      %v1361 = vadd.f32 %v1192, %v1360
      %v1362 = vpop.f32.mrf.mxu0
      %v1363 = vadd.f32 %v1194, %v1362
      %1364 = vmatmul.bf16.gmra.mxu0 %v682
      %v1365 = vpop.f32.mrf.mxu0
      %v1366 = vadd.f32 %v1197, %v1365
      %v1367 = vpop.f32.mrf.mxu0
      %v1368 = vadd.f32 %v1199, %v1367
      %1369 = vmatmul.bf16.gmra.mxu0 %v685
      %v1370 = vpop.f32.mrf.mxu0
      %v1371 = vadd.f32 %v1202, %v1370
      %v1372 = vpop.f32.mrf.mxu0
      %v1373 = vadd.f32 %v1204, %v1372
      %1374 = vmatmul.bf16.gmra.mxu0 %v688
      %v1375 = vpop.f32.mrf.mxu0
      %v1376 = vadd.f32 %v1207, %v1375
      %v1377 = vpop.f32.mrf.mxu0
      %v1378 = vadd.f32 %v1209, %v1377
      %1379 = vmatmul.bf16.gmra.mxu0 %v691
      %v1380 = vpop.f32.mrf.mxu0
      %v1381 = vadd.f32 %v1212, %v1380
      %v1382 = vpop.f32.mrf.mxu0
      %v1383 = vadd.f32 %v1214, %v1382
      %1384 = vmatmul.bf16.gmra.mxu0 %v694
      %v1385 = vpop.f32.mrf.mxu0
      %v1386 = vadd.f32 %v1217, %v1385
      %v1387 = vpop.f32.mrf.mxu0
      %v1388 = vadd.f32 %v1219, %v1387
      %1389 = vmatmul.bf16.gmra.mxu0 %v697
      %v1390 = vpop.f32.mrf.mxu0
      %v1391 = vadd.f32 %v1222, %v1390
      %v1392 = vpop.f32.mrf.mxu0
      %v1393 = vadd.f32 %v1224, %v1392
      %1394 = vmatmul.bf16.gmra.mxu0 %v700
      %v1395 = vpop.f32.mrf.mxu0
      %v1396 = vadd.f32 %v1227, %v1395
      %v1397 = vpop.f32.mrf.mxu0
      %v1398 = vadd.f32 %v1229, %v1397
      %1399 = vmatmul.bf16.gmra.mxu0 %v703
      %v1400 = vpop.f32.mrf.mxu0
      %v1401 = vadd.f32 %v1232, %v1400
      %v1402 = vpop.f32.mrf.mxu0
      %v1403 = vadd.f32 %v1234, %v1402
      %1404 = vmatmul.bf16.gmra.mxu0 %v706
      %v1405 = vpop.f32.mrf.mxu0
      %v1406 = vadd.f32 %v1237, %v1405
      %v1407 = vpop.f32.mrf.mxu0
      %v1408 = vadd.f32 %v1239, %v1407
      %1409 = vmatmul.bf16.gmra.mxu0 %v709
      %v1410 = vpop.f32.mrf.mxu0
      %v1411 = vadd.f32 %v1242, %v1410
      %v1412 = vpop.f32.mrf.mxu0
      %v1413 = vadd.f32 %v1244, %v1412
      %1414 = vmatmul.bf16.gmra.mxu0 %v712
      %v1415 = vpop.f32.mrf.mxu0
      %v1416 = vadd.f32 %v1247, %v1415
      %v1417 = vpop.f32.mrf.mxu0
      %v1418 = vadd.f32 %v1249, %v1417
      %1419 = vmatmul.bf16.gmra.mxu0 %v715
      %v1420 = vpop.f32.mrf.mxu0
      %v1421 = vadd.f32 %v1252, %v1420
      %v1422 = vpop.f32.mrf.mxu0
      %v1423 = vadd.f32 %v1254, %v1422
      %1424 = vmatmul.bf16.gmra.mxu0 %v718
      %v1425 = vpop.f32.mrf.mxu0
      %v1426 = vadd.f32 %v1257, %v1425
      %v1427 = vpop.f32.mrf.mxu0
      %v1428 = vadd.f32 %v1259, %v1427
      %1429 = vmatmul.bf16.gmra.mxu0 %v721
      %v1430 = vpop.f32.mrf.mxu0
      %v1431 = vadd.f32 %v1262, %v1430
      %v1432 = vpop.f32.mrf.mxu0
      %v1433 = vadd.f32 %v1264, %v1432
      %1434 = vmatmul.bf16.gmra.mxu0 %v724
      %v1435 = vpop.f32.mrf.mxu0
      %v1436 = vadd.f32 %v1267, %v1435
      %v1437 = vpop.f32.mrf.mxu0
      %v1438 = vadd.f32 %v1269, %v1437
      %1439 = vmatmul.bf16.gmra.mxu0 %v727
      %v1440 = vpop.f32.mrf.mxu0
      %v1441 = vadd.f32 %v1272, %v1440
      %v1442 = vpop.f32.mrf.mxu0
      %v1443 = vadd.f32 %v1274, %v1442
      %1444 = vmatmul.bf16.gmra.mxu0 %v730
      %v1445 = vpop.f32.mrf.mxu0
      %v1446 = vadd.f32 %v1277, %v1445
      %v1447 = vpop.f32.mrf.mxu0
      %v1448 = vadd.f32 %v1279, %v1447
      %1449 = vmatmul.bf16.gmra.mxu0 %v733
      %v1450 = vpop.f32.mrf.mxu0
      %v1451 = vadd.f32 %v1282, %v1450
      %v1452 = vpop.f32.mrf.mxu0
      %v1453 = vadd.f32 %v1284, %v1452
      %1454 = vmatmul.bf16.gmra.mxu0 %v736
      %v1455 = vpop.f32.mrf.mxu0
      %v1456 = vadd.f32 %v1287, %v1455
      %v1457 = vpop.f32.mrf.mxu0
      %v1458 = vadd.f32 %v1289, %v1457
      %1459 = vmatmul.bf16.gmra.mxu0 %v739
      %v1460 = vpop.f32.mrf.mxu0
      %v1461 = vadd.f32 %v1292, %v1460
      %v1462 = vpop.f32.mrf.mxu0
      %v1463 = vadd.f32 %v1294, %v1462
      %1464 = vmatmul.bf16.gmra.mxu0 %v742
      %v1465 = vpop.f32.mrf.mxu0
      %v1466 = vadd.f32 %v1297, %v1465
      %v1467 = vpop.f32.mrf.mxu0
      %v1468 = vadd.f32 %v1299, %v1467
      %1469 = vmatmul.bf16.gmra.mxu0 %v745
      %v1470 = vpop.f32.mrf.mxu0
      %v1471 = vadd.f32 %v1302, %v1470
      %v1472 = vpop.f32.mrf.mxu0
      %v1473 = vadd.f32 %v1304, %v1472
      %1474 = vmatmul.bf16.gmra.mxu0 %v748
      %v1475 = vpop.f32.mrf.mxu0
      %v1476 = vadd.f32 %v1307, %v1475
      %v1477 = vpop.f32.mrf.mxu0
      %v1478 = vadd.f32 %v1309, %v1477
      %1479 = vmatmul.bf16.gmra.mxu0 %v751
      %v1480 = vpop.f32.mrf.mxu0
      %v1481 = vadd.f32 %v1312, %v1480
      %v1482 = vpop.f32.mrf.mxu0
      %v1483 = vadd.f32 %v1314, %v1482
      %1484 = vmatmul.bf16.gmra.mxu0 %v754
      %v1485 = vpop.f32.mrf.mxu0
      %v1486 = vadd.f32 %v1317, %v1485
      %v1487 = vpop.f32.mrf.mxu0
      %v1488 = vadd.f32 %v1319, %v1487
      %1489 = vmatmul.bf16.gmra.mxu0 %v757
      %v1490 = vpop.f32.mrf.mxu0
      %v1491 = vadd.f32 %v1322, %v1490
      %v1492 = vpop.f32.mrf.mxu0
      %v1493 = vadd.f32 %v1324, %v1492
      %1494 = vmatmul.bf16.gmra.mxu0 %v760
      %v1495 = vpop.f32.mrf.mxu0
      %v1496 = vadd.f32 %v1327, %v1495
      %v1497 = vpop.f32.mrf.mxu0
      %v1498 = vadd.f32 %v1329, %v1497
      %1499 = vmatmul.bf16.gmra.mxu0 %v763
      %v1500 = vpop.f32.mrf.mxu0
      %v1501 = vadd.f32 %v1332, %v1500
      %v1502 = vpop.f32.mrf.mxu0
      %v1503 = vadd.f32 %v1334, %v1502
      %1504 = vmatmul.bf16.gmra.mxu0 %v766
      %v1505 = vpop.f32.mrf.mxu0
      %v1506 = vadd.f32 %v1337, %v1505
      %v1507 = vpop.f32.mrf.mxu0
      %v1508 = vadd.f32 %v1339, %v1507
      %1509 = vmatmul.bf16.gmra.mxu0 %v769
      %v1510 = vpop.f32.mrf.mxu0
      %v1511 = vadd.f32 %v1342, %v1510
      %v1512 = vpop.f32.mrf.mxu0
      %v1513 = vadd.f32 %v1344, %v1512
      %1514 = vmatmul.bf16.gmra.mxu0 %v772
      %v1515 = vpop.f32.mrf.mxu0
      %v1516 = vadd.f32 %v1347, %v1515
      %v1517 = vpop.f32.mrf.mxu0
      %v1518 = vadd.f32 %v1349, %v1517
      %1519 = vdwg.mxu0
      %v1520 = vmax.f32 %v1361, 0.0
      %v1521 = vmax.f32 %v1363, 0.0
      %v1522 = vmax.f32 %v1366, 0.0
      %v1523 = vmax.f32 %v1368, 0.0
      %v1524 = vmax.f32 %v1371, 0.0
      %v1525 = vmax.f32 %v1373, 0.0
      %v1526 = vmax.f32 %v1376, 0.0
      %v1527 = vmax.f32 %v1378, 0.0
      %v1528 = vmax.f32 %v1381, 0.0
      %v1529 = vmax.f32 %v1383, 0.0
      %v1530 = vmax.f32 %v1386, 0.0
      %v1531 = vmax.f32 %v1388, 0.0
      %v1532 = vmax.f32 %v1391, 0.0
      %v1533 = vmax.f32 %v1393, 0.0
      %v1534 = vmax.f32 %v1396, 0.0
      %v1535 = vmax.f32 %v1398, 0.0
      %v1536 = vmax.f32 %v1401, 0.0
      %v1537 = vmax.f32 %v1403, 0.0
      %v1538 = vmax.f32 %v1406, 0.0
      %v1539 = vmax.f32 %v1408, 0.0
      %v1540 = vmax.f32 %v1411, 0.0
      %v1541 = vmax.f32 %v1413, 0.0
      %v1542 = vmax.f32 %v1416, 0.0
      %v1543 = vmax.f32 %v1418, 0.0
      %v1544 = vmax.f32 %v1421, 0.0
      %v1545 = vmax.f32 %v1423, 0.0
      %v1546 = vmax.f32 %v1426, 0.0
      %v1547 = vmax.f32 %v1428, 0.0
      %v1548 = vmax.f32 %v1431, 0.0
      %v1549 = vmax.f32 %v1433, 0.0
      %v1550 = vmax.f32 %v1436, 0.0
      %v1551 = vmax.f32 %v1438, 0.0
      %v1552 = vmax.f32 %v1441, 0.0
      %v1553 = vmax.f32 %v1443, 0.0
      %v1554 = vmax.f32 %v1446, 0.0
      %v1555 = vmax.f32 %v1448, 0.0
      %v1556 = vmax.f32 %v1451, 0.0
      %v1557 = vmax.f32 %v1453, 0.0
      %v1558 = vmax.f32 %v1456, 0.0
      %v1559 = vmax.f32 %v1458, 0.0
      %v1560 = vmax.f32 %v1461, 0.0
      %v1561 = vmax.f32 %v1463, 0.0
      %v1562 = vmax.f32 %v1466, 0.0
      %v1563 = vmax.f32 %v1468, 0.0
      %v1564 = vmax.f32 %v1471, 0.0
      %v1565 = vmax.f32 %v1473, 0.0
      %v1566 = vmax.f32 %v1476, 0.0
      %v1567 = vmax.f32 %v1478, 0.0
      %v1568 = vmax.f32 %v1481, 0.0
      %v1569 = vmax.f32 %v1483, 0.0
      %v1570 = vmax.f32 %v1486, 0.0
      %v1571 = vmax.f32 %v1488, 0.0
      %v1572 = vmax.f32 %v1491, 0.0
      %v1573 = vmax.f32 %v1493, 0.0
      %v1574 = vmax.f32 %v1496, 0.0
      %v1575 = vmax.f32 %v1498, 0.0
      %v1576 = vmax.f32 %v1501, 0.0
      %v1577 = vmax.f32 %v1503, 0.0
      %v1578 = vmax.f32 %v1506, 0.0
      %v1579 = vmax.f32 %v1508, 0.0
      %v1580 = vmax.f32 %v1511, 0.0
      %v1581 = vmax.f32 %v1513, 0.0
      %v1582 = vmax.f32 %v1516, 0.0
      %v1583 = vmax.f32 %v1518, 0.0
      %v1584 = vpack.c.bf16 %v1520, %v1520
      %v1585 = vpack.c.bf16 %v1521, %v1521
      %v1586 = vpack.c.bf16 %v1522, %v1522
      %v1587 = vpack.c.bf16 %v1523, %v1523
      %v1588 = vpack.c.bf16 %v1524, %v1524
      %v1589 = vpack.c.bf16 %v1525, %v1525
      %v1590 = vpack.c.bf16 %v1526, %v1526
      %v1591 = vpack.c.bf16 %v1527, %v1527
      %v1592 = vpack.c.bf16 %v1528, %v1528
      %v1593 = vpack.c.bf16 %v1529, %v1529
      %v1594 = vpack.c.bf16 %v1530, %v1530
      %v1595 = vpack.c.bf16 %v1531, %v1531
      %v1596 = vpack.c.bf16 %v1532, %v1532
      %v1597 = vpack.c.bf16 %v1533, %v1533
      %v1598 = vpack.c.bf16 %v1534, %v1534
      %v1599 = vpack.c.bf16 %v1535, %v1535
      %v1600 = vpack.c.bf16 %v1536, %v1536
      %v1601 = vpack.c.bf16 %v1537, %v1537
      %v1602 = vpack.c.bf16 %v1538, %v1538
      %v1603 = vpack.c.bf16 %v1539, %v1539
      %v1604 = vpack.c.bf16 %v1540, %v1540
      %v1605 = vpack.c.bf16 %v1541, %v1541
      %v1606 = vpack.c.bf16 %v1542, %v1542
      %v1607 = vpack.c.bf16 %v1543, %v1543
      %v1608 = vpack.c.bf16 %v1544, %v1544
      %v1609 = vpack.c.bf16 %v1545, %v1545
      %v1610 = vpack.c.bf16 %v1546, %v1546
      %v1611 = vpack.c.bf16 %v1547, %v1547
      %v1612 = vpack.c.bf16 %v1548, %v1548
      %v1613 = vpack.c.bf16 %v1549, %v1549
      %v1614 = vpack.c.bf16 %v1550, %v1550
      %v1615 = vpack.c.bf16 %v1551, %v1551
      %v1616 = vpack.c.bf16 %v1552, %v1552
      %v1617 = vpack.c.bf16 %v1553, %v1553
      %v1618 = vpack.c.bf16 %v1554, %v1554
      %v1619 = vpack.c.bf16 %v1555, %v1555
      %v1620 = vpack.c.bf16 %v1556, %v1556
      %v1621 = vpack.c.bf16 %v1557, %v1557
      %v1622 = vpack.c.bf16 %v1558, %v1558
      %v1623 = vpack.c.bf16 %v1559, %v1559
      %v1624 = vpack.c.bf16 %v1560, %v1560
      %v1625 = vpack.c.bf16 %v1561, %v1561
      %v1626 = vpack.c.bf16 %v1562, %v1562
      %v1627 = vpack.c.bf16 %v1563, %v1563
      %v1628 = vpack.c.bf16 %v1564, %v1564
      %v1629 = vpack.c.bf16 %v1565, %v1565
      %v1630 = vpack.c.bf16 %v1566, %v1566
      %v1631 = vpack.c.bf16 %v1567, %v1567
      %v1632 = vpack.c.bf16 %v1568, %v1568
      %v1633 = vpack.c.bf16 %v1569, %v1569
      %v1634 = vpack.c.bf16 %v1570, %v1570
      %v1635 = vpack.c.bf16 %v1571, %v1571
      %v1636 = vpack.c.bf16 %v1572, %v1572
      %v1637 = vpack.c.bf16 %v1573, %v1573
      %v1638 = vpack.c.bf16 %v1574, %v1574
      %v1639 = vpack.c.bf16 %v1575, %v1575
      %v1640 = vpack.c.bf16 %v1576, %v1576
      %v1641 = vpack.c.bf16 %v1577, %v1577
      %v1642 = vpack.c.bf16 %v1578, %v1578
      %v1643 = vpack.c.bf16 %v1579, %v1579
      %v1644 = vpack.c.bf16 %v1580, %v1580
      %v1645 = vpack.c.bf16 %v1581, %v1581
      %v1646 = vpack.c.bf16 %v1582, %v1582
      %v1647 = vpack.c.bf16 %v1583, %v1583
      %1648 = vst [vmem:[%s175] sm:$0xf] %v1584
      %1649 = vst [vmem:[%s175 + $0x4] sm:$0xf] %v1585
      %1650 = vst [vmem:[%s175 + $0x8] sm:$0xf] %v1586
      %1651 = vst [vmem:[%s175 + $0xc] sm:$0xf] %v1587
      %1652 = vst [vmem:[%s175 + $0x10] sm:$0xf] %v1588
      %1653 = vst [vmem:[%s175 + $0x14] sm:$0xf] %v1589
      %1654 = vst [vmem:[%s175 + $0x18] sm:$0xf] %v1590
      %1655 = vst [vmem:[%s175 + $0x1c] sm:$0xf] %v1591
      %1656 = vst [vmem:[%s175 + $0x20] sm:$0xf] %v1592
      %1657 = vst [vmem:[%s175 + $0x24] sm:$0xf] %v1593
      %1658 = vst [vmem:[%s175 + $0x28] sm:$0xf] %v1594
      %1659 = vst [vmem:[%s175 + $0x2c] sm:$0xf] %v1595
      %1660 = vst [vmem:[%s175 + $0x30] sm:$0xf] %v1596
      %1661 = vst [vmem:[%s175 + $0x34] sm:$0xf] %v1597
      %1662 = vst [vmem:[%s175 + $0x38] sm:$0xf] %v1598
      %1663 = vst [vmem:[%s175 + $0x3c] sm:$0xf] %v1599
      %1664 = vst [vmem:[%s175 + $0x40] sm:$0xf] %v1600
      %1665 = vst [vmem:[%s175 + $0x44] sm:$0xf] %v1601
      %1666 = vst [vmem:[%s175 + $0x48] sm:$0xf] %v1602
      %1667 = vst [vmem:[%s175 + $0x4c] sm:$0xf] %v1603
      %1668 = vst [vmem:[%s175 + $0x50] sm:$0xf] %v1604
      %1669 = vst [vmem:[%s175 + $0x54] sm:$0xf] %v1605
      %1670 = vst [vmem:[%s175 + $0x58] sm:$0xf] %v1606
      %1671 = vst [vmem:[%s175 + $0x5c] sm:$0xf] %v1607
      %1672 = vst [vmem:[%s175 + $0x60] sm:$0xf] %v1608
      %1673 = vst [vmem:[%s175 + $0x64] sm:$0xf] %v1609
      %1674 = vst [vmem:[%s175 + $0x68] sm:$0xf] %v1610
      %1675 = vst [vmem:[%s175 + $0x6c] sm:$0xf] %v1611
      %1676 = vst [vmem:[%s175 + $0x70] sm:$0xf] %v1612
      %1677 = vst [vmem:[%s175 + $0x74] sm:$0xf] %v1613
      %1678 = vst [vmem:[%s175 + $0x78] sm:$0xf] %v1614
      %1679 = vst [vmem:[%s175 + $0x7c] sm:$0xf] %v1615
      %1680 = vst [vmem:[%s175 + $0x80] sm:$0xf] %v1616
      %1681 = vst [vmem:[%s175 + $0x84] sm:$0xf] %v1617
      %1682 = vst [vmem:[%s175 + $0x88] sm:$0xf] %v1618
      %1683 = vst [vmem:[%s175 + $0x8c] sm:$0xf] %v1619
      %1684 = vst [vmem:[%s175 + $0x90] sm:$0xf] %v1620
      %1685 = vst [vmem:[%s175 + $0x94] sm:$0xf] %v1621
      %1686 = vst [vmem:[%s175 + $0x98] sm:$0xf] %v1622
      %1687 = vst [vmem:[%s175 + $0x9c] sm:$0xf] %v1623
      %1688 = vst [vmem:[%s175 + $0xa0] sm:$0xf] %v1624
      %1689 = vst [vmem:[%s175 + $0xa4] sm:$0xf] %v1625
      %1690 = vst [vmem:[%s175 + $0xa8] sm:$0xf] %v1626
      %1691 = vst [vmem:[%s175 + $0xac] sm:$0xf] %v1627
      %1692 = vst [vmem:[%s175 + $0xb0] sm:$0xf] %v1628
      %1693 = vst [vmem:[%s175 + $0xb4] sm:$0xf] %v1629
      %1694 = vst [vmem:[%s175 + $0xb8] sm:$0xf] %v1630
      %1695 = vst [vmem:[%s175 + $0xbc] sm:$0xf] %v1631
      %1696 = vst [vmem:[%s175 + $0xc0] sm:$0xf] %v1632
      %1697 = vst [vmem:[%s175 + $0xc4] sm:$0xf] %v1633
      %1698 = vst [vmem:[%s175 + $0xc8] sm:$0xf] %v1634
      %1699 = vst [vmem:[%s175 + $0xcc] sm:$0xf] %v1635
      %1700 = vst [vmem:[%s175 + $0xd0] sm:$0xf] %v1636
      %1701 = vst [vmem:[%s175 + $0xd4] sm:$0xf] %v1637
      %1702 = vst [vmem:[%s175 + $0xd8] sm:$0xf] %v1638
      %1703 = vst [vmem:[%s175 + $0xdc] sm:$0xf] %v1639
      %1704 = vst [vmem:[%s175 + $0xe0] sm:$0xf] %v1640
      %1705 = vst [vmem:[%s175 + $0xe4] sm:$0xf] %v1641
      %1706 = vst [vmem:[%s175 + $0xe8] sm:$0xf] %v1642
      %1707 = vst [vmem:[%s175 + $0xec] sm:$0xf] %v1643
      %1708 = vst [vmem:[%s175 + $0xf0] sm:$0xf] %v1644
      %1709 = vst [vmem:[%s175 + $0xf4] sm:$0xf] %v1645
      %1710 = vst [vmem:[%s175 + $0xf8] sm:$0xf] %v1646
      %1711 = vst [vmem:[%s175 + $0xfc] sm:$0xf] %v1647
      %s1712 = smul.u32 64, %s14
      %p1713 = scmp.lt.s32.totalorder %s1712, 127
      %s1714 = scalar_select %p1713, %s1712, 127
      %s1715 = smul.addr %s1714, 4
      %s1716 = scalar_lea.vmem %s3, %s1715
      // Predicated region
      $region33: #{encoder_cnn_forward.7} parent=31 // pred_check
        %p1717 = pneg %p100
      $region34: #{encoder_cnn_forward.7} parent=31 // pred_check_branch
        %1719 = sbr.rel (%p1717) target = $region36
      $region35: #{encoder_cnn_forward.7} parent=31 // pred_region
        %s1720 = smul.u32 64, %s14
      $region36: #{encoder_cnn_forward.7} parent=31 // pred_fallthru
        _
    $region32: #{encoder_cnn_forward.7} parent=5 // pred_fallthru
      _
    %p1721 = scmp.le.s32.totalorder 2, %s9
    // Predicated region
    $region37: #{encoder_cnn_forward.7} parent=5 // pred_check
      %p1722 = pneg %p1721
    $region38: #{encoder_cnn_forward.7} parent=5 // pred_check_branch
      %1724 = sbr.rel (%p1722) target = $region40
    $region39: #{encoder_cnn_forward.7} parent=5 // pred_region
      %s1725 = ssub.s32 %s9, 2
      // Predicated region
      $region41: #{encoder_cnn_forward.7} parent=39 // pred_check
        %p1726 = pneg %p106
      $region42: #{encoder_cnn_forward.7} parent=39 // pred_check_branch
        %1728 = sbr.rel (%p1726) target = $region44
      $region43: #{encoder_cnn_forward.7} parent=39 // pred_region
        %s1729 = smul.u32 64, %s15
        %p1730 = scmp.lt.s32.totalorder %s1729, 127
        %s1731 = scalar_select %p1730, %s1729, 127
        %s1732 = smul.addr %s1731, 4
        %s1733 = scalar_lea.vmem %s3, %s1732
      $region44: #{encoder_cnn_forward.7} parent=39 // pred_fallthru
        _
    $region40: #{encoder_cnn_forward.7} parent=5 // pred_fallthru
      _
  $region6: #{encoder_cnn_forward.7} parent=0 // loop_footer
    %s13 = sadd.s32 1, %s9
  $region7: #{encoder_cnn_forward.7} parent=0 // loop_footer_branch
    %8 = sbr.rel target = $region3
  $region8: #{encoder_cnn_forward.7} parent=0 // loop_exit
    _

// kernel: encoder_cnn_forward.8
$region0: #{encoder_cnn_forward.8}
  #allocation0 [shape = 'u32[]', space=smem, size = 0x4, offset = 0x4, fixed_abs, tag = 'smem constant byte address 0x4 - core index']
  #allocation1 [shape = 'u32[72,128]{1,0:T(1,128)}', space=vmem, size = 0x9000, scoped, tag = 'internal scratch']
  %s0 = inlined_call_operand.vmem [shape: bf16[144,640], index: 0, kind: input, shape index: {}]
  %s1 = inlined_call_operand.vmem [shape: bf16[640,128], index: 1, kind: input, shape index: {}]
  %s2 = inlined_call_operand.vmem [shape: f32[1,128], index: 2, kind: input, shape index: {}]
  %s3 = inlined_call_operand.vmem [shape: bf16[144,128], index: 3, kind: output, shape index: {}]
  %s4 = sld [smem:[#allocation0]]
  $region22: #{encoder_cnn_forward.8} parent=0
    _
  %s6 = ssub.s32 1, %s4
  %s7 = scalar_select 0, %s6, %s4
  // Predicated region
  $region2: #{encoder_cnn_forward.8} parent=0 // pred_check
    _
  $region3: #{encoder_cnn_forward.8} parent=0 // pred_check_branch
    %9 = sbr.rel (0) target = $region5
  $region4: #{encoder_cnn_forward.8} parent=0 // pred_region
    _
  $region5: #{encoder_cnn_forward.8} parent=0 // pred_fallthru
    _
  // Predicated region
  $region6: #{encoder_cnn_forward.8} parent=0 // pred_check
    _
  $region7: #{encoder_cnn_forward.8} parent=0 // pred_check_branch
    %11 = sbr.rel (0) target = $region9
  $region8: #{encoder_cnn_forward.8} parent=0 // pred_region
    _
  $region9: #{encoder_cnn_forward.8} parent=0 // pred_fallthru
    _
  // Predicated region
  $region10: #{encoder_cnn_forward.8} parent=0 // pred_check
    _
  $region11: #{encoder_cnn_forward.8} parent=0 // pred_check_branch
    %13 = sbr.rel (0) target = $region13
  $region12: #{encoder_cnn_forward.8} parent=0 // pred_region
    _
  $region13: #{encoder_cnn_forward.8} parent=0 // pred_fallthru
    _
  %v14 = vld [vmem:[%s0] sm:$0xff]
  %v15 = vld [vmem:[%s0 + $0x8] sm:$0xff]
  %v16 = vld [vmem:[%s0 + $0x10] sm:$0xf]
  %v17 = vld [vmem:[%s0 + $0x14] sm:$0xff]
  %v18 = vld [vmem:[%s0 + $0x1c] sm:$0xff]
  %v19 = vld [vmem:[%s0 + $0x24] sm:$0xf]
  %v20 = vld [vmem:[%s0 + $0x28] sm:$0xff]
  %v21 = vld [vmem:[%s0 + $0x30] sm:$0xff]
  %v22 = vld [vmem:[%s0 + $0x38] sm:$0xf]
  %v23 = vld [vmem:[%s0 + $0x3c] sm:$0xff]
  %v24 = vld [vmem:[%s0 + $0x44] sm:$0xff]
  %v25 = vld [vmem:[%s0 + $0x4c] sm:$0xf]
  %v26 = vld [vmem:[%s0 + $0x50] sm:$0xff]
  %v27 = vld [vmem:[%s0 + $0x58] sm:$0xff]
  %v28 = vld [vmem:[%s0 + $0x60] sm:$0xf]
  %v29 = vld [vmem:[%s0 + $0x64] sm:$0xff]
  %v30 = vld [vmem:[%s0 + $0x6c] sm:$0xff]
  %v31 = vld [vmem:[%s0 + $0x74] sm:$0xf]
  %v32 = vld [vmem:[%s0 + $0x78] sm:$0xff]
  %v33 = vld [vmem:[%s0 + $0x80] sm:$0xff]
  %v34 = vld [vmem:[%s0 + $0x88] sm:$0xf]
  %v35 = vld [vmem:[%s0 + $0x8c] sm:$0xff]
  %v36 = vld [vmem:[%s0 + $0x94] sm:$0xff]
  %v37 = vld [vmem:[%s0 + $0x9c] sm:$0xf]
  %v38 = vld [vmem:[%s0 + $0xa0] sm:$0xff]
  %v39 = vld [vmem:[%s0 + $0xa8] sm:$0xff]
  %v40 = vld [vmem:[%s0 + $0xb0] sm:$0xf]
  %v41 = vld [vmem:[%s0 + $0xb4] sm:$0xff]
  %v42 = vld [vmem:[%s0 + $0xbc] sm:$0xff]
  %v43 = vld [vmem:[%s0 + $0xc4] sm:$0xf]
  %v44 = vld [vmem:[%s0 + $0xc8] sm:$0xff]
  %v45 = vld [vmem:[%s0 + $0xd0] sm:$0xff]
  %v46 = vld [vmem:[%s0 + $0xd8] sm:$0xf]
  %v47 = vld [vmem:[%s0 + $0xdc] sm:$0xff]
  %v48 = vld [vmem:[%s0 + $0xe4] sm:$0xff]
  %v49 = vld [vmem:[%s0 + $0xec] sm:$0xf]
  %v50 = vld [vmem:[%s0 + $0xf0] sm:$0xff]
  %v51 = vld [vmem:[%s0 + $0xf8] sm:$0xff]
  %v52 = vld [vmem:[%s0 + $0x100] sm:$0xf]
  %v53 = vld [vmem:[%s0 + $0x104] sm:$0xff]
  %v54 = vld [vmem:[%s0 + $0x10c] sm:$0xff]
  %v55 = vld [vmem:[%s0 + $0x114] sm:$0xf]
  %v56 = vld [vmem:[%s0 + $0x118] sm:$0xff]
  %v57 = vld [vmem:[%s0 + $0x120] sm:$0xff]
  %v58 = vld [vmem:[%s0 + $0x128] sm:$0xf]
  %v59 = vld [vmem:[%s0 + $0x12c] sm:$0xff]
  %v60 = vld [vmem:[%s0 + $0x134] sm:$0xff]
  %v61 = vld [vmem:[%s0 + $0x13c] sm:$0xf]
  %v62 = vld [vmem:[%s0 + $0x140] sm:$0xff]
  %v63 = vld [vmem:[%s0 + $0x148] sm:$0xff]
  %v64 = vld [vmem:[%s0 + $0x150] sm:$0xf]
  %v65 = vld [vmem:[%s0 + $0x154] sm:$0xff]
  %v66 = vld [vmem:[%s0 + $0x15c] sm:$0xff]
  %v67 = vld [vmem:[%s0 + $0x164] sm:$0xf]
  %v68 = vld [vmem:[%s1] sm:$0xf]
  %v69 = vld [vmem:[%s1 + $0x4] sm:$0xf]
  %v70 = vld [vmem:[%s1 + $0x8] sm:$0xf]
  %v71 = vld [vmem:[%s1 + $0xc] sm:$0xf]
  %v72 = vld [vmem:[%s1 + $0x10] sm:$0xf]
  %v73 = vld [vmem:[%s1 + $0x14] sm:$0xf]
  %v74 = vld [vmem:[%s1 + $0x18] sm:$0xf]
  %v75 = vld [vmem:[%s1 + $0x1c] sm:$0xf]
  %v76 = vld [vmem:[%s1 + $0x20] sm:$0xf]
  %v77 = vld [vmem:[%s1 + $0x24] sm:$0xf]
  %v78 = vld [vmem:[%s1 + $0x28] sm:$0xf]
  %v79 = vld [vmem:[%s1 + $0x2c] sm:$0xf]
  %v80 = vld [vmem:[%s1 + $0x30] sm:$0xf]
  %v81 = vld [vmem:[%s1 + $0x34] sm:$0xf]
  %v82 = vld [vmem:[%s1 + $0x38] sm:$0xf]
  %v83 = vld [vmem:[%s1 + $0x3c] sm:$0xf]
  %v84 = vld [vmem:[%s1 + $0x40] sm:$0xf]
  %v85 = vld [vmem:[%s1 + $0x44] sm:$0xf]
  %v86 = vld [vmem:[%s1 + $0x48] sm:$0xf]
  %v87 = vld [vmem:[%s1 + $0x4c] sm:$0xf]
  %v88 = vld [vmem:[%s1 + $0x50] sm:$0xf]
  %v89 = vld [vmem:[%s1 + $0x54] sm:$0xf]
  %v90 = vld [vmem:[%s1 + $0x58] sm:$0xf]
  %v91 = vld [vmem:[%s1 + $0x5c] sm:$0xf]
  %v92 = vld [vmem:[%s1 + $0x60] sm:$0xf]
  %v93 = vld [vmem:[%s1 + $0x64] sm:$0xf]
  %v94 = vld [vmem:[%s1 + $0x68] sm:$0xf]
  %v95 = vld [vmem:[%s1 + $0x6c] sm:$0xf]
  %v96 = vld [vmem:[%s1 + $0x70] sm:$0xf]
  %v97 = vld [vmem:[%s1 + $0x74] sm:$0xf]
  %v98 = vld [vmem:[%s1 + $0x78] sm:$0xf]
  %v99 = vld [vmem:[%s1 + $0x7c] sm:$0xf]
  %v100 = vld [vmem:[%s1 + $0x80] sm:$0xf]
  %v101 = vld [vmem:[%s1 + $0x84] sm:$0xf]
  %v102 = vld [vmem:[%s1 + $0x88] sm:$0xf]
  %v103 = vld [vmem:[%s1 + $0x8c] sm:$0xf]
  %v104 = vld [vmem:[%s1 + $0x90] sm:$0xf]
  %v105 = vld [vmem:[%s1 + $0x94] sm:$0xf]
  %v106 = vld [vmem:[%s1 + $0x98] sm:$0xf]
  %v107 = vld [vmem:[%s1 + $0x9c] sm:$0xf]
  %v108 = vld [vmem:[%s1 + $0xa0] sm:$0xf]
  %v109 = vld [vmem:[%s1 + $0xa4] sm:$0xf]
  %v110 = vld [vmem:[%s1 + $0xa8] sm:$0xf]
  %v111 = vld [vmem:[%s1 + $0xac] sm:$0xf]
  %v112 = vld [vmem:[%s1 + $0xb0] sm:$0xf]
  %v113 = vld [vmem:[%s1 + $0xb4] sm:$0xf]
  %v114 = vld [vmem:[%s1 + $0xb8] sm:$0xf]
  %v115 = vld [vmem:[%s1 + $0xbc] sm:$0xf]
  %v116 = vld [vmem:[%s1 + $0xc0] sm:$0xf]
  %v117 = vld [vmem:[%s1 + $0xc4] sm:$0xf]
  %v118 = vld [vmem:[%s1 + $0xc8] sm:$0xf]
  %v119 = vld [vmem:[%s1 + $0xcc] sm:$0xf]
  %v120 = vld [vmem:[%s1 + $0xd0] sm:$0xf]
  %v121 = vld [vmem:[%s1 + $0xd4] sm:$0xf]
  %v122 = vld [vmem:[%s1 + $0xd8] sm:$0xf]
  %v123 = vld [vmem:[%s1 + $0xdc] sm:$0xf]
  %v124 = vld [vmem:[%s1 + $0xe0] sm:$0xf]
  %v125 = vld [vmem:[%s1 + $0xe4] sm:$0xf]
  %v126 = vld [vmem:[%s1 + $0xe8] sm:$0xf]
  %v127 = vld [vmem:[%s1 + $0xec] sm:$0xf]
  %v128 = vld [vmem:[%s1 + $0xf0] sm:$0xf]
  %v129 = vld [vmem:[%s1 + $0xf4] sm:$0xf]
  %v130 = vld [vmem:[%s1 + $0xf8] sm:$0xf]
  %v131 = vld [vmem:[%s1 + $0xfc] sm:$0xf]
  %v132 = vld [vmem:[%s1 + $0x100] sm:$0xf]
  %v133 = vld [vmem:[%s1 + $0x104] sm:$0xf]
  %v134 = vld [vmem:[%s1 + $0x108] sm:$0xf]
  %v135 = vld [vmem:[%s1 + $0x10c] sm:$0xf]
  %v136 = vld [vmem:[%s1 + $0x110] sm:$0xf]
  %v137 = vld [vmem:[%s1 + $0x114] sm:$0xf]
  %v138 = vld [vmem:[%s1 + $0x118] sm:$0xf]
  %v139 = vld [vmem:[%s1 + $0x11c] sm:$0xf]
  %v140 = vld [vmem:[%s1 + $0x120] sm:$0xf]
  %v141 = vld [vmem:[%s1 + $0x124] sm:$0xf]
  %v142 = vld [vmem:[%s1 + $0x128] sm:$0xf]
  %v143 = vld [vmem:[%s1 + $0x12c] sm:$0xf]
  %v144 = vld [vmem:[%s1 + $0x130] sm:$0xf]
  %v145 = vld [vmem:[%s1 + $0x134] sm:$0xf]
  %v146 = vld [vmem:[%s1 + $0x138] sm:$0xf]
  %v147 = vld [vmem:[%s1 + $0x13c] sm:$0xf]
  %v148 = vld [vmem:[%s2] sm:$0x1]
  %v150 = vperm.slane %v148, 0
  %v206 = vunpack.c.l.b16 %v14
  %v207 = vunpack.c.h.b16 %v14
  %v208 = vunpack.c.l.b16 %v15
  %v209 = vunpack.c.h.b16 %v15
  %v210 = vunpack.c.l.b16 %v16
  %v211 = vunpack.c.l.b16 %v17
  %v212 = vunpack.c.h.b16 %v17
  %v213 = vunpack.c.l.b16 %v18
  %v214 = vunpack.c.h.b16 %v18
  %v215 = vunpack.c.l.b16 %v19
  %v216 = vunpack.c.l.b16 %v20
  %v217 = vunpack.c.h.b16 %v20
  %v218 = vunpack.c.l.b16 %v21
  %v219 = vunpack.c.h.b16 %v21
  %v220 = vunpack.c.l.b16 %v22
  %v221 = vunpack.c.l.b16 %v23
  %v222 = vunpack.c.h.b16 %v23
  %v223 = vunpack.c.l.b16 %v24
  %v224 = vunpack.c.h.b16 %v24
  %v225 = vunpack.c.l.b16 %v25
  %v226 = vunpack.c.l.b16 %v26
  %v227 = vunpack.c.h.b16 %v26
  %v228 = vunpack.c.l.b16 %v27
  %v229 = vunpack.c.h.b16 %v27
  %v230 = vunpack.c.l.b16 %v28
  %v231 = vunpack.c.l.b16 %v29
  %v232 = vunpack.c.h.b16 %v29
  %v233 = vunpack.c.l.b16 %v30
  %v234 = vunpack.c.h.b16 %v30
  %v235 = vunpack.c.l.b16 %v31
  %v236 = vunpack.c.l.b16 %v32
  %v237 = vunpack.c.h.b16 %v32
  %v238 = vunpack.c.l.b16 %v33
  %v239 = vunpack.c.h.b16 %v33
  %v240 = vunpack.c.l.b16 %v34
  %v241 = vunpack.c.l.b16 %v35
  %v242 = vunpack.c.h.b16 %v35
  %v243 = vunpack.c.l.b16 %v36
  %v244 = vunpack.c.h.b16 %v36
  %v245 = vunpack.c.l.b16 %v37
  %v246 = vunpack.c.l.b16 %v38
  %v247 = vunpack.c.h.b16 %v38
  %v248 = vunpack.c.l.b16 %v39
  %v249 = vunpack.c.h.b16 %v39
  %v250 = vunpack.c.l.b16 %v40
  %v251 = vunpack.c.l.b16 %v41
  %v252 = vunpack.c.h.b16 %v41
  %v253 = vunpack.c.l.b16 %v42
  %v254 = vunpack.c.h.b16 %v42
  %v255 = vunpack.c.l.b16 %v43
  %v256 = vunpack.c.l.b16 %v44
  %v257 = vunpack.c.h.b16 %v44
  %v258 = vunpack.c.l.b16 %v45
  %v259 = vunpack.c.h.b16 %v45
  %v260 = vunpack.c.l.b16 %v46
  %v261 = vunpack.c.l.b16 %v47
  %v262 = vunpack.c.h.b16 %v47
  %v263 = vunpack.c.l.b16 %v48
  %v264 = vunpack.c.h.b16 %v48
  %v265 = vunpack.c.l.b16 %v49
  %v266 = vunpack.c.l.b16 %v50
  %v267 = vunpack.c.h.b16 %v50
  %v268 = vunpack.c.l.b16 %v51
  %v269 = vunpack.c.h.b16 %v51
  %v270 = vunpack.c.l.b16 %v52
  %v271 = vunpack.c.l.b16 %v53
  %v272 = vunpack.c.h.b16 %v53
  %v273 = vunpack.c.l.b16 %v54
  %v274 = vunpack.c.h.b16 %v54
  %v275 = vunpack.c.l.b16 %v55
  %v276 = vunpack.c.l.b16 %v56
  %v277 = vunpack.c.h.b16 %v56
  %v278 = vunpack.c.l.b16 %v57
  %v279 = vunpack.c.h.b16 %v57
  %v280 = vunpack.c.l.b16 %v58
  %v281 = vunpack.c.l.b16 %v59
  %v282 = vunpack.c.h.b16 %v59
  %v283 = vunpack.c.l.b16 %v60
  %v284 = vunpack.c.h.b16 %v60
  %v285 = vunpack.c.l.b16 %v61
  %v286 = vunpack.c.l.b16 %v62
  %v287 = vunpack.c.h.b16 %v62
  %v288 = vunpack.c.l.b16 %v63
  %v289 = vunpack.c.h.b16 %v63
  %v290 = vunpack.c.l.b16 %v64
  %v291 = vunpack.c.l.b16 %v65
  %v292 = vunpack.c.h.b16 %v65
  %v293 = vunpack.c.l.b16 %v66
  %v294 = vunpack.c.h.b16 %v66
  %v295 = vunpack.c.l.b16 %v67
  %v296 = vpack.c.b16 %v211, %v206
  %v297 = vpack.c.b16 %v212, %v207
  %v298 = vpack.c.b16 %v213, %v208
  %v299 = vpack.c.b16 %v214, %v209
  %v300 = vpack.c.b16 %v215, %v210
  %v301 = vpack.c.b16 %v221, %v216
  %v302 = vpack.c.b16 %v222, %v217
  %v303 = vpack.c.b16 %v223, %v218
  %v304 = vpack.c.b16 %v224, %v219
  %v305 = vpack.c.b16 %v225, %v220
  %v306 = vpack.c.b16 %v231, %v226
  %v307 = vpack.c.b16 %v232, %v227
  %v308 = vpack.c.b16 %v233, %v228
  %v309 = vpack.c.b16 %v234, %v229
  %v310 = vpack.c.b16 %v235, %v230
  %v311 = vpack.c.b16 %v241, %v236
  %v312 = vpack.c.b16 %v242, %v237
  %v313 = vpack.c.b16 %v243, %v238
  %v314 = vpack.c.b16 %v244, %v239
  %v315 = vpack.c.b16 %v245, %v240
  %v316 = vpack.c.b16 %v251, %v246
  %v317 = vpack.c.b16 %v252, %v247
  %v318 = vpack.c.b16 %v253, %v248
  %v319 = vpack.c.b16 %v254, %v249
  %v320 = vpack.c.b16 %v255, %v250
  %v321 = vpack.c.b16 %v261, %v256
  %v322 = vpack.c.b16 %v262, %v257
  %v323 = vpack.c.b16 %v263, %v258
  %v324 = vpack.c.b16 %v264, %v259
  %v325 = vpack.c.b16 %v265, %v260
  %v326 = vpack.c.b16 %v271, %v266
  %v327 = vpack.c.b16 %v272, %v267
  %v328 = vpack.c.b16 %v273, %v268
  %v329 = vpack.c.b16 %v274, %v269
  %v330 = vpack.c.b16 %v275, %v270
  %v331 = vpack.c.b16 %v281, %v276
  %v332 = vpack.c.b16 %v282, %v277
  %v333 = vpack.c.b16 %v283, %v278
  %v334 = vpack.c.b16 %v284, %v279
  %v335 = vpack.c.b16 %v285, %v280
  %v336 = vpack.c.b16 %v291, %v286
  %v337 = vpack.c.b16 %v292, %v287
  %v338 = vpack.c.b16 %v293, %v288
  %v339 = vpack.c.b16 %v294, %v289
  %v340 = vpack.c.b16 %v295, %v290
  %v466 = vunpack.c.l.b16 %v68
  %v467 = vunpack.c.l.b16 %v69
  %v468 = vunpack.c.l.b16 %v70
  %v469 = vunpack.c.l.b16 %v71
  %v470 = vunpack.c.l.b16 %v72
  %v471 = vunpack.c.l.b16 %v73
  %v472 = vunpack.c.l.b16 %v74
  %v473 = vunpack.c.l.b16 %v75
  %v474 = vunpack.c.l.b16 %v76
  %v475 = vunpack.c.l.b16 %v77
  %v476 = vunpack.c.l.b16 %v78
  %v477 = vunpack.c.l.b16 %v79
  %v478 = vunpack.c.l.b16 %v80
  %v479 = vunpack.c.l.b16 %v81
  %v480 = vunpack.c.l.b16 %v82
  %v481 = vunpack.c.l.b16 %v83
  %v482 = vunpack.c.l.b16 %v84
  %v483 = vunpack.c.l.b16 %v85
  %v484 = vunpack.c.l.b16 %v86
  %v485 = vunpack.c.l.b16 %v87
  %v486 = vunpack.c.l.b16 %v88
  %v487 = vunpack.c.l.b16 %v89
  %v488 = vunpack.c.l.b16 %v90
  %v489 = vunpack.c.l.b16 %v91
  %v490 = vunpack.c.l.b16 %v92
  %v491 = vunpack.c.l.b16 %v93
  %v492 = vunpack.c.l.b16 %v94
  %v493 = vunpack.c.l.b16 %v95
  %v494 = vunpack.c.l.b16 %v96
  %v495 = vunpack.c.l.b16 %v97
  %v496 = vunpack.c.l.b16 %v98
  %v497 = vunpack.c.l.b16 %v99
  %v498 = vunpack.c.l.b16 %v100
  %v499 = vunpack.c.l.b16 %v101
  %v500 = vunpack.c.l.b16 %v102
  %v501 = vunpack.c.l.b16 %v103
  %v502 = vunpack.c.l.b16 %v104
  %v503 = vunpack.c.l.b16 %v105
  %v504 = vunpack.c.l.b16 %v106
  %v505 = vunpack.c.l.b16 %v107
  %v506 = vunpack.c.l.b16 %v108
  %v507 = vunpack.c.l.b16 %v109
  %v508 = vunpack.c.l.b16 %v110
  %v509 = vunpack.c.l.b16 %v111
  %v510 = vunpack.c.l.b16 %v112
  %v511 = vunpack.c.l.b16 %v113
  %v512 = vunpack.c.l.b16 %v114
  %v513 = vunpack.c.l.b16 %v115
  %v514 = vunpack.c.l.b16 %v116
  %v515 = vunpack.c.l.b16 %v117
  %v516 = vunpack.c.l.b16 %v118
  %v517 = vunpack.c.l.b16 %v119
  %v518 = vunpack.c.l.b16 %v120
  %v519 = vunpack.c.l.b16 %v121
  %v520 = vunpack.c.l.b16 %v122
  %v521 = vunpack.c.l.b16 %v123
  %v522 = vunpack.c.l.b16 %v124
  %v523 = vunpack.c.l.b16 %v125
  %v524 = vunpack.c.l.b16 %v126
  %v525 = vunpack.c.l.b16 %v127
  %v526 = vunpack.c.l.b16 %v128
  %v527 = vunpack.c.l.b16 %v129
  %v528 = vunpack.c.l.b16 %v130
  %v529 = vunpack.c.l.b16 %v131
  %v530 = vunpack.c.l.b16 %v132
  %v531 = vunpack.c.l.b16 %v133
  %v532 = vunpack.c.l.b16 %v134
  %v533 = vunpack.c.l.b16 %v135
  %v534 = vunpack.c.l.b16 %v136
  %v535 = vunpack.c.l.b16 %v137
  %v536 = vunpack.c.l.b16 %v138
  %v537 = vunpack.c.l.b16 %v139
  %v538 = vunpack.c.l.b16 %v140
  %v539 = vunpack.c.l.b16 %v141
  %v540 = vunpack.c.l.b16 %v142
  %v541 = vunpack.c.l.b16 %v143
  %v542 = vunpack.c.l.b16 %v144
  %v543 = vunpack.c.l.b16 %v145
  %v544 = vunpack.c.l.b16 %v146
  %v545 = vunpack.c.l.b16 %v147
  %v546 = vpack.c.b16 %v467, %v466
  %v547 = vpack.c.b16 %v469, %v468
  %v548 = vpack.c.b16 %v471, %v470
  %v549 = vpack.c.b16 %v473, %v472
  %v550 = vpack.c.b16 %v475, %v474
  %v551 = vpack.c.b16 %v477, %v476
  %v552 = vpack.c.b16 %v479, %v478
  %v553 = vpack.c.b16 %v481, %v480
  %v554 = vpack.c.b16 %v483, %v482
  %v555 = vpack.c.b16 %v485, %v484
  %v556 = vpack.c.b16 %v487, %v486
  %v557 = vpack.c.b16 %v489, %v488
  %v558 = vpack.c.b16 %v491, %v490
  %v559 = vpack.c.b16 %v493, %v492
  %v560 = vpack.c.b16 %v495, %v494
  %v561 = vpack.c.b16 %v497, %v496
  %v562 = vpack.c.b16 %v499, %v498
  %v563 = vpack.c.b16 %v501, %v500
  %v564 = vpack.c.b16 %v503, %v502
  %v565 = vpack.c.b16 %v505, %v504
  %v566 = vpack.c.b16 %v507, %v506
  %v567 = vpack.c.b16 %v509, %v508
  %v568 = vpack.c.b16 %v511, %v510
  %v569 = vpack.c.b16 %v513, %v512
  %v570 = vpack.c.b16 %v515, %v514
  %v571 = vpack.c.b16 %v517, %v516
  %v572 = vpack.c.b16 %v519, %v518
  %v573 = vpack.c.b16 %v521, %v520
  %v574 = vpack.c.b16 %v523, %v522
  %v575 = vpack.c.b16 %v525, %v524
  %v576 = vpack.c.b16 %v527, %v526
  %v577 = vpack.c.b16 %v529, %v528
  %v578 = vpack.c.b16 %v531, %v530
  %v579 = vpack.c.b16 %v533, %v532
  %v580 = vpack.c.b16 %v535, %v534
  %v581 = vpack.c.b16 %v537, %v536
  %v582 = vpack.c.b16 %v539, %v538
  %v583 = vpack.c.b16 %v541, %v540
  %v584 = vpack.c.b16 %v543, %v542
  %v585 = vpack.c.b16 %v545, %v544
  %626 = vmatpush.bf16.msra.mxu0 %v553
  %627 = vmatpush.bf16.msra.mxu0 %v552
  %628 = vmatpush.bf16.msra.mxu0 %v551
  %629 = vmatpush.bf16.msra.mxu0 %v550
  %630 = vmatpush.bf16.msra.mxu0 %v549
  %631 = vmatpush.bf16.msra.mxu0 %v548
  %632 = vmatpush.bf16.msra.mxu0 %v547
  %633 = vmatpush.bf16.msra.mxu0 %v546
  %634 = vmatmul.bf16.gmra.mxu0 %v296
  %v635 = vpop.f32.mrf.mxu0
  %v636 = vadd.f32 %v150, %v635
  %v637 = vpop.f32.mrf.mxu0
  %v638 = vadd.f32 %v150, %v637
  %639 = vmatmul.bf16.gmra.mxu0 %v301
  %v640 = vpop.f32.mrf.mxu0
  %v641 = vadd.f32 %v150, %v640
  %v642 = vpop.f32.mrf.mxu0
  %v643 = vadd.f32 %v150, %v642
  %644 = vmatmul.bf16.gmra.mxu0 %v306
  %v645 = vpop.f32.mrf.mxu0
  %v646 = vadd.f32 %v150, %v645
  %v647 = vpop.f32.mrf.mxu0
  %v648 = vadd.f32 %v150, %v647
  %649 = vmatmul.bf16.gmra.mxu0 %v311
  %v650 = vpop.f32.mrf.mxu0
  %v651 = vadd.f32 %v150, %v650
  %v652 = vpop.f32.mrf.mxu0
  %v653 = vadd.f32 %v150, %v652
  %654 = vmatmul.bf16.gmra.mxu0 %v316
  %v655 = vpop.f32.mrf.mxu0
  %v656 = vadd.f32 %v150, %v655
  %v657 = vpop.f32.mrf.mxu0
  %v658 = vadd.f32 %v150, %v657
  %659 = vmatmul.bf16.gmra.mxu0 %v321
  %v660 = vpop.f32.mrf.mxu0
  %v661 = vadd.f32 %v150, %v660
  %v662 = vpop.f32.mrf.mxu0
  %v663 = vadd.f32 %v150, %v662
  %664 = vmatmul.bf16.gmra.mxu0 %v326
  %v665 = vpop.f32.mrf.mxu0
  %v666 = vadd.f32 %v150, %v665
  %v667 = vpop.f32.mrf.mxu0
  %v668 = vadd.f32 %v150, %v667
  %669 = vmatmul.bf16.gmra.mxu0 %v331
  %v670 = vpop.f32.mrf.mxu0
  %v671 = vadd.f32 %v150, %v670
  %v672 = vpop.f32.mrf.mxu0
  %v673 = vadd.f32 %v150, %v672
  %674 = vmatmul.bf16.gmra.mxu0 %v336
  %v675 = vpop.f32.mrf.mxu0
  %v676 = vadd.f32 %v150, %v675
  %v677 = vpop.f32.mrf.mxu0
  %v678 = vadd.f32 %v150, %v677
  %679 = vdwg.mxu0
  %680 = vmatpush.bf16.msra.mxu0 %v561
  %681 = vmatpush.bf16.msra.mxu0 %v560
  %682 = vmatpush.bf16.msra.mxu0 %v559
  %683 = vmatpush.bf16.msra.mxu0 %v558
  %684 = vmatpush.bf16.msra.mxu0 %v557
  %685 = vmatpush.bf16.msra.mxu0 %v556
  %686 = vmatpush.bf16.msra.mxu0 %v555
  %687 = vmatpush.bf16.msra.mxu0 %v554
  %688 = vmatmul.bf16.gmra.mxu0 %v297
  %v689 = vpop.f32.mrf.mxu0
  %v690 = vadd.f32 %v636, %v689
  %v691 = vpop.f32.mrf.mxu0
  %v692 = vadd.f32 %v638, %v691
  %693 = vmatmul.bf16.gmra.mxu0 %v302
  %v694 = vpop.f32.mrf.mxu0
  %v695 = vadd.f32 %v641, %v694
  %v696 = vpop.f32.mrf.mxu0
  %v697 = vadd.f32 %v643, %v696
  %698 = vmatmul.bf16.gmra.mxu0 %v307
  %v699 = vpop.f32.mrf.mxu0
  %v700 = vadd.f32 %v646, %v699
  %v701 = vpop.f32.mrf.mxu0
  %v702 = vadd.f32 %v648, %v701
  %703 = vmatmul.bf16.gmra.mxu0 %v312
  %v704 = vpop.f32.mrf.mxu0
  %v705 = vadd.f32 %v651, %v704
  %v706 = vpop.f32.mrf.mxu0
  %v707 = vadd.f32 %v653, %v706
  %708 = vmatmul.bf16.gmra.mxu0 %v317
  %v709 = vpop.f32.mrf.mxu0
  %v710 = vadd.f32 %v656, %v709
  %v711 = vpop.f32.mrf.mxu0
  %v712 = vadd.f32 %v658, %v711
  %713 = vmatmul.bf16.gmra.mxu0 %v322
  %v714 = vpop.f32.mrf.mxu0
  %v715 = vadd.f32 %v661, %v714
  %v716 = vpop.f32.mrf.mxu0
  %v717 = vadd.f32 %v663, %v716
  %718 = vmatmul.bf16.gmra.mxu0 %v327
  %v719 = vpop.f32.mrf.mxu0
  %v720 = vadd.f32 %v666, %v719
  %v721 = vpop.f32.mrf.mxu0
  %v722 = vadd.f32 %v668, %v721
  %723 = vmatmul.bf16.gmra.mxu0 %v332
  %v724 = vpop.f32.mrf.mxu0
  %v725 = vadd.f32 %v671, %v724
  %v726 = vpop.f32.mrf.mxu0
  %v727 = vadd.f32 %v673, %v726
  %728 = vmatmul.bf16.gmra.mxu0 %v337
  %v729 = vpop.f32.mrf.mxu0
  %v730 = vadd.f32 %v676, %v729
  %v731 = vpop.f32.mrf.mxu0
  %v732 = vadd.f32 %v678, %v731
  %733 = vdwg.mxu0
  %734 = vmatpush.bf16.msra.mxu0 %v569
  %735 = vmatpush.bf16.msra.mxu0 %v568
  %736 = vmatpush.bf16.msra.mxu0 %v567
  %737 = vmatpush.bf16.msra.mxu0 %v566
  %738 = vmatpush.bf16.msra.mxu0 %v565
  %739 = vmatpush.bf16.msra.mxu0 %v564
  %740 = vmatpush.bf16.msra.mxu0 %v563
  %741 = vmatpush.bf16.msra.mxu0 %v562
  %742 = vmatmul.bf16.gmra.mxu0 %v298
  %v743 = vpop.f32.mrf.mxu0
  %v744 = vadd.f32 %v690, %v743
  %v745 = vpop.f32.mrf.mxu0
  %v746 = vadd.f32 %v692, %v745
  %747 = vmatmul.bf16.gmra.mxu0 %v303
  %v748 = vpop.f32.mrf.mxu0
  %v749 = vadd.f32 %v695, %v748
  %v750 = vpop.f32.mrf.mxu0
  %v751 = vadd.f32 %v697, %v750
  %752 = vmatmul.bf16.gmra.mxu0 %v308
  %v753 = vpop.f32.mrf.mxu0
  %v754 = vadd.f32 %v700, %v753
  %v755 = vpop.f32.mrf.mxu0
  %v756 = vadd.f32 %v702, %v755
  %757 = vmatmul.bf16.gmra.mxu0 %v313
  %v758 = vpop.f32.mrf.mxu0
  %v759 = vadd.f32 %v705, %v758
  %v760 = vpop.f32.mrf.mxu0
  %v761 = vadd.f32 %v707, %v760
  %762 = vmatmul.bf16.gmra.mxu0 %v318
  %v763 = vpop.f32.mrf.mxu0
  %v764 = vadd.f32 %v710, %v763
  %v765 = vpop.f32.mrf.mxu0
  %v766 = vadd.f32 %v712, %v765
  %767 = vmatmul.bf16.gmra.mxu0 %v323
  %v768 = vpop.f32.mrf.mxu0
  %v769 = vadd.f32 %v715, %v768
  %v770 = vpop.f32.mrf.mxu0
  %v771 = vadd.f32 %v717, %v770
  %772 = vmatmul.bf16.gmra.mxu0 %v328
  %v773 = vpop.f32.mrf.mxu0
  %v774 = vadd.f32 %v720, %v773
  %v775 = vpop.f32.mrf.mxu0
  %v776 = vadd.f32 %v722, %v775
  %777 = vmatmul.bf16.gmra.mxu0 %v333
  %v778 = vpop.f32.mrf.mxu0
  %v779 = vadd.f32 %v725, %v778
  %v780 = vpop.f32.mrf.mxu0
  %v781 = vadd.f32 %v727, %v780
  %782 = vmatmul.bf16.gmra.mxu0 %v338
  %v783 = vpop.f32.mrf.mxu0
  %v784 = vadd.f32 %v730, %v783
  %v785 = vpop.f32.mrf.mxu0
  %v786 = vadd.f32 %v732, %v785
  %787 = vdwg.mxu0
  %788 = vmatpush.bf16.msra.mxu0 %v577
  %789 = vmatpush.bf16.msra.mxu0 %v576
  %790 = vmatpush.bf16.msra.mxu0 %v575
  %791 = vmatpush.bf16.msra.mxu0 %v574
  %792 = vmatpush.bf16.msra.mxu0 %v573
  %793 = vmatpush.bf16.msra.mxu0 %v572
  %794 = vmatpush.bf16.msra.mxu0 %v571
  %795 = vmatpush.bf16.msra.mxu0 %v570
  %796 = vmatmul.bf16.gmra.mxu0 %v299
  %v797 = vpop.f32.mrf.mxu0
  %v798 = vadd.f32 %v744, %v797
  %v799 = vpop.f32.mrf.mxu0
  %v800 = vadd.f32 %v746, %v799
  %801 = vmatmul.bf16.gmra.mxu0 %v304
  %v802 = vpop.f32.mrf.mxu0
  %v803 = vadd.f32 %v749, %v802
  %v804 = vpop.f32.mrf.mxu0
  %v805 = vadd.f32 %v751, %v804
  %806 = vmatmul.bf16.gmra.mxu0 %v309
  %v807 = vpop.f32.mrf.mxu0
  %v808 = vadd.f32 %v754, %v807
  %v809 = vpop.f32.mrf.mxu0
  %v810 = vadd.f32 %v756, %v809
  %811 = vmatmul.bf16.gmra.mxu0 %v314
  %v812 = vpop.f32.mrf.mxu0
  %v813 = vadd.f32 %v759, %v812
  %v814 = vpop.f32.mrf.mxu0
  %v815 = vadd.f32 %v761, %v814
  %816 = vmatmul.bf16.gmra.mxu0 %v319
  %v817 = vpop.f32.mrf.mxu0
  %v818 = vadd.f32 %v764, %v817
  %v819 = vpop.f32.mrf.mxu0
  %v820 = vadd.f32 %v766, %v819
  %821 = vmatmul.bf16.gmra.mxu0 %v324
  %v822 = vpop.f32.mrf.mxu0
  %v823 = vadd.f32 %v769, %v822
  %v824 = vpop.f32.mrf.mxu0
  %v825 = vadd.f32 %v771, %v824
  %826 = vmatmul.bf16.gmra.mxu0 %v329
  %v827 = vpop.f32.mrf.mxu0
  %v828 = vadd.f32 %v774, %v827
  %v829 = vpop.f32.mrf.mxu0
  %v830 = vadd.f32 %v776, %v829
  %831 = vmatmul.bf16.gmra.mxu0 %v334
  %v832 = vpop.f32.mrf.mxu0
  %v833 = vadd.f32 %v779, %v832
  %v834 = vpop.f32.mrf.mxu0
  %v835 = vadd.f32 %v781, %v834
  %836 = vmatmul.bf16.gmra.mxu0 %v339
  %v837 = vpop.f32.mrf.mxu0
  %v838 = vadd.f32 %v784, %v837
  %v839 = vpop.f32.mrf.mxu0
  %v840 = vadd.f32 %v786, %v839
  %841 = vdwg.mxu0
  %842 = vmatpush.bf16.msra.mxu0 %v585
  %843 = vmatpush.bf16.msra.mxu0 %v584
  %844 = vmatpush.bf16.msra.mxu0 %v583
  %845 = vmatpush.bf16.msra.mxu0 %v582
  %846 = vmatpush.bf16.msra.mxu0 %v581
  %847 = vmatpush.bf16.msra.mxu0 %v580
  %848 = vmatpush.bf16.msra.mxu0 %v579
  %849 = vmatpush.bf16.msra.mxu0 %v578
  %850 = vmatmul.bf16.gmra.mxu0 %v300
  %v851 = vpop.f32.mrf.mxu0
  %v852 = vadd.f32 %v798, %v851
  %v853 = vpop.f32.mrf.mxu0
  %v854 = vadd.f32 %v800, %v853
  %855 = vmatmul.bf16.gmra.mxu0 %v305
  %v856 = vpop.f32.mrf.mxu0
  %v857 = vadd.f32 %v803, %v856
  %v858 = vpop.f32.mrf.mxu0
  %v859 = vadd.f32 %v805, %v858
  %860 = vmatmul.bf16.gmra.mxu0 %v310
  %v861 = vpop.f32.mrf.mxu0
  %v862 = vadd.f32 %v808, %v861
  %v863 = vpop.f32.mrf.mxu0
  %v864 = vadd.f32 %v810, %v863
  %865 = vmatmul.bf16.gmra.mxu0 %v315
  %v866 = vpop.f32.mrf.mxu0
  %v867 = vadd.f32 %v813, %v866
  %v868 = vpop.f32.mrf.mxu0
  %v869 = vadd.f32 %v815, %v868
  %870 = vmatmul.bf16.gmra.mxu0 %v320
  %v871 = vpop.f32.mrf.mxu0
  %v872 = vadd.f32 %v818, %v871
  %v873 = vpop.f32.mrf.mxu0
  %v874 = vadd.f32 %v820, %v873
  %875 = vmatmul.bf16.gmra.mxu0 %v325
  %v876 = vpop.f32.mrf.mxu0
  %v877 = vadd.f32 %v823, %v876
  %v878 = vpop.f32.mrf.mxu0
  %v879 = vadd.f32 %v825, %v878
  %880 = vmatmul.bf16.gmra.mxu0 %v330
  %v881 = vpop.f32.mrf.mxu0
  %v882 = vadd.f32 %v828, %v881
  %v883 = vpop.f32.mrf.mxu0
  %v884 = vadd.f32 %v830, %v883
  %885 = vmatmul.bf16.gmra.mxu0 %v335
  %v886 = vpop.f32.mrf.mxu0
  %v887 = vadd.f32 %v833, %v886
  %v888 = vpop.f32.mrf.mxu0
  %v889 = vadd.f32 %v835, %v888
  %890 = vmatmul.bf16.gmra.mxu0 %v340
  %v891 = vpop.f32.mrf.mxu0
  %v892 = vadd.f32 %v838, %v891
  %v893 = vpop.f32.mrf.mxu0
  %v894 = vadd.f32 %v840, %v893
  %895 = vdwg.mxu0
  %v896 = vmax.f32 %v852, 0.0
  %v897 = vmax.f32 %v854, 0.0
  %v898 = vmax.f32 %v857, 0.0
  %v899 = vmax.f32 %v859, 0.0
  %v900 = vmax.f32 %v862, 0.0
  %v901 = vmax.f32 %v864, 0.0
  %v902 = vmax.f32 %v867, 0.0
  %v903 = vmax.f32 %v869, 0.0
  %v904 = vmax.f32 %v872, 0.0
  %v905 = vmax.f32 %v874, 0.0
  %v906 = vmax.f32 %v877, 0.0
  %v907 = vmax.f32 %v879, 0.0
  %v908 = vmax.f32 %v882, 0.0
  %v909 = vmax.f32 %v884, 0.0
  %v910 = vmax.f32 %v887, 0.0
  %v911 = vmax.f32 %v889, 0.0
  %v912 = vmax.f32 %v892, 0.0
  %v913 = vmax.f32 %v894, 0.0
  %v914 = vpack.c.bf16 %v896, %v896
  %v915 = vpack.c.bf16 %v897, %v897
  %v916 = vpack.c.bf16 %v898, %v898
  %v917 = vpack.c.bf16 %v899, %v899
  %v918 = vpack.c.bf16 %v900, %v900
  %v919 = vpack.c.bf16 %v901, %v901
  %v920 = vpack.c.bf16 %v902, %v902
  %v921 = vpack.c.bf16 %v903, %v903
  %v922 = vpack.c.bf16 %v904, %v904
  %v923 = vpack.c.bf16 %v905, %v905
  %v924 = vpack.c.bf16 %v906, %v906
  %v925 = vpack.c.bf16 %v907, %v907
  %v926 = vpack.c.bf16 %v908, %v908
  %v927 = vpack.c.bf16 %v909, %v909
  %v928 = vpack.c.bf16 %v910, %v910
  %v929 = vpack.c.bf16 %v911, %v911
  %v930 = vpack.c.bf16 %v912, %v912
  %v931 = vpack.c.bf16 %v913, %v913
  %932 = vst [vmem:[%s3] sm:$0xf] %v914
  %933 = vst [vmem:[%s3 + $0x4] sm:$0xf] %v915
  %934 = vst [vmem:[%s3 + $0x8] sm:$0xf] %v916
  %935 = vst [vmem:[%s3 + $0xc] sm:$0xf] %v917
  %936 = vst [vmem:[%s3 + $0x10] sm:$0xf] %v918
  %937 = vst [vmem:[%s3 + $0x14] sm:$0xf] %v919
  %938 = vst [vmem:[%s3 + $0x18] sm:$0xf] %v920
  %939 = vst [vmem:[%s3 + $0x1c] sm:$0xf] %v921
  %940 = vst [vmem:[%s3 + $0x20] sm:$0xf] %v922
  %941 = vst [vmem:[%s3 + $0x24] sm:$0xf] %v923
  %942 = vst [vmem:[%s3 + $0x28] sm:$0xf] %v924
  %943 = vst [vmem:[%s3 + $0x2c] sm:$0xf] %v925
  %944 = vst [vmem:[%s3 + $0x30] sm:$0xf] %v926
  %945 = vst [vmem:[%s3 + $0x34] sm:$0xf] %v927
  %946 = vst [vmem:[%s3 + $0x38] sm:$0xf] %v928
  %947 = vst [vmem:[%s3 + $0x3c] sm:$0xf] %v929
  %948 = vst [vmem:[%s3 + $0x40] sm:$0xf] %v930
  %949 = vst [vmem:[%s3 + $0x44] sm:$0xf] %v931
  // Predicated region
  $region14: #{encoder_cnn_forward.8} parent=0 // pred_check
    _
  $region15: #{encoder_cnn_forward.8} parent=0 // pred_check_branch
    %951 = sbr.rel (0) target = $region17
  $region16: #{encoder_cnn_forward.8} parent=0 // pred_region
    _
  $region17: #{encoder_cnn_forward.8} parent=0 // pred_fallthru
    _
  // Predicated region
  $region18: #{encoder_cnn_forward.8} parent=0 // pred_check
    _
  $region19: #{encoder_cnn_forward.8} parent=0 // pred_check_branch
    %953 = sbr.rel (0) target = $region21
  $region20: #{encoder_cnn_forward.8} parent=0 // pred_region
    _
  $region21: #{encoder_cnn_forward.8} parent=0 // pred_fallthru
    _

// kernel: encoder_cnn_forward.9
$region0: #{encoder_cnn_forward.9}
  #allocation0 [shape = 'u32[]', space=smem, size = 0x4, offset = 0x4, fixed_abs, tag = 'smem constant byte address 0x4 - core index']
  #allocation1 [shape = 'u32[72,128]{1,0:T(1,128)}', space=vmem, size = 0x9000, scoped, tag = 'internal scratch']
  %s0 = inlined_call_operand.vmem [shape: bf16[16,1152], index: 0, kind: input, shape index: {}]
  %s1 = inlined_call_operand.vmem [shape: bf16[1152,256], index: 1, kind: input, shape index: {}]
  %s2 = inlined_call_operand.vmem [shape: f32[1,256], index: 2, kind: input, shape index: {}]
  %s3 = inlined_call_operand.vmem [shape: bf16[16,256], index: 3, kind: output, shape index: {}]
  %s4 = sld [smem:[#allocation0]]
  $region22: #{encoder_cnn_forward.9} parent=0
    _
  %s6 = ssub.s32 1, %s4
  %s7 = scalar_select 0, %s6, %s4
  // Predicated region
  $region2: #{encoder_cnn_forward.9} parent=0 // pred_check
    _
  $region3: #{encoder_cnn_forward.9} parent=0 // pred_check_branch
    %9 = sbr.rel (0) target = $region5
  $region4: #{encoder_cnn_forward.9} parent=0 // pred_region
    _
  $region5: #{encoder_cnn_forward.9} parent=0 // pred_fallthru
    _
  // Predicated region
  $region6: #{encoder_cnn_forward.9} parent=0 // pred_check
    _
  $region7: #{encoder_cnn_forward.9} parent=0 // pred_check_branch
    %11 = sbr.rel (0) target = $region9
  $region8: #{encoder_cnn_forward.9} parent=0 // pred_region
    _
  $region9: #{encoder_cnn_forward.9} parent=0 // pred_fallthru
    _
  // Predicated region
  $region10: #{encoder_cnn_forward.9} parent=0 // pred_check
    _
  $region11: #{encoder_cnn_forward.9} parent=0 // pred_check_branch
    %13 = sbr.rel (0) target = $region13
  $region12: #{encoder_cnn_forward.9} parent=0 // pred_region
    _
  $region13: #{encoder_cnn_forward.9} parent=0 // pred_fallthru
    _
  %v14 = vld [vmem:[%s0] sm:$0xff]
  %v15 = vld [vmem:[%s0 + $0x8] sm:$0xff]
  %v16 = vld [vmem:[%s0 + $0x10] sm:$0xff]
  %v17 = vld [vmem:[%s0 + $0x18] sm:$0xff]
  %v18 = vld [vmem:[%s0 + $0x20] sm:$0xf]
  %v19 = vld [vmem:[%s0 + $0x24] sm:$0xff]
  %v20 = vld [vmem:[%s0 + $0x2c] sm:$0xff]
  %v21 = vld [vmem:[%s0 + $0x34] sm:$0xff]
  %v22 = vld [vmem:[%s0 + $0x3c] sm:$0xff]
  %v23 = vld [vmem:[%s0 + $0x44] sm:$0xf]
  %v24 = vld [vmem:[%s1] sm:$0xff]
  %v25 = vld [vmem:[%s1 + $0x8] sm:$0xff]
  %v26 = vld [vmem:[%s1 + $0x10] sm:$0xff]
  %v27 = vld [vmem:[%s1 + $0x18] sm:$0xff]
  %v28 = vld [vmem:[%s1 + $0x20] sm:$0xff]
  %v29 = vld [vmem:[%s1 + $0x28] sm:$0xff]
  %v30 = vld [vmem:[%s1 + $0x30] sm:$0xff]
  %v31 = vld [vmem:[%s1 + $0x38] sm:$0xff]
  %v32 = vld [vmem:[%s1 + $0x40] sm:$0xff]
  %v33 = vld [vmem:[%s1 + $0x48] sm:$0xff]
  %v34 = vld [vmem:[%s1 + $0x50] sm:$0xff]
  %v35 = vld [vmem:[%s1 + $0x58] sm:$0xff]
  %v36 = vld [vmem:[%s1 + $0x60] sm:$0xff]
  %v37 = vld [vmem:[%s1 + $0x68] sm:$0xff]
  %v38 = vld [vmem:[%s1 + $0x70] sm:$0xff]
  %v39 = vld [vmem:[%s1 + $0x78] sm:$0xff]
  %v40 = vld [vmem:[%s1 + $0x80] sm:$0xff]
  %v41 = vld [vmem:[%s1 + $0x88] sm:$0xff]
  %v42 = vld [vmem:[%s1 + $0x90] sm:$0xff]
  %v43 = vld [vmem:[%s1 + $0x98] sm:$0xff]
  %v44 = vld [vmem:[%s1 + $0xa0] sm:$0xff]
  %v45 = vld [vmem:[%s1 + $0xa8] sm:$0xff]
  %v46 = vld [vmem:[%s1 + $0xb0] sm:$0xff]
  %v47 = vld [vmem:[%s1 + $0xb8] sm:$0xff]
  %v48 = vld [vmem:[%s1 + $0xc0] sm:$0xff]
  %v49 = vld [vmem:[%s1 + $0xc8] sm:$0xff]
  %v50 = vld [vmem:[%s1 + $0xd0] sm:$0xff]
  %v51 = vld [vmem:[%s1 + $0xd8] sm:$0xff]
  %v52 = vld [vmem:[%s1 + $0xe0] sm:$0xff]
  %v53 = vld [vmem:[%s1 + $0xe8] sm:$0xff]
  %v54 = vld [vmem:[%s1 + $0xf0] sm:$0xff]
  %v55 = vld [vmem:[%s1 + $0xf8] sm:$0xff]
  %v56 = vld [vmem:[%s1 + $0x100] sm:$0xff]
  %v57 = vld [vmem:[%s1 + $0x108] sm:$0xff]
  %v58 = vld [vmem:[%s1 + $0x110] sm:$0xff]
  %v59 = vld [vmem:[%s1 + $0x118] sm:$0xff]
  %v60 = vld [vmem:[%s1 + $0x120] sm:$0xff]
  %v61 = vld [vmem:[%s1 + $0x128] sm:$0xff]
  %v62 = vld [vmem:[%s1 + $0x130] sm:$0xff]
  %v63 = vld [vmem:[%s1 + $0x138] sm:$0xff]
  %v64 = vld [vmem:[%s1 + $0x140] sm:$0xff]
  %v65 = vld [vmem:[%s1 + $0x148] sm:$0xff]
  %v66 = vld [vmem:[%s1 + $0x150] sm:$0xff]
  %v67 = vld [vmem:[%s1 + $0x158] sm:$0xff]
  %v68 = vld [vmem:[%s1 + $0x160] sm:$0xff]
  %v69 = vld [vmem:[%s1 + $0x168] sm:$0xff]
  %v70 = vld [vmem:[%s1 + $0x170] sm:$0xff]
  %v71 = vld [vmem:[%s1 + $0x178] sm:$0xff]
  %v72 = vld [vmem:[%s1 + $0x180] sm:$0xff]
  %v73 = vld [vmem:[%s1 + $0x188] sm:$0xff]
  %v74 = vld [vmem:[%s1 + $0x190] sm:$0xff]
  %v75 = vld [vmem:[%s1 + $0x198] sm:$0xff]
  %v76 = vld [vmem:[%s1 + $0x1a0] sm:$0xff]
  %v77 = vld [vmem:[%s1 + $0x1a8] sm:$0xff]
  %v78 = vld [vmem:[%s1 + $0x1b0] sm:$0xff]
  %v79 = vld [vmem:[%s1 + $0x1b8] sm:$0xff]
  %v80 = vld [vmem:[%s1 + $0x1c0] sm:$0xff]
  %v81 = vld [vmem:[%s1 + $0x1c8] sm:$0xff]
  %v82 = vld [vmem:[%s1 + $0x1d0] sm:$0xff]
  %v83 = vld [vmem:[%s1 + $0x1d8] sm:$0xff]
  %v84 = vld [vmem:[%s1 + $0x1e0] sm:$0xff]
  %v85 = vld [vmem:[%s1 + $0x1e8] sm:$0xff]
  %v86 = vld [vmem:[%s1 + $0x1f0] sm:$0xff]
  %v87 = vld [vmem:[%s1 + $0x1f8] sm:$0xff]
  %v88 = vld [vmem:[%s1 + $0x200] sm:$0xff]
  %v89 = vld [vmem:[%s1 + $0x208] sm:$0xff]
  %v90 = vld [vmem:[%s1 + $0x210] sm:$0xff]
  %v91 = vld [vmem:[%s1 + $0x218] sm:$0xff]
  %v92 = vld [vmem:[%s1 + $0x220] sm:$0xff]
  %v93 = vld [vmem:[%s1 + $0x228] sm:$0xff]
  %v94 = vld [vmem:[%s1 + $0x230] sm:$0xff]
  %v95 = vld [vmem:[%s1 + $0x238] sm:$0xff]
  %v96 = vld [vmem:[%s1 + $0x240] sm:$0xff]
  %v97 = vld [vmem:[%s1 + $0x248] sm:$0xff]
  %v98 = vld [vmem:[%s1 + $0x250] sm:$0xff]
  %v99 = vld [vmem:[%s1 + $0x258] sm:$0xff]
  %v100 = vld [vmem:[%s1 + $0x260] sm:$0xff]
  %v101 = vld [vmem:[%s1 + $0x268] sm:$0xff]
  %v102 = vld [vmem:[%s1 + $0x270] sm:$0xff]
  %v103 = vld [vmem:[%s1 + $0x278] sm:$0xff]
  %v104 = vld [vmem:[%s1 + $0x280] sm:$0xff]
  %v105 = vld [vmem:[%s1 + $0x288] sm:$0xff]
  %v106 = vld [vmem:[%s1 + $0x290] sm:$0xff]
  %v107 = vld [vmem:[%s1 + $0x298] sm:$0xff]
  %v108 = vld [vmem:[%s1 + $0x2a0] sm:$0xff]
  %v109 = vld [vmem:[%s1 + $0x2a8] sm:$0xff]
  %v110 = vld [vmem:[%s1 + $0x2b0] sm:$0xff]
  %v111 = vld [vmem:[%s1 + $0x2b8] sm:$0xff]
  %v112 = vld [vmem:[%s1 + $0x2c0] sm:$0xff]
  %v113 = vld [vmem:[%s1 + $0x2c8] sm:$0xff]
  %v114 = vld [vmem:[%s1 + $0x2d0] sm:$0xff]
  %v115 = vld [vmem:[%s1 + $0x2d8] sm:$0xff]
  %v116 = vld [vmem:[%s1 + $0x2e0] sm:$0xff]
  %v117 = vld [vmem:[%s1 + $0x2e8] sm:$0xff]
  %v118 = vld [vmem:[%s1 + $0x2f0] sm:$0xff]
  %v119 = vld [vmem:[%s1 + $0x2f8] sm:$0xff]
  %v120 = vld [vmem:[%s1 + $0x300] sm:$0xff]
  %v121 = vld [vmem:[%s1 + $0x308] sm:$0xff]
  %v122 = vld [vmem:[%s1 + $0x310] sm:$0xff]
  %v123 = vld [vmem:[%s1 + $0x318] sm:$0xff]
  %v124 = vld [vmem:[%s1 + $0x320] sm:$0xff]
  %v125 = vld [vmem:[%s1 + $0x328] sm:$0xff]
  %v126 = vld [vmem:[%s1 + $0x330] sm:$0xff]
  %v127 = vld [vmem:[%s1 + $0x338] sm:$0xff]
  %v128 = vld [vmem:[%s1 + $0x340] sm:$0xff]
  %v129 = vld [vmem:[%s1 + $0x348] sm:$0xff]
  %v130 = vld [vmem:[%s1 + $0x350] sm:$0xff]
  %v131 = vld [vmem:[%s1 + $0x358] sm:$0xff]
  %v132 = vld [vmem:[%s1 + $0x360] sm:$0xff]
  %v133 = vld [vmem:[%s1 + $0x368] sm:$0xff]
  %v134 = vld [vmem:[%s1 + $0x370] sm:$0xff]
  %v135 = vld [vmem:[%s1 + $0x378] sm:$0xff]
  %v136 = vld [vmem:[%s1 + $0x380] sm:$0xff]
  %v137 = vld [vmem:[%s1 + $0x388] sm:$0xff]
  %v138 = vld [vmem:[%s1 + $0x390] sm:$0xff]
  %v139 = vld [vmem:[%s1 + $0x398] sm:$0xff]
  %v140 = vld [vmem:[%s1 + $0x3a0] sm:$0xff]
  %v141 = vld [vmem:[%s1 + $0x3a8] sm:$0xff]
  %v142 = vld [vmem:[%s1 + $0x3b0] sm:$0xff]
  %v143 = vld [vmem:[%s1 + $0x3b8] sm:$0xff]
  %v144 = vld [vmem:[%s1 + $0x3c0] sm:$0xff]
  %v145 = vld [vmem:[%s1 + $0x3c8] sm:$0xff]
  %v146 = vld [vmem:[%s1 + $0x3d0] sm:$0xff]
  %v147 = vld [vmem:[%s1 + $0x3d8] sm:$0xff]
  %v148 = vld [vmem:[%s1 + $0x3e0] sm:$0xff]
  %v149 = vld [vmem:[%s1 + $0x3e8] sm:$0xff]
  %v150 = vld [vmem:[%s1 + $0x3f0] sm:$0xff]
  %v151 = vld [vmem:[%s1 + $0x3f8] sm:$0xff]
  %v152 = vld [vmem:[%s1 + $0x400] sm:$0xff]
  %v153 = vld [vmem:[%s1 + $0x408] sm:$0xff]
  %v154 = vld [vmem:[%s1 + $0x410] sm:$0xff]
  %v155 = vld [vmem:[%s1 + $0x418] sm:$0xff]
  %v156 = vld [vmem:[%s1 + $0x420] sm:$0xff]
  %v157 = vld [vmem:[%s1 + $0x428] sm:$0xff]
  %v158 = vld [vmem:[%s1 + $0x430] sm:$0xff]
  %v159 = vld [vmem:[%s1 + $0x438] sm:$0xff]
  %v160 = vld [vmem:[%s1 + $0x440] sm:$0xff]
  %v161 = vld [vmem:[%s1 + $0x448] sm:$0xff]
  %v162 = vld [vmem:[%s1 + $0x450] sm:$0xff]
  %v163 = vld [vmem:[%s1 + $0x458] sm:$0xff]
  %v164 = vld [vmem:[%s1 + $0x460] sm:$0xff]
  %v165 = vld [vmem:[%s1 + $0x468] sm:$0xff]
  %v166 = vld [vmem:[%s1 + $0x470] sm:$0xff]
  %v167 = vld [vmem:[%s1 + $0x478] sm:$0xff]
  %v168 = vld [vmem:[%s2] sm:$0x3]
  %v170 = vperm.slane %v168, 0
  %v171 = vperm.slane %v168, 1
  %v184 = vunpack.c.l.b16 %v14
  %v185 = vunpack.c.h.b16 %v14
  %v186 = vunpack.c.l.b16 %v15
  %v187 = vunpack.c.h.b16 %v15
  %v188 = vunpack.c.l.b16 %v16
  %v189 = vunpack.c.h.b16 %v16
  %v190 = vunpack.c.l.b16 %v17
  %v191 = vunpack.c.h.b16 %v17
  %v192 = vunpack.c.l.b16 %v18
  %v193 = vunpack.c.l.b16 %v19
  %v194 = vunpack.c.h.b16 %v19
  %v195 = vunpack.c.l.b16 %v20
  %v196 = vunpack.c.h.b16 %v20
  %v197 = vunpack.c.l.b16 %v21
  %v198 = vunpack.c.h.b16 %v21
  %v199 = vunpack.c.l.b16 %v22
  %v200 = vunpack.c.h.b16 %v22
  %v201 = vunpack.c.l.b16 %v23
  %v202 = vpack.c.b16 %v193, %v184
  %v203 = vpack.c.b16 %v194, %v185
  %v204 = vpack.c.b16 %v195, %v186
  %v205 = vpack.c.b16 %v196, %v187
  %v206 = vpack.c.b16 %v197, %v188
  %v207 = vpack.c.b16 %v198, %v189
  %v208 = vpack.c.b16 %v199, %v190
  %v209 = vpack.c.b16 %v200, %v191
  %v210 = vpack.c.b16 %v201, %v192
  %v364 = vunpack.c.l.b16 %v24
  %v365 = vunpack.c.h.b16 %v24
  %v366 = vunpack.c.l.b16 %v25
  %v367 = vunpack.c.h.b16 %v25
  %v368 = vunpack.c.l.b16 %v26
  %v369 = vunpack.c.h.b16 %v26
  %v370 = vunpack.c.l.b16 %v27
  %v371 = vunpack.c.h.b16 %v27
  %v372 = vunpack.c.l.b16 %v28
  %v373 = vunpack.c.h.b16 %v28
  %v374 = vunpack.c.l.b16 %v29
  %v375 = vunpack.c.h.b16 %v29
  %v376 = vunpack.c.l.b16 %v30
  %v377 = vunpack.c.h.b16 %v30
  %v378 = vunpack.c.l.b16 %v31
  %v379 = vunpack.c.h.b16 %v31
  %v380 = vunpack.c.l.b16 %v32
  %v381 = vunpack.c.h.b16 %v32
  %v382 = vunpack.c.l.b16 %v33
  %v383 = vunpack.c.h.b16 %v33
  %v384 = vunpack.c.l.b16 %v34
  %v385 = vunpack.c.h.b16 %v34
  %v386 = vunpack.c.l.b16 %v35
  %v387 = vunpack.c.h.b16 %v35
  %v388 = vunpack.c.l.b16 %v36
  %v389 = vunpack.c.h.b16 %v36
  %v390 = vunpack.c.l.b16 %v37
  %v391 = vunpack.c.h.b16 %v37
  %v392 = vunpack.c.l.b16 %v38
  %v393 = vunpack.c.h.b16 %v38
  %v394 = vunpack.c.l.b16 %v39
  %v395 = vunpack.c.h.b16 %v39
  %v396 = vunpack.c.l.b16 %v40
  %v397 = vunpack.c.h.b16 %v40
  %v398 = vunpack.c.l.b16 %v41
  %v399 = vunpack.c.h.b16 %v41
  %v400 = vunpack.c.l.b16 %v42
  %v401 = vunpack.c.h.b16 %v42
  %v402 = vunpack.c.l.b16 %v43
  %v403 = vunpack.c.h.b16 %v43
  %v404 = vunpack.c.l.b16 %v44
  %v405 = vunpack.c.h.b16 %v44
  %v406 = vunpack.c.l.b16 %v45
  %v407 = vunpack.c.h.b16 %v45
  %v408 = vunpack.c.l.b16 %v46
  %v409 = vunpack.c.h.b16 %v46
  %v410 = vunpack.c.l.b16 %v47
  %v411 = vunpack.c.h.b16 %v47
  %v412 = vunpack.c.l.b16 %v48
  %v413 = vunpack.c.h.b16 %v48
  %v414 = vunpack.c.l.b16 %v49
  %v415 = vunpack.c.h.b16 %v49
  %v416 = vunpack.c.l.b16 %v50
  %v417 = vunpack.c.h.b16 %v50
  %v418 = vunpack.c.l.b16 %v51
  %v419 = vunpack.c.h.b16 %v51
  %v420 = vunpack.c.l.b16 %v52
  %v421 = vunpack.c.h.b16 %v52
  %v422 = vunpack.c.l.b16 %v53
  %v423 = vunpack.c.h.b16 %v53
  %v424 = vunpack.c.l.b16 %v54
  %v425 = vunpack.c.h.b16 %v54
  %v426 = vunpack.c.l.b16 %v55
  %v427 = vunpack.c.h.b16 %v55
  %v428 = vunpack.c.l.b16 %v56
  %v429 = vunpack.c.h.b16 %v56
  %v430 = vunpack.c.l.b16 %v57
  %v431 = vunpack.c.h.b16 %v57
  %v432 = vunpack.c.l.b16 %v58
  %v433 = vunpack.c.h.b16 %v58
  %v434 = vunpack.c.l.b16 %v59
  %v435 = vunpack.c.h.b16 %v59
  %v436 = vunpack.c.l.b16 %v60
  %v437 = vunpack.c.h.b16 %v60
  %v438 = vunpack.c.l.b16 %v61
  %v439 = vunpack.c.h.b16 %v61
  %v440 = vunpack.c.l.b16 %v62
  %v441 = vunpack.c.h.b16 %v62
  %v442 = vunpack.c.l.b16 %v63
  %v443 = vunpack.c.h.b16 %v63
  %v444 = vunpack.c.l.b16 %v64
  %v445 = vunpack.c.h.b16 %v64
  %v446 = vunpack.c.l.b16 %v65
  %v447 = vunpack.c.h.b16 %v65
  %v448 = vunpack.c.l.b16 %v66
  %v449 = vunpack.c.h.b16 %v66
  %v450 = vunpack.c.l.b16 %v67
  %v451 = vunpack.c.h.b16 %v67
  %v452 = vunpack.c.l.b16 %v68
  %v453 = vunpack.c.h.b16 %v68
  %v454 = vunpack.c.l.b16 %v69
  %v455 = vunpack.c.h.b16 %v69
  %v456 = vunpack.c.l.b16 %v70
  %v457 = vunpack.c.h.b16 %v70
  %v458 = vunpack.c.l.b16 %v71
  %v459 = vunpack.c.h.b16 %v71
  %v460 = vunpack.c.l.b16 %v72
  %v461 = vunpack.c.h.b16 %v72
  %v462 = vunpack.c.l.b16 %v73
  %v463 = vunpack.c.h.b16 %v73
  %v464 = vunpack.c.l.b16 %v74
  %v465 = vunpack.c.h.b16 %v74
  %v466 = vunpack.c.l.b16 %v75
  %v467 = vunpack.c.h.b16 %v75
  %v468 = vunpack.c.l.b16 %v76
  %v469 = vunpack.c.h.b16 %v76
  %v470 = vunpack.c.l.b16 %v77
  %v471 = vunpack.c.h.b16 %v77
  %v472 = vunpack.c.l.b16 %v78
  %v473 = vunpack.c.h.b16 %v78
  %v474 = vunpack.c.l.b16 %v79
  %v475 = vunpack.c.h.b16 %v79
  %v476 = vunpack.c.l.b16 %v80
  %v477 = vunpack.c.h.b16 %v80
  %v478 = vunpack.c.l.b16 %v81
  %v479 = vunpack.c.h.b16 %v81
  %v480 = vunpack.c.l.b16 %v82
  %v481 = vunpack.c.h.b16 %v82
  %v482 = vunpack.c.l.b16 %v83
  %v483 = vunpack.c.h.b16 %v83
  %v484 = vunpack.c.l.b16 %v84
  %v485 = vunpack.c.h.b16 %v84
  %v486 = vunpack.c.l.b16 %v85
  %v487 = vunpack.c.h.b16 %v85
  %v488 = vunpack.c.l.b16 %v86
  %v489 = vunpack.c.h.b16 %v86
  %v490 = vunpack.c.l.b16 %v87
  %v491 = vunpack.c.h.b16 %v87
  %v492 = vunpack.c.l.b16 %v88
  %v493 = vunpack.c.h.b16 %v88
  %v494 = vunpack.c.l.b16 %v89
  %v495 = vunpack.c.h.b16 %v89
  %v496 = vunpack.c.l.b16 %v90
  %v497 = vunpack.c.h.b16 %v90
  %v498 = vunpack.c.l.b16 %v91
  %v499 = vunpack.c.h.b16 %v91
  %v500 = vunpack.c.l.b16 %v92
  %v501 = vunpack.c.h.b16 %v92
  %v502 = vunpack.c.l.b16 %v93
  %v503 = vunpack.c.h.b16 %v93
  %v504 = vunpack.c.l.b16 %v94
  %v505 = vunpack.c.h.b16 %v94
  %v506 = vunpack.c.l.b16 %v95
  %v507 = vunpack.c.h.b16 %v95
  %v508 = vunpack.c.l.b16 %v96
  %v509 = vunpack.c.h.b16 %v96
  %v510 = vunpack.c.l.b16 %v97
  %v511 = vunpack.c.h.b16 %v97
  %v512 = vunpack.c.l.b16 %v98
  %v513 = vunpack.c.h.b16 %v98
  %v514 = vunpack.c.l.b16 %v99
  %v515 = vunpack.c.h.b16 %v99
  %v516 = vunpack.c.l.b16 %v100
  %v517 = vunpack.c.h.b16 %v100
  %v518 = vunpack.c.l.b16 %v101
  %v519 = vunpack.c.h.b16 %v101
  %v520 = vunpack.c.l.b16 %v102
  %v521 = vunpack.c.h.b16 %v102
  %v522 = vunpack.c.l.b16 %v103
  %v523 = vunpack.c.h.b16 %v103
  %v524 = vunpack.c.l.b16 %v104
  %v525 = vunpack.c.h.b16 %v104
  %v526 = vunpack.c.l.b16 %v105
  %v527 = vunpack.c.h.b16 %v105
  %v528 = vunpack.c.l.b16 %v106
  %v529 = vunpack.c.h.b16 %v106
  %v530 = vunpack.c.l.b16 %v107
  %v531 = vunpack.c.h.b16 %v107
  %v532 = vunpack.c.l.b16 %v108
  %v533 = vunpack.c.h.b16 %v108
  %v534 = vunpack.c.l.b16 %v109
  %v535 = vunpack.c.h.b16 %v109
  %v536 = vunpack.c.l.b16 %v110
  %v537 = vunpack.c.h.b16 %v110
  %v538 = vunpack.c.l.b16 %v111
  %v539 = vunpack.c.h.b16 %v111
  %v540 = vunpack.c.l.b16 %v112
  %v541 = vunpack.c.h.b16 %v112
  %v542 = vunpack.c.l.b16 %v113
  %v543 = vunpack.c.h.b16 %v113
  %v544 = vunpack.c.l.b16 %v114
  %v545 = vunpack.c.h.b16 %v114
  %v546 = vunpack.c.l.b16 %v115
  %v547 = vunpack.c.h.b16 %v115
  %v548 = vunpack.c.l.b16 %v116
  %v549 = vunpack.c.h.b16 %v116
  %v550 = vunpack.c.l.b16 %v117
  %v551 = vunpack.c.h.b16 %v117
  %v552 = vunpack.c.l.b16 %v118
  %v553 = vunpack.c.h.b16 %v118
  %v554 = vunpack.c.l.b16 %v119
  %v555 = vunpack.c.h.b16 %v119
  %v556 = vunpack.c.l.b16 %v120
  %v557 = vunpack.c.h.b16 %v120
  %v558 = vunpack.c.l.b16 %v121
  %v559 = vunpack.c.h.b16 %v121
  %v560 = vunpack.c.l.b16 %v122
  %v561 = vunpack.c.h.b16 %v122
  %v562 = vunpack.c.l.b16 %v123
  %v563 = vunpack.c.h.b16 %v123
  %v564 = vunpack.c.l.b16 %v124
  %v565 = vunpack.c.h.b16 %v124
  %v566 = vunpack.c.l.b16 %v125
  %v567 = vunpack.c.h.b16 %v125
  %v568 = vunpack.c.l.b16 %v126
  %v569 = vunpack.c.h.b16 %v126
  %v570 = vunpack.c.l.b16 %v127
  %v571 = vunpack.c.h.b16 %v127
  %v572 = vunpack.c.l.b16 %v128
  %v573 = vunpack.c.h.b16 %v128
  %v574 = vunpack.c.l.b16 %v129
  %v575 = vunpack.c.h.b16 %v129
  %v576 = vunpack.c.l.b16 %v130
  %v577 = vunpack.c.h.b16 %v130
  %v578 = vunpack.c.l.b16 %v131
  %v579 = vunpack.c.h.b16 %v131
  %v580 = vunpack.c.l.b16 %v132
  %v581 = vunpack.c.h.b16 %v132
  %v582 = vunpack.c.l.b16 %v133
  %v583 = vunpack.c.h.b16 %v133
  %v584 = vunpack.c.l.b16 %v134
  %v585 = vunpack.c.h.b16 %v134
  %v586 = vunpack.c.l.b16 %v135
  %v587 = vunpack.c.h.b16 %v135
  %v588 = vunpack.c.l.b16 %v136
  %v589 = vunpack.c.h.b16 %v136
  %v590 = vunpack.c.l.b16 %v137
  %v591 = vunpack.c.h.b16 %v137
  %v592 = vunpack.c.l.b16 %v138
  %v593 = vunpack.c.h.b16 %v138
  %v594 = vunpack.c.l.b16 %v139
  %v595 = vunpack.c.h.b16 %v139
  %v596 = vunpack.c.l.b16 %v140
  %v597 = vunpack.c.h.b16 %v140
  %v598 = vunpack.c.l.b16 %v141
  %v599 = vunpack.c.h.b16 %v141
  %v600 = vunpack.c.l.b16 %v142
  %v601 = vunpack.c.h.b16 %v142
  %v602 = vunpack.c.l.b16 %v143
  %v603 = vunpack.c.h.b16 %v143
  %v604 = vunpack.c.l.b16 %v144
  %v605 = vunpack.c.h.b16 %v144
  %v606 = vunpack.c.l.b16 %v145
  %v607 = vunpack.c.h.b16 %v145
  %v608 = vunpack.c.l.b16 %v146
  %v609 = vunpack.c.h.b16 %v146
  %v610 = vunpack.c.l.b16 %v147
  %v611 = vunpack.c.h.b16 %v147
  %v612 = vunpack.c.l.b16 %v148
  %v613 = vunpack.c.h.b16 %v148
  %v614 = vunpack.c.l.b16 %v149
  %v615 = vunpack.c.h.b16 %v149
  %v616 = vunpack.c.l.b16 %v150
  %v617 = vunpack.c.h.b16 %v150
  %v618 = vunpack.c.l.b16 %v151
  %v619 = vunpack.c.h.b16 %v151
  %v620 = vunpack.c.l.b16 %v152
  %v621 = vunpack.c.h.b16 %v152
  %v622 = vunpack.c.l.b16 %v153
  %v623 = vunpack.c.h.b16 %v153
  %v624 = vunpack.c.l.b16 %v154
  %v625 = vunpack.c.h.b16 %v154
  %v626 = vunpack.c.l.b16 %v155
  %v627 = vunpack.c.h.b16 %v155
  %v628 = vunpack.c.l.b16 %v156
  %v629 = vunpack.c.h.b16 %v156
  %v630 = vunpack.c.l.b16 %v157
  %v631 = vunpack.c.h.b16 %v157
  %v632 = vunpack.c.l.b16 %v158
  %v633 = vunpack.c.h.b16 %v158
  %v634 = vunpack.c.l.b16 %v159
  %v635 = vunpack.c.h.b16 %v159
  %v636 = vunpack.c.l.b16 %v160
  %v637 = vunpack.c.h.b16 %v160
  %v638 = vunpack.c.l.b16 %v161
  %v639 = vunpack.c.h.b16 %v161
  %v640 = vunpack.c.l.b16 %v162
  %v641 = vunpack.c.h.b16 %v162
  %v642 = vunpack.c.l.b16 %v163
  %v643 = vunpack.c.h.b16 %v163
  %v644 = vunpack.c.l.b16 %v164
  %v645 = vunpack.c.h.b16 %v164
  %v646 = vunpack.c.l.b16 %v165
  %v647 = vunpack.c.h.b16 %v165
  %v648 = vunpack.c.l.b16 %v166
  %v649 = vunpack.c.h.b16 %v166
  %v650 = vunpack.c.l.b16 %v167
  %v651 = vunpack.c.h.b16 %v167
  %v652 = vpack.c.b16 %v366, %v364
  %v653 = vpack.c.b16 %v367, %v365
  %v654 = vpack.c.b16 %v370, %v368
  %v655 = vpack.c.b16 %v371, %v369
  %v656 = vpack.c.b16 %v374, %v372
  %v657 = vpack.c.b16 %v375, %v373
  %v658 = vpack.c.b16 %v378, %v376
  %v659 = vpack.c.b16 %v379, %v377
  %v660 = vpack.c.b16 %v382, %v380
  %v661 = vpack.c.b16 %v383, %v381
  %v662 = vpack.c.b16 %v386, %v384
  %v663 = vpack.c.b16 %v387, %v385
  %v664 = vpack.c.b16 %v390, %v388
  %v665 = vpack.c.b16 %v391, %v389
  %v666 = vpack.c.b16 %v394, %v392
  %v667 = vpack.c.b16 %v395, %v393
  %v668 = vpack.c.b16 %v398, %v396
  %v669 = vpack.c.b16 %v399, %v397
  %v670 = vpack.c.b16 %v402, %v400
  %v671 = vpack.c.b16 %v403, %v401
  %v672 = vpack.c.b16 %v406, %v404
  %v673 = vpack.c.b16 %v407, %v405
  %v674 = vpack.c.b16 %v410, %v408
  %v675 = vpack.c.b16 %v411, %v409
  %v676 = vpack.c.b16 %v414, %v412
  %v677 = vpack.c.b16 %v415, %v413
  %v678 = vpack.c.b16 %v418, %v416
  %v679 = vpack.c.b16 %v419, %v417
  %v680 = vpack.c.b16 %v422, %v420
  %v681 = vpack.c.b16 %v423, %v421
  %v682 = vpack.c.b16 %v426, %v424
  %v683 = vpack.c.b16 %v427, %v425
  %v684 = vpack.c.b16 %v430, %v428
  %v685 = vpack.c.b16 %v431, %v429
  %v686 = vpack.c.b16 %v434, %v432
  %v687 = vpack.c.b16 %v435, %v433
  %v688 = vpack.c.b16 %v438, %v436
  %v689 = vpack.c.b16 %v439, %v437
  %v690 = vpack.c.b16 %v442, %v440
  %v691 = vpack.c.b16 %v443, %v441
  %v692 = vpack.c.b16 %v446, %v444
  %v693 = vpack.c.b16 %v447, %v445
  %v694 = vpack.c.b16 %v450, %v448
  %v695 = vpack.c.b16 %v451, %v449
  %v696 = vpack.c.b16 %v454, %v452
  %v697 = vpack.c.b16 %v455, %v453
  %v698 = vpack.c.b16 %v458, %v456
  %v699 = vpack.c.b16 %v459, %v457
  %v700 = vpack.c.b16 %v462, %v460
  %v701 = vpack.c.b16 %v463, %v461
  %v702 = vpack.c.b16 %v466, %v464
  %v703 = vpack.c.b16 %v467, %v465
  %v704 = vpack.c.b16 %v470, %v468
  %v705 = vpack.c.b16 %v471, %v469
  %v706 = vpack.c.b16 %v474, %v472
  %v707 = vpack.c.b16 %v475, %v473
  %v708 = vpack.c.b16 %v478, %v476
  %v709 = vpack.c.b16 %v479, %v477
  %v710 = vpack.c.b16 %v482, %v480
  %v711 = vpack.c.b16 %v483, %v481
  %v712 = vpack.c.b16 %v486, %v484
  %v713 = vpack.c.b16 %v487, %v485
  %v714 = vpack.c.b16 %v490, %v488
  %v715 = vpack.c.b16 %v491, %v489
  %v716 = vpack.c.b16 %v494, %v492
  %v717 = vpack.c.b16 %v495, %v493
  %v718 = vpack.c.b16 %v498, %v496
  %v719 = vpack.c.b16 %v499, %v497
  %v720 = vpack.c.b16 %v502, %v500
  %v721 = vpack.c.b16 %v503, %v501
  %v722 = vpack.c.b16 %v506, %v504
  %v723 = vpack.c.b16 %v507, %v505
  %v724 = vpack.c.b16 %v510, %v508
  %v725 = vpack.c.b16 %v511, %v509
  %v726 = vpack.c.b16 %v514, %v512
  %v727 = vpack.c.b16 %v515, %v513
  %v728 = vpack.c.b16 %v518, %v516
  %v729 = vpack.c.b16 %v519, %v517
  %v730 = vpack.c.b16 %v522, %v520
  %v731 = vpack.c.b16 %v523, %v521
  %v732 = vpack.c.b16 %v526, %v524
  %v733 = vpack.c.b16 %v527, %v525
  %v734 = vpack.c.b16 %v530, %v528
  %v735 = vpack.c.b16 %v531, %v529
  %v736 = vpack.c.b16 %v534, %v532
  %v737 = vpack.c.b16 %v535, %v533
  %v738 = vpack.c.b16 %v538, %v536
  %v739 = vpack.c.b16 %v539, %v537
  %v740 = vpack.c.b16 %v542, %v540
  %v741 = vpack.c.b16 %v543, %v541
  %v742 = vpack.c.b16 %v546, %v544
  %v743 = vpack.c.b16 %v547, %v545
  %v744 = vpack.c.b16 %v550, %v548
  %v745 = vpack.c.b16 %v551, %v549
  %v746 = vpack.c.b16 %v554, %v552
  %v747 = vpack.c.b16 %v555, %v553
  %v748 = vpack.c.b16 %v558, %v556
  %v749 = vpack.c.b16 %v559, %v557
  %v750 = vpack.c.b16 %v562, %v560
  %v751 = vpack.c.b16 %v563, %v561
  %v752 = vpack.c.b16 %v566, %v564
  %v753 = vpack.c.b16 %v567, %v565
  %v754 = vpack.c.b16 %v570, %v568
  %v755 = vpack.c.b16 %v571, %v569
  %v756 = vpack.c.b16 %v574, %v572
  %v757 = vpack.c.b16 %v575, %v573
  %v758 = vpack.c.b16 %v578, %v576
  %v759 = vpack.c.b16 %v579, %v577
  %v760 = vpack.c.b16 %v582, %v580
  %v761 = vpack.c.b16 %v583, %v581
  %v762 = vpack.c.b16 %v586, %v584
  %v763 = vpack.c.b16 %v587, %v585
  %v764 = vpack.c.b16 %v590, %v588
  %v765 = vpack.c.b16 %v591, %v589
  %v766 = vpack.c.b16 %v594, %v592
  %v767 = vpack.c.b16 %v595, %v593
  %v768 = vpack.c.b16 %v598, %v596
  %v769 = vpack.c.b16 %v599, %v597
  %v770 = vpack.c.b16 %v602, %v600
  %v771 = vpack.c.b16 %v603, %v601
  %v772 = vpack.c.b16 %v606, %v604
  %v773 = vpack.c.b16 %v607, %v605
  %v774 = vpack.c.b16 %v610, %v608
  %v775 = vpack.c.b16 %v611, %v609
  %v776 = vpack.c.b16 %v614, %v612
  %v777 = vpack.c.b16 %v615, %v613
  %v778 = vpack.c.b16 %v618, %v616
  %v779 = vpack.c.b16 %v619, %v617
  %v780 = vpack.c.b16 %v622, %v620
  %v781 = vpack.c.b16 %v623, %v621
  %v782 = vpack.c.b16 %v626, %v624
  %v783 = vpack.c.b16 %v627, %v625
  %v784 = vpack.c.b16 %v630, %v628
  %v785 = vpack.c.b16 %v631, %v629
  %v786 = vpack.c.b16 %v634, %v632
  %v787 = vpack.c.b16 %v635, %v633
  %v788 = vpack.c.b16 %v638, %v636
  %v789 = vpack.c.b16 %v639, %v637
  %v790 = vpack.c.b16 %v642, %v640
  %v791 = vpack.c.b16 %v643, %v641
  %v792 = vpack.c.b16 %v646, %v644
  %v793 = vpack.c.b16 %v647, %v645
  %v794 = vpack.c.b16 %v650, %v648
  %v795 = vpack.c.b16 %v651, %v649
  %940 = vmatpush.bf16.msra.mxu0 %v666
  %941 = vmatpush.bf16.msra.mxu0 %v664
  %942 = vmatpush.bf16.msra.mxu0 %v662
  %943 = vmatpush.bf16.msra.mxu0 %v660
  %944 = vmatpush.bf16.msra.mxu0 %v658
  %945 = vmatpush.bf16.msra.mxu0 %v656
  %946 = vmatpush.bf16.msra.mxu0 %v654
  %947 = vmatpush.bf16.msra.mxu0 %v652
  %948 = vmatmul.bf16.gmra.mxu0 %v202
  %v949 = vpop.f32.mrf.mxu0
  %v950 = vadd.f32 %v170, %v949
  %v951 = vpop.f32.mrf.mxu0
  %v952 = vadd.f32 %v170, %v951
  %953 = vdwg.mxu0
  %954 = vmatpush.bf16.msra.mxu0 %v682
  %955 = vmatpush.bf16.msra.mxu0 %v680
  %956 = vmatpush.bf16.msra.mxu0 %v678
  %957 = vmatpush.bf16.msra.mxu0 %v676
  %958 = vmatpush.bf16.msra.mxu0 %v674
  %959 = vmatpush.bf16.msra.mxu0 %v672
  %960 = vmatpush.bf16.msra.mxu0 %v670
  %961 = vmatpush.bf16.msra.mxu0 %v668
  %962 = vmatmul.bf16.gmra.mxu0 %v203
  %v963 = vpop.f32.mrf.mxu0
  %v964 = vadd.f32 %v950, %v963
  %v965 = vpop.f32.mrf.mxu0
  %v966 = vadd.f32 %v952, %v965
  %967 = vdwg.mxu0
  %968 = vmatpush.bf16.msra.mxu0 %v698
  %969 = vmatpush.bf16.msra.mxu0 %v696
  %970 = vmatpush.bf16.msra.mxu0 %v694
  %971 = vmatpush.bf16.msra.mxu0 %v692
  %972 = vmatpush.bf16.msra.mxu0 %v690
  %973 = vmatpush.bf16.msra.mxu0 %v688
  %974 = vmatpush.bf16.msra.mxu0 %v686
  %975 = vmatpush.bf16.msra.mxu0 %v684
  %976 = vmatmul.bf16.gmra.mxu0 %v204
  %v977 = vpop.f32.mrf.mxu0
  %v978 = vadd.f32 %v964, %v977
  %v979 = vpop.f32.mrf.mxu0
  %v980 = vadd.f32 %v966, %v979
  %981 = vdwg.mxu0
  %982 = vmatpush.bf16.msra.mxu0 %v714
  %983 = vmatpush.bf16.msra.mxu0 %v712
  %984 = vmatpush.bf16.msra.mxu0 %v710
  %985 = vmatpush.bf16.msra.mxu0 %v708
  %986 = vmatpush.bf16.msra.mxu0 %v706
  %987 = vmatpush.bf16.msra.mxu0 %v704
  %988 = vmatpush.bf16.msra.mxu0 %v702
  %989 = vmatpush.bf16.msra.mxu0 %v700
  %990 = vmatmul.bf16.gmra.mxu0 %v205
  %v991 = vpop.f32.mrf.mxu0
  %v992 = vadd.f32 %v978, %v991
  %v993 = vpop.f32.mrf.mxu0
  %v994 = vadd.f32 %v980, %v993
  %995 = vdwg.mxu0
  %996 = vmatpush.bf16.msra.mxu0 %v730
  %997 = vmatpush.bf16.msra.mxu0 %v728
  %998 = vmatpush.bf16.msra.mxu0 %v726
  %999 = vmatpush.bf16.msra.mxu0 %v724
  %1000 = vmatpush.bf16.msra.mxu0 %v722
  %1001 = vmatpush.bf16.msra.mxu0 %v720
  %1002 = vmatpush.bf16.msra.mxu0 %v718
  %1003 = vmatpush.bf16.msra.mxu0 %v716
  %1004 = vmatmul.bf16.gmra.mxu0 %v206
  %v1005 = vpop.f32.mrf.mxu0
  %v1006 = vadd.f32 %v992, %v1005
  %v1007 = vpop.f32.mrf.mxu0
  %v1008 = vadd.f32 %v994, %v1007
  %1009 = vdwg.mxu0
  %1010 = vmatpush.bf16.msra.mxu0 %v746
  %1011 = vmatpush.bf16.msra.mxu0 %v744
  %1012 = vmatpush.bf16.msra.mxu0 %v742
  %1013 = vmatpush.bf16.msra.mxu0 %v740
  %1014 = vmatpush.bf16.msra.mxu0 %v738
  %1015 = vmatpush.bf16.msra.mxu0 %v736
  %1016 = vmatpush.bf16.msra.mxu0 %v734
  %1017 = vmatpush.bf16.msra.mxu0 %v732
  %1018 = vmatmul.bf16.gmra.mxu0 %v207
  %v1019 = vpop.f32.mrf.mxu0
  %v1020 = vadd.f32 %v1006, %v1019
  %v1021 = vpop.f32.mrf.mxu0
  %v1022 = vadd.f32 %v1008, %v1021
  %1023 = vdwg.mxu0
  %1024 = vmatpush.bf16.msra.mxu0 %v762
  %1025 = vmatpush.bf16.msra.mxu0 %v760
  %1026 = vmatpush.bf16.msra.mxu0 %v758
  %1027 = vmatpush.bf16.msra.mxu0 %v756
  %1028 = vmatpush.bf16.msra.mxu0 %v754
  %1029 = vmatpush.bf16.msra.mxu0 %v752
  %1030 = vmatpush.bf16.msra.mxu0 %v750
  %1031 = vmatpush.bf16.msra.mxu0 %v748
  %1032 = vmatmul.bf16.gmra.mxu0 %v208
  %v1033 = vpop.f32.mrf.mxu0
  %v1034 = vadd.f32 %v1020, %v1033
  %v1035 = vpop.f32.mrf.mxu0
  %v1036 = vadd.f32 %v1022, %v1035
  %1037 = vdwg.mxu0
  %1038 = vmatpush.bf16.msra.mxu0 %v778
  %1039 = vmatpush.bf16.msra.mxu0 %v776
  %1040 = vmatpush.bf16.msra.mxu0 %v774
  %1041 = vmatpush.bf16.msra.mxu0 %v772
  %1042 = vmatpush.bf16.msra.mxu0 %v770
  %1043 = vmatpush.bf16.msra.mxu0 %v768
  %1044 = vmatpush.bf16.msra.mxu0 %v766
  %1045 = vmatpush.bf16.msra.mxu0 %v764
  %1046 = vmatmul.bf16.gmra.mxu0 %v209
  %v1047 = vpop.f32.mrf.mxu0
  %v1048 = vadd.f32 %v1034, %v1047
  %v1049 = vpop.f32.mrf.mxu0
  %v1050 = vadd.f32 %v1036, %v1049
  %1051 = vdwg.mxu0
  %1052 = vmatpush.bf16.msra.mxu0 %v794
  %1053 = vmatpush.bf16.msra.mxu0 %v792
  %1054 = vmatpush.bf16.msra.mxu0 %v790
  %1055 = vmatpush.bf16.msra.mxu0 %v788
  %1056 = vmatpush.bf16.msra.mxu0 %v786
  %1057 = vmatpush.bf16.msra.mxu0 %v784
  %1058 = vmatpush.bf16.msra.mxu0 %v782
  %1059 = vmatpush.bf16.msra.mxu0 %v780
  %1060 = vmatmul.bf16.gmra.mxu0 %v210
  %v1061 = vpop.f32.mrf.mxu0
  %v1062 = vadd.f32 %v1048, %v1061
  %v1063 = vpop.f32.mrf.mxu0
  %v1064 = vadd.f32 %v1050, %v1063
  %1065 = vdwg.mxu0
  %1066 = vmatpush.bf16.msra.mxu0 %v667
  %1067 = vmatpush.bf16.msra.mxu0 %v665
  %1068 = vmatpush.bf16.msra.mxu0 %v663
  %1069 = vmatpush.bf16.msra.mxu0 %v661
  %1070 = vmatpush.bf16.msra.mxu0 %v659
  %1071 = vmatpush.bf16.msra.mxu0 %v657
  %1072 = vmatpush.bf16.msra.mxu0 %v655
  %1073 = vmatpush.bf16.msra.mxu0 %v653
  %1074 = vmatmul.bf16.gmra.mxu0 %v202
  %v1075 = vpop.f32.mrf.mxu0
  %v1076 = vadd.f32 %v171, %v1075
  %v1077 = vpop.f32.mrf.mxu0
  %v1078 = vadd.f32 %v171, %v1077
  %1079 = vdwg.mxu0
  %1080 = vmatpush.bf16.msra.mxu0 %v683
  %1081 = vmatpush.bf16.msra.mxu0 %v681
  %1082 = vmatpush.bf16.msra.mxu0 %v679
  %1083 = vmatpush.bf16.msra.mxu0 %v677
  %1084 = vmatpush.bf16.msra.mxu0 %v675
  %1085 = vmatpush.bf16.msra.mxu0 %v673
  %1086 = vmatpush.bf16.msra.mxu0 %v671
  %1087 = vmatpush.bf16.msra.mxu0 %v669
  %1088 = vmatmul.bf16.gmra.mxu0 %v203
  %v1089 = vpop.f32.mrf.mxu0
  %v1090 = vadd.f32 %v1076, %v1089
  %v1091 = vpop.f32.mrf.mxu0
  %v1092 = vadd.f32 %v1078, %v1091
  %1093 = vdwg.mxu0
  %1094 = vmatpush.bf16.msra.mxu0 %v699
  %1095 = vmatpush.bf16.msra.mxu0 %v697
  %1096 = vmatpush.bf16.msra.mxu0 %v695
  %1097 = vmatpush.bf16.msra.mxu0 %v693
  %1098 = vmatpush.bf16.msra.mxu0 %v691
  %1099 = vmatpush.bf16.msra.mxu0 %v689
  %1100 = vmatpush.bf16.msra.mxu0 %v687
  %1101 = vmatpush.bf16.msra.mxu0 %v685
  %1102 = vmatmul.bf16.gmra.mxu0 %v204
  %v1103 = vpop.f32.mrf.mxu0
  %v1104 = vadd.f32 %v1090, %v1103
  %v1105 = vpop.f32.mrf.mxu0
  %v1106 = vadd.f32 %v1092, %v1105
  %1107 = vdwg.mxu0
  %1108 = vmatpush.bf16.msra.mxu0 %v715
  %1109 = vmatpush.bf16.msra.mxu0 %v713
  %1110 = vmatpush.bf16.msra.mxu0 %v711
  %1111 = vmatpush.bf16.msra.mxu0 %v709
  %1112 = vmatpush.bf16.msra.mxu0 %v707
  %1113 = vmatpush.bf16.msra.mxu0 %v705
  %1114 = vmatpush.bf16.msra.mxu0 %v703
  %1115 = vmatpush.bf16.msra.mxu0 %v701
  %1116 = vmatmul.bf16.gmra.mxu0 %v205
  %v1117 = vpop.f32.mrf.mxu0
  %v1118 = vadd.f32 %v1104, %v1117
  %v1119 = vpop.f32.mrf.mxu0
  %v1120 = vadd.f32 %v1106, %v1119
  %1121 = vdwg.mxu0
  %1122 = vmatpush.bf16.msra.mxu0 %v731
  %1123 = vmatpush.bf16.msra.mxu0 %v729
  %1124 = vmatpush.bf16.msra.mxu0 %v727
  %1125 = vmatpush.bf16.msra.mxu0 %v725
  %1126 = vmatpush.bf16.msra.mxu0 %v723
  %1127 = vmatpush.bf16.msra.mxu0 %v721
  %1128 = vmatpush.bf16.msra.mxu0 %v719
  %1129 = vmatpush.bf16.msra.mxu0 %v717
  %1130 = vmatmul.bf16.gmra.mxu0 %v206
  %v1131 = vpop.f32.mrf.mxu0
  %v1132 = vadd.f32 %v1118, %v1131
  %v1133 = vpop.f32.mrf.mxu0
  %v1134 = vadd.f32 %v1120, %v1133
  %1135 = vdwg.mxu0
  %1136 = vmatpush.bf16.msra.mxu0 %v747
  %1137 = vmatpush.bf16.msra.mxu0 %v745
  %1138 = vmatpush.bf16.msra.mxu0 %v743
  %1139 = vmatpush.bf16.msra.mxu0 %v741
  %1140 = vmatpush.bf16.msra.mxu0 %v739
  %1141 = vmatpush.bf16.msra.mxu0 %v737
  %1142 = vmatpush.bf16.msra.mxu0 %v735
  %1143 = vmatpush.bf16.msra.mxu0 %v733
  %1144 = vmatmul.bf16.gmra.mxu0 %v207
  %v1145 = vpop.f32.mrf.mxu0
  %v1146 = vadd.f32 %v1132, %v1145
  %v1147 = vpop.f32.mrf.mxu0
  %v1148 = vadd.f32 %v1134, %v1147
  %1149 = vdwg.mxu0
  %1150 = vmatpush.bf16.msra.mxu0 %v763
  %1151 = vmatpush.bf16.msra.mxu0 %v761
  %1152 = vmatpush.bf16.msra.mxu0 %v759
  %1153 = vmatpush.bf16.msra.mxu0 %v757
  %1154 = vmatpush.bf16.msra.mxu0 %v755
  %1155 = vmatpush.bf16.msra.mxu0 %v753
  %1156 = vmatpush.bf16.msra.mxu0 %v751
  %1157 = vmatpush.bf16.msra.mxu0 %v749
  %1158 = vmatmul.bf16.gmra.mxu0 %v208
  %v1159 = vpop.f32.mrf.mxu0
  %v1160 = vadd.f32 %v1146, %v1159
  %v1161 = vpop.f32.mrf.mxu0
  %v1162 = vadd.f32 %v1148, %v1161
  %1163 = vdwg.mxu0
  %1164 = vmatpush.bf16.msra.mxu0 %v779
  %1165 = vmatpush.bf16.msra.mxu0 %v777
  %1166 = vmatpush.bf16.msra.mxu0 %v775
  %1167 = vmatpush.bf16.msra.mxu0 %v773
  %1168 = vmatpush.bf16.msra.mxu0 %v771
  %1169 = vmatpush.bf16.msra.mxu0 %v769
  %1170 = vmatpush.bf16.msra.mxu0 %v767
  %1171 = vmatpush.bf16.msra.mxu0 %v765
  %1172 = vmatmul.bf16.gmra.mxu0 %v209
  %v1173 = vpop.f32.mrf.mxu0
  %v1174 = vadd.f32 %v1160, %v1173
  %v1175 = vpop.f32.mrf.mxu0
  %v1176 = vadd.f32 %v1162, %v1175
  %1177 = vdwg.mxu0
  %1178 = vmatpush.bf16.msra.mxu0 %v795
  %1179 = vmatpush.bf16.msra.mxu0 %v793
  %1180 = vmatpush.bf16.msra.mxu0 %v791
  %1181 = vmatpush.bf16.msra.mxu0 %v789
  %1182 = vmatpush.bf16.msra.mxu0 %v787
  %1183 = vmatpush.bf16.msra.mxu0 %v785
  %1184 = vmatpush.bf16.msra.mxu0 %v783
  %1185 = vmatpush.bf16.msra.mxu0 %v781
  %1186 = vmatmul.bf16.gmra.mxu0 %v210
  %v1187 = vpop.f32.mrf.mxu0
  %v1188 = vadd.f32 %v1174, %v1187
  %v1189 = vpop.f32.mrf.mxu0
  %v1190 = vadd.f32 %v1176, %v1189
  %1191 = vdwg.mxu0
  %v1192 = vmax.f32 %v1062, 0.0
  %v1193 = vmax.f32 %v1188, 0.0
  %v1194 = vmax.f32 %v1064, 0.0
  %v1195 = vmax.f32 %v1190, 0.0
  %v1196 = vpack.c.bf16 %v1193, %v1192
  %v1197 = vpack.c.bf16 %v1195, %v1194
  %1198 = vst [vmem:[%s3] sm:$0xff] %v1196
  %1199 = vst [vmem:[%s3 + $0x8] sm:$0xff] %v1197
  // Predicated region
  $region14: #{encoder_cnn_forward.9} parent=0 // pred_check
    _
  $region15: #{encoder_cnn_forward.9} parent=0 // pred_check_branch
    %1201 = sbr.rel (0) target = $region17
  $region16: #{encoder_cnn_forward.9} parent=0 // pred_region
    _
  $region17: #{encoder_cnn_forward.9} parent=0 // pred_fallthru
    _
  // Predicated region
  $region18: #{encoder_cnn_forward.9} parent=0 // pred_check
    _
  $region19: #{encoder_cnn_forward.9} parent=0 // pred_check_branch
    %1203 = sbr.rel (0) target = $region21
  $region20: #{encoder_cnn_forward.9} parent=0 // pred_region
    _
  $region21: #{encoder_cnn_forward.9} parent=0 // pred_fallthru
    _

// kernel: encoder_cnn_forward.11
$region0: #{encoder_cnn_forward.11}
  #allocation0 [shape = 'u32[]', space=smem, size = 0x4, offset = 0x4, fixed_abs, tag = 'smem constant byte address 0x4 - core index']
  #allocation1 [shape = 'u32[72,128]{1,0:T(1,128)}', space=vmem, size = 0x9000, scoped, tag = 'internal scratch']
  %s0 = inlined_call_operand.vmem [shape: bf16[8,1024], index: 0, kind: input, shape index: {}]
  %s1 = inlined_call_operand.vmem [shape: bf16[1024,512], index: 1, kind: input, shape index: {}]
  %s2 = inlined_call_operand.vmem [shape: f32[1,512], index: 2, kind: input, shape index: {}]
  %s3 = inlined_call_operand.vmem [shape: f32[8,512], index: 3, kind: output, shape index: {}]
  %s4 = sld [smem:[#allocation0]]
  $region22: #{encoder_cnn_forward.11} parent=0
    _
  %s6 = ssub.s32 1, %s4
  %s7 = scalar_select 0, %s6, %s4
  // Predicated region
  $region2: #{encoder_cnn_forward.11} parent=0 // pred_check
    _
  $region3: #{encoder_cnn_forward.11} parent=0 // pred_check_branch
    %9 = sbr.rel (0) target = $region5
  $region4: #{encoder_cnn_forward.11} parent=0 // pred_region
    _
  $region5: #{encoder_cnn_forward.11} parent=0 // pred_fallthru
    _
  // Predicated region
  $region6: #{encoder_cnn_forward.11} parent=0 // pred_check
    _
  $region7: #{encoder_cnn_forward.11} parent=0 // pred_check_branch
    %11 = sbr.rel (0) target = $region9
  $region8: #{encoder_cnn_forward.11} parent=0 // pred_region
    _
  $region9: #{encoder_cnn_forward.11} parent=0 // pred_fallthru
    _
  // Predicated region
  $region10: #{encoder_cnn_forward.11} parent=0 // pred_check
    _
  $region11: #{encoder_cnn_forward.11} parent=0 // pred_check_branch
    %13 = sbr.rel (0) target = $region13
  $region12: #{encoder_cnn_forward.11} parent=0 // pred_region
    _
  $region13: #{encoder_cnn_forward.11} parent=0 // pred_fallthru
    _
  %v14 = vld [vmem:[%s0] sm:$0xff]
  %v15 = vld [vmem:[%s0 + $0x8] sm:$0xff]
  %v16 = vld [vmem:[%s0 + $0x10] sm:$0xff]
  %v17 = vld [vmem:[%s0 + $0x18] sm:$0xff]
  %v18 = vld [vmem:[%s1] sm:$0xff]
  %v19 = vld [vmem:[%s1 + $0x8] sm:$0xff]
  %v20 = vld [vmem:[%s1 + $0x10] sm:$0xff]
  %v21 = vld [vmem:[%s1 + $0x18] sm:$0xff]
  %v22 = vld [vmem:[%s1 + $0x20] sm:$0xff]
  %v23 = vld [vmem:[%s1 + $0x28] sm:$0xff]
  %v24 = vld [vmem:[%s1 + $0x30] sm:$0xff]
  %v25 = vld [vmem:[%s1 + $0x38] sm:$0xff]
  %v26 = vld [vmem:[%s1 + $0x40] sm:$0xff]
  %v27 = vld [vmem:[%s1 + $0x48] sm:$0xff]
  %v28 = vld [vmem:[%s1 + $0x50] sm:$0xff]
  %v29 = vld [vmem:[%s1 + $0x58] sm:$0xff]
  %v30 = vld [vmem:[%s1 + $0x60] sm:$0xff]
  %v31 = vld [vmem:[%s1 + $0x68] sm:$0xff]
  %v32 = vld [vmem:[%s1 + $0x70] sm:$0xff]
  %v33 = vld [vmem:[%s1 + $0x78] sm:$0xff]
  %v34 = vld [vmem:[%s1 + $0x80] sm:$0xff]
  %v35 = vld [vmem:[%s1 + $0x88] sm:$0xff]
  %v36 = vld [vmem:[%s1 + $0x90] sm:$0xff]
  %v37 = vld [vmem:[%s1 + $0x98] sm:$0xff]
  %v38 = vld [vmem:[%s1 + $0xa0] sm:$0xff]
  %v39 = vld [vmem:[%s1 + $0xa8] sm:$0xff]
  %v40 = vld [vmem:[%s1 + $0xb0] sm:$0xff]
  %v41 = vld [vmem:[%s1 + $0xb8] sm:$0xff]
  %v42 = vld [vmem:[%s1 + $0xc0] sm:$0xff]
  %v43 = vld [vmem:[%s1 + $0xc8] sm:$0xff]
  %v44 = vld [vmem:[%s1 + $0xd0] sm:$0xff]
  %v45 = vld [vmem:[%s1 + $0xd8] sm:$0xff]
  %v46 = vld [vmem:[%s1 + $0xe0] sm:$0xff]
  %v47 = vld [vmem:[%s1 + $0xe8] sm:$0xff]
  %v48 = vld [vmem:[%s1 + $0xf0] sm:$0xff]
  %v49 = vld [vmem:[%s1 + $0xf8] sm:$0xff]
  %v50 = vld [vmem:[%s1 + $0x100] sm:$0xff]
  %v51 = vld [vmem:[%s1 + $0x108] sm:$0xff]
  %v52 = vld [vmem:[%s1 + $0x110] sm:$0xff]
  %v53 = vld [vmem:[%s1 + $0x118] sm:$0xff]
  %v54 = vld [vmem:[%s1 + $0x120] sm:$0xff]
  %v55 = vld [vmem:[%s1 + $0x128] sm:$0xff]
  %v56 = vld [vmem:[%s1 + $0x130] sm:$0xff]
  %v57 = vld [vmem:[%s1 + $0x138] sm:$0xff]
  %v58 = vld [vmem:[%s1 + $0x140] sm:$0xff]
  %v59 = vld [vmem:[%s1 + $0x148] sm:$0xff]
  %v60 = vld [vmem:[%s1 + $0x150] sm:$0xff]
  %v61 = vld [vmem:[%s1 + $0x158] sm:$0xff]
  %v62 = vld [vmem:[%s1 + $0x160] sm:$0xff]
  %v63 = vld [vmem:[%s1 + $0x168] sm:$0xff]
  %v64 = vld [vmem:[%s1 + $0x170] sm:$0xff]
  %v65 = vld [vmem:[%s1 + $0x178] sm:$0xff]
  %v66 = vld [vmem:[%s1 + $0x180] sm:$0xff]
  %v67 = vld [vmem:[%s1 + $0x188] sm:$0xff]
  %v68 = vld [vmem:[%s1 + $0x190] sm:$0xff]
  %v69 = vld [vmem:[%s1 + $0x198] sm:$0xff]
  %v70 = vld [vmem:[%s1 + $0x1a0] sm:$0xff]
  %v71 = vld [vmem:[%s1 + $0x1a8] sm:$0xff]
  %v72 = vld [vmem:[%s1 + $0x1b0] sm:$0xff]
  %v73 = vld [vmem:[%s1 + $0x1b8] sm:$0xff]
  %v74 = vld [vmem:[%s1 + $0x1c0] sm:$0xff]
  %v75 = vld [vmem:[%s1 + $0x1c8] sm:$0xff]
  %v76 = vld [vmem:[%s1 + $0x1d0] sm:$0xff]
  %v77 = vld [vmem:[%s1 + $0x1d8] sm:$0xff]
  %v78 = vld [vmem:[%s1 + $0x1e0] sm:$0xff]
  %v79 = vld [vmem:[%s1 + $0x1e8] sm:$0xff]
  %v80 = vld [vmem:[%s1 + $0x1f0] sm:$0xff]
  %v81 = vld [vmem:[%s1 + $0x1f8] sm:$0xff]
  %v82 = vld [vmem:[%s1 + $0x200] sm:$0xff]
  %v83 = vld [vmem:[%s1 + $0x208] sm:$0xff]
  %v84 = vld [vmem:[%s1 + $0x210] sm:$0xff]
  %v85 = vld [vmem:[%s1 + $0x218] sm:$0xff]
  %v86 = vld [vmem:[%s1 + $0x220] sm:$0xff]
  %v87 = vld [vmem:[%s1 + $0x228] sm:$0xff]
  %v88 = vld [vmem:[%s1 + $0x230] sm:$0xff]
  %v89 = vld [vmem:[%s1 + $0x238] sm:$0xff]
  %v90 = vld [vmem:[%s1 + $0x240] sm:$0xff]
  %v91 = vld [vmem:[%s1 + $0x248] sm:$0xff]
  %v92 = vld [vmem:[%s1 + $0x250] sm:$0xff]
  %v93 = vld [vmem:[%s1 + $0x258] sm:$0xff]
  %v94 = vld [vmem:[%s1 + $0x260] sm:$0xff]
  %v95 = vld [vmem:[%s1 + $0x268] sm:$0xff]
  %v96 = vld [vmem:[%s1 + $0x270] sm:$0xff]
  %v97 = vld [vmem:[%s1 + $0x278] sm:$0xff]
  %v98 = vld [vmem:[%s1 + $0x280] sm:$0xff]
  %v99 = vld [vmem:[%s1 + $0x288] sm:$0xff]
  %v100 = vld [vmem:[%s1 + $0x290] sm:$0xff]
  %v101 = vld [vmem:[%s1 + $0x298] sm:$0xff]
  %v102 = vld [vmem:[%s1 + $0x2a0] sm:$0xff]
  %v103 = vld [vmem:[%s1 + $0x2a8] sm:$0xff]
  %v104 = vld [vmem:[%s1 + $0x2b0] sm:$0xff]
  %v105 = vld [vmem:[%s1 + $0x2b8] sm:$0xff]
  %v106 = vld [vmem:[%s1 + $0x2c0] sm:$0xff]
  %v107 = vld [vmem:[%s1 + $0x2c8] sm:$0xff]
  %v108 = vld [vmem:[%s1 + $0x2d0] sm:$0xff]
  %v109 = vld [vmem:[%s1 + $0x2d8] sm:$0xff]
  %v110 = vld [vmem:[%s1 + $0x2e0] sm:$0xff]
  %v111 = vld [vmem:[%s1 + $0x2e8] sm:$0xff]
  %v112 = vld [vmem:[%s1 + $0x2f0] sm:$0xff]
  %v113 = vld [vmem:[%s1 + $0x2f8] sm:$0xff]
  %v114 = vld [vmem:[%s1 + $0x300] sm:$0xff]
  %v115 = vld [vmem:[%s1 + $0x308] sm:$0xff]
  %v116 = vld [vmem:[%s1 + $0x310] sm:$0xff]
  %v117 = vld [vmem:[%s1 + $0x318] sm:$0xff]
  %v118 = vld [vmem:[%s1 + $0x320] sm:$0xff]
  %v119 = vld [vmem:[%s1 + $0x328] sm:$0xff]
  %v120 = vld [vmem:[%s1 + $0x330] sm:$0xff]
  %v121 = vld [vmem:[%s1 + $0x338] sm:$0xff]
  %v122 = vld [vmem:[%s1 + $0x340] sm:$0xff]
  %v123 = vld [vmem:[%s1 + $0x348] sm:$0xff]
  %v124 = vld [vmem:[%s1 + $0x350] sm:$0xff]
  %v125 = vld [vmem:[%s1 + $0x358] sm:$0xff]
  %v126 = vld [vmem:[%s1 + $0x360] sm:$0xff]
  %v127 = vld [vmem:[%s1 + $0x368] sm:$0xff]
  %v128 = vld [vmem:[%s1 + $0x370] sm:$0xff]
  %v129 = vld [vmem:[%s1 + $0x378] sm:$0xff]
  %v130 = vld [vmem:[%s1 + $0x380] sm:$0xff]
  %v131 = vld [vmem:[%s1 + $0x388] sm:$0xff]
  %v132 = vld [vmem:[%s1 + $0x390] sm:$0xff]
  %v133 = vld [vmem:[%s1 + $0x398] sm:$0xff]
  %v134 = vld [vmem:[%s1 + $0x3a0] sm:$0xff]
  %v135 = vld [vmem:[%s1 + $0x3a8] sm:$0xff]
  %v136 = vld [vmem:[%s1 + $0x3b0] sm:$0xff]
  %v137 = vld [vmem:[%s1 + $0x3b8] sm:$0xff]
  %v138 = vld [vmem:[%s1 + $0x3c0] sm:$0xff]
  %v139 = vld [vmem:[%s1 + $0x3c8] sm:$0xff]
  %v140 = vld [vmem:[%s1 + $0x3d0] sm:$0xff]
  %v141 = vld [vmem:[%s1 + $0x3d8] sm:$0xff]
  %v142 = vld [vmem:[%s1 + $0x3e0] sm:$0xff]
  %v143 = vld [vmem:[%s1 + $0x3e8] sm:$0xff]
  %v144 = vld [vmem:[%s1 + $0x3f0] sm:$0xff]
  %v145 = vld [vmem:[%s1 + $0x3f8] sm:$0xff]
  %v146 = vld [vmem:[%s1 + $0x400] sm:$0xff]
  %v147 = vld [vmem:[%s1 + $0x408] sm:$0xff]
  %v148 = vld [vmem:[%s1 + $0x410] sm:$0xff]
  %v149 = vld [vmem:[%s1 + $0x418] sm:$0xff]
  %v150 = vld [vmem:[%s1 + $0x420] sm:$0xff]
  %v151 = vld [vmem:[%s1 + $0x428] sm:$0xff]
  %v152 = vld [vmem:[%s1 + $0x430] sm:$0xff]
  %v153 = vld [vmem:[%s1 + $0x438] sm:$0xff]
  %v154 = vld [vmem:[%s1 + $0x440] sm:$0xff]
  %v155 = vld [vmem:[%s1 + $0x448] sm:$0xff]
  %v156 = vld [vmem:[%s1 + $0x450] sm:$0xff]
  %v157 = vld [vmem:[%s1 + $0x458] sm:$0xff]
  %v158 = vld [vmem:[%s1 + $0x460] sm:$0xff]
  %v159 = vld [vmem:[%s1 + $0x468] sm:$0xff]
  %v160 = vld [vmem:[%s1 + $0x470] sm:$0xff]
  %v161 = vld [vmem:[%s1 + $0x478] sm:$0xff]
  %v162 = vld [vmem:[%s1 + $0x480] sm:$0xff]
  %v163 = vld [vmem:[%s1 + $0x488] sm:$0xff]
  %v164 = vld [vmem:[%s1 + $0x490] sm:$0xff]
  %v165 = vld [vmem:[%s1 + $0x498] sm:$0xff]
  %v166 = vld [vmem:[%s1 + $0x4a0] sm:$0xff]
  %v167 = vld [vmem:[%s1 + $0x4a8] sm:$0xff]
  %v168 = vld [vmem:[%s1 + $0x4b0] sm:$0xff]
  %v169 = vld [vmem:[%s1 + $0x4b8] sm:$0xff]
  %v170 = vld [vmem:[%s1 + $0x4c0] sm:$0xff]
  %v171 = vld [vmem:[%s1 + $0x4c8] sm:$0xff]
  %v172 = vld [vmem:[%s1 + $0x4d0] sm:$0xff]
  %v173 = vld [vmem:[%s1 + $0x4d8] sm:$0xff]
  %v174 = vld [vmem:[%s1 + $0x4e0] sm:$0xff]
  %v175 = vld [vmem:[%s1 + $0x4e8] sm:$0xff]
  %v176 = vld [vmem:[%s1 + $0x4f0] sm:$0xff]
  %v177 = vld [vmem:[%s1 + $0x4f8] sm:$0xff]
  %v178 = vld [vmem:[%s1 + $0x500] sm:$0xff]
  %v179 = vld [vmem:[%s1 + $0x508] sm:$0xff]
  %v180 = vld [vmem:[%s1 + $0x510] sm:$0xff]
  %v181 = vld [vmem:[%s1 + $0x518] sm:$0xff]
  %v182 = vld [vmem:[%s1 + $0x520] sm:$0xff]
  %v183 = vld [vmem:[%s1 + $0x528] sm:$0xff]
  %v184 = vld [vmem:[%s1 + $0x530] sm:$0xff]
  %v185 = vld [vmem:[%s1 + $0x538] sm:$0xff]
  %v186 = vld [vmem:[%s1 + $0x540] sm:$0xff]
  %v187 = vld [vmem:[%s1 + $0x548] sm:$0xff]
  %v188 = vld [vmem:[%s1 + $0x550] sm:$0xff]
  %v189 = vld [vmem:[%s1 + $0x558] sm:$0xff]
  %v190 = vld [vmem:[%s1 + $0x560] sm:$0xff]
  %v191 = vld [vmem:[%s1 + $0x568] sm:$0xff]
  %v192 = vld [vmem:[%s1 + $0x570] sm:$0xff]
  %v193 = vld [vmem:[%s1 + $0x578] sm:$0xff]
  %v194 = vld [vmem:[%s1 + $0x580] sm:$0xff]
  %v195 = vld [vmem:[%s1 + $0x588] sm:$0xff]
  %v196 = vld [vmem:[%s1 + $0x590] sm:$0xff]
  %v197 = vld [vmem:[%s1 + $0x598] sm:$0xff]
  %v198 = vld [vmem:[%s1 + $0x5a0] sm:$0xff]
  %v199 = vld [vmem:[%s1 + $0x5a8] sm:$0xff]
  %v200 = vld [vmem:[%s1 + $0x5b0] sm:$0xff]
  %v201 = vld [vmem:[%s1 + $0x5b8] sm:$0xff]
  %v202 = vld [vmem:[%s1 + $0x5c0] sm:$0xff]
  %v203 = vld [vmem:[%s1 + $0x5c8] sm:$0xff]
  %v204 = vld [vmem:[%s1 + $0x5d0] sm:$0xff]
  %v205 = vld [vmem:[%s1 + $0x5d8] sm:$0xff]
  %v206 = vld [vmem:[%s1 + $0x5e0] sm:$0xff]
  %v207 = vld [vmem:[%s1 + $0x5e8] sm:$0xff]
  %v208 = vld [vmem:[%s1 + $0x5f0] sm:$0xff]
  %v209 = vld [vmem:[%s1 + $0x5f8] sm:$0xff]
  %v210 = vld [vmem:[%s1 + $0x600] sm:$0xff]
  %v211 = vld [vmem:[%s1 + $0x608] sm:$0xff]
  %v212 = vld [vmem:[%s1 + $0x610] sm:$0xff]
  %v213 = vld [vmem:[%s1 + $0x618] sm:$0xff]
  %v214 = vld [vmem:[%s1 + $0x620] sm:$0xff]
  %v215 = vld [vmem:[%s1 + $0x628] sm:$0xff]
  %v216 = vld [vmem:[%s1 + $0x630] sm:$0xff]
  %v217 = vld [vmem:[%s1 + $0x638] sm:$0xff]
  %v218 = vld [vmem:[%s1 + $0x640] sm:$0xff]
  %v219 = vld [vmem:[%s1 + $0x648] sm:$0xff]
  %v220 = vld [vmem:[%s1 + $0x650] sm:$0xff]
  %v221 = vld [vmem:[%s1 + $0x658] sm:$0xff]
  %v222 = vld [vmem:[%s1 + $0x660] sm:$0xff]
  %v223 = vld [vmem:[%s1 + $0x668] sm:$0xff]
  %v224 = vld [vmem:[%s1 + $0x670] sm:$0xff]
  %v225 = vld [vmem:[%s1 + $0x678] sm:$0xff]
  %v226 = vld [vmem:[%s1 + $0x680] sm:$0xff]
  %v227 = vld [vmem:[%s1 + $0x688] sm:$0xff]
  %v228 = vld [vmem:[%s1 + $0x690] sm:$0xff]
  %v229 = vld [vmem:[%s1 + $0x698] sm:$0xff]
  %v230 = vld [vmem:[%s1 + $0x6a0] sm:$0xff]
  %v231 = vld [vmem:[%s1 + $0x6a8] sm:$0xff]
  %v232 = vld [vmem:[%s1 + $0x6b0] sm:$0xff]
  %v233 = vld [vmem:[%s1 + $0x6b8] sm:$0xff]
  %v234 = vld [vmem:[%s1 + $0x6c0] sm:$0xff]
  %v235 = vld [vmem:[%s1 + $0x6c8] sm:$0xff]
  %v236 = vld [vmem:[%s1 + $0x6d0] sm:$0xff]
  %v237 = vld [vmem:[%s1 + $0x6d8] sm:$0xff]
  %v238 = vld [vmem:[%s1 + $0x6e0] sm:$0xff]
  %v239 = vld [vmem:[%s1 + $0x6e8] sm:$0xff]
  %v240 = vld [vmem:[%s1 + $0x6f0] sm:$0xff]
  %v241 = vld [vmem:[%s1 + $0x6f8] sm:$0xff]
  %v242 = vld [vmem:[%s1 + $0x700] sm:$0xff]
  %v243 = vld [vmem:[%s1 + $0x708] sm:$0xff]
  %v244 = vld [vmem:[%s1 + $0x710] sm:$0xff]
  %v245 = vld [vmem:[%s1 + $0x718] sm:$0xff]
  %v246 = vld [vmem:[%s1 + $0x720] sm:$0xff]
  %v247 = vld [vmem:[%s1 + $0x728] sm:$0xff]
  %v248 = vld [vmem:[%s1 + $0x730] sm:$0xff]
  %v249 = vld [vmem:[%s1 + $0x738] sm:$0xff]
  %v250 = vld [vmem:[%s1 + $0x740] sm:$0xff]
  %v251 = vld [vmem:[%s1 + $0x748] sm:$0xff]
  %v252 = vld [vmem:[%s1 + $0x750] sm:$0xff]
  %v253 = vld [vmem:[%s1 + $0x758] sm:$0xff]
  %v254 = vld [vmem:[%s1 + $0x760] sm:$0xff]
  %v255 = vld [vmem:[%s1 + $0x768] sm:$0xff]
  %v256 = vld [vmem:[%s1 + $0x770] sm:$0xff]
  %v257 = vld [vmem:[%s1 + $0x778] sm:$0xff]
  %v258 = vld [vmem:[%s1 + $0x780] sm:$0xff]
  %v259 = vld [vmem:[%s1 + $0x788] sm:$0xff]
  %v260 = vld [vmem:[%s1 + $0x790] sm:$0xff]
  %v261 = vld [vmem:[%s1 + $0x798] sm:$0xff]
  %v262 = vld [vmem:[%s1 + $0x7a0] sm:$0xff]
  %v263 = vld [vmem:[%s1 + $0x7a8] sm:$0xff]
  %v264 = vld [vmem:[%s1 + $0x7b0] sm:$0xff]
  %v265 = vld [vmem:[%s1 + $0x7b8] sm:$0xff]
  %v266 = vld [vmem:[%s1 + $0x7c0] sm:$0xff]
  %v267 = vld [vmem:[%s1 + $0x7c8] sm:$0xff]
  %v268 = vld [vmem:[%s1 + $0x7d0] sm:$0xff]
  %v269 = vld [vmem:[%s1 + $0x7d8] sm:$0xff]
  %v270 = vld [vmem:[%s1 + $0x7e0] sm:$0xff]
  %v271 = vld [vmem:[%s1 + $0x7e8] sm:$0xff]
  %v272 = vld [vmem:[%s1 + $0x7f0] sm:$0xff]
  %v273 = vld [vmem:[%s1 + $0x7f8] sm:$0xff]
  %v274 = vld [vmem:[%s2] sm:$0xf]
  %v276 = vperm.slane %v274, 0
  %v277 = vperm.slane %v274, 1
  %v278 = vperm.slane %v274, 2
  %v279 = vperm.slane %v274, 3
  %v288 = vunpack.c.l.b16 %v14
  %v289 = vunpack.c.h.b16 %v14
  %v290 = vunpack.c.l.b16 %v15
  %v291 = vunpack.c.h.b16 %v15
  %v292 = vunpack.c.l.b16 %v16
  %v293 = vunpack.c.h.b16 %v16
  %v294 = vunpack.c.l.b16 %v17
  %v295 = vunpack.c.h.b16 %v17
  %v296 = vpack.c.b16 %v288, %v288
  %v297 = vpack.c.b16 %v289, %v289
  %v298 = vpack.c.b16 %v290, %v290
  %v299 = vpack.c.b16 %v291, %v291
  %v300 = vpack.c.b16 %v292, %v292
  %v301 = vpack.c.b16 %v293, %v293
  %v302 = vpack.c.b16 %v294, %v294
  %v303 = vpack.c.b16 %v295, %v295
  %v568 = vunpack.c.l.b16 %v18
  %v569 = vunpack.c.h.b16 %v18
  %v570 = vunpack.c.l.b16 %v19
  %v571 = vunpack.c.h.b16 %v19
  %v572 = vunpack.c.l.b16 %v20
  %v573 = vunpack.c.h.b16 %v20
  %v574 = vunpack.c.l.b16 %v21
  %v575 = vunpack.c.h.b16 %v21
  %v576 = vunpack.c.l.b16 %v22
  %v577 = vunpack.c.h.b16 %v22
  %v578 = vunpack.c.l.b16 %v23
  %v579 = vunpack.c.h.b16 %v23
  %v580 = vunpack.c.l.b16 %v24
  %v581 = vunpack.c.h.b16 %v24
  %v582 = vunpack.c.l.b16 %v25
  %v583 = vunpack.c.h.b16 %v25
  %v584 = vunpack.c.l.b16 %v26
  %v585 = vunpack.c.h.b16 %v26
  %v586 = vunpack.c.l.b16 %v27
  %v587 = vunpack.c.h.b16 %v27
  %v588 = vunpack.c.l.b16 %v28
  %v589 = vunpack.c.h.b16 %v28
  %v590 = vunpack.c.l.b16 %v29
  %v591 = vunpack.c.h.b16 %v29
  %v592 = vunpack.c.l.b16 %v30
  %v593 = vunpack.c.h.b16 %v30
  %v594 = vunpack.c.l.b16 %v31
  %v595 = vunpack.c.h.b16 %v31
  %v596 = vunpack.c.l.b16 %v32
  %v597 = vunpack.c.h.b16 %v32
  %v598 = vunpack.c.l.b16 %v33
  %v599 = vunpack.c.h.b16 %v33
  %v600 = vunpack.c.l.b16 %v34
  %v601 = vunpack.c.h.b16 %v34
  %v602 = vunpack.c.l.b16 %v35
  %v603 = vunpack.c.h.b16 %v35
  %v604 = vunpack.c.l.b16 %v36
  %v605 = vunpack.c.h.b16 %v36
  %v606 = vunpack.c.l.b16 %v37
  %v607 = vunpack.c.h.b16 %v37
  %v608 = vunpack.c.l.b16 %v38
  %v609 = vunpack.c.h.b16 %v38
  %v610 = vunpack.c.l.b16 %v39
  %v611 = vunpack.c.h.b16 %v39
  %v612 = vunpack.c.l.b16 %v40
  %v613 = vunpack.c.h.b16 %v40
  %v614 = vunpack.c.l.b16 %v41
  %v615 = vunpack.c.h.b16 %v41
  %v616 = vunpack.c.l.b16 %v42
  %v617 = vunpack.c.h.b16 %v42
  %v618 = vunpack.c.l.b16 %v43
  %v619 = vunpack.c.h.b16 %v43
  %v620 = vunpack.c.l.b16 %v44
  %v621 = vunpack.c.h.b16 %v44
  %v622 = vunpack.c.l.b16 %v45
  %v623 = vunpack.c.h.b16 %v45
  %v624 = vunpack.c.l.b16 %v46
  %v625 = vunpack.c.h.b16 %v46
  %v626 = vunpack.c.l.b16 %v47
  %v627 = vunpack.c.h.b16 %v47
  %v628 = vunpack.c.l.b16 %v48
  %v629 = vunpack.c.h.b16 %v48
  %v630 = vunpack.c.l.b16 %v49
  %v631 = vunpack.c.h.b16 %v49
  %v632 = vunpack.c.l.b16 %v50
  %v633 = vunpack.c.h.b16 %v50
  %v634 = vunpack.c.l.b16 %v51
  %v635 = vunpack.c.h.b16 %v51
  %v636 = vunpack.c.l.b16 %v52
  %v637 = vunpack.c.h.b16 %v52
  %v638 = vunpack.c.l.b16 %v53
  %v639 = vunpack.c.h.b16 %v53
  %v640 = vunpack.c.l.b16 %v54
  %v641 = vunpack.c.h.b16 %v54
  %v642 = vunpack.c.l.b16 %v55
  %v643 = vunpack.c.h.b16 %v55
  %v644 = vunpack.c.l.b16 %v56
  %v645 = vunpack.c.h.b16 %v56
  %v646 = vunpack.c.l.b16 %v57
  %v647 = vunpack.c.h.b16 %v57
  %v648 = vunpack.c.l.b16 %v58
  %v649 = vunpack.c.h.b16 %v58
  %v650 = vunpack.c.l.b16 %v59
  %v651 = vunpack.c.h.b16 %v59
  %v652 = vunpack.c.l.b16 %v60
  %v653 = vunpack.c.h.b16 %v60
  %v654 = vunpack.c.l.b16 %v61
  %v655 = vunpack.c.h.b16 %v61
  %v656 = vunpack.c.l.b16 %v62
  %v657 = vunpack.c.h.b16 %v62
  %v658 = vunpack.c.l.b16 %v63
  %v659 = vunpack.c.h.b16 %v63
  %v660 = vunpack.c.l.b16 %v64
  %v661 = vunpack.c.h.b16 %v64
  %v662 = vunpack.c.l.b16 %v65
  %v663 = vunpack.c.h.b16 %v65
  %v664 = vunpack.c.l.b16 %v66
  %v665 = vunpack.c.h.b16 %v66
  %v666 = vunpack.c.l.b16 %v67
  %v667 = vunpack.c.h.b16 %v67
  %v668 = vunpack.c.l.b16 %v68
  %v669 = vunpack.c.h.b16 %v68
  %v670 = vunpack.c.l.b16 %v69
  %v671 = vunpack.c.h.b16 %v69
  %v672 = vunpack.c.l.b16 %v70
  %v673 = vunpack.c.h.b16 %v70
  %v674 = vunpack.c.l.b16 %v71
  %v675 = vunpack.c.h.b16 %v71
  %v676 = vunpack.c.l.b16 %v72
  %v677 = vunpack.c.h.b16 %v72
  %v678 = vunpack.c.l.b16 %v73
  %v679 = vunpack.c.h.b16 %v73
  %v680 = vunpack.c.l.b16 %v74
  %v681 = vunpack.c.h.b16 %v74
  %v682 = vunpack.c.l.b16 %v75
  %v683 = vunpack.c.h.b16 %v75
  %v684 = vunpack.c.l.b16 %v76
  %v685 = vunpack.c.h.b16 %v76
  %v686 = vunpack.c.l.b16 %v77
  %v687 = vunpack.c.h.b16 %v77
  %v688 = vunpack.c.l.b16 %v78
  %v689 = vunpack.c.h.b16 %v78
  %v690 = vunpack.c.l.b16 %v79
  %v691 = vunpack.c.h.b16 %v79
  %v692 = vunpack.c.l.b16 %v80
  %v693 = vunpack.c.h.b16 %v80
  %v694 = vunpack.c.l.b16 %v81
  %v695 = vunpack.c.h.b16 %v81
  %v696 = vunpack.c.l.b16 %v82
  %v697 = vunpack.c.h.b16 %v82
  %v698 = vunpack.c.l.b16 %v83
  %v699 = vunpack.c.h.b16 %v83
  %v700 = vunpack.c.l.b16 %v84
  %v701 = vunpack.c.h.b16 %v84
  %v702 = vunpack.c.l.b16 %v85
  %v703 = vunpack.c.h.b16 %v85
  %v704 = vunpack.c.l.b16 %v86
  %v705 = vunpack.c.h.b16 %v86
  %v706 = vunpack.c.l.b16 %v87
  %v707 = vunpack.c.h.b16 %v87
  %v708 = vunpack.c.l.b16 %v88
  %v709 = vunpack.c.h.b16 %v88
  %v710 = vunpack.c.l.b16 %v89
  %v711 = vunpack.c.h.b16 %v89
  %v712 = vunpack.c.l.b16 %v90
  %v713 = vunpack.c.h.b16 %v90
  %v714 = vunpack.c.l.b16 %v91
  %v715 = vunpack.c.h.b16 %v91
  %v716 = vunpack.c.l.b16 %v92
  %v717 = vunpack.c.h.b16 %v92
  %v718 = vunpack.c.l.b16 %v93
  %v719 = vunpack.c.h.b16 %v93
  %v720 = vunpack.c.l.b16 %v94
  %v721 = vunpack.c.h.b16 %v94
  %v722 = vunpack.c.l.b16 %v95
  %v723 = vunpack.c.h.b16 %v95
  %v724 = vunpack.c.l.b16 %v96
  %v725 = vunpack.c.h.b16 %v96
  %v726 = vunpack.c.l.b16 %v97
  %v727 = vunpack.c.h.b16 %v97
  %v728 = vunpack.c.l.b16 %v98
  %v729 = vunpack.c.h.b16 %v98
  %v730 = vunpack.c.l.b16 %v99
  %v731 = vunpack.c.h.b16 %v99
  %v732 = vunpack.c.l.b16 %v100
  %v733 = vunpack.c.h.b16 %v100
  %v734 = vunpack.c.l.b16 %v101
  %v735 = vunpack.c.h.b16 %v101
  %v736 = vunpack.c.l.b16 %v102
  %v737 = vunpack.c.h.b16 %v102
  %v738 = vunpack.c.l.b16 %v103
  %v739 = vunpack.c.h.b16 %v103
  %v740 = vunpack.c.l.b16 %v104
  %v741 = vunpack.c.h.b16 %v104
  %v742 = vunpack.c.l.b16 %v105
  %v743 = vunpack.c.h.b16 %v105
  %v744 = vunpack.c.l.b16 %v106
  %v745 = vunpack.c.h.b16 %v106
  %v746 = vunpack.c.l.b16 %v107
  %v747 = vunpack.c.h.b16 %v107
  %v748 = vunpack.c.l.b16 %v108
  %v749 = vunpack.c.h.b16 %v108
  %v750 = vunpack.c.l.b16 %v109
  %v751 = vunpack.c.h.b16 %v109
  %v752 = vunpack.c.l.b16 %v110
  %v753 = vunpack.c.h.b16 %v110
  %v754 = vunpack.c.l.b16 %v111
  %v755 = vunpack.c.h.b16 %v111
  %v756 = vunpack.c.l.b16 %v112
  %v757 = vunpack.c.h.b16 %v112
  %v758 = vunpack.c.l.b16 %v113
  %v759 = vunpack.c.h.b16 %v113
  %v760 = vunpack.c.l.b16 %v114
  %v761 = vunpack.c.h.b16 %v114
  %v762 = vunpack.c.l.b16 %v115
  %v763 = vunpack.c.h.b16 %v115
  %v764 = vunpack.c.l.b16 %v116
  %v765 = vunpack.c.h.b16 %v116
  %v766 = vunpack.c.l.b16 %v117
  %v767 = vunpack.c.h.b16 %v117
  %v768 = vunpack.c.l.b16 %v118
  %v769 = vunpack.c.h.b16 %v118
  %v770 = vunpack.c.l.b16 %v119
  %v771 = vunpack.c.h.b16 %v119
  %v772 = vunpack.c.l.b16 %v120
  %v773 = vunpack.c.h.b16 %v120
  %v774 = vunpack.c.l.b16 %v121
  %v775 = vunpack.c.h.b16 %v121
  %v776 = vunpack.c.l.b16 %v122
  %v777 = vunpack.c.h.b16 %v122
  %v778 = vunpack.c.l.b16 %v123
  %v779 = vunpack.c.h.b16 %v123
  %v780 = vunpack.c.l.b16 %v124
  %v781 = vunpack.c.h.b16 %v124
  %v782 = vunpack.c.l.b16 %v125
  %v783 = vunpack.c.h.b16 %v125
  %v784 = vunpack.c.l.b16 %v126
  %v785 = vunpack.c.h.b16 %v126
  %v786 = vunpack.c.l.b16 %v127
  %v787 = vunpack.c.h.b16 %v127
  %v788 = vunpack.c.l.b16 %v128
  %v789 = vunpack.c.h.b16 %v128
  %v790 = vunpack.c.l.b16 %v129
  %v791 = vunpack.c.h.b16 %v129
  %v792 = vunpack.c.l.b16 %v130
  %v793 = vunpack.c.h.b16 %v130
  %v794 = vunpack.c.l.b16 %v131
  %v795 = vunpack.c.h.b16 %v131
  %v796 = vunpack.c.l.b16 %v132
  %v797 = vunpack.c.h.b16 %v132
  %v798 = vunpack.c.l.b16 %v133
  %v799 = vunpack.c.h.b16 %v133
  %v800 = vunpack.c.l.b16 %v134
  %v801 = vunpack.c.h.b16 %v134
  %v802 = vunpack.c.l.b16 %v135
  %v803 = vunpack.c.h.b16 %v135
  %v804 = vunpack.c.l.b16 %v136
  %v805 = vunpack.c.h.b16 %v136
  %v806 = vunpack.c.l.b16 %v137
  %v807 = vunpack.c.h.b16 %v137
  %v808 = vunpack.c.l.b16 %v138
  %v809 = vunpack.c.h.b16 %v138
  %v810 = vunpack.c.l.b16 %v139
  %v811 = vunpack.c.h.b16 %v139
  %v812 = vunpack.c.l.b16 %v140
  %v813 = vunpack.c.h.b16 %v140
  %v814 = vunpack.c.l.b16 %v141
  %v815 = vunpack.c.h.b16 %v141
  %v816 = vunpack.c.l.b16 %v142
  %v817 = vunpack.c.h.b16 %v142
  %v818 = vunpack.c.l.b16 %v143
  %v819 = vunpack.c.h.b16 %v143
  %v820 = vunpack.c.l.b16 %v144
  %v821 = vunpack.c.h.b16 %v144
  %v822 = vunpack.c.l.b16 %v145
  %v823 = vunpack.c.h.b16 %v145
  %v824 = vunpack.c.l.b16 %v146
  %v825 = vunpack.c.h.b16 %v146
  %v826 = vunpack.c.l.b16 %v147
  %v827 = vunpack.c.h.b16 %v147
  %v828 = vunpack.c.l.b16 %v148
  %v829 = vunpack.c.h.b16 %v148
  %v830 = vunpack.c.l.b16 %v149
  %v831 = vunpack.c.h.b16 %v149
  %v832 = vunpack.c.l.b16 %v150
  %v833 = vunpack.c.h.b16 %v150
  %v834 = vunpack.c.l.b16 %v151
  %v835 = vunpack.c.h.b16 %v151
  %v836 = vunpack.c.l.b16 %v152
  %v837 = vunpack.c.h.b16 %v152
  %v838 = vunpack.c.l.b16 %v153
  %v839 = vunpack.c.h.b16 %v153
  %v840 = vunpack.c.l.b16 %v154
  %v841 = vunpack.c.h.b16 %v154
  %v842 = vunpack.c.l.b16 %v155
  %v843 = vunpack.c.h.b16 %v155
  %v844 = vunpack.c.l.b16 %v156
  %v845 = vunpack.c.h.b16 %v156
  %v846 = vunpack.c.l.b16 %v157
  %v847 = vunpack.c.h.b16 %v157
  %v848 = vunpack.c.l.b16 %v158
  %v849 = vunpack.c.h.b16 %v158
  %v850 = vunpack.c.l.b16 %v159
  %v851 = vunpack.c.h.b16 %v159
  %v852 = vunpack.c.l.b16 %v160
  %v853 = vunpack.c.h.b16 %v160
  %v854 = vunpack.c.l.b16 %v161
  %v855 = vunpack.c.h.b16 %v161
  %v856 = vunpack.c.l.b16 %v162
  %v857 = vunpack.c.h.b16 %v162
  %v858 = vunpack.c.l.b16 %v163
  %v859 = vunpack.c.h.b16 %v163
  %v860 = vunpack.c.l.b16 %v164
  %v861 = vunpack.c.h.b16 %v164
  %v862 = vunpack.c.l.b16 %v165
  %v863 = vunpack.c.h.b16 %v165
  %v864 = vunpack.c.l.b16 %v166
  %v865 = vunpack.c.h.b16 %v166
  %v866 = vunpack.c.l.b16 %v167
  %v867 = vunpack.c.h.b16 %v167
  %v868 = vunpack.c.l.b16 %v168
  %v869 = vunpack.c.h.b16 %v168
  %v870 = vunpack.c.l.b16 %v169
  %v871 = vunpack.c.h.b16 %v169
  %v872 = vunpack.c.l.b16 %v170
  %v873 = vunpack.c.h.b16 %v170
  %v874 = vunpack.c.l.b16 %v171
  %v875 = vunpack.c.h.b16 %v171
  %v876 = vunpack.c.l.b16 %v172
  %v877 = vunpack.c.h.b16 %v172
  %v878 = vunpack.c.l.b16 %v173
  %v879 = vunpack.c.h.b16 %v173
  %v880 = vunpack.c.l.b16 %v174
  %v881 = vunpack.c.h.b16 %v174
  %v882 = vunpack.c.l.b16 %v175
  %v883 = vunpack.c.h.b16 %v175
  %v884 = vunpack.c.l.b16 %v176
  %v885 = vunpack.c.h.b16 %v176
  %v886 = vunpack.c.l.b16 %v177
  %v887 = vunpack.c.h.b16 %v177
  %v888 = vunpack.c.l.b16 %v178
  %v889 = vunpack.c.h.b16 %v178
  %v890 = vunpack.c.l.b16 %v179
  %v891 = vunpack.c.h.b16 %v179
  %v892 = vunpack.c.l.b16 %v180
  %v893 = vunpack.c.h.b16 %v180
  %v894 = vunpack.c.l.b16 %v181
  %v895 = vunpack.c.h.b16 %v181
  %v896 = vunpack.c.l.b16 %v182
  %v897 = vunpack.c.h.b16 %v182
  %v898 = vunpack.c.l.b16 %v183
  %v899 = vunpack.c.h.b16 %v183
  %v900 = vunpack.c.l.b16 %v184
  %v901 = vunpack.c.h.b16 %v184
  %v902 = vunpack.c.l.b16 %v185
  %v903 = vunpack.c.h.b16 %v185
  %v904 = vunpack.c.l.b16 %v186
  %v905 = vunpack.c.h.b16 %v186
  %v906 = vunpack.c.l.b16 %v187
  %v907 = vunpack.c.h.b16 %v187
  %v908 = vunpack.c.l.b16 %v188
  %v909 = vunpack.c.h.b16 %v188
  %v910 = vunpack.c.l.b16 %v189
  %v911 = vunpack.c.h.b16 %v189
  %v912 = vunpack.c.l.b16 %v190
  %v913 = vunpack.c.h.b16 %v190
  %v914 = vunpack.c.l.b16 %v191
  %v915 = vunpack.c.h.b16 %v191
  %v916 = vunpack.c.l.b16 %v192
  %v917 = vunpack.c.h.b16 %v192
  %v918 = vunpack.c.l.b16 %v193
  %v919 = vunpack.c.h.b16 %v193
  %v920 = vunpack.c.l.b16 %v194
  %v921 = vunpack.c.h.b16 %v194
  %v922 = vunpack.c.l.b16 %v195
  %v923 = vunpack.c.h.b16 %v195
  %v924 = vunpack.c.l.b16 %v196
  %v925 = vunpack.c.h.b16 %v196
  %v926 = vunpack.c.l.b16 %v197
  %v927 = vunpack.c.h.b16 %v197
  %v928 = vunpack.c.l.b16 %v198
  %v929 = vunpack.c.h.b16 %v198
  %v930 = vunpack.c.l.b16 %v199
  %v931 = vunpack.c.h.b16 %v199
  %v932 = vunpack.c.l.b16 %v200
  %v933 = vunpack.c.h.b16 %v200
  %v934 = vunpack.c.l.b16 %v201
  %v935 = vunpack.c.h.b16 %v201
  %v936 = vunpack.c.l.b16 %v202
  %v937 = vunpack.c.h.b16 %v202
  %v938 = vunpack.c.l.b16 %v203
  %v939 = vunpack.c.h.b16 %v203
  %v940 = vunpack.c.l.b16 %v204
  %v941 = vunpack.c.h.b16 %v204
  %v942 = vunpack.c.l.b16 %v205
  %v943 = vunpack.c.h.b16 %v205
  %v944 = vunpack.c.l.b16 %v206
  %v945 = vunpack.c.h.b16 %v206
  %v946 = vunpack.c.l.b16 %v207
  %v947 = vunpack.c.h.b16 %v207
  %v948 = vunpack.c.l.b16 %v208
  %v949 = vunpack.c.h.b16 %v208
  %v950 = vunpack.c.l.b16 %v209
  %v951 = vunpack.c.h.b16 %v209
  %v952 = vunpack.c.l.b16 %v210
  %v953 = vunpack.c.h.b16 %v210
  %v954 = vunpack.c.l.b16 %v211
  %v955 = vunpack.c.h.b16 %v211
  %v956 = vunpack.c.l.b16 %v212
  %v957 = vunpack.c.h.b16 %v212
  %v958 = vunpack.c.l.b16 %v213
  %v959 = vunpack.c.h.b16 %v213
  %v960 = vunpack.c.l.b16 %v214
  %v961 = vunpack.c.h.b16 %v214
  %v962 = vunpack.c.l.b16 %v215
  %v963 = vunpack.c.h.b16 %v215
  %v964 = vunpack.c.l.b16 %v216
  %v965 = vunpack.c.h.b16 %v216
  %v966 = vunpack.c.l.b16 %v217
  %v967 = vunpack.c.h.b16 %v217
  %v968 = vunpack.c.l.b16 %v218
  %v969 = vunpack.c.h.b16 %v218
  %v970 = vunpack.c.l.b16 %v219
  %v971 = vunpack.c.h.b16 %v219
  %v972 = vunpack.c.l.b16 %v220
  %v973 = vunpack.c.h.b16 %v220
  %v974 = vunpack.c.l.b16 %v221
  %v975 = vunpack.c.h.b16 %v221
  %v976 = vunpack.c.l.b16 %v222
  %v977 = vunpack.c.h.b16 %v222
  %v978 = vunpack.c.l.b16 %v223
  %v979 = vunpack.c.h.b16 %v223
  %v980 = vunpack.c.l.b16 %v224
  %v981 = vunpack.c.h.b16 %v224
  %v982 = vunpack.c.l.b16 %v225
  %v983 = vunpack.c.h.b16 %v225
  %v984 = vunpack.c.l.b16 %v226
  %v985 = vunpack.c.h.b16 %v226
  %v986 = vunpack.c.l.b16 %v227
  %v987 = vunpack.c.h.b16 %v227
  %v988 = vunpack.c.l.b16 %v228
  %v989 = vunpack.c.h.b16 %v228
  %v990 = vunpack.c.l.b16 %v229
  %v991 = vunpack.c.h.b16 %v229
  %v992 = vunpack.c.l.b16 %v230
  %v993 = vunpack.c.h.b16 %v230
  %v994 = vunpack.c.l.b16 %v231
  %v995 = vunpack.c.h.b16 %v231
  %v996 = vunpack.c.l.b16 %v232
  %v997 = vunpack.c.h.b16 %v232
  %v998 = vunpack.c.l.b16 %v233
  %v999 = vunpack.c.h.b16 %v233
  %v1000 = vunpack.c.l.b16 %v234
  %v1001 = vunpack.c.h.b16 %v234
  %v1002 = vunpack.c.l.b16 %v235
  %v1003 = vunpack.c.h.b16 %v235
  %v1004 = vunpack.c.l.b16 %v236
  %v1005 = vunpack.c.h.b16 %v236
  %v1006 = vunpack.c.l.b16 %v237
  %v1007 = vunpack.c.h.b16 %v237
  %v1008 = vunpack.c.l.b16 %v238
  %v1009 = vunpack.c.h.b16 %v238
  %v1010 = vunpack.c.l.b16 %v239
  %v1011 = vunpack.c.h.b16 %v239
  %v1012 = vunpack.c.l.b16 %v240
  %v1013 = vunpack.c.h.b16 %v240
  %v1014 = vunpack.c.l.b16 %v241
  %v1015 = vunpack.c.h.b16 %v241
  %v1016 = vunpack.c.l.b16 %v242
  %v1017 = vunpack.c.h.b16 %v242
  %v1018 = vunpack.c.l.b16 %v243
  %v1019 = vunpack.c.h.b16 %v243
  %v1020 = vunpack.c.l.b16 %v244
  %v1021 = vunpack.c.h.b16 %v244
  %v1022 = vunpack.c.l.b16 %v245
  %v1023 = vunpack.c.h.b16 %v245
  %v1024 = vunpack.c.l.b16 %v246
  %v1025 = vunpack.c.h.b16 %v246
  %v1026 = vunpack.c.l.b16 %v247
  %v1027 = vunpack.c.h.b16 %v247
  %v1028 = vunpack.c.l.b16 %v248
  %v1029 = vunpack.c.h.b16 %v248
  %v1030 = vunpack.c.l.b16 %v249
  %v1031 = vunpack.c.h.b16 %v249
  %v1032 = vunpack.c.l.b16 %v250
  %v1033 = vunpack.c.h.b16 %v250
  %v1034 = vunpack.c.l.b16 %v251
  %v1035 = vunpack.c.h.b16 %v251
  %v1036 = vunpack.c.l.b16 %v252
  %v1037 = vunpack.c.h.b16 %v252
  %v1038 = vunpack.c.l.b16 %v253
  %v1039 = vunpack.c.h.b16 %v253
  %v1040 = vunpack.c.l.b16 %v254
  %v1041 = vunpack.c.h.b16 %v254
  %v1042 = vunpack.c.l.b16 %v255
  %v1043 = vunpack.c.h.b16 %v255
  %v1044 = vunpack.c.l.b16 %v256
  %v1045 = vunpack.c.h.b16 %v256
  %v1046 = vunpack.c.l.b16 %v257
  %v1047 = vunpack.c.h.b16 %v257
  %v1048 = vunpack.c.l.b16 %v258
  %v1049 = vunpack.c.h.b16 %v258
  %v1050 = vunpack.c.l.b16 %v259
  %v1051 = vunpack.c.h.b16 %v259
  %v1052 = vunpack.c.l.b16 %v260
  %v1053 = vunpack.c.h.b16 %v260
  %v1054 = vunpack.c.l.b16 %v261
  %v1055 = vunpack.c.h.b16 %v261
  %v1056 = vunpack.c.l.b16 %v262
  %v1057 = vunpack.c.h.b16 %v262
  %v1058 = vunpack.c.l.b16 %v263
  %v1059 = vunpack.c.h.b16 %v263
  %v1060 = vunpack.c.l.b16 %v264
  %v1061 = vunpack.c.h.b16 %v264
  %v1062 = vunpack.c.l.b16 %v265
  %v1063 = vunpack.c.h.b16 %v265
  %v1064 = vunpack.c.l.b16 %v266
  %v1065 = vunpack.c.h.b16 %v266
  %v1066 = vunpack.c.l.b16 %v267
  %v1067 = vunpack.c.h.b16 %v267
  %v1068 = vunpack.c.l.b16 %v268
  %v1069 = vunpack.c.h.b16 %v268
  %v1070 = vunpack.c.l.b16 %v269
  %v1071 = vunpack.c.h.b16 %v269
  %v1072 = vunpack.c.l.b16 %v270
  %v1073 = vunpack.c.h.b16 %v270
  %v1074 = vunpack.c.l.b16 %v271
  %v1075 = vunpack.c.h.b16 %v271
  %v1076 = vunpack.c.l.b16 %v272
  %v1077 = vunpack.c.h.b16 %v272
  %v1078 = vunpack.c.l.b16 %v273
  %v1079 = vunpack.c.h.b16 %v273
  %v1080 = vpack.c.b16 %v572, %v568
  %v1081 = vpack.c.b16 %v573, %v569
  %v1082 = vpack.c.b16 %v574, %v570
  %v1083 = vpack.c.b16 %v575, %v571
  %v1084 = vpack.c.b16 %v580, %v576
  %v1085 = vpack.c.b16 %v581, %v577
  %v1086 = vpack.c.b16 %v582, %v578
  %v1087 = vpack.c.b16 %v583, %v579
  %v1088 = vpack.c.b16 %v588, %v584
  %v1089 = vpack.c.b16 %v589, %v585
  %v1090 = vpack.c.b16 %v590, %v586
  %v1091 = vpack.c.b16 %v591, %v587
  %v1092 = vpack.c.b16 %v596, %v592
  %v1093 = vpack.c.b16 %v597, %v593
  %v1094 = vpack.c.b16 %v598, %v594
  %v1095 = vpack.c.b16 %v599, %v595
  %v1096 = vpack.c.b16 %v604, %v600
  %v1097 = vpack.c.b16 %v605, %v601
  %v1098 = vpack.c.b16 %v606, %v602
  %v1099 = vpack.c.b16 %v607, %v603
  %v1100 = vpack.c.b16 %v612, %v608
  %v1101 = vpack.c.b16 %v613, %v609
  %v1102 = vpack.c.b16 %v614, %v610
  %v1103 = vpack.c.b16 %v615, %v611
  %v1104 = vpack.c.b16 %v620, %v616
  %v1105 = vpack.c.b16 %v621, %v617
  %v1106 = vpack.c.b16 %v622, %v618
  %v1107 = vpack.c.b16 %v623, %v619
  %v1108 = vpack.c.b16 %v628, %v624
  %v1109 = vpack.c.b16 %v629, %v625
  %v1110 = vpack.c.b16 %v630, %v626
  %v1111 = vpack.c.b16 %v631, %v627
  %v1112 = vpack.c.b16 %v636, %v632
  %v1113 = vpack.c.b16 %v637, %v633
  %v1114 = vpack.c.b16 %v638, %v634
  %v1115 = vpack.c.b16 %v639, %v635
  %v1116 = vpack.c.b16 %v644, %v640
  %v1117 = vpack.c.b16 %v645, %v641
  %v1118 = vpack.c.b16 %v646, %v642
  %v1119 = vpack.c.b16 %v647, %v643
  %v1120 = vpack.c.b16 %v652, %v648
  %v1121 = vpack.c.b16 %v653, %v649
  %v1122 = vpack.c.b16 %v654, %v650
  %v1123 = vpack.c.b16 %v655, %v651
  %v1124 = vpack.c.b16 %v660, %v656
  %v1125 = vpack.c.b16 %v661, %v657
  %v1126 = vpack.c.b16 %v662, %v658
  %v1127 = vpack.c.b16 %v663, %v659
  %v1128 = vpack.c.b16 %v668, %v664
  %v1129 = vpack.c.b16 %v669, %v665
  %v1130 = vpack.c.b16 %v670, %v666
  %v1131 = vpack.c.b16 %v671, %v667
  %v1132 = vpack.c.b16 %v676, %v672
  %v1133 = vpack.c.b16 %v677, %v673
  %v1134 = vpack.c.b16 %v678, %v674
  %v1135 = vpack.c.b16 %v679, %v675
  %v1136 = vpack.c.b16 %v684, %v680
  %v1137 = vpack.c.b16 %v685, %v681
  %v1138 = vpack.c.b16 %v686, %v682
  %v1139 = vpack.c.b16 %v687, %v683
  %v1140 = vpack.c.b16 %v692, %v688
  %v1141 = vpack.c.b16 %v693, %v689
  %v1142 = vpack.c.b16 %v694, %v690
  %v1143 = vpack.c.b16 %v695, %v691
  %v1144 = vpack.c.b16 %v700, %v696
  %v1145 = vpack.c.b16 %v701, %v697
  %v1146 = vpack.c.b16 %v702, %v698
  %v1147 = vpack.c.b16 %v703, %v699
  %v1148 = vpack.c.b16 %v708, %v704
  %v1149 = vpack.c.b16 %v709, %v705
  %v1150 = vpack.c.b16 %v710, %v706
  %v1151 = vpack.c.b16 %v711, %v707
  %v1152 = vpack.c.b16 %v716, %v712
  %v1153 = vpack.c.b16 %v717, %v713
  %v1154 = vpack.c.b16 %v718, %v714
  %v1155 = vpack.c.b16 %v719, %v715
  %v1156 = vpack.c.b16 %v724, %v720
  %v1157 = vpack.c.b16 %v725, %v721
  %v1158 = vpack.c.b16 %v726, %v722
  %v1159 = vpack.c.b16 %v727, %v723
  %v1160 = vpack.c.b16 %v732, %v728
  %v1161 = vpack.c.b16 %v733, %v729
  %v1162 = vpack.c.b16 %v734, %v730
  %v1163 = vpack.c.b16 %v735, %v731
  %v1164 = vpack.c.b16 %v740, %v736
  %v1165 = vpack.c.b16 %v741, %v737
  %v1166 = vpack.c.b16 %v742, %v738
  %v1167 = vpack.c.b16 %v743, %v739
  %v1168 = vpack.c.b16 %v748, %v744
  %v1169 = vpack.c.b16 %v749, %v745
  %v1170 = vpack.c.b16 %v750, %v746
  %v1171 = vpack.c.b16 %v751, %v747
  %v1172 = vpack.c.b16 %v756, %v752
  %v1173 = vpack.c.b16 %v757, %v753
  %v1174 = vpack.c.b16 %v758, %v754
  %v1175 = vpack.c.b16 %v759, %v755
  %v1176 = vpack.c.b16 %v764, %v760
  %v1177 = vpack.c.b16 %v765, %v761
  %v1178 = vpack.c.b16 %v766, %v762
  %v1179 = vpack.c.b16 %v767, %v763
  %v1180 = vpack.c.b16 %v772, %v768
  %v1181 = vpack.c.b16 %v773, %v769
  %v1182 = vpack.c.b16 %v774, %v770
  %v1183 = vpack.c.b16 %v775, %v771
  %v1184 = vpack.c.b16 %v780, %v776
  %v1185 = vpack.c.b16 %v781, %v777
  %v1186 = vpack.c.b16 %v782, %v778
  %v1187 = vpack.c.b16 %v783, %v779
  %v1188 = vpack.c.b16 %v788, %v784
  %v1189 = vpack.c.b16 %v789, %v785
  %v1190 = vpack.c.b16 %v790, %v786
  %v1191 = vpack.c.b16 %v791, %v787
  %v1192 = vpack.c.b16 %v796, %v792
  %v1193 = vpack.c.b16 %v797, %v793
  %v1194 = vpack.c.b16 %v798, %v794
  %v1195 = vpack.c.b16 %v799, %v795
  %v1196 = vpack.c.b16 %v804, %v800
  %v1197 = vpack.c.b16 %v805, %v801
  %v1198 = vpack.c.b16 %v806, %v802
  %v1199 = vpack.c.b16 %v807, %v803
  %v1200 = vpack.c.b16 %v812, %v808
  %v1201 = vpack.c.b16 %v813, %v809
  %v1202 = vpack.c.b16 %v814, %v810
  %v1203 = vpack.c.b16 %v815, %v811
  %v1204 = vpack.c.b16 %v820, %v816
  %v1205 = vpack.c.b16 %v821, %v817
  %v1206 = vpack.c.b16 %v822, %v818
  %v1207 = vpack.c.b16 %v823, %v819
  %v1208 = vpack.c.b16 %v828, %v824
  %v1209 = vpack.c.b16 %v829, %v825
  %v1210 = vpack.c.b16 %v830, %v826
  %v1211 = vpack.c.b16 %v831, %v827
  %v1212 = vpack.c.b16 %v836, %v832
  %v1213 = vpack.c.b16 %v837, %v833
  %v1214 = vpack.c.b16 %v838, %v834
  %v1215 = vpack.c.b16 %v839, %v835
  %v1216 = vpack.c.b16 %v844, %v840
  %v1217 = vpack.c.b16 %v845, %v841
  %v1218 = vpack.c.b16 %v846, %v842
  %v1219 = vpack.c.b16 %v847, %v843
  %v1220 = vpack.c.b16 %v852, %v848
  %v1221 = vpack.c.b16 %v853, %v849
  %v1222 = vpack.c.b16 %v854, %v850
  %v1223 = vpack.c.b16 %v855, %v851
  %v1224 = vpack.c.b16 %v860, %v856
  %v1225 = vpack.c.b16 %v861, %v857
  %v1226 = vpack.c.b16 %v862, %v858
  %v1227 = vpack.c.b16 %v863, %v859
  %v1228 = vpack.c.b16 %v868, %v864
  %v1229 = vpack.c.b16 %v869, %v865
  %v1230 = vpack.c.b16 %v870, %v866
  %v1231 = vpack.c.b16 %v871, %v867
  %v1232 = vpack.c.b16 %v876, %v872
  %v1233 = vpack.c.b16 %v877, %v873
  %v1234 = vpack.c.b16 %v878, %v874
  %v1235 = vpack.c.b16 %v879, %v875
  %v1236 = vpack.c.b16 %v884, %v880
  %v1237 = vpack.c.b16 %v885, %v881
  %v1238 = vpack.c.b16 %v886, %v882
  %v1239 = vpack.c.b16 %v887, %v883
  %v1240 = vpack.c.b16 %v892, %v888
  %v1241 = vpack.c.b16 %v893, %v889
  %v1242 = vpack.c.b16 %v894, %v890
  %v1243 = vpack.c.b16 %v895, %v891
  %v1244 = vpack.c.b16 %v900, %v896
  %v1245 = vpack.c.b16 %v901, %v897
  %v1246 = vpack.c.b16 %v902, %v898
  %v1247 = vpack.c.b16 %v903, %v899
  %v1248 = vpack.c.b16 %v908, %v904
  %v1249 = vpack.c.b16 %v909, %v905
  %v1250 = vpack.c.b16 %v910, %v906
  %v1251 = vpack.c.b16 %v911, %v907
  %v1252 = vpack.c.b16 %v916, %v912
  %v1253 = vpack.c.b16 %v917, %v913
  %v1254 = vpack.c.b16 %v918, %v914
  %v1255 = vpack.c.b16 %v919, %v915
  %v1256 = vpack.c.b16 %v924, %v920
  %v1257 = vpack.c.b16 %v925, %v921
  %v1258 = vpack.c.b16 %v926, %v922
  %v1259 = vpack.c.b16 %v927, %v923
  %v1260 = vpack.c.b16 %v932, %v928
  %v1261 = vpack.c.b16 %v933, %v929
  %v1262 = vpack.c.b16 %v934, %v930
  %v1263 = vpack.c.b16 %v935, %v931
  %v1264 = vpack.c.b16 %v940, %v936
  %v1265 = vpack.c.b16 %v941, %v937
  %v1266 = vpack.c.b16 %v942, %v938
  %v1267 = vpack.c.b16 %v943, %v939
  %v1268 = vpack.c.b16 %v948, %v944
  %v1269 = vpack.c.b16 %v949, %v945
  %v1270 = vpack.c.b16 %v950, %v946
  %v1271 = vpack.c.b16 %v951, %v947
  %v1272 = vpack.c.b16 %v956, %v952
  %v1273 = vpack.c.b16 %v957, %v953
  %v1274 = vpack.c.b16 %v958, %v954
  %v1275 = vpack.c.b16 %v959, %v955
  %v1276 = vpack.c.b16 %v964, %v960
  %v1277 = vpack.c.b16 %v965, %v961
  %v1278 = vpack.c.b16 %v966, %v962
  %v1279 = vpack.c.b16 %v967, %v963
  %v1280 = vpack.c.b16 %v972, %v968
  %v1281 = vpack.c.b16 %v973, %v969
  %v1282 = vpack.c.b16 %v974, %v970
  %v1283 = vpack.c.b16 %v975, %v971
  %v1284 = vpack.c.b16 %v980, %v976
  %v1285 = vpack.c.b16 %v981, %v977
  %v1286 = vpack.c.b16 %v982, %v978
  %v1287 = vpack.c.b16 %v983, %v979
  %v1288 = vpack.c.b16 %v988, %v984
  %v1289 = vpack.c.b16 %v989, %v985
  %v1290 = vpack.c.b16 %v990, %v986
  %v1291 = vpack.c.b16 %v991, %v987
  %v1292 = vpack.c.b16 %v996, %v992
  %v1293 = vpack.c.b16 %v997, %v993
  %v1294 = vpack.c.b16 %v998, %v994
  %v1295 = vpack.c.b16 %v999, %v995
  %v1296 = vpack.c.b16 %v1004, %v1000
  %v1297 = vpack.c.b16 %v1005, %v1001
  %v1298 = vpack.c.b16 %v1006, %v1002
  %v1299 = vpack.c.b16 %v1007, %v1003
  %v1300 = vpack.c.b16 %v1012, %v1008
  %v1301 = vpack.c.b16 %v1013, %v1009
  %v1302 = vpack.c.b16 %v1014, %v1010
  %v1303 = vpack.c.b16 %v1015, %v1011
  %v1304 = vpack.c.b16 %v1020, %v1016
  %v1305 = vpack.c.b16 %v1021, %v1017
  %v1306 = vpack.c.b16 %v1022, %v1018
  %v1307 = vpack.c.b16 %v1023, %v1019
  %v1308 = vpack.c.b16 %v1028, %v1024
  %v1309 = vpack.c.b16 %v1029, %v1025
  %v1310 = vpack.c.b16 %v1030, %v1026
  %v1311 = vpack.c.b16 %v1031, %v1027
  %v1312 = vpack.c.b16 %v1036, %v1032
  %v1313 = vpack.c.b16 %v1037, %v1033
  %v1314 = vpack.c.b16 %v1038, %v1034
  %v1315 = vpack.c.b16 %v1039, %v1035
  %v1316 = vpack.c.b16 %v1044, %v1040
  %v1317 = vpack.c.b16 %v1045, %v1041
  %v1318 = vpack.c.b16 %v1046, %v1042
  %v1319 = vpack.c.b16 %v1047, %v1043
  %v1320 = vpack.c.b16 %v1052, %v1048
  %v1321 = vpack.c.b16 %v1053, %v1049
  %v1322 = vpack.c.b16 %v1054, %v1050
  %v1323 = vpack.c.b16 %v1055, %v1051
  %v1324 = vpack.c.b16 %v1060, %v1056
  %v1325 = vpack.c.b16 %v1061, %v1057
  %v1326 = vpack.c.b16 %v1062, %v1058
  %v1327 = vpack.c.b16 %v1063, %v1059
  %v1328 = vpack.c.b16 %v1068, %v1064
  %v1329 = vpack.c.b16 %v1069, %v1065
  %v1330 = vpack.c.b16 %v1070, %v1066
  %v1331 = vpack.c.b16 %v1071, %v1067
  %v1332 = vpack.c.b16 %v1076, %v1072
  %v1333 = vpack.c.b16 %v1077, %v1073
  %v1334 = vpack.c.b16 %v1078, %v1074
  %v1335 = vpack.c.b16 %v1079, %v1075
  %1592 = vmatpush.bf16.msra.mxu0 %v1108
  %1593 = vmatpush.bf16.msra.mxu0 %v1104
  %1594 = vmatpush.bf16.msra.mxu0 %v1100
  %1595 = vmatpush.bf16.msra.mxu0 %v1096
  %1596 = vmatpush.bf16.msra.mxu0 %v1092
  %1597 = vmatpush.bf16.msra.mxu0 %v1088
  %1598 = vmatpush.bf16.msra.mxu0 %v1084
  %1599 = vmatpush.bf16.msra.mxu0 %v1080
  %1600 = vmatmul.bf16.gmra.mxu0 %v296
  %v1601 = vpop.f32.mrf.mxu0
  %v1602 = vadd.f32 %v276, %v1601
  %v1603 = vpop.f32.mrf.mxu0
  %1604 = vdwg.mxu0
  %1605 = vmatpush.bf16.msra.mxu0 %v1140
  %1606 = vmatpush.bf16.msra.mxu0 %v1136
  %1607 = vmatpush.bf16.msra.mxu0 %v1132
  %1608 = vmatpush.bf16.msra.mxu0 %v1128
  %1609 = vmatpush.bf16.msra.mxu0 %v1124
  %1610 = vmatpush.bf16.msra.mxu0 %v1120
  %1611 = vmatpush.bf16.msra.mxu0 %v1116
  %1612 = vmatpush.bf16.msra.mxu0 %v1112
  %1613 = vmatmul.bf16.gmra.mxu0 %v297
  %v1614 = vpop.f32.mrf.mxu0
  %v1615 = vadd.f32 %v1602, %v1614
  %v1616 = vpop.f32.mrf.mxu0
  %1617 = vdwg.mxu0
  %1618 = vmatpush.bf16.msra.mxu0 %v1172
  %1619 = vmatpush.bf16.msra.mxu0 %v1168
  %1620 = vmatpush.bf16.msra.mxu0 %v1164
  %1621 = vmatpush.bf16.msra.mxu0 %v1160
  %1622 = vmatpush.bf16.msra.mxu0 %v1156
  %1623 = vmatpush.bf16.msra.mxu0 %v1152
  %1624 = vmatpush.bf16.msra.mxu0 %v1148
  %1625 = vmatpush.bf16.msra.mxu0 %v1144
  %1626 = vmatmul.bf16.gmra.mxu0 %v298
  %v1627 = vpop.f32.mrf.mxu0
  %v1628 = vadd.f32 %v1615, %v1627
  %v1629 = vpop.f32.mrf.mxu0
  %1630 = vdwg.mxu0
  %1631 = vmatpush.bf16.msra.mxu0 %v1204
  %1632 = vmatpush.bf16.msra.mxu0 %v1200
  %1633 = vmatpush.bf16.msra.mxu0 %v1196
  %1634 = vmatpush.bf16.msra.mxu0 %v1192
  %1635 = vmatpush.bf16.msra.mxu0 %v1188
  %1636 = vmatpush.bf16.msra.mxu0 %v1184
  %1637 = vmatpush.bf16.msra.mxu0 %v1180
  %1638 = vmatpush.bf16.msra.mxu0 %v1176
  %1639 = vmatmul.bf16.gmra.mxu0 %v299
  %v1640 = vpop.f32.mrf.mxu0
  %v1641 = vadd.f32 %v1628, %v1640
  %v1642 = vpop.f32.mrf.mxu0
  %1643 = vdwg.mxu0
  %1644 = vmatpush.bf16.msra.mxu0 %v1236
  %1645 = vmatpush.bf16.msra.mxu0 %v1232
  %1646 = vmatpush.bf16.msra.mxu0 %v1228
  %1647 = vmatpush.bf16.msra.mxu0 %v1224
  %1648 = vmatpush.bf16.msra.mxu0 %v1220
  %1649 = vmatpush.bf16.msra.mxu0 %v1216
  %1650 = vmatpush.bf16.msra.mxu0 %v1212
  %1651 = vmatpush.bf16.msra.mxu0 %v1208
  %1652 = vmatmul.bf16.gmra.mxu0 %v300
  %v1653 = vpop.f32.mrf.mxu0
  %v1654 = vadd.f32 %v1641, %v1653
  %v1655 = vpop.f32.mrf.mxu0
  %1656 = vdwg.mxu0
  %1657 = vmatpush.bf16.msra.mxu0 %v1268
  %1658 = vmatpush.bf16.msra.mxu0 %v1264
  %1659 = vmatpush.bf16.msra.mxu0 %v1260
  %1660 = vmatpush.bf16.msra.mxu0 %v1256
  %1661 = vmatpush.bf16.msra.mxu0 %v1252
  %1662 = vmatpush.bf16.msra.mxu0 %v1248
  %1663 = vmatpush.bf16.msra.mxu0 %v1244
  %1664 = vmatpush.bf16.msra.mxu0 %v1240
  %1665 = vmatmul.bf16.gmra.mxu0 %v301
  %v1666 = vpop.f32.mrf.mxu0
  %v1667 = vadd.f32 %v1654, %v1666
  %v1668 = vpop.f32.mrf.mxu0
  %1669 = vdwg.mxu0
  %1670 = vmatpush.bf16.msra.mxu0 %v1300
  %1671 = vmatpush.bf16.msra.mxu0 %v1296
  %1672 = vmatpush.bf16.msra.mxu0 %v1292
  %1673 = vmatpush.bf16.msra.mxu0 %v1288
  %1674 = vmatpush.bf16.msra.mxu0 %v1284
  %1675 = vmatpush.bf16.msra.mxu0 %v1280
  %1676 = vmatpush.bf16.msra.mxu0 %v1276
  %1677 = vmatpush.bf16.msra.mxu0 %v1272
  %1678 = vmatmul.bf16.gmra.mxu0 %v302
  %v1679 = vpop.f32.mrf.mxu0
  %v1680 = vadd.f32 %v1667, %v1679
  %v1681 = vpop.f32.mrf.mxu0
  %1682 = vdwg.mxu0
  %1683 = vmatpush.bf16.msra.mxu0 %v1332
  %1684 = vmatpush.bf16.msra.mxu0 %v1328
  %1685 = vmatpush.bf16.msra.mxu0 %v1324
  %1686 = vmatpush.bf16.msra.mxu0 %v1320
  %1687 = vmatpush.bf16.msra.mxu0 %v1316
  %1688 = vmatpush.bf16.msra.mxu0 %v1312
  %1689 = vmatpush.bf16.msra.mxu0 %v1308
  %1690 = vmatpush.bf16.msra.mxu0 %v1304
  %1691 = vmatmul.bf16.gmra.mxu0 %v303
  %v1692 = vpop.f32.mrf.mxu0
  %v1693 = vadd.f32 %v1680, %v1692
  %v1694 = vpop.f32.mrf.mxu0
  %1695 = vdwg.mxu0
  %1696 = vmatpush.bf16.msra.mxu0 %v1109
  %1697 = vmatpush.bf16.msra.mxu0 %v1105
  %1698 = vmatpush.bf16.msra.mxu0 %v1101
  %1699 = vmatpush.bf16.msra.mxu0 %v1097
  %1700 = vmatpush.bf16.msra.mxu0 %v1093
  %1701 = vmatpush.bf16.msra.mxu0 %v1089
  %1702 = vmatpush.bf16.msra.mxu0 %v1085
  %1703 = vmatpush.bf16.msra.mxu0 %v1081
  %1704 = vmatmul.bf16.gmra.mxu0 %v296
  %v1705 = vpop.f32.mrf.mxu0
  %v1706 = vadd.f32 %v277, %v1705
  %v1707 = vpop.f32.mrf.mxu0
  %1708 = vdwg.mxu0
  %1709 = vmatpush.bf16.msra.mxu0 %v1141
  %1710 = vmatpush.bf16.msra.mxu0 %v1137
  %1711 = vmatpush.bf16.msra.mxu0 %v1133
  %1712 = vmatpush.bf16.msra.mxu0 %v1129
  %1713 = vmatpush.bf16.msra.mxu0 %v1125
  %1714 = vmatpush.bf16.msra.mxu0 %v1121
  %1715 = vmatpush.bf16.msra.mxu0 %v1117
  %1716 = vmatpush.bf16.msra.mxu0 %v1113
  %1717 = vmatmul.bf16.gmra.mxu0 %v297
  %v1718 = vpop.f32.mrf.mxu0
  %v1719 = vadd.f32 %v1706, %v1718
  %v1720 = vpop.f32.mrf.mxu0
  %1721 = vdwg.mxu0
  %1722 = vmatpush.bf16.msra.mxu0 %v1173
  %1723 = vmatpush.bf16.msra.mxu0 %v1169
  %1724 = vmatpush.bf16.msra.mxu0 %v1165
  %1725 = vmatpush.bf16.msra.mxu0 %v1161
  %1726 = vmatpush.bf16.msra.mxu0 %v1157
  %1727 = vmatpush.bf16.msra.mxu0 %v1153
  %1728 = vmatpush.bf16.msra.mxu0 %v1149
  %1729 = vmatpush.bf16.msra.mxu0 %v1145
  %1730 = vmatmul.bf16.gmra.mxu0 %v298
  %v1731 = vpop.f32.mrf.mxu0
  %v1732 = vadd.f32 %v1719, %v1731
  %v1733 = vpop.f32.mrf.mxu0
  %1734 = vdwg.mxu0
  %1735 = vmatpush.bf16.msra.mxu0 %v1205
  %1736 = vmatpush.bf16.msra.mxu0 %v1201
  %1737 = vmatpush.bf16.msra.mxu0 %v1197
  %1738 = vmatpush.bf16.msra.mxu0 %v1193
  %1739 = vmatpush.bf16.msra.mxu0 %v1189
  %1740 = vmatpush.bf16.msra.mxu0 %v1185
  %1741 = vmatpush.bf16.msra.mxu0 %v1181
  %1742 = vmatpush.bf16.msra.mxu0 %v1177
  %1743 = vmatmul.bf16.gmra.mxu0 %v299
  %v1744 = vpop.f32.mrf.mxu0
  %v1745 = vadd.f32 %v1732, %v1744
  %v1746 = vpop.f32.mrf.mxu0
  %1747 = vdwg.mxu0
  %1748 = vmatpush.bf16.msra.mxu0 %v1237
  %1749 = vmatpush.bf16.msra.mxu0 %v1233
  %1750 = vmatpush.bf16.msra.mxu0 %v1229
  %1751 = vmatpush.bf16.msra.mxu0 %v1225
  %1752 = vmatpush.bf16.msra.mxu0 %v1221
  %1753 = vmatpush.bf16.msra.mxu0 %v1217
  %1754 = vmatpush.bf16.msra.mxu0 %v1213
  %1755 = vmatpush.bf16.msra.mxu0 %v1209
  %1756 = vmatmul.bf16.gmra.mxu0 %v300
  %v1757 = vpop.f32.mrf.mxu0
  %v1758 = vadd.f32 %v1745, %v1757
  %v1759 = vpop.f32.mrf.mxu0
  %1760 = vdwg.mxu0
  %1761 = vmatpush.bf16.msra.mxu0 %v1269
  %1762 = vmatpush.bf16.msra.mxu0 %v1265
  %1763 = vmatpush.bf16.msra.mxu0 %v1261
  %1764 = vmatpush.bf16.msra.mxu0 %v1257
  %1765 = vmatpush.bf16.msra.mxu0 %v1253
  %1766 = vmatpush.bf16.msra.mxu0 %v1249
  %1767 = vmatpush.bf16.msra.mxu0 %v1245
  %1768 = vmatpush.bf16.msra.mxu0 %v1241
  %1769 = vmatmul.bf16.gmra.mxu0 %v301
  %v1770 = vpop.f32.mrf.mxu0
  %v1771 = vadd.f32 %v1758, %v1770
  %v1772 = vpop.f32.mrf.mxu0
  %1773 = vdwg.mxu0
  %1774 = vmatpush.bf16.msra.mxu0 %v1301
  %1775 = vmatpush.bf16.msra.mxu0 %v1297
  %1776 = vmatpush.bf16.msra.mxu0 %v1293
  %1777 = vmatpush.bf16.msra.mxu0 %v1289
  %1778 = vmatpush.bf16.msra.mxu0 %v1285
  %1779 = vmatpush.bf16.msra.mxu0 %v1281
  %1780 = vmatpush.bf16.msra.mxu0 %v1277
  %1781 = vmatpush.bf16.msra.mxu0 %v1273
  %1782 = vmatmul.bf16.gmra.mxu0 %v302
  %v1783 = vpop.f32.mrf.mxu0
  %v1784 = vadd.f32 %v1771, %v1783
  %v1785 = vpop.f32.mrf.mxu0
  %1786 = vdwg.mxu0
  %1787 = vmatpush.bf16.msra.mxu0 %v1333
  %1788 = vmatpush.bf16.msra.mxu0 %v1329
  %1789 = vmatpush.bf16.msra.mxu0 %v1325
  %1790 = vmatpush.bf16.msra.mxu0 %v1321
  %1791 = vmatpush.bf16.msra.mxu0 %v1317
  %1792 = vmatpush.bf16.msra.mxu0 %v1313
  %1793 = vmatpush.bf16.msra.mxu0 %v1309
  %1794 = vmatpush.bf16.msra.mxu0 %v1305
  %1795 = vmatmul.bf16.gmra.mxu0 %v303
  %v1796 = vpop.f32.mrf.mxu0
  %v1797 = vadd.f32 %v1784, %v1796
  %v1798 = vpop.f32.mrf.mxu0
  %1799 = vdwg.mxu0
  %1800 = vmatpush.bf16.msra.mxu0 %v1110
  %1801 = vmatpush.bf16.msra.mxu0 %v1106
  %1802 = vmatpush.bf16.msra.mxu0 %v1102
  %1803 = vmatpush.bf16.msra.mxu0 %v1098
  %1804 = vmatpush.bf16.msra.mxu0 %v1094
  %1805 = vmatpush.bf16.msra.mxu0 %v1090
  %1806 = vmatpush.bf16.msra.mxu0 %v1086
  %1807 = vmatpush.bf16.msra.mxu0 %v1082
  %1808 = vmatmul.bf16.gmra.mxu0 %v296
  %v1809 = vpop.f32.mrf.mxu0
  %v1810 = vadd.f32 %v278, %v1809
  %v1811 = vpop.f32.mrf.mxu0
  %1812 = vdwg.mxu0
  %1813 = vmatpush.bf16.msra.mxu0 %v1142
  %1814 = vmatpush.bf16.msra.mxu0 %v1138
  %1815 = vmatpush.bf16.msra.mxu0 %v1134
  %1816 = vmatpush.bf16.msra.mxu0 %v1130
  %1817 = vmatpush.bf16.msra.mxu0 %v1126
  %1818 = vmatpush.bf16.msra.mxu0 %v1122
  %1819 = vmatpush.bf16.msra.mxu0 %v1118
  %1820 = vmatpush.bf16.msra.mxu0 %v1114
  %1821 = vmatmul.bf16.gmra.mxu0 %v297
  %v1822 = vpop.f32.mrf.mxu0
  %v1823 = vadd.f32 %v1810, %v1822
  %v1824 = vpop.f32.mrf.mxu0
  %1825 = vdwg.mxu0
  %1826 = vmatpush.bf16.msra.mxu0 %v1174
  %1827 = vmatpush.bf16.msra.mxu0 %v1170
  %1828 = vmatpush.bf16.msra.mxu0 %v1166
  %1829 = vmatpush.bf16.msra.mxu0 %v1162
  %1830 = vmatpush.bf16.msra.mxu0 %v1158
  %1831 = vmatpush.bf16.msra.mxu0 %v1154
  %1832 = vmatpush.bf16.msra.mxu0 %v1150
  %1833 = vmatpush.bf16.msra.mxu0 %v1146
  %1834 = vmatmul.bf16.gmra.mxu0 %v298
  %v1835 = vpop.f32.mrf.mxu0
  %v1836 = vadd.f32 %v1823, %v1835
  %v1837 = vpop.f32.mrf.mxu0
  %1838 = vdwg.mxu0
  %1839 = vmatpush.bf16.msra.mxu0 %v1206
  %1840 = vmatpush.bf16.msra.mxu0 %v1202
  %1841 = vmatpush.bf16.msra.mxu0 %v1198
  %1842 = vmatpush.bf16.msra.mxu0 %v1194
  %1843 = vmatpush.bf16.msra.mxu0 %v1190
  %1844 = vmatpush.bf16.msra.mxu0 %v1186
  %1845 = vmatpush.bf16.msra.mxu0 %v1182
  %1846 = vmatpush.bf16.msra.mxu0 %v1178
  %1847 = vmatmul.bf16.gmra.mxu0 %v299
  %v1848 = vpop.f32.mrf.mxu0
  %v1849 = vadd.f32 %v1836, %v1848
  %v1850 = vpop.f32.mrf.mxu0
  %1851 = vdwg.mxu0
  %1852 = vmatpush.bf16.msra.mxu0 %v1238
  %1853 = vmatpush.bf16.msra.mxu0 %v1234
  %1854 = vmatpush.bf16.msra.mxu0 %v1230
  %1855 = vmatpush.bf16.msra.mxu0 %v1226
  %1856 = vmatpush.bf16.msra.mxu0 %v1222
  %1857 = vmatpush.bf16.msra.mxu0 %v1218
  %1858 = vmatpush.bf16.msra.mxu0 %v1214
  %1859 = vmatpush.bf16.msra.mxu0 %v1210
  %1860 = vmatmul.bf16.gmra.mxu0 %v300
  %v1861 = vpop.f32.mrf.mxu0
  %v1862 = vadd.f32 %v1849, %v1861
  %v1863 = vpop.f32.mrf.mxu0
  %1864 = vdwg.mxu0
  %1865 = vmatpush.bf16.msra.mxu0 %v1270
  %1866 = vmatpush.bf16.msra.mxu0 %v1266
  %1867 = vmatpush.bf16.msra.mxu0 %v1262
  %1868 = vmatpush.bf16.msra.mxu0 %v1258
  %1869 = vmatpush.bf16.msra.mxu0 %v1254
  %1870 = vmatpush.bf16.msra.mxu0 %v1250
  %1871 = vmatpush.bf16.msra.mxu0 %v1246
  %1872 = vmatpush.bf16.msra.mxu0 %v1242
  %1873 = vmatmul.bf16.gmra.mxu0 %v301
  %v1874 = vpop.f32.mrf.mxu0
  %v1875 = vadd.f32 %v1862, %v1874
  %v1876 = vpop.f32.mrf.mxu0
  %1877 = vdwg.mxu0
  %1878 = vmatpush.bf16.msra.mxu0 %v1302
  %1879 = vmatpush.bf16.msra.mxu0 %v1298
  %1880 = vmatpush.bf16.msra.mxu0 %v1294
  %1881 = vmatpush.bf16.msra.mxu0 %v1290
  %1882 = vmatpush.bf16.msra.mxu0 %v1286
  %1883 = vmatpush.bf16.msra.mxu0 %v1282
  %1884 = vmatpush.bf16.msra.mxu0 %v1278
  %1885 = vmatpush.bf16.msra.mxu0 %v1274
  %1886 = vmatmul.bf16.gmra.mxu0 %v302
  %v1887 = vpop.f32.mrf.mxu0
  %v1888 = vadd.f32 %v1875, %v1887
  %v1889 = vpop.f32.mrf.mxu0
  %1890 = vdwg.mxu0
  %1891 = vmatpush.bf16.msra.mxu0 %v1334
  %1892 = vmatpush.bf16.msra.mxu0 %v1330
  %1893 = vmatpush.bf16.msra.mxu0 %v1326
  %1894 = vmatpush.bf16.msra.mxu0 %v1322
  %1895 = vmatpush.bf16.msra.mxu0 %v1318
  %1896 = vmatpush.bf16.msra.mxu0 %v1314
  %1897 = vmatpush.bf16.msra.mxu0 %v1310
  %1898 = vmatpush.bf16.msra.mxu0 %v1306
  %1899 = vmatmul.bf16.gmra.mxu0 %v303
  %v1900 = vpop.f32.mrf.mxu0
  %v1901 = vadd.f32 %v1888, %v1900
  %v1902 = vpop.f32.mrf.mxu0
  %1903 = vdwg.mxu0
  %1904 = vmatpush.bf16.msra.mxu0 %v1111
  %1905 = vmatpush.bf16.msra.mxu0 %v1107
  %1906 = vmatpush.bf16.msra.mxu0 %v1103
  %1907 = vmatpush.bf16.msra.mxu0 %v1099
  %1908 = vmatpush.bf16.msra.mxu0 %v1095
  %1909 = vmatpush.bf16.msra.mxu0 %v1091
  %1910 = vmatpush.bf16.msra.mxu0 %v1087
  %1911 = vmatpush.bf16.msra.mxu0 %v1083
  %1912 = vmatmul.bf16.gmra.mxu0 %v296
  %v1913 = vpop.f32.mrf.mxu0
  %v1914 = vadd.f32 %v279, %v1913
  %v1915 = vpop.f32.mrf.mxu0
  %1916 = vdwg.mxu0
  %1917 = vmatpush.bf16.msra.mxu0 %v1143
  %1918 = vmatpush.bf16.msra.mxu0 %v1139
  %1919 = vmatpush.bf16.msra.mxu0 %v1135
  %1920 = vmatpush.bf16.msra.mxu0 %v1131
  %1921 = vmatpush.bf16.msra.mxu0 %v1127
  %1922 = vmatpush.bf16.msra.mxu0 %v1123
  %1923 = vmatpush.bf16.msra.mxu0 %v1119
  %1924 = vmatpush.bf16.msra.mxu0 %v1115
  %1925 = vmatmul.bf16.gmra.mxu0 %v297
  %v1926 = vpop.f32.mrf.mxu0
  %v1927 = vadd.f32 %v1914, %v1926
  %v1928 = vpop.f32.mrf.mxu0
  %1929 = vdwg.mxu0
  %1930 = vmatpush.bf16.msra.mxu0 %v1175
  %1931 = vmatpush.bf16.msra.mxu0 %v1171
  %1932 = vmatpush.bf16.msra.mxu0 %v1167
  %1933 = vmatpush.bf16.msra.mxu0 %v1163
  %1934 = vmatpush.bf16.msra.mxu0 %v1159
  %1935 = vmatpush.bf16.msra.mxu0 %v1155
  %1936 = vmatpush.bf16.msra.mxu0 %v1151
  %1937 = vmatpush.bf16.msra.mxu0 %v1147
  %1938 = vmatmul.bf16.gmra.mxu0 %v298
  %v1939 = vpop.f32.mrf.mxu0
  %v1940 = vadd.f32 %v1927, %v1939
  %v1941 = vpop.f32.mrf.mxu0
  %1942 = vdwg.mxu0
  %1943 = vmatpush.bf16.msra.mxu0 %v1207
  %1944 = vmatpush.bf16.msra.mxu0 %v1203
  %1945 = vmatpush.bf16.msra.mxu0 %v1199
  %1946 = vmatpush.bf16.msra.mxu0 %v1195
  %1947 = vmatpush.bf16.msra.mxu0 %v1191
  %1948 = vmatpush.bf16.msra.mxu0 %v1187
  %1949 = vmatpush.bf16.msra.mxu0 %v1183
  %1950 = vmatpush.bf16.msra.mxu0 %v1179
  %1951 = vmatmul.bf16.gmra.mxu0 %v299
  %v1952 = vpop.f32.mrf.mxu0
  %v1953 = vadd.f32 %v1940, %v1952
  %v1954 = vpop.f32.mrf.mxu0
  %1955 = vdwg.mxu0
  %1956 = vmatpush.bf16.msra.mxu0 %v1239
  %1957 = vmatpush.bf16.msra.mxu0 %v1235
  %1958 = vmatpush.bf16.msra.mxu0 %v1231
  %1959 = vmatpush.bf16.msra.mxu0 %v1227
  %1960 = vmatpush.bf16.msra.mxu0 %v1223
  %1961 = vmatpush.bf16.msra.mxu0 %v1219
  %1962 = vmatpush.bf16.msra.mxu0 %v1215
  %1963 = vmatpush.bf16.msra.mxu0 %v1211
  %1964 = vmatmul.bf16.gmra.mxu0 %v300
  %v1965 = vpop.f32.mrf.mxu0
  %v1966 = vadd.f32 %v1953, %v1965
  %v1967 = vpop.f32.mrf.mxu0
  %1968 = vdwg.mxu0
  %1969 = vmatpush.bf16.msra.mxu0 %v1271
  %1970 = vmatpush.bf16.msra.mxu0 %v1267
  %1971 = vmatpush.bf16.msra.mxu0 %v1263
  %1972 = vmatpush.bf16.msra.mxu0 %v1259
  %1973 = vmatpush.bf16.msra.mxu0 %v1255
  %1974 = vmatpush.bf16.msra.mxu0 %v1251
  %1975 = vmatpush.bf16.msra.mxu0 %v1247
  %1976 = vmatpush.bf16.msra.mxu0 %v1243
  %1977 = vmatmul.bf16.gmra.mxu0 %v301
  %v1978 = vpop.f32.mrf.mxu0
  %v1979 = vadd.f32 %v1966, %v1978
  %v1980 = vpop.f32.mrf.mxu0
  %1981 = vdwg.mxu0
  %1982 = vmatpush.bf16.msra.mxu0 %v1303
  %1983 = vmatpush.bf16.msra.mxu0 %v1299
  %1984 = vmatpush.bf16.msra.mxu0 %v1295
  %1985 = vmatpush.bf16.msra.mxu0 %v1291
  %1986 = vmatpush.bf16.msra.mxu0 %v1287
  %1987 = vmatpush.bf16.msra.mxu0 %v1283
  %1988 = vmatpush.bf16.msra.mxu0 %v1279
  %1989 = vmatpush.bf16.msra.mxu0 %v1275
  %1990 = vmatmul.bf16.gmra.mxu0 %v302
  %v1991 = vpop.f32.mrf.mxu0
  %v1992 = vadd.f32 %v1979, %v1991
  %v1993 = vpop.f32.mrf.mxu0
  %1994 = vdwg.mxu0
  %1995 = vmatpush.bf16.msra.mxu0 %v1335
  %1996 = vmatpush.bf16.msra.mxu0 %v1331
  %1997 = vmatpush.bf16.msra.mxu0 %v1327
  %1998 = vmatpush.bf16.msra.mxu0 %v1323
  %1999 = vmatpush.bf16.msra.mxu0 %v1319
  %2000 = vmatpush.bf16.msra.mxu0 %v1315
  %2001 = vmatpush.bf16.msra.mxu0 %v1311
  %2002 = vmatpush.bf16.msra.mxu0 %v1307
  %2003 = vmatmul.bf16.gmra.mxu0 %v303
  %v2004 = vpop.f32.mrf.mxu0
  %v2005 = vadd.f32 %v1992, %v2004
  %v2006 = vpop.f32.mrf.mxu0
  %2007 = vdwg.mxu0
  %v2008 = vmax.f32 %v1693, 0.0
  %v2009 = vmax.f32 %v1797, 0.0
  %v2010 = vmax.f32 %v1901, 0.0
  %v2011 = vmax.f32 %v2005, 0.0
  %2012 = vst [vmem:[%s3] sm:$0xff] %v2008
  %2013 = vst [vmem:[%s3 + $0x8] sm:$0xff] %v2009
  %2014 = vst [vmem:[%s3 + $0x10] sm:$0xff] %v2010
  %2015 = vst [vmem:[%s3 + $0x18] sm:$0xff] %v2011
  // Predicated region
  $region14: #{encoder_cnn_forward.11} parent=0 // pred_check
    _
  $region15: #{encoder_cnn_forward.11} parent=0 // pred_check_branch
    %2017 = sbr.rel (0) target = $region17
  $region16: #{encoder_cnn_forward.11} parent=0 // pred_region
    _
  $region17: #{encoder_cnn_forward.11} parent=0 // pred_fallthru
    _
  // Predicated region
  $region18: #{encoder_cnn_forward.11} parent=0 // pred_check
    _
  $region19: #{encoder_cnn_forward.11} parent=0 // pred_check_branch
    %2019 = sbr.rel (0) target = $region21
  $region20: #{encoder_cnn_forward.11} parent=0 // pred_region
    _
  $region21: #{encoder_cnn_forward.11} parent=0 // pred_fallthru
    _

// kernel: encoder_cnn_forward.10
$region0: #{encoder_cnn_forward.10}
  #allocation0 [shape = 'u32[]', space=smem, size = 0x4, offset = 0x4, fixed_abs, tag = 'smem constant byte address 0x4 - core index']
  #allocation1 [shape = 'u32[72,128]{1,0:T(1,128)}', space=vmem, size = 0x9000, scoped, tag = 'internal scratch']
  %s0 = inlined_call_operand.vmem [shape: bf16[8,1024], index: 0, kind: input, shape index: {}]
  %s1 = inlined_call_operand.vmem [shape: bf16[1024,512], index: 1, kind: input, shape index: {}]
  %s2 = inlined_call_operand.vmem [shape: f32[1,512], index: 2, kind: input, shape index: {}]
  %s3 = inlined_call_operand.vmem [shape: bf16[512,512], index: 3, kind: input, shape index: {}]
  %s4 = inlined_call_operand.vmem [shape: f32[1,512], index: 4, kind: input, shape index: {}]
  %s5 = inlined_call_operand.vmem [shape: bf16[512,384], index: 5, kind: input, shape index: {}]
  %s6 = inlined_call_operand.vmem [shape: f32[1,384], index: 6, kind: input, shape index: {}]
  %s7 = inlined_call_operand.vmem [shape: f32[8,384], index: 7, kind: output, shape index: {}]
  %s8 = sld [smem:[#allocation0]]
  $region38: #{encoder_cnn_forward.10} parent=0
    _
  %s10 = ssub.s32 1, %s8
  %s11 = scalar_select 0, %s10, %s8
  // Predicated region
  $region2: #{encoder_cnn_forward.10} parent=0 // pred_check
    _
  $region3: #{encoder_cnn_forward.10} parent=0 // pred_check_branch
    %13 = sbr.rel (0) target = $region5
  $region4: #{encoder_cnn_forward.10} parent=0 // pred_region
    _
  $region5: #{encoder_cnn_forward.10} parent=0 // pred_fallthru
    _
  // Predicated region
  $region6: #{encoder_cnn_forward.10} parent=0 // pred_check
    _
  $region7: #{encoder_cnn_forward.10} parent=0 // pred_check_branch
    %15 = sbr.rel (0) target = $region9
  $region8: #{encoder_cnn_forward.10} parent=0 // pred_region
    _
  $region9: #{encoder_cnn_forward.10} parent=0 // pred_fallthru
    _
  // Predicated region
  $region10: #{encoder_cnn_forward.10} parent=0 // pred_check
    _
  $region11: #{encoder_cnn_forward.10} parent=0 // pred_check_branch
    %17 = sbr.rel (0) target = $region13
  $region12: #{encoder_cnn_forward.10} parent=0 // pred_region
    _
  $region13: #{encoder_cnn_forward.10} parent=0 // pred_fallthru
    _
  // Predicated region
  $region14: #{encoder_cnn_forward.10} parent=0 // pred_check
    _
  $region15: #{encoder_cnn_forward.10} parent=0 // pred_check_branch
    %19 = sbr.rel (0) target = $region17
  $region16: #{encoder_cnn_forward.10} parent=0 // pred_region
    _
  $region17: #{encoder_cnn_forward.10} parent=0 // pred_fallthru
    _
  // Predicated region
  $region18: #{encoder_cnn_forward.10} parent=0 // pred_check
    _
  $region19: #{encoder_cnn_forward.10} parent=0 // pred_check_branch
    %21 = sbr.rel (0) target = $region21
  $region20: #{encoder_cnn_forward.10} parent=0 // pred_region
    _
  $region21: #{encoder_cnn_forward.10} parent=0 // pred_fallthru
    _
  // Predicated region
  $region22: #{encoder_cnn_forward.10} parent=0 // pred_check
    _
  $region23: #{encoder_cnn_forward.10} parent=0 // pred_check_branch
    %23 = sbr.rel (0) target = $region25
  $region24: #{encoder_cnn_forward.10} parent=0 // pred_region
    _
  $region25: #{encoder_cnn_forward.10} parent=0 // pred_fallthru
    _
  // Predicated region
  $region26: #{encoder_cnn_forward.10} parent=0 // pred_check
    _
  $region27: #{encoder_cnn_forward.10} parent=0 // pred_check_branch
    %25 = sbr.rel (0) target = $region29
  $region28: #{encoder_cnn_forward.10} parent=0 // pred_region
    _
  $region29: #{encoder_cnn_forward.10} parent=0 // pred_fallthru
    _
  %v26 = vld [vmem:[%s0] sm:$0xff]
  %v27 = vld [vmem:[%s0 + $0x8] sm:$0xff]
  %v28 = vld [vmem:[%s0 + $0x10] sm:$0xff]
  %v29 = vld [vmem:[%s0 + $0x18] sm:$0xff]
  %v30 = vld [vmem:[%s1] sm:$0xff]
  %v31 = vld [vmem:[%s1 + $0x8] sm:$0xff]
  %v32 = vld [vmem:[%s1 + $0x10] sm:$0xff]
  %v33 = vld [vmem:[%s1 + $0x18] sm:$0xff]
  %v34 = vld [vmem:[%s1 + $0x20] sm:$0xff]
  %v35 = vld [vmem:[%s1 + $0x28] sm:$0xff]
  %v36 = vld [vmem:[%s1 + $0x30] sm:$0xff]
  %v37 = vld [vmem:[%s1 + $0x38] sm:$0xff]
  %v38 = vld [vmem:[%s1 + $0x40] sm:$0xff]
  %v39 = vld [vmem:[%s1 + $0x48] sm:$0xff]
  %v40 = vld [vmem:[%s1 + $0x50] sm:$0xff]
  %v41 = vld [vmem:[%s1 + $0x58] sm:$0xff]
  %v42 = vld [vmem:[%s1 + $0x60] sm:$0xff]
  %v43 = vld [vmem:[%s1 + $0x68] sm:$0xff]
  %v44 = vld [vmem:[%s1 + $0x70] sm:$0xff]
  %v45 = vld [vmem:[%s1 + $0x78] sm:$0xff]
  %v46 = vld [vmem:[%s1 + $0x80] sm:$0xff]
  %v47 = vld [vmem:[%s1 + $0x88] sm:$0xff]
  %v48 = vld [vmem:[%s1 + $0x90] sm:$0xff]
  %v49 = vld [vmem:[%s1 + $0x98] sm:$0xff]
  %v50 = vld [vmem:[%s1 + $0xa0] sm:$0xff]
  %v51 = vld [vmem:[%s1 + $0xa8] sm:$0xff]
  %v52 = vld [vmem:[%s1 + $0xb0] sm:$0xff]
  %v53 = vld [vmem:[%s1 + $0xb8] sm:$0xff]
  %v54 = vld [vmem:[%s1 + $0xc0] sm:$0xff]
  %v55 = vld [vmem:[%s1 + $0xc8] sm:$0xff]
  %v56 = vld [vmem:[%s1 + $0xd0] sm:$0xff]
  %v57 = vld [vmem:[%s1 + $0xd8] sm:$0xff]
  %v58 = vld [vmem:[%s1 + $0xe0] sm:$0xff]
  %v59 = vld [vmem:[%s1 + $0xe8] sm:$0xff]
  %v60 = vld [vmem:[%s1 + $0xf0] sm:$0xff]
  %v61 = vld [vmem:[%s1 + $0xf8] sm:$0xff]
  %v62 = vld [vmem:[%s1 + $0x100] sm:$0xff]
  %v63 = vld [vmem:[%s1 + $0x108] sm:$0xff]
  %v64 = vld [vmem:[%s1 + $0x110] sm:$0xff]
  %v65 = vld [vmem:[%s1 + $0x118] sm:$0xff]
  %v66 = vld [vmem:[%s1 + $0x120] sm:$0xff]
  %v67 = vld [vmem:[%s1 + $0x128] sm:$0xff]
  %v68 = vld [vmem:[%s1 + $0x130] sm:$0xff]
  %v69 = vld [vmem:[%s1 + $0x138] sm:$0xff]
  %v70 = vld [vmem:[%s1 + $0x140] sm:$0xff]
  %v71 = vld [vmem:[%s1 + $0x148] sm:$0xff]
  %v72 = vld [vmem:[%s1 + $0x150] sm:$0xff]
  %v73 = vld [vmem:[%s1 + $0x158] sm:$0xff]
  %v74 = vld [vmem:[%s1 + $0x160] sm:$0xff]
  %v75 = vld [vmem:[%s1 + $0x168] sm:$0xff]
  %v76 = vld [vmem:[%s1 + $0x170] sm:$0xff]
  %v77 = vld [vmem:[%s1 + $0x178] sm:$0xff]
  %v78 = vld [vmem:[%s1 + $0x180] sm:$0xff]
  %v79 = vld [vmem:[%s1 + $0x188] sm:$0xff]
  %v80 = vld [vmem:[%s1 + $0x190] sm:$0xff]
  %v81 = vld [vmem:[%s1 + $0x198] sm:$0xff]
  %v82 = vld [vmem:[%s1 + $0x1a0] sm:$0xff]
  %v83 = vld [vmem:[%s1 + $0x1a8] sm:$0xff]
  %v84 = vld [vmem:[%s1 + $0x1b0] sm:$0xff]
  %v85 = vld [vmem:[%s1 + $0x1b8] sm:$0xff]
  %v86 = vld [vmem:[%s1 + $0x1c0] sm:$0xff]
  %v87 = vld [vmem:[%s1 + $0x1c8] sm:$0xff]
  %v88 = vld [vmem:[%s1 + $0x1d0] sm:$0xff]
  %v89 = vld [vmem:[%s1 + $0x1d8] sm:$0xff]
  %v90 = vld [vmem:[%s1 + $0x1e0] sm:$0xff]
  %v91 = vld [vmem:[%s1 + $0x1e8] sm:$0xff]
  %v92 = vld [vmem:[%s1 + $0x1f0] sm:$0xff]
  %v93 = vld [vmem:[%s1 + $0x1f8] sm:$0xff]
  %v94 = vld [vmem:[%s1 + $0x200] sm:$0xff]
  %v95 = vld [vmem:[%s1 + $0x208] sm:$0xff]
  %v96 = vld [vmem:[%s1 + $0x210] sm:$0xff]
  %v97 = vld [vmem:[%s1 + $0x218] sm:$0xff]
  %v98 = vld [vmem:[%s1 + $0x220] sm:$0xff]
  %v99 = vld [vmem:[%s1 + $0x228] sm:$0xff]
  %v100 = vld [vmem:[%s1 + $0x230] sm:$0xff]
  %v101 = vld [vmem:[%s1 + $0x238] sm:$0xff]
  %v102 = vld [vmem:[%s1 + $0x240] sm:$0xff]
  %v103 = vld [vmem:[%s1 + $0x248] sm:$0xff]
  %v104 = vld [vmem:[%s1 + $0x250] sm:$0xff]
  %v105 = vld [vmem:[%s1 + $0x258] sm:$0xff]
  %v106 = vld [vmem:[%s1 + $0x260] sm:$0xff]
  %v107 = vld [vmem:[%s1 + $0x268] sm:$0xff]
  %v108 = vld [vmem:[%s1 + $0x270] sm:$0xff]
  %v109 = vld [vmem:[%s1 + $0x278] sm:$0xff]
  %v110 = vld [vmem:[%s1 + $0x280] sm:$0xff]
  %v111 = vld [vmem:[%s1 + $0x288] sm:$0xff]
  %v112 = vld [vmem:[%s1 + $0x290] sm:$0xff]
  %v113 = vld [vmem:[%s1 + $0x298] sm:$0xff]
  %v114 = vld [vmem:[%s1 + $0x2a0] sm:$0xff]
  %v115 = vld [vmem:[%s1 + $0x2a8] sm:$0xff]
  %v116 = vld [vmem:[%s1 + $0x2b0] sm:$0xff]
  %v117 = vld [vmem:[%s1 + $0x2b8] sm:$0xff]
  %v118 = vld [vmem:[%s1 + $0x2c0] sm:$0xff]
  %v119 = vld [vmem:[%s1 + $0x2c8] sm:$0xff]
  %v120 = vld [vmem:[%s1 + $0x2d0] sm:$0xff]
  %v121 = vld [vmem:[%s1 + $0x2d8] sm:$0xff]
  %v122 = vld [vmem:[%s1 + $0x2e0] sm:$0xff]
  %v123 = vld [vmem:[%s1 + $0x2e8] sm:$0xff]
  %v124 = vld [vmem:[%s1 + $0x2f0] sm:$0xff]
  %v125 = vld [vmem:[%s1 + $0x2f8] sm:$0xff]
  %v126 = vld [vmem:[%s1 + $0x300] sm:$0xff]
  %v127 = vld [vmem:[%s1 + $0x308] sm:$0xff]
  %v128 = vld [vmem:[%s1 + $0x310] sm:$0xff]
  %v129 = vld [vmem:[%s1 + $0x318] sm:$0xff]
  %v130 = vld [vmem:[%s1 + $0x320] sm:$0xff]
  %v131 = vld [vmem:[%s1 + $0x328] sm:$0xff]
  %v132 = vld [vmem:[%s1 + $0x330] sm:$0xff]
  %v133 = vld [vmem:[%s1 + $0x338] sm:$0xff]
  %v134 = vld [vmem:[%s1 + $0x340] sm:$0xff]
  %v135 = vld [vmem:[%s1 + $0x348] sm:$0xff]
  %v136 = vld [vmem:[%s1 + $0x350] sm:$0xff]
  %v137 = vld [vmem:[%s1 + $0x358] sm:$0xff]
  %v138 = vld [vmem:[%s1 + $0x360] sm:$0xff]
  %v139 = vld [vmem:[%s1 + $0x368] sm:$0xff]
  %v140 = vld [vmem:[%s1 + $0x370] sm:$0xff]
  %v141 = vld [vmem:[%s1 + $0x378] sm:$0xff]
  %v142 = vld [vmem:[%s1 + $0x380] sm:$0xff]
  %v143 = vld [vmem:[%s1 + $0x388] sm:$0xff]
  %v144 = vld [vmem:[%s1 + $0x390] sm:$0xff]
  %v145 = vld [vmem:[%s1 + $0x398] sm:$0xff]
  %v146 = vld [vmem:[%s1 + $0x3a0] sm:$0xff]
  %v147 = vld [vmem:[%s1 + $0x3a8] sm:$0xff]
  %v148 = vld [vmem:[%s1 + $0x3b0] sm:$0xff]
  %v149 = vld [vmem:[%s1 + $0x3b8] sm:$0xff]
  %v150 = vld [vmem:[%s1 + $0x3c0] sm:$0xff]
  %v151 = vld [vmem:[%s1 + $0x3c8] sm:$0xff]
  %v152 = vld [vmem:[%s1 + $0x3d0] sm:$0xff]
  %v153 = vld [vmem:[%s1 + $0x3d8] sm:$0xff]
  %v154 = vld [vmem:[%s1 + $0x3e0] sm:$0xff]
  %v155 = vld [vmem:[%s1 + $0x3e8] sm:$0xff]
  %v156 = vld [vmem:[%s1 + $0x3f0] sm:$0xff]
  %v157 = vld [vmem:[%s1 + $0x3f8] sm:$0xff]
  %v158 = vld [vmem:[%s1 + $0x400] sm:$0xff]
  %v159 = vld [vmem:[%s1 + $0x408] sm:$0xff]
  %v160 = vld [vmem:[%s1 + $0x410] sm:$0xff]
  %v161 = vld [vmem:[%s1 + $0x418] sm:$0xff]
  %v162 = vld [vmem:[%s1 + $0x420] sm:$0xff]
  %v163 = vld [vmem:[%s1 + $0x428] sm:$0xff]
  %v164 = vld [vmem:[%s1 + $0x430] sm:$0xff]
  %v165 = vld [vmem:[%s1 + $0x438] sm:$0xff]
  %v166 = vld [vmem:[%s1 + $0x440] sm:$0xff]
  %v167 = vld [vmem:[%s1 + $0x448] sm:$0xff]
  %v168 = vld [vmem:[%s1 + $0x450] sm:$0xff]
  %v169 = vld [vmem:[%s1 + $0x458] sm:$0xff]
  %v170 = vld [vmem:[%s1 + $0x460] sm:$0xff]
  %v171 = vld [vmem:[%s1 + $0x468] sm:$0xff]
  %v172 = vld [vmem:[%s1 + $0x470] sm:$0xff]
  %v173 = vld [vmem:[%s1 + $0x478] sm:$0xff]
  %v174 = vld [vmem:[%s1 + $0x480] sm:$0xff]
  %v175 = vld [vmem:[%s1 + $0x488] sm:$0xff]
  %v176 = vld [vmem:[%s1 + $0x490] sm:$0xff]
  %v177 = vld [vmem:[%s1 + $0x498] sm:$0xff]
  %v178 = vld [vmem:[%s1 + $0x4a0] sm:$0xff]
  %v179 = vld [vmem:[%s1 + $0x4a8] sm:$0xff]
  %v180 = vld [vmem:[%s1 + $0x4b0] sm:$0xff]
  %v181 = vld [vmem:[%s1 + $0x4b8] sm:$0xff]
  %v182 = vld [vmem:[%s1 + $0x4c0] sm:$0xff]
  %v183 = vld [vmem:[%s1 + $0x4c8] sm:$0xff]
  %v184 = vld [vmem:[%s1 + $0x4d0] sm:$0xff]
  %v185 = vld [vmem:[%s1 + $0x4d8] sm:$0xff]
  %v186 = vld [vmem:[%s1 + $0x4e0] sm:$0xff]
  %v187 = vld [vmem:[%s1 + $0x4e8] sm:$0xff]
  %v188 = vld [vmem:[%s1 + $0x4f0] sm:$0xff]
  %v189 = vld [vmem:[%s1 + $0x4f8] sm:$0xff]
  %v190 = vld [vmem:[%s1 + $0x500] sm:$0xff]
  %v191 = vld [vmem:[%s1 + $0x508] sm:$0xff]
  %v192 = vld [vmem:[%s1 + $0x510] sm:$0xff]
  %v193 = vld [vmem:[%s1 + $0x518] sm:$0xff]
  %v194 = vld [vmem:[%s1 + $0x520] sm:$0xff]
  %v195 = vld [vmem:[%s1 + $0x528] sm:$0xff]
  %v196 = vld [vmem:[%s1 + $0x530] sm:$0xff]
  %v197 = vld [vmem:[%s1 + $0x538] sm:$0xff]
  %v198 = vld [vmem:[%s1 + $0x540] sm:$0xff]
  %v199 = vld [vmem:[%s1 + $0x548] sm:$0xff]
  %v200 = vld [vmem:[%s1 + $0x550] sm:$0xff]
  %v201 = vld [vmem:[%s1 + $0x558] sm:$0xff]
  %v202 = vld [vmem:[%s1 + $0x560] sm:$0xff]
  %v203 = vld [vmem:[%s1 + $0x568] sm:$0xff]
  %v204 = vld [vmem:[%s1 + $0x570] sm:$0xff]
  %v205 = vld [vmem:[%s1 + $0x578] sm:$0xff]
  %v206 = vld [vmem:[%s1 + $0x580] sm:$0xff]
  %v207 = vld [vmem:[%s1 + $0x588] sm:$0xff]
  %v208 = vld [vmem:[%s1 + $0x590] sm:$0xff]
  %v209 = vld [vmem:[%s1 + $0x598] sm:$0xff]
  %v210 = vld [vmem:[%s1 + $0x5a0] sm:$0xff]
  %v211 = vld [vmem:[%s1 + $0x5a8] sm:$0xff]
  %v212 = vld [vmem:[%s1 + $0x5b0] sm:$0xff]
  %v213 = vld [vmem:[%s1 + $0x5b8] sm:$0xff]
  %v214 = vld [vmem:[%s1 + $0x5c0] sm:$0xff]
  %v215 = vld [vmem:[%s1 + $0x5c8] sm:$0xff]
  %v216 = vld [vmem:[%s1 + $0x5d0] sm:$0xff]
  %v217 = vld [vmem:[%s1 + $0x5d8] sm:$0xff]
  %v218 = vld [vmem:[%s1 + $0x5e0] sm:$0xff]
  %v219 = vld [vmem:[%s1 + $0x5e8] sm:$0xff]
  %v220 = vld [vmem:[%s1 + $0x5f0] sm:$0xff]
  %v221 = vld [vmem:[%s1 + $0x5f8] sm:$0xff]
  %v222 = vld [vmem:[%s1 + $0x600] sm:$0xff]
  %v223 = vld [vmem:[%s1 + $0x608] sm:$0xff]
  %v224 = vld [vmem:[%s1 + $0x610] sm:$0xff]
  %v225 = vld [vmem:[%s1 + $0x618] sm:$0xff]
  %v226 = vld [vmem:[%s1 + $0x620] sm:$0xff]
  %v227 = vld [vmem:[%s1 + $0x628] sm:$0xff]
  %v228 = vld [vmem:[%s1 + $0x630] sm:$0xff]
  %v229 = vld [vmem:[%s1 + $0x638] sm:$0xff]
  %v230 = vld [vmem:[%s1 + $0x640] sm:$0xff]
  %v231 = vld [vmem:[%s1 + $0x648] sm:$0xff]
  %v232 = vld [vmem:[%s1 + $0x650] sm:$0xff]
  %v233 = vld [vmem:[%s1 + $0x658] sm:$0xff]
  %v234 = vld [vmem:[%s1 + $0x660] sm:$0xff]
  %v235 = vld [vmem:[%s1 + $0x668] sm:$0xff]
  %v236 = vld [vmem:[%s1 + $0x670] sm:$0xff]
  %v237 = vld [vmem:[%s1 + $0x678] sm:$0xff]
  %v238 = vld [vmem:[%s1 + $0x680] sm:$0xff]
  %v239 = vld [vmem:[%s1 + $0x688] sm:$0xff]
  %v240 = vld [vmem:[%s1 + $0x690] sm:$0xff]
  %v241 = vld [vmem:[%s1 + $0x698] sm:$0xff]
  %v242 = vld [vmem:[%s1 + $0x6a0] sm:$0xff]
  %v243 = vld [vmem:[%s1 + $0x6a8] sm:$0xff]
  %v244 = vld [vmem:[%s1 + $0x6b0] sm:$0xff]
  %v245 = vld [vmem:[%s1 + $0x6b8] sm:$0xff]
  %v246 = vld [vmem:[%s1 + $0x6c0] sm:$0xff]
  %v247 = vld [vmem:[%s1 + $0x6c8] sm:$0xff]
  %v248 = vld [vmem:[%s1 + $0x6d0] sm:$0xff]
  %v249 = vld [vmem:[%s1 + $0x6d8] sm:$0xff]
  %v250 = vld [vmem:[%s1 + $0x6e0] sm:$0xff]
  %v251 = vld [vmem:[%s1 + $0x6e8] sm:$0xff]
  %v252 = vld [vmem:[%s1 + $0x6f0] sm:$0xff]
  %v253 = vld [vmem:[%s1 + $0x6f8] sm:$0xff]
  %v254 = vld [vmem:[%s1 + $0x700] sm:$0xff]
  %v255 = vld [vmem:[%s1 + $0x708] sm:$0xff]
  %v256 = vld [vmem:[%s1 + $0x710] sm:$0xff]
  %v257 = vld [vmem:[%s1 + $0x718] sm:$0xff]
  %v258 = vld [vmem:[%s1 + $0x720] sm:$0xff]
  %v259 = vld [vmem:[%s1 + $0x728] sm:$0xff]
  %v260 = vld [vmem:[%s1 + $0x730] sm:$0xff]
  %v261 = vld [vmem:[%s1 + $0x738] sm:$0xff]
  %v262 = vld [vmem:[%s1 + $0x740] sm:$0xff]
  %v263 = vld [vmem:[%s1 + $0x748] sm:$0xff]
  %v264 = vld [vmem:[%s1 + $0x750] sm:$0xff]
  %v265 = vld [vmem:[%s1 + $0x758] sm:$0xff]
  %v266 = vld [vmem:[%s1 + $0x760] sm:$0xff]
  %v267 = vld [vmem:[%s1 + $0x768] sm:$0xff]
  %v268 = vld [vmem:[%s1 + $0x770] sm:$0xff]
  %v269 = vld [vmem:[%s1 + $0x778] sm:$0xff]
  %v270 = vld [vmem:[%s1 + $0x780] sm:$0xff]
  %v271 = vld [vmem:[%s1 + $0x788] sm:$0xff]
  %v272 = vld [vmem:[%s1 + $0x790] sm:$0xff]
  %v273 = vld [vmem:[%s1 + $0x798] sm:$0xff]
  %v274 = vld [vmem:[%s1 + $0x7a0] sm:$0xff]
  %v275 = vld [vmem:[%s1 + $0x7a8] sm:$0xff]
  %v276 = vld [vmem:[%s1 + $0x7b0] sm:$0xff]
  %v277 = vld [vmem:[%s1 + $0x7b8] sm:$0xff]
  %v278 = vld [vmem:[%s1 + $0x7c0] sm:$0xff]
  %v279 = vld [vmem:[%s1 + $0x7c8] sm:$0xff]
  %v280 = vld [vmem:[%s1 + $0x7d0] sm:$0xff]
  %v281 = vld [vmem:[%s1 + $0x7d8] sm:$0xff]
  %v282 = vld [vmem:[%s1 + $0x7e0] sm:$0xff]
  %v283 = vld [vmem:[%s1 + $0x7e8] sm:$0xff]
  %v284 = vld [vmem:[%s1 + $0x7f0] sm:$0xff]
  %v285 = vld [vmem:[%s1 + $0x7f8] sm:$0xff]
  %v286 = vld [vmem:[%s2] sm:$0xf]
  %v288 = vperm.slane %v286, 0
  %v289 = vperm.slane %v286, 1
  %v290 = vperm.slane %v286, 2
  %v291 = vperm.slane %v286, 3
  %v300 = vunpack.c.l.b16 %v26
  %v301 = vunpack.c.h.b16 %v26
  %v302 = vunpack.c.l.b16 %v27
  %v303 = vunpack.c.h.b16 %v27
  %v304 = vunpack.c.l.b16 %v28
  %v305 = vunpack.c.h.b16 %v28
  %v306 = vunpack.c.l.b16 %v29
  %v307 = vunpack.c.h.b16 %v29
  %v308 = vpack.c.b16 %v300, %v300
  %v309 = vpack.c.b16 %v301, %v301
  %v310 = vpack.c.b16 %v302, %v302
  %v311 = vpack.c.b16 %v303, %v303
  %v312 = vpack.c.b16 %v304, %v304
  %v313 = vpack.c.b16 %v305, %v305
  %v314 = vpack.c.b16 %v306, %v306
  %v315 = vpack.c.b16 %v307, %v307
  %v580 = vunpack.c.l.b16 %v30
  %v581 = vunpack.c.h.b16 %v30
  %v582 = vunpack.c.l.b16 %v31
  %v583 = vunpack.c.h.b16 %v31
  %v584 = vunpack.c.l.b16 %v32
  %v585 = vunpack.c.h.b16 %v32
  %v586 = vunpack.c.l.b16 %v33
  %v587 = vunpack.c.h.b16 %v33
  %v588 = vunpack.c.l.b16 %v34
  %v589 = vunpack.c.h.b16 %v34
  %v590 = vunpack.c.l.b16 %v35
  %v591 = vunpack.c.h.b16 %v35
  %v592 = vunpack.c.l.b16 %v36
  %v593 = vunpack.c.h.b16 %v36
  %v594 = vunpack.c.l.b16 %v37
  %v595 = vunpack.c.h.b16 %v37
  %v596 = vunpack.c.l.b16 %v38
  %v597 = vunpack.c.h.b16 %v38
  %v598 = vunpack.c.l.b16 %v39
  %v599 = vunpack.c.h.b16 %v39
  %v600 = vunpack.c.l.b16 %v40
  %v601 = vunpack.c.h.b16 %v40
  %v602 = vunpack.c.l.b16 %v41
  %v603 = vunpack.c.h.b16 %v41
  %v604 = vunpack.c.l.b16 %v42
  %v605 = vunpack.c.h.b16 %v42
  %v606 = vunpack.c.l.b16 %v43
  %v607 = vunpack.c.h.b16 %v43
  %v608 = vunpack.c.l.b16 %v44
  %v609 = vunpack.c.h.b16 %v44
  %v610 = vunpack.c.l.b16 %v45
  %v611 = vunpack.c.h.b16 %v45
  %v612 = vunpack.c.l.b16 %v46
  %v613 = vunpack.c.h.b16 %v46
  %v614 = vunpack.c.l.b16 %v47
  %v615 = vunpack.c.h.b16 %v47
  %v616 = vunpack.c.l.b16 %v48
  %v617 = vunpack.c.h.b16 %v48
  %v618 = vunpack.c.l.b16 %v49
  %v619 = vunpack.c.h.b16 %v49
  %v620 = vunpack.c.l.b16 %v50
  %v621 = vunpack.c.h.b16 %v50
  %v622 = vunpack.c.l.b16 %v51
  %v623 = vunpack.c.h.b16 %v51
  %v624 = vunpack.c.l.b16 %v52
  %v625 = vunpack.c.h.b16 %v52
  %v626 = vunpack.c.l.b16 %v53
  %v627 = vunpack.c.h.b16 %v53
  %v628 = vunpack.c.l.b16 %v54
  %v629 = vunpack.c.h.b16 %v54
  %v630 = vunpack.c.l.b16 %v55
  %v631 = vunpack.c.h.b16 %v55
  %v632 = vunpack.c.l.b16 %v56
  %v633 = vunpack.c.h.b16 %v56
  %v634 = vunpack.c.l.b16 %v57
  %v635 = vunpack.c.h.b16 %v57
  %v636 = vunpack.c.l.b16 %v58
  %v637 = vunpack.c.h.b16 %v58
  %v638 = vunpack.c.l.b16 %v59
  %v639 = vunpack.c.h.b16 %v59
  %v640 = vunpack.c.l.b16 %v60
  %v641 = vunpack.c.h.b16 %v60
  %v642 = vunpack.c.l.b16 %v61
  %v643 = vunpack.c.h.b16 %v61
  %v644 = vunpack.c.l.b16 %v62
  %v645 = vunpack.c.h.b16 %v62
  %v646 = vunpack.c.l.b16 %v63
  %v647 = vunpack.c.h.b16 %v63
  %v648 = vunpack.c.l.b16 %v64
  %v649 = vunpack.c.h.b16 %v64
  %v650 = vunpack.c.l.b16 %v65
  %v651 = vunpack.c.h.b16 %v65
  %v652 = vunpack.c.l.b16 %v66
  %v653 = vunpack.c.h.b16 %v66
  %v654 = vunpack.c.l.b16 %v67
  %v655 = vunpack.c.h.b16 %v67
  %v656 = vunpack.c.l.b16 %v68
  %v657 = vunpack.c.h.b16 %v68
  %v658 = vunpack.c.l.b16 %v69
  %v659 = vunpack.c.h.b16 %v69
  %v660 = vunpack.c.l.b16 %v70
  %v661 = vunpack.c.h.b16 %v70
  %v662 = vunpack.c.l.b16 %v71
  %v663 = vunpack.c.h.b16 %v71
  %v664 = vunpack.c.l.b16 %v72
  %v665 = vunpack.c.h.b16 %v72
  %v666 = vunpack.c.l.b16 %v73
  %v667 = vunpack.c.h.b16 %v73
  %v668 = vunpack.c.l.b16 %v74
  %v669 = vunpack.c.h.b16 %v74
  %v670 = vunpack.c.l.b16 %v75
  %v671 = vunpack.c.h.b16 %v75
  %v672 = vunpack.c.l.b16 %v76
  %v673 = vunpack.c.h.b16 %v76
  %v674 = vunpack.c.l.b16 %v77
  %v675 = vunpack.c.h.b16 %v77
  %v676 = vunpack.c.l.b16 %v78
  %v677 = vunpack.c.h.b16 %v78
  %v678 = vunpack.c.l.b16 %v79
  %v679 = vunpack.c.h.b16 %v79
  %v680 = vunpack.c.l.b16 %v80
  %v681 = vunpack.c.h.b16 %v80
  %v682 = vunpack.c.l.b16 %v81
  %v683 = vunpack.c.h.b16 %v81
  %v684 = vunpack.c.l.b16 %v82
  %v685 = vunpack.c.h.b16 %v82
  %v686 = vunpack.c.l.b16 %v83
  %v687 = vunpack.c.h.b16 %v83
  %v688 = vunpack.c.l.b16 %v84
  %v689 = vunpack.c.h.b16 %v84
  %v690 = vunpack.c.l.b16 %v85
  %v691 = vunpack.c.h.b16 %v85
  %v692 = vunpack.c.l.b16 %v86
  %v693 = vunpack.c.h.b16 %v86
  %v694 = vunpack.c.l.b16 %v87
  %v695 = vunpack.c.h.b16 %v87
  %v696 = vunpack.c.l.b16 %v88
  %v697 = vunpack.c.h.b16 %v88
  %v698 = vunpack.c.l.b16 %v89
  %v699 = vunpack.c.h.b16 %v89
  %v700 = vunpack.c.l.b16 %v90
  %v701 = vunpack.c.h.b16 %v90
  %v702 = vunpack.c.l.b16 %v91
  %v703 = vunpack.c.h.b16 %v91
  %v704 = vunpack.c.l.b16 %v92
  %v705 = vunpack.c.h.b16 %v92
  %v706 = vunpack.c.l.b16 %v93
  %v707 = vunpack.c.h.b16 %v93
  %v708 = vunpack.c.l.b16 %v94
  %v709 = vunpack.c.h.b16 %v94
  %v710 = vunpack.c.l.b16 %v95
  %v711 = vunpack.c.h.b16 %v95
  %v712 = vunpack.c.l.b16 %v96
  %v713 = vunpack.c.h.b16 %v96
  %v714 = vunpack.c.l.b16 %v97
  %v715 = vunpack.c.h.b16 %v97
  %v716 = vunpack.c.l.b16 %v98
  %v717 = vunpack.c.h.b16 %v98
  %v718 = vunpack.c.l.b16 %v99
  %v719 = vunpack.c.h.b16 %v99
  %v720 = vunpack.c.l.b16 %v100
  %v721 = vunpack.c.h.b16 %v100
  %v722 = vunpack.c.l.b16 %v101
  %v723 = vunpack.c.h.b16 %v101
  %v724 = vunpack.c.l.b16 %v102
  %v725 = vunpack.c.h.b16 %v102
  %v726 = vunpack.c.l.b16 %v103
  %v727 = vunpack.c.h.b16 %v103
  %v728 = vunpack.c.l.b16 %v104
  %v729 = vunpack.c.h.b16 %v104
  %v730 = vunpack.c.l.b16 %v105
  %v731 = vunpack.c.h.b16 %v105
  %v732 = vunpack.c.l.b16 %v106
  %v733 = vunpack.c.h.b16 %v106
  %v734 = vunpack.c.l.b16 %v107
  %v735 = vunpack.c.h.b16 %v107
  %v736 = vunpack.c.l.b16 %v108
  %v737 = vunpack.c.h.b16 %v108
  %v738 = vunpack.c.l.b16 %v109
  %v739 = vunpack.c.h.b16 %v109
  %v740 = vunpack.c.l.b16 %v110
  %v741 = vunpack.c.h.b16 %v110
  %v742 = vunpack.c.l.b16 %v111
  %v743 = vunpack.c.h.b16 %v111
  %v744 = vunpack.c.l.b16 %v112
  %v745 = vunpack.c.h.b16 %v112
  %v746 = vunpack.c.l.b16 %v113
  %v747 = vunpack.c.h.b16 %v113
  %v748 = vunpack.c.l.b16 %v114
  %v749 = vunpack.c.h.b16 %v114
  %v750 = vunpack.c.l.b16 %v115
  %v751 = vunpack.c.h.b16 %v115
  %v752 = vunpack.c.l.b16 %v116
  %v753 = vunpack.c.h.b16 %v116
  %v754 = vunpack.c.l.b16 %v117
  %v755 = vunpack.c.h.b16 %v117
  %v756 = vunpack.c.l.b16 %v118
  %v757 = vunpack.c.h.b16 %v118
  %v758 = vunpack.c.l.b16 %v119
  %v759 = vunpack.c.h.b16 %v119
  %v760 = vunpack.c.l.b16 %v120
  %v761 = vunpack.c.h.b16 %v120
  %v762 = vunpack.c.l.b16 %v121
  %v763 = vunpack.c.h.b16 %v121
  %v764 = vunpack.c.l.b16 %v122
  %v765 = vunpack.c.h.b16 %v122
  %v766 = vunpack.c.l.b16 %v123
  %v767 = vunpack.c.h.b16 %v123
  %v768 = vunpack.c.l.b16 %v124
  %v769 = vunpack.c.h.b16 %v124
  %v770 = vunpack.c.l.b16 %v125
  %v771 = vunpack.c.h.b16 %v125
  %v772 = vunpack.c.l.b16 %v126
  %v773 = vunpack.c.h.b16 %v126
  %v774 = vunpack.c.l.b16 %v127
  %v775 = vunpack.c.h.b16 %v127
  %v776 = vunpack.c.l.b16 %v128
  %v777 = vunpack.c.h.b16 %v128
  %v778 = vunpack.c.l.b16 %v129
  %v779 = vunpack.c.h.b16 %v129
  %v780 = vunpack.c.l.b16 %v130
  %v781 = vunpack.c.h.b16 %v130
  %v782 = vunpack.c.l.b16 %v131
  %v783 = vunpack.c.h.b16 %v131
  %v784 = vunpack.c.l.b16 %v132
  %v785 = vunpack.c.h.b16 %v132
  %v786 = vunpack.c.l.b16 %v133
  %v787 = vunpack.c.h.b16 %v133
  %v788 = vunpack.c.l.b16 %v134
  %v789 = vunpack.c.h.b16 %v134
  %v790 = vunpack.c.l.b16 %v135
  %v791 = vunpack.c.h.b16 %v135
  %v792 = vunpack.c.l.b16 %v136
  %v793 = vunpack.c.h.b16 %v136
  %v794 = vunpack.c.l.b16 %v137
  %v795 = vunpack.c.h.b16 %v137
  %v796 = vunpack.c.l.b16 %v138
  %v797 = vunpack.c.h.b16 %v138
  %v798 = vunpack.c.l.b16 %v139
  %v799 = vunpack.c.h.b16 %v139
  %v800 = vunpack.c.l.b16 %v140
  %v801 = vunpack.c.h.b16 %v140
  %v802 = vunpack.c.l.b16 %v141
  %v803 = vunpack.c.h.b16 %v141
  %v804 = vunpack.c.l.b16 %v142
  %v805 = vunpack.c.h.b16 %v142
  %v806 = vunpack.c.l.b16 %v143
  %v807 = vunpack.c.h.b16 %v143
  %v808 = vunpack.c.l.b16 %v144
  %v809 = vunpack.c.h.b16 %v144
  %v810 = vunpack.c.l.b16 %v145
  %v811 = vunpack.c.h.b16 %v145
  %v812 = vunpack.c.l.b16 %v146
  %v813 = vunpack.c.h.b16 %v146
  %v814 = vunpack.c.l.b16 %v147
  %v815 = vunpack.c.h.b16 %v147
  %v816 = vunpack.c.l.b16 %v148
  %v817 = vunpack.c.h.b16 %v148
  %v818 = vunpack.c.l.b16 %v149
  %v819 = vunpack.c.h.b16 %v149
  %v820 = vunpack.c.l.b16 %v150
  %v821 = vunpack.c.h.b16 %v150
  %v822 = vunpack.c.l.b16 %v151
  %v823 = vunpack.c.h.b16 %v151
  %v824 = vunpack.c.l.b16 %v152
  %v825 = vunpack.c.h.b16 %v152
  %v826 = vunpack.c.l.b16 %v153
  %v827 = vunpack.c.h.b16 %v153
  %v828 = vunpack.c.l.b16 %v154
  %v829 = vunpack.c.h.b16 %v154
  %v830 = vunpack.c.l.b16 %v155
  %v831 = vunpack.c.h.b16 %v155
  %v832 = vunpack.c.l.b16 %v156
  %v833 = vunpack.c.h.b16 %v156
  %v834 = vunpack.c.l.b16 %v157
  %v835 = vunpack.c.h.b16 %v157
  %v836 = vunpack.c.l.b16 %v158
  %v837 = vunpack.c.h.b16 %v158
  %v838 = vunpack.c.l.b16 %v159
  %v839 = vunpack.c.h.b16 %v159
  %v840 = vunpack.c.l.b16 %v160
  %v841 = vunpack.c.h.b16 %v160
  %v842 = vunpack.c.l.b16 %v161
  %v843 = vunpack.c.h.b16 %v161
  %v844 = vunpack.c.l.b16 %v162
  %v845 = vunpack.c.h.b16 %v162
  %v846 = vunpack.c.l.b16 %v163
  %v847 = vunpack.c.h.b16 %v163
  %v848 = vunpack.c.l.b16 %v164
  %v849 = vunpack.c.h.b16 %v164
  %v850 = vunpack.c.l.b16 %v165
  %v851 = vunpack.c.h.b16 %v165
  %v852 = vunpack.c.l.b16 %v166
  %v853 = vunpack.c.h.b16 %v166
  %v854 = vunpack.c.l.b16 %v167
  %v855 = vunpack.c.h.b16 %v167
  %v856 = vunpack.c.l.b16 %v168
  %v857 = vunpack.c.h.b16 %v168
  %v858 = vunpack.c.l.b16 %v169
  %v859 = vunpack.c.h.b16 %v169
  %v860 = vunpack.c.l.b16 %v170
  %v861 = vunpack.c.h.b16 %v170
  %v862 = vunpack.c.l.b16 %v171
  %v863 = vunpack.c.h.b16 %v171
  %v864 = vunpack.c.l.b16 %v172
  %v865 = vunpack.c.h.b16 %v172
  %v866 = vunpack.c.l.b16 %v173
  %v867 = vunpack.c.h.b16 %v173
  %v868 = vunpack.c.l.b16 %v174
  %v869 = vunpack.c.h.b16 %v174
  %v870 = vunpack.c.l.b16 %v175
  %v871 = vunpack.c.h.b16 %v175
  %v872 = vunpack.c.l.b16 %v176
  %v873 = vunpack.c.h.b16 %v176
  %v874 = vunpack.c.l.b16 %v177
  %v875 = vunpack.c.h.b16 %v177
  %v876 = vunpack.c.l.b16 %v178
  %v877 = vunpack.c.h.b16 %v178
  %v878 = vunpack.c.l.b16 %v179
  %v879 = vunpack.c.h.b16 %v179
  %v880 = vunpack.c.l.b16 %v180
  %v881 = vunpack.c.h.b16 %v180
  %v882 = vunpack.c.l.b16 %v181
  %v883 = vunpack.c.h.b16 %v181
  %v884 = vunpack.c.l.b16 %v182
  %v885 = vunpack.c.h.b16 %v182
  %v886 = vunpack.c.l.b16 %v183
  %v887 = vunpack.c.h.b16 %v183
  %v888 = vunpack.c.l.b16 %v184
  %v889 = vunpack.c.h.b16 %v184
  %v890 = vunpack.c.l.b16 %v185
  %v891 = vunpack.c.h.b16 %v185
  %v892 = vunpack.c.l.b16 %v186
  %v893 = vunpack.c.h.b16 %v186
  %v894 = vunpack.c.l.b16 %v187
  %v895 = vunpack.c.h.b16 %v187
  %v896 = vunpack.c.l.b16 %v188
  %v897 = vunpack.c.h.b16 %v188
  %v898 = vunpack.c.l.b16 %v189
  %v899 = vunpack.c.h.b16 %v189
  %v900 = vunpack.c.l.b16 %v190
  %v901 = vunpack.c.h.b16 %v190
  %v902 = vunpack.c.l.b16 %v191
  %v903 = vunpack.c.h.b16 %v191
  %v904 = vunpack.c.l.b16 %v192
  %v905 = vunpack.c.h.b16 %v192
  %v906 = vunpack.c.l.b16 %v193
  %v907 = vunpack.c.h.b16 %v193
  %v908 = vunpack.c.l.b16 %v194
  %v909 = vunpack.c.h.b16 %v194
  %v910 = vunpack.c.l.b16 %v195
  %v911 = vunpack.c.h.b16 %v195
  %v912 = vunpack.c.l.b16 %v196
  %v913 = vunpack.c.h.b16 %v196
  %v914 = vunpack.c.l.b16 %v197
  %v915 = vunpack.c.h.b16 %v197
  %v916 = vunpack.c.l.b16 %v198
  %v917 = vunpack.c.h.b16 %v198
  %v918 = vunpack.c.l.b16 %v199
  %v919 = vunpack.c.h.b16 %v199
  %v920 = vunpack.c.l.b16 %v200
  %v921 = vunpack.c.h.b16 %v200
  %v922 = vunpack.c.l.b16 %v201
  %v923 = vunpack.c.h.b16 %v201
  %v924 = vunpack.c.l.b16 %v202
  %v925 = vunpack.c.h.b16 %v202
  %v926 = vunpack.c.l.b16 %v203
  %v927 = vunpack.c.h.b16 %v203
  %v928 = vunpack.c.l.b16 %v204
  %v929 = vunpack.c.h.b16 %v204
  %v930 = vunpack.c.l.b16 %v205
  %v931 = vunpack.c.h.b16 %v205
  %v932 = vunpack.c.l.b16 %v206
  %v933 = vunpack.c.h.b16 %v206
  %v934 = vunpack.c.l.b16 %v207
  %v935 = vunpack.c.h.b16 %v207
  %v936 = vunpack.c.l.b16 %v208
  %v937 = vunpack.c.h.b16 %v208
  %v938 = vunpack.c.l.b16 %v209
  %v939 = vunpack.c.h.b16 %v209
  %v940 = vunpack.c.l.b16 %v210
  %v941 = vunpack.c.h.b16 %v210
  %v942 = vunpack.c.l.b16 %v211
  %v943 = vunpack.c.h.b16 %v211
  %v944 = vunpack.c.l.b16 %v212
  %v945 = vunpack.c.h.b16 %v212
  %v946 = vunpack.c.l.b16 %v213
  %v947 = vunpack.c.h.b16 %v213
  %v948 = vunpack.c.l.b16 %v214
  %v949 = vunpack.c.h.b16 %v214
  %v950 = vunpack.c.l.b16 %v215
  %v951 = vunpack.c.h.b16 %v215
  %v952 = vunpack.c.l.b16 %v216
  %v953 = vunpack.c.h.b16 %v216
  %v954 = vunpack.c.l.b16 %v217
  %v955 = vunpack.c.h.b16 %v217
  %v956 = vunpack.c.l.b16 %v218
  %v957 = vunpack.c.h.b16 %v218
  %v958 = vunpack.c.l.b16 %v219
  %v959 = vunpack.c.h.b16 %v219
  %v960 = vunpack.c.l.b16 %v220
  %v961 = vunpack.c.h.b16 %v220
  %v962 = vunpack.c.l.b16 %v221
  %v963 = vunpack.c.h.b16 %v221
  %v964 = vunpack.c.l.b16 %v222
  %v965 = vunpack.c.h.b16 %v222
  %v966 = vunpack.c.l.b16 %v223
  %v967 = vunpack.c.h.b16 %v223
  %v968 = vunpack.c.l.b16 %v224
  %v969 = vunpack.c.h.b16 %v224
  %v970 = vunpack.c.l.b16 %v225
  %v971 = vunpack.c.h.b16 %v225
  %v972 = vunpack.c.l.b16 %v226
  %v973 = vunpack.c.h.b16 %v226
  %v974 = vunpack.c.l.b16 %v227
  %v975 = vunpack.c.h.b16 %v227
  %v976 = vunpack.c.l.b16 %v228
  %v977 = vunpack.c.h.b16 %v228
  %v978 = vunpack.c.l.b16 %v229
  %v979 = vunpack.c.h.b16 %v229
  %v980 = vunpack.c.l.b16 %v230
  %v981 = vunpack.c.h.b16 %v230
  %v982 = vunpack.c.l.b16 %v231
  %v983 = vunpack.c.h.b16 %v231
  %v984 = vunpack.c.l.b16 %v232
  %v985 = vunpack.c.h.b16 %v232
  %v986 = vunpack.c.l.b16 %v233
  %v987 = vunpack.c.h.b16 %v233
  %v988 = vunpack.c.l.b16 %v234
  %v989 = vunpack.c.h.b16 %v234
  %v990 = vunpack.c.l.b16 %v235
  %v991 = vunpack.c.h.b16 %v235
  %v992 = vunpack.c.l.b16 %v236
  %v993 = vunpack.c.h.b16 %v236
  %v994 = vunpack.c.l.b16 %v237
  %v995 = vunpack.c.h.b16 %v237
  %v996 = vunpack.c.l.b16 %v238
  %v997 = vunpack.c.h.b16 %v238
  %v998 = vunpack.c.l.b16 %v239
  %v999 = vunpack.c.h.b16 %v239
  %v1000 = vunpack.c.l.b16 %v240
  %v1001 = vunpack.c.h.b16 %v240
  %v1002 = vunpack.c.l.b16 %v241
  %v1003 = vunpack.c.h.b16 %v241
  %v1004 = vunpack.c.l.b16 %v242
  %v1005 = vunpack.c.h.b16 %v242
  %v1006 = vunpack.c.l.b16 %v243
  %v1007 = vunpack.c.h.b16 %v243
  %v1008 = vunpack.c.l.b16 %v244
  %v1009 = vunpack.c.h.b16 %v244
  %v1010 = vunpack.c.l.b16 %v245
  %v1011 = vunpack.c.h.b16 %v245
  %v1012 = vunpack.c.l.b16 %v246
  %v1013 = vunpack.c.h.b16 %v246
  %v1014 = vunpack.c.l.b16 %v247
  %v1015 = vunpack.c.h.b16 %v247
  %v1016 = vunpack.c.l.b16 %v248
  %v1017 = vunpack.c.h.b16 %v248
  %v1018 = vunpack.c.l.b16 %v249
  %v1019 = vunpack.c.h.b16 %v249
  %v1020 = vunpack.c.l.b16 %v250
  %v1021 = vunpack.c.h.b16 %v250
  %v1022 = vunpack.c.l.b16 %v251
  %v1023 = vunpack.c.h.b16 %v251
  %v1024 = vunpack.c.l.b16 %v252
  %v1025 = vunpack.c.h.b16 %v252
  %v1026 = vunpack.c.l.b16 %v253
  %v1027 = vunpack.c.h.b16 %v253
  %v1028 = vunpack.c.l.b16 %v254
  %v1029 = vunpack.c.h.b16 %v254
  %v1030 = vunpack.c.l.b16 %v255
  %v1031 = vunpack.c.h.b16 %v255
  %v1032 = vunpack.c.l.b16 %v256
  %v1033 = vunpack.c.h.b16 %v256
  %v1034 = vunpack.c.l.b16 %v257
  %v1035 = vunpack.c.h.b16 %v257
  %v1036 = vunpack.c.l.b16 %v258
  %v1037 = vunpack.c.h.b16 %v258
  %v1038 = vunpack.c.l.b16 %v259
  %v1039 = vunpack.c.h.b16 %v259
  %v1040 = vunpack.c.l.b16 %v260
  %v1041 = vunpack.c.h.b16 %v260
  %v1042 = vunpack.c.l.b16 %v261
  %v1043 = vunpack.c.h.b16 %v261
  %v1044 = vunpack.c.l.b16 %v262
  %v1045 = vunpack.c.h.b16 %v262
  %v1046 = vunpack.c.l.b16 %v263
  %v1047 = vunpack.c.h.b16 %v263
  %v1048 = vunpack.c.l.b16 %v264
  %v1049 = vunpack.c.h.b16 %v264
  %v1050 = vunpack.c.l.b16 %v265
  %v1051 = vunpack.c.h.b16 %v265
  %v1052 = vunpack.c.l.b16 %v266
  %v1053 = vunpack.c.h.b16 %v266
  %v1054 = vunpack.c.l.b16 %v267
  %v1055 = vunpack.c.h.b16 %v267
  %v1056 = vunpack.c.l.b16 %v268
  %v1057 = vunpack.c.h.b16 %v268
  %v1058 = vunpack.c.l.b16 %v269
  %v1059 = vunpack.c.h.b16 %v269
  %v1060 = vunpack.c.l.b16 %v270
  %v1061 = vunpack.c.h.b16 %v270
  %v1062 = vunpack.c.l.b16 %v271
  %v1063 = vunpack.c.h.b16 %v271
  %v1064 = vunpack.c.l.b16 %v272
  %v1065 = vunpack.c.h.b16 %v272
  %v1066 = vunpack.c.l.b16 %v273
  %v1067 = vunpack.c.h.b16 %v273
  %v1068 = vunpack.c.l.b16 %v274
  %v1069 = vunpack.c.h.b16 %v274
  %v1070 = vunpack.c.l.b16 %v275
  %v1071 = vunpack.c.h.b16 %v275
  %v1072 = vunpack.c.l.b16 %v276
  %v1073 = vunpack.c.h.b16 %v276
  %v1074 = vunpack.c.l.b16 %v277
  %v1075 = vunpack.c.h.b16 %v277
  %v1076 = vunpack.c.l.b16 %v278
  %v1077 = vunpack.c.h.b16 %v278
  %v1078 = vunpack.c.l.b16 %v279
  %v1079 = vunpack.c.h.b16 %v279
  %v1080 = vunpack.c.l.b16 %v280
  %v1081 = vunpack.c.h.b16 %v280
  %v1082 = vunpack.c.l.b16 %v281
  %v1083 = vunpack.c.h.b16 %v281
  %v1084 = vunpack.c.l.b16 %v282
  %v1085 = vunpack.c.h.b16 %v282
  %v1086 = vunpack.c.l.b16 %v283
  %v1087 = vunpack.c.h.b16 %v283
  %v1088 = vunpack.c.l.b16 %v284
  %v1089 = vunpack.c.h.b16 %v284
  %v1090 = vunpack.c.l.b16 %v285
  %v1091 = vunpack.c.h.b16 %v285
  %v1092 = vpack.c.b16 %v584, %v580
  %v1093 = vpack.c.b16 %v585, %v581
  %v1094 = vpack.c.b16 %v586, %v582
  %v1095 = vpack.c.b16 %v587, %v583
  %v1096 = vpack.c.b16 %v592, %v588
  %v1097 = vpack.c.b16 %v593, %v589
  %v1098 = vpack.c.b16 %v594, %v590
  %v1099 = vpack.c.b16 %v595, %v591
  %v1100 = vpack.c.b16 %v600, %v596
  %v1101 = vpack.c.b16 %v601, %v597
  %v1102 = vpack.c.b16 %v602, %v598
  %v1103 = vpack.c.b16 %v603, %v599
  %v1104 = vpack.c.b16 %v608, %v604
  %v1105 = vpack.c.b16 %v609, %v605
  %v1106 = vpack.c.b16 %v610, %v606
  %v1107 = vpack.c.b16 %v611, %v607
  %v1108 = vpack.c.b16 %v616, %v612
  %v1109 = vpack.c.b16 %v617, %v613
  %v1110 = vpack.c.b16 %v618, %v614
  %v1111 = vpack.c.b16 %v619, %v615
  %v1112 = vpack.c.b16 %v624, %v620
  %v1113 = vpack.c.b16 %v625, %v621
  %v1114 = vpack.c.b16 %v626, %v622
  %v1115 = vpack.c.b16 %v627, %v623
  %v1116 = vpack.c.b16 %v632, %v628
  %v1117 = vpack.c.b16 %v633, %v629
  %v1118 = vpack.c.b16 %v634, %v630
  %v1119 = vpack.c.b16 %v635, %v631
  %v1120 = vpack.c.b16 %v640, %v636
  %v1121 = vpack.c.b16 %v641, %v637
  %v1122 = vpack.c.b16 %v642, %v638
  %v1123 = vpack.c.b16 %v643, %v639
  %v1124 = vpack.c.b16 %v648, %v644
  %v1125 = vpack.c.b16 %v649, %v645
  %v1126 = vpack.c.b16 %v650, %v646
  %v1127 = vpack.c.b16 %v651, %v647
  %v1128 = vpack.c.b16 %v656, %v652
  %v1129 = vpack.c.b16 %v657, %v653
  %v1130 = vpack.c.b16 %v658, %v654
  %v1131 = vpack.c.b16 %v659, %v655
  %v1132 = vpack.c.b16 %v664, %v660
  %v1133 = vpack.c.b16 %v665, %v661
  %v1134 = vpack.c.b16 %v666, %v662
  %v1135 = vpack.c.b16 %v667, %v663
  %v1136 = vpack.c.b16 %v672, %v668
  %v1137 = vpack.c.b16 %v673, %v669
  %v1138 = vpack.c.b16 %v674, %v670
  %v1139 = vpack.c.b16 %v675, %v671
  %v1140 = vpack.c.b16 %v680, %v676
  %v1141 = vpack.c.b16 %v681, %v677
  %v1142 = vpack.c.b16 %v682, %v678
  %v1143 = vpack.c.b16 %v683, %v679
  %v1144 = vpack.c.b16 %v688, %v684
  %v1145 = vpack.c.b16 %v689, %v685
  %v1146 = vpack.c.b16 %v690, %v686
  %v1147 = vpack.c.b16 %v691, %v687
  %v1148 = vpack.c.b16 %v696, %v692
  %v1149 = vpack.c.b16 %v697, %v693
  %v1150 = vpack.c.b16 %v698, %v694
  %v1151 = vpack.c.b16 %v699, %v695
  %v1152 = vpack.c.b16 %v704, %v700
  %v1153 = vpack.c.b16 %v705, %v701
  %v1154 = vpack.c.b16 %v706, %v702
  %v1155 = vpack.c.b16 %v707, %v703
  %v1156 = vpack.c.b16 %v712, %v708
  %v1157 = vpack.c.b16 %v713, %v709
  %v1158 = vpack.c.b16 %v714, %v710
  %v1159 = vpack.c.b16 %v715, %v711
  %v1160 = vpack.c.b16 %v720, %v716
  %v1161 = vpack.c.b16 %v721, %v717
  %v1162 = vpack.c.b16 %v722, %v718
  %v1163 = vpack.c.b16 %v723, %v719
  %v1164 = vpack.c.b16 %v728, %v724
  %v1165 = vpack.c.b16 %v729, %v725
  %v1166 = vpack.c.b16 %v730, %v726
  %v1167 = vpack.c.b16 %v731, %v727
  %v1168 = vpack.c.b16 %v736, %v732
  %v1169 = vpack.c.b16 %v737, %v733
  %v1170 = vpack.c.b16 %v738, %v734
  %v1171 = vpack.c.b16 %v739, %v735
  %v1172 = vpack.c.b16 %v744, %v740
  %v1173 = vpack.c.b16 %v745, %v741
  %v1174 = vpack.c.b16 %v746, %v742
  %v1175 = vpack.c.b16 %v747, %v743
  %v1176 = vpack.c.b16 %v752, %v748
  %v1177 = vpack.c.b16 %v753, %v749
  %v1178 = vpack.c.b16 %v754, %v750
  %v1179 = vpack.c.b16 %v755, %v751
  %v1180 = vpack.c.b16 %v760, %v756
  %v1181 = vpack.c.b16 %v761, %v757
  %v1182 = vpack.c.b16 %v762, %v758
  %v1183 = vpack.c.b16 %v763, %v759
  %v1184 = vpack.c.b16 %v768, %v764
  %v1185 = vpack.c.b16 %v769, %v765
  %v1186 = vpack.c.b16 %v770, %v766
  %v1187 = vpack.c.b16 %v771, %v767
  %v1188 = vpack.c.b16 %v776, %v772
  %v1189 = vpack.c.b16 %v777, %v773
  %v1190 = vpack.c.b16 %v778, %v774
  %v1191 = vpack.c.b16 %v779, %v775
  %v1192 = vpack.c.b16 %v784, %v780
  %v1193 = vpack.c.b16 %v785, %v781
  %v1194 = vpack.c.b16 %v786, %v782
  %v1195 = vpack.c.b16 %v787, %v783
  %v1196 = vpack.c.b16 %v792, %v788
  %v1197 = vpack.c.b16 %v793, %v789
  %v1198 = vpack.c.b16 %v794, %v790
  %v1199 = vpack.c.b16 %v795, %v791
  %v1200 = vpack.c.b16 %v800, %v796
  %v1201 = vpack.c.b16 %v801, %v797
  %v1202 = vpack.c.b16 %v802, %v798
  %v1203 = vpack.c.b16 %v803, %v799
  %v1204 = vpack.c.b16 %v808, %v804
  %v1205 = vpack.c.b16 %v809, %v805
  %v1206 = vpack.c.b16 %v810, %v806
  %v1207 = vpack.c.b16 %v811, %v807
  %v1208 = vpack.c.b16 %v816, %v812
  %v1209 = vpack.c.b16 %v817, %v813
  %v1210 = vpack.c.b16 %v818, %v814
  %v1211 = vpack.c.b16 %v819, %v815
  %v1212 = vpack.c.b16 %v824, %v820
  %v1213 = vpack.c.b16 %v825, %v821
  %v1214 = vpack.c.b16 %v826, %v822
  %v1215 = vpack.c.b16 %v827, %v823
  %v1216 = vpack.c.b16 %v832, %v828
  %v1217 = vpack.c.b16 %v833, %v829
  %v1218 = vpack.c.b16 %v834, %v830
  %v1219 = vpack.c.b16 %v835, %v831
  %v1220 = vpack.c.b16 %v840, %v836
  %v1221 = vpack.c.b16 %v841, %v837
  %v1222 = vpack.c.b16 %v842, %v838
  %v1223 = vpack.c.b16 %v843, %v839
  %v1224 = vpack.c.b16 %v848, %v844
  %v1225 = vpack.c.b16 %v849, %v845
  %v1226 = vpack.c.b16 %v850, %v846
  %v1227 = vpack.c.b16 %v851, %v847
  %v1228 = vpack.c.b16 %v856, %v852
  %v1229 = vpack.c.b16 %v857, %v853
  %v1230 = vpack.c.b16 %v858, %v854
  %v1231 = vpack.c.b16 %v859, %v855
  %v1232 = vpack.c.b16 %v864, %v860
  %v1233 = vpack.c.b16 %v865, %v861
  %v1234 = vpack.c.b16 %v866, %v862
  %v1235 = vpack.c.b16 %v867, %v863
  %v1236 = vpack.c.b16 %v872, %v868
  %v1237 = vpack.c.b16 %v873, %v869
  %v1238 = vpack.c.b16 %v874, %v870
  %v1239 = vpack.c.b16 %v875, %v871
  %v1240 = vpack.c.b16 %v880, %v876
  %v1241 = vpack.c.b16 %v881, %v877
  %v1242 = vpack.c.b16 %v882, %v878
  %v1243 = vpack.c.b16 %v883, %v879
  %v1244 = vpack.c.b16 %v888, %v884
  %v1245 = vpack.c.b16 %v889, %v885
  %v1246 = vpack.c.b16 %v890, %v886
  %v1247 = vpack.c.b16 %v891, %v887
  %v1248 = vpack.c.b16 %v896, %v892
  %v1249 = vpack.c.b16 %v897, %v893
  %v1250 = vpack.c.b16 %v898, %v894
  %v1251 = vpack.c.b16 %v899, %v895
  %v1252 = vpack.c.b16 %v904, %v900
  %v1253 = vpack.c.b16 %v905, %v901
  %v1254 = vpack.c.b16 %v906, %v902
  %v1255 = vpack.c.b16 %v907, %v903
  %v1256 = vpack.c.b16 %v912, %v908
  %v1257 = vpack.c.b16 %v913, %v909
  %v1258 = vpack.c.b16 %v914, %v910
  %v1259 = vpack.c.b16 %v915, %v911
  %v1260 = vpack.c.b16 %v920, %v916
  %v1261 = vpack.c.b16 %v921, %v917
  %v1262 = vpack.c.b16 %v922, %v918
  %v1263 = vpack.c.b16 %v923, %v919
  %v1264 = vpack.c.b16 %v928, %v924
  %v1265 = vpack.c.b16 %v929, %v925
  %v1266 = vpack.c.b16 %v930, %v926
  %v1267 = vpack.c.b16 %v931, %v927
  %v1268 = vpack.c.b16 %v936, %v932
  %v1269 = vpack.c.b16 %v937, %v933
  %v1270 = vpack.c.b16 %v938, %v934
  %v1271 = vpack.c.b16 %v939, %v935
  %v1272 = vpack.c.b16 %v944, %v940
  %v1273 = vpack.c.b16 %v945, %v941
  %v1274 = vpack.c.b16 %v946, %v942
  %v1275 = vpack.c.b16 %v947, %v943
  %v1276 = vpack.c.b16 %v952, %v948
  %v1277 = vpack.c.b16 %v953, %v949
  %v1278 = vpack.c.b16 %v954, %v950
  %v1279 = vpack.c.b16 %v955, %v951
  %v1280 = vpack.c.b16 %v960, %v956
  %v1281 = vpack.c.b16 %v961, %v957
  %v1282 = vpack.c.b16 %v962, %v958
  %v1283 = vpack.c.b16 %v963, %v959
  %v1284 = vpack.c.b16 %v968, %v964
  %v1285 = vpack.c.b16 %v969, %v965
  %v1286 = vpack.c.b16 %v970, %v966
  %v1287 = vpack.c.b16 %v971, %v967
  %v1288 = vpack.c.b16 %v976, %v972
  %v1289 = vpack.c.b16 %v977, %v973
  %v1290 = vpack.c.b16 %v978, %v974
  %v1291 = vpack.c.b16 %v979, %v975
  %v1292 = vpack.c.b16 %v984, %v980
  %v1293 = vpack.c.b16 %v985, %v981
  %v1294 = vpack.c.b16 %v986, %v982
  %v1295 = vpack.c.b16 %v987, %v983
  %v1296 = vpack.c.b16 %v992, %v988
  %v1297 = vpack.c.b16 %v993, %v989
  %v1298 = vpack.c.b16 %v994, %v990
  %v1299 = vpack.c.b16 %v995, %v991
  %v1300 = vpack.c.b16 %v1000, %v996
  %v1301 = vpack.c.b16 %v1001, %v997
  %v1302 = vpack.c.b16 %v1002, %v998
  %v1303 = vpack.c.b16 %v1003, %v999
  %v1304 = vpack.c.b16 %v1008, %v1004
  %v1305 = vpack.c.b16 %v1009, %v1005
  %v1306 = vpack.c.b16 %v1010, %v1006
  %v1307 = vpack.c.b16 %v1011, %v1007
  %v1308 = vpack.c.b16 %v1016, %v1012
  %v1309 = vpack.c.b16 %v1017, %v1013
  %v1310 = vpack.c.b16 %v1018, %v1014
  %v1311 = vpack.c.b16 %v1019, %v1015
  %v1312 = vpack.c.b16 %v1024, %v1020
  %v1313 = vpack.c.b16 %v1025, %v1021
  %v1314 = vpack.c.b16 %v1026, %v1022
  %v1315 = vpack.c.b16 %v1027, %v1023
  %v1316 = vpack.c.b16 %v1032, %v1028
  %v1317 = vpack.c.b16 %v1033, %v1029
  %v1318 = vpack.c.b16 %v1034, %v1030
  %v1319 = vpack.c.b16 %v1035, %v1031
  %v1320 = vpack.c.b16 %v1040, %v1036
  %v1321 = vpack.c.b16 %v1041, %v1037
  %v1322 = vpack.c.b16 %v1042, %v1038
  %v1323 = vpack.c.b16 %v1043, %v1039
  %v1324 = vpack.c.b16 %v1048, %v1044
  %v1325 = vpack.c.b16 %v1049, %v1045
  %v1326 = vpack.c.b16 %v1050, %v1046
  %v1327 = vpack.c.b16 %v1051, %v1047
  %v1328 = vpack.c.b16 %v1056, %v1052
  %v1329 = vpack.c.b16 %v1057, %v1053
  %v1330 = vpack.c.b16 %v1058, %v1054
  %v1331 = vpack.c.b16 %v1059, %v1055
  %v1332 = vpack.c.b16 %v1064, %v1060
  %v1333 = vpack.c.b16 %v1065, %v1061
  %v1334 = vpack.c.b16 %v1066, %v1062
  %v1335 = vpack.c.b16 %v1067, %v1063
  %v1336 = vpack.c.b16 %v1072, %v1068
  %v1337 = vpack.c.b16 %v1073, %v1069
  %v1338 = vpack.c.b16 %v1074, %v1070
  %v1339 = vpack.c.b16 %v1075, %v1071
  %v1340 = vpack.c.b16 %v1080, %v1076
  %v1341 = vpack.c.b16 %v1081, %v1077
  %v1342 = vpack.c.b16 %v1082, %v1078
  %v1343 = vpack.c.b16 %v1083, %v1079
  %v1344 = vpack.c.b16 %v1088, %v1084
  %v1345 = vpack.c.b16 %v1089, %v1085
  %v1346 = vpack.c.b16 %v1090, %v1086
  %v1347 = vpack.c.b16 %v1091, %v1087
  %1604 = vmatpush.bf16.msra.mxu0 %v1120
  %1605 = vmatpush.bf16.msra.mxu0 %v1116
  %1606 = vmatpush.bf16.msra.mxu0 %v1112
  %1607 = vmatpush.bf16.msra.mxu0 %v1108
  %1608 = vmatpush.bf16.msra.mxu0 %v1104
  %1609 = vmatpush.bf16.msra.mxu0 %v1100
  %1610 = vmatpush.bf16.msra.mxu0 %v1096
  %1611 = vmatpush.bf16.msra.mxu0 %v1092
  %1612 = vmatmul.bf16.gmra.mxu0 %v308
  %v1613 = vpop.f32.mrf.mxu0
  %v1614 = vadd.f32 %v288, %v1613
  %v1615 = vpop.f32.mrf.mxu0
  %1616 = vdwg.mxu0
  %1617 = vmatpush.bf16.msra.mxu0 %v1152
  %1618 = vmatpush.bf16.msra.mxu0 %v1148
  %1619 = vmatpush.bf16.msra.mxu0 %v1144
  %1620 = vmatpush.bf16.msra.mxu0 %v1140
  %1621 = vmatpush.bf16.msra.mxu0 %v1136
  %1622 = vmatpush.bf16.msra.mxu0 %v1132
  %1623 = vmatpush.bf16.msra.mxu0 %v1128
  %1624 = vmatpush.bf16.msra.mxu0 %v1124
  %1625 = vmatmul.bf16.gmra.mxu0 %v309
  %v1626 = vpop.f32.mrf.mxu0
  %v1627 = vadd.f32 %v1614, %v1626
  %v1628 = vpop.f32.mrf.mxu0
  %1629 = vdwg.mxu0
  %1630 = vmatpush.bf16.msra.mxu0 %v1184
  %1631 = vmatpush.bf16.msra.mxu0 %v1180
  %1632 = vmatpush.bf16.msra.mxu0 %v1176
  %1633 = vmatpush.bf16.msra.mxu0 %v1172
  %1634 = vmatpush.bf16.msra.mxu0 %v1168
  %1635 = vmatpush.bf16.msra.mxu0 %v1164
  %1636 = vmatpush.bf16.msra.mxu0 %v1160
  %1637 = vmatpush.bf16.msra.mxu0 %v1156
  %1638 = vmatmul.bf16.gmra.mxu0 %v310
  %v1639 = vpop.f32.mrf.mxu0
  %v1640 = vadd.f32 %v1627, %v1639
  %v1641 = vpop.f32.mrf.mxu0
  %1642 = vdwg.mxu0
  %1643 = vmatpush.bf16.msra.mxu0 %v1216
  %1644 = vmatpush.bf16.msra.mxu0 %v1212
  %1645 = vmatpush.bf16.msra.mxu0 %v1208
  %1646 = vmatpush.bf16.msra.mxu0 %v1204
  %1647 = vmatpush.bf16.msra.mxu0 %v1200
  %1648 = vmatpush.bf16.msra.mxu0 %v1196
  %1649 = vmatpush.bf16.msra.mxu0 %v1192
  %1650 = vmatpush.bf16.msra.mxu0 %v1188
  %1651 = vmatmul.bf16.gmra.mxu0 %v311
  %v1652 = vpop.f32.mrf.mxu0
  %v1653 = vadd.f32 %v1640, %v1652
  %v1654 = vpop.f32.mrf.mxu0
  %1655 = vdwg.mxu0
  %1656 = vmatpush.bf16.msra.mxu0 %v1248
  %1657 = vmatpush.bf16.msra.mxu0 %v1244
  %1658 = vmatpush.bf16.msra.mxu0 %v1240
  %1659 = vmatpush.bf16.msra.mxu0 %v1236
  %1660 = vmatpush.bf16.msra.mxu0 %v1232
  %1661 = vmatpush.bf16.msra.mxu0 %v1228
  %1662 = vmatpush.bf16.msra.mxu0 %v1224
  %1663 = vmatpush.bf16.msra.mxu0 %v1220
  %1664 = vmatmul.bf16.gmra.mxu0 %v312
  %v1665 = vpop.f32.mrf.mxu0
  %v1666 = vadd.f32 %v1653, %v1665
  %v1667 = vpop.f32.mrf.mxu0
  %1668 = vdwg.mxu0
  %1669 = vmatpush.bf16.msra.mxu0 %v1280
  %1670 = vmatpush.bf16.msra.mxu0 %v1276
  %1671 = vmatpush.bf16.msra.mxu0 %v1272
  %1672 = vmatpush.bf16.msra.mxu0 %v1268
  %1673 = vmatpush.bf16.msra.mxu0 %v1264
  %1674 = vmatpush.bf16.msra.mxu0 %v1260
  %1675 = vmatpush.bf16.msra.mxu0 %v1256
  %1676 = vmatpush.bf16.msra.mxu0 %v1252
  %1677 = vmatmul.bf16.gmra.mxu0 %v313
  %v1678 = vpop.f32.mrf.mxu0
  %v1679 = vadd.f32 %v1666, %v1678
  %v1680 = vpop.f32.mrf.mxu0
  %1681 = vdwg.mxu0
  %1682 = vmatpush.bf16.msra.mxu0 %v1312
  %1683 = vmatpush.bf16.msra.mxu0 %v1308
  %1684 = vmatpush.bf16.msra.mxu0 %v1304
  %1685 = vmatpush.bf16.msra.mxu0 %v1300
  %1686 = vmatpush.bf16.msra.mxu0 %v1296
  %1687 = vmatpush.bf16.msra.mxu0 %v1292
  %1688 = vmatpush.bf16.msra.mxu0 %v1288
  %1689 = vmatpush.bf16.msra.mxu0 %v1284
  %1690 = vmatmul.bf16.gmra.mxu0 %v314
  %v1691 = vpop.f32.mrf.mxu0
  %v1692 = vadd.f32 %v1679, %v1691
  %v1693 = vpop.f32.mrf.mxu0
  %1694 = vdwg.mxu0
  %1695 = vmatpush.bf16.msra.mxu0 %v1344
  %1696 = vmatpush.bf16.msra.mxu0 %v1340
  %1697 = vmatpush.bf16.msra.mxu0 %v1336
  %1698 = vmatpush.bf16.msra.mxu0 %v1332
  %1699 = vmatpush.bf16.msra.mxu0 %v1328
  %1700 = vmatpush.bf16.msra.mxu0 %v1324
  %1701 = vmatpush.bf16.msra.mxu0 %v1320
  %1702 = vmatpush.bf16.msra.mxu0 %v1316
  %1703 = vmatmul.bf16.gmra.mxu0 %v315
  %v1704 = vpop.f32.mrf.mxu0
  %v1705 = vadd.f32 %v1692, %v1704
  %v1706 = vpop.f32.mrf.mxu0
  %1707 = vdwg.mxu0
  %1708 = vmatpush.bf16.msra.mxu0 %v1121
  %1709 = vmatpush.bf16.msra.mxu0 %v1117
  %1710 = vmatpush.bf16.msra.mxu0 %v1113
  %1711 = vmatpush.bf16.msra.mxu0 %v1109
  %1712 = vmatpush.bf16.msra.mxu0 %v1105
  %1713 = vmatpush.bf16.msra.mxu0 %v1101
  %1714 = vmatpush.bf16.msra.mxu0 %v1097
  %1715 = vmatpush.bf16.msra.mxu0 %v1093
  %1716 = vmatmul.bf16.gmra.mxu0 %v308
  %v1717 = vpop.f32.mrf.mxu0
  %v1718 = vadd.f32 %v289, %v1717
  %v1719 = vpop.f32.mrf.mxu0
  %1720 = vdwg.mxu0
  %1721 = vmatpush.bf16.msra.mxu0 %v1153
  %1722 = vmatpush.bf16.msra.mxu0 %v1149
  %1723 = vmatpush.bf16.msra.mxu0 %v1145
  %1724 = vmatpush.bf16.msra.mxu0 %v1141
  %1725 = vmatpush.bf16.msra.mxu0 %v1137
  %1726 = vmatpush.bf16.msra.mxu0 %v1133
  %1727 = vmatpush.bf16.msra.mxu0 %v1129
  %1728 = vmatpush.bf16.msra.mxu0 %v1125
  %1729 = vmatmul.bf16.gmra.mxu0 %v309
  %v1730 = vpop.f32.mrf.mxu0
  %v1731 = vadd.f32 %v1718, %v1730
  %v1732 = vpop.f32.mrf.mxu0
  %1733 = vdwg.mxu0
  %1734 = vmatpush.bf16.msra.mxu0 %v1185
  %1735 = vmatpush.bf16.msra.mxu0 %v1181
  %1736 = vmatpush.bf16.msra.mxu0 %v1177
  %1737 = vmatpush.bf16.msra.mxu0 %v1173
  %1738 = vmatpush.bf16.msra.mxu0 %v1169
  %1739 = vmatpush.bf16.msra.mxu0 %v1165
  %1740 = vmatpush.bf16.msra.mxu0 %v1161
  %1741 = vmatpush.bf16.msra.mxu0 %v1157
  %1742 = vmatmul.bf16.gmra.mxu0 %v310
  %v1743 = vpop.f32.mrf.mxu0
  %v1744 = vadd.f32 %v1731, %v1743
  %v1745 = vpop.f32.mrf.mxu0
  %1746 = vdwg.mxu0
  %1747 = vmatpush.bf16.msra.mxu0 %v1217
  %1748 = vmatpush.bf16.msra.mxu0 %v1213
  %1749 = vmatpush.bf16.msra.mxu0 %v1209
  %1750 = vmatpush.bf16.msra.mxu0 %v1205
  %1751 = vmatpush.bf16.msra.mxu0 %v1201
  %1752 = vmatpush.bf16.msra.mxu0 %v1197
  %1753 = vmatpush.bf16.msra.mxu0 %v1193
  %1754 = vmatpush.bf16.msra.mxu0 %v1189
  %1755 = vmatmul.bf16.gmra.mxu0 %v311
  %v1756 = vpop.f32.mrf.mxu0
  %v1757 = vadd.f32 %v1744, %v1756
  %v1758 = vpop.f32.mrf.mxu0
  %1759 = vdwg.mxu0
  %1760 = vmatpush.bf16.msra.mxu0 %v1249
  %1761 = vmatpush.bf16.msra.mxu0 %v1245
  %1762 = vmatpush.bf16.msra.mxu0 %v1241
  %1763 = vmatpush.bf16.msra.mxu0 %v1237
  %1764 = vmatpush.bf16.msra.mxu0 %v1233
  %1765 = vmatpush.bf16.msra.mxu0 %v1229
  %1766 = vmatpush.bf16.msra.mxu0 %v1225
  %1767 = vmatpush.bf16.msra.mxu0 %v1221
  %1768 = vmatmul.bf16.gmra.mxu0 %v312
  %v1769 = vpop.f32.mrf.mxu0
  %v1770 = vadd.f32 %v1757, %v1769
  %v1771 = vpop.f32.mrf.mxu0
  %1772 = vdwg.mxu0
  %1773 = vmatpush.bf16.msra.mxu0 %v1281
  %1774 = vmatpush.bf16.msra.mxu0 %v1277
  %1775 = vmatpush.bf16.msra.mxu0 %v1273
  %1776 = vmatpush.bf16.msra.mxu0 %v1269
  %1777 = vmatpush.bf16.msra.mxu0 %v1265
  %1778 = vmatpush.bf16.msra.mxu0 %v1261
  %1779 = vmatpush.bf16.msra.mxu0 %v1257
  %1780 = vmatpush.bf16.msra.mxu0 %v1253
  %1781 = vmatmul.bf16.gmra.mxu0 %v313
  %v1782 = vpop.f32.mrf.mxu0
  %v1783 = vadd.f32 %v1770, %v1782
  %v1784 = vpop.f32.mrf.mxu0
  %1785 = vdwg.mxu0
  %1786 = vmatpush.bf16.msra.mxu0 %v1313
  %1787 = vmatpush.bf16.msra.mxu0 %v1309
  %1788 = vmatpush.bf16.msra.mxu0 %v1305
  %1789 = vmatpush.bf16.msra.mxu0 %v1301
  %1790 = vmatpush.bf16.msra.mxu0 %v1297
  %1791 = vmatpush.bf16.msra.mxu0 %v1293
  %1792 = vmatpush.bf16.msra.mxu0 %v1289
  %1793 = vmatpush.bf16.msra.mxu0 %v1285
  %1794 = vmatmul.bf16.gmra.mxu0 %v314
  %v1795 = vpop.f32.mrf.mxu0
  %v1796 = vadd.f32 %v1783, %v1795
  %v1797 = vpop.f32.mrf.mxu0
  %1798 = vdwg.mxu0
  %1799 = vmatpush.bf16.msra.mxu0 %v1345
  %1800 = vmatpush.bf16.msra.mxu0 %v1341
  %1801 = vmatpush.bf16.msra.mxu0 %v1337
  %1802 = vmatpush.bf16.msra.mxu0 %v1333
  %1803 = vmatpush.bf16.msra.mxu0 %v1329
  %1804 = vmatpush.bf16.msra.mxu0 %v1325
  %1805 = vmatpush.bf16.msra.mxu0 %v1321
  %1806 = vmatpush.bf16.msra.mxu0 %v1317
  %1807 = vmatmul.bf16.gmra.mxu0 %v315
  %v1808 = vpop.f32.mrf.mxu0
  %v1809 = vadd.f32 %v1796, %v1808
  %v1810 = vpop.f32.mrf.mxu0
  %1811 = vdwg.mxu0
  %1812 = vmatpush.bf16.msra.mxu0 %v1122
  %1813 = vmatpush.bf16.msra.mxu0 %v1118
  %1814 = vmatpush.bf16.msra.mxu0 %v1114
  %1815 = vmatpush.bf16.msra.mxu0 %v1110
  %1816 = vmatpush.bf16.msra.mxu0 %v1106
  %1817 = vmatpush.bf16.msra.mxu0 %v1102
  %1818 = vmatpush.bf16.msra.mxu0 %v1098
  %1819 = vmatpush.bf16.msra.mxu0 %v1094
  %1820 = vmatmul.bf16.gmra.mxu0 %v308
  %v1821 = vpop.f32.mrf.mxu0
  %v1822 = vadd.f32 %v290, %v1821
  %v1823 = vpop.f32.mrf.mxu0
  %1824 = vdwg.mxu0
  %1825 = vmatpush.bf16.msra.mxu0 %v1154
  %1826 = vmatpush.bf16.msra.mxu0 %v1150
  %1827 = vmatpush.bf16.msra.mxu0 %v1146
  %1828 = vmatpush.bf16.msra.mxu0 %v1142
  %1829 = vmatpush.bf16.msra.mxu0 %v1138
  %1830 = vmatpush.bf16.msra.mxu0 %v1134
  %1831 = vmatpush.bf16.msra.mxu0 %v1130
  %1832 = vmatpush.bf16.msra.mxu0 %v1126
  %1833 = vmatmul.bf16.gmra.mxu0 %v309
  %v1834 = vpop.f32.mrf.mxu0
  %v1835 = vadd.f32 %v1822, %v1834
  %v1836 = vpop.f32.mrf.mxu0
  %1837 = vdwg.mxu0
  %1838 = vmatpush.bf16.msra.mxu0 %v1186
  %1839 = vmatpush.bf16.msra.mxu0 %v1182
  %1840 = vmatpush.bf16.msra.mxu0 %v1178
  %1841 = vmatpush.bf16.msra.mxu0 %v1174
  %1842 = vmatpush.bf16.msra.mxu0 %v1170
  %1843 = vmatpush.bf16.msra.mxu0 %v1166
  %1844 = vmatpush.bf16.msra.mxu0 %v1162
  %1845 = vmatpush.bf16.msra.mxu0 %v1158
  %1846 = vmatmul.bf16.gmra.mxu0 %v310
  %v1847 = vpop.f32.mrf.mxu0
  %v1848 = vadd.f32 %v1835, %v1847
  %v1849 = vpop.f32.mrf.mxu0
  %1850 = vdwg.mxu0
  %1851 = vmatpush.bf16.msra.mxu0 %v1218
  %1852 = vmatpush.bf16.msra.mxu0 %v1214
  %1853 = vmatpush.bf16.msra.mxu0 %v1210
  %1854 = vmatpush.bf16.msra.mxu0 %v1206
  %1855 = vmatpush.bf16.msra.mxu0 %v1202
  %1856 = vmatpush.bf16.msra.mxu0 %v1198
  %1857 = vmatpush.bf16.msra.mxu0 %v1194
  %1858 = vmatpush.bf16.msra.mxu0 %v1190
  %1859 = vmatmul.bf16.gmra.mxu0 %v311
  %v1860 = vpop.f32.mrf.mxu0
  %v1861 = vadd.f32 %v1848, %v1860
  %v1862 = vpop.f32.mrf.mxu0
  %1863 = vdwg.mxu0
  %1864 = vmatpush.bf16.msra.mxu0 %v1250
  %1865 = vmatpush.bf16.msra.mxu0 %v1246
  %1866 = vmatpush.bf16.msra.mxu0 %v1242
  %1867 = vmatpush.bf16.msra.mxu0 %v1238
  %1868 = vmatpush.bf16.msra.mxu0 %v1234
  %1869 = vmatpush.bf16.msra.mxu0 %v1230
  %1870 = vmatpush.bf16.msra.mxu0 %v1226
  %1871 = vmatpush.bf16.msra.mxu0 %v1222
  %1872 = vmatmul.bf16.gmra.mxu0 %v312
  %v1873 = vpop.f32.mrf.mxu0
  %v1874 = vadd.f32 %v1861, %v1873
  %v1875 = vpop.f32.mrf.mxu0
  %1876 = vdwg.mxu0
  %1877 = vmatpush.bf16.msra.mxu0 %v1282
  %1878 = vmatpush.bf16.msra.mxu0 %v1278
  %1879 = vmatpush.bf16.msra.mxu0 %v1274
  %1880 = vmatpush.bf16.msra.mxu0 %v1270
  %1881 = vmatpush.bf16.msra.mxu0 %v1266
  %1882 = vmatpush.bf16.msra.mxu0 %v1262
  %1883 = vmatpush.bf16.msra.mxu0 %v1258
  %1884 = vmatpush.bf16.msra.mxu0 %v1254
  %1885 = vmatmul.bf16.gmra.mxu0 %v313
  %v1886 = vpop.f32.mrf.mxu0
  %v1887 = vadd.f32 %v1874, %v1886
  %v1888 = vpop.f32.mrf.mxu0
  %1889 = vdwg.mxu0
  %1890 = vmatpush.bf16.msra.mxu0 %v1314
  %1891 = vmatpush.bf16.msra.mxu0 %v1310
  %1892 = vmatpush.bf16.msra.mxu0 %v1306
  %1893 = vmatpush.bf16.msra.mxu0 %v1302
  %1894 = vmatpush.bf16.msra.mxu0 %v1298
  %1895 = vmatpush.bf16.msra.mxu0 %v1294
  %1896 = vmatpush.bf16.msra.mxu0 %v1290
  %1897 = vmatpush.bf16.msra.mxu0 %v1286
  %1898 = vmatmul.bf16.gmra.mxu0 %v314
  %v1899 = vpop.f32.mrf.mxu0
  %v1900 = vadd.f32 %v1887, %v1899
  %v1901 = vpop.f32.mrf.mxu0
  %1902 = vdwg.mxu0
  %1903 = vmatpush.bf16.msra.mxu0 %v1346
  %1904 = vmatpush.bf16.msra.mxu0 %v1342
  %1905 = vmatpush.bf16.msra.mxu0 %v1338
  %1906 = vmatpush.bf16.msra.mxu0 %v1334
  %1907 = vmatpush.bf16.msra.mxu0 %v1330
  %1908 = vmatpush.bf16.msra.mxu0 %v1326
  %1909 = vmatpush.bf16.msra.mxu0 %v1322
  %1910 = vmatpush.bf16.msra.mxu0 %v1318
  %1911 = vmatmul.bf16.gmra.mxu0 %v315
  %v1912 = vpop.f32.mrf.mxu0
  %v1913 = vadd.f32 %v1900, %v1912
  %v1914 = vpop.f32.mrf.mxu0
  %1915 = vdwg.mxu0
  %1916 = vmatpush.bf16.msra.mxu0 %v1123
  %1917 = vmatpush.bf16.msra.mxu0 %v1119
  %1918 = vmatpush.bf16.msra.mxu0 %v1115
  %1919 = vmatpush.bf16.msra.mxu0 %v1111
  %1920 = vmatpush.bf16.msra.mxu0 %v1107
  %1921 = vmatpush.bf16.msra.mxu0 %v1103
  %1922 = vmatpush.bf16.msra.mxu0 %v1099
  %1923 = vmatpush.bf16.msra.mxu0 %v1095
  %1924 = vmatmul.bf16.gmra.mxu0 %v308
  %v1925 = vpop.f32.mrf.mxu0
  %v1926 = vadd.f32 %v291, %v1925
  %v1927 = vpop.f32.mrf.mxu0
  %1928 = vdwg.mxu0
  %1929 = vmatpush.bf16.msra.mxu0 %v1155
  %1930 = vmatpush.bf16.msra.mxu0 %v1151
  %1931 = vmatpush.bf16.msra.mxu0 %v1147
  %1932 = vmatpush.bf16.msra.mxu0 %v1143
  %1933 = vmatpush.bf16.msra.mxu0 %v1139
  %1934 = vmatpush.bf16.msra.mxu0 %v1135
  %1935 = vmatpush.bf16.msra.mxu0 %v1131
  %1936 = vmatpush.bf16.msra.mxu0 %v1127
  %1937 = vmatmul.bf16.gmra.mxu0 %v309
  %v1938 = vpop.f32.mrf.mxu0
  %v1939 = vadd.f32 %v1926, %v1938
  %v1940 = vpop.f32.mrf.mxu0
  %1941 = vdwg.mxu0
  %1942 = vmatpush.bf16.msra.mxu0 %v1187
  %1943 = vmatpush.bf16.msra.mxu0 %v1183
  %1944 = vmatpush.bf16.msra.mxu0 %v1179
  %1945 = vmatpush.bf16.msra.mxu0 %v1175
  %1946 = vmatpush.bf16.msra.mxu0 %v1171
  %1947 = vmatpush.bf16.msra.mxu0 %v1167
  %1948 = vmatpush.bf16.msra.mxu0 %v1163
  %1949 = vmatpush.bf16.msra.mxu0 %v1159
  %1950 = vmatmul.bf16.gmra.mxu0 %v310
  %v1951 = vpop.f32.mrf.mxu0
  %v1952 = vadd.f32 %v1939, %v1951
  %v1953 = vpop.f32.mrf.mxu0
  %1954 = vdwg.mxu0
  %1955 = vmatpush.bf16.msra.mxu0 %v1219
  %1956 = vmatpush.bf16.msra.mxu0 %v1215
  %1957 = vmatpush.bf16.msra.mxu0 %v1211
  %1958 = vmatpush.bf16.msra.mxu0 %v1207
  %1959 = vmatpush.bf16.msra.mxu0 %v1203
  %1960 = vmatpush.bf16.msra.mxu0 %v1199
  %1961 = vmatpush.bf16.msra.mxu0 %v1195
  %1962 = vmatpush.bf16.msra.mxu0 %v1191
  %1963 = vmatmul.bf16.gmra.mxu0 %v311
  %v1964 = vpop.f32.mrf.mxu0
  %v1965 = vadd.f32 %v1952, %v1964
  %v1966 = vpop.f32.mrf.mxu0
  %1967 = vdwg.mxu0
  %1968 = vmatpush.bf16.msra.mxu0 %v1251
  %1969 = vmatpush.bf16.msra.mxu0 %v1247
  %1970 = vmatpush.bf16.msra.mxu0 %v1243
  %1971 = vmatpush.bf16.msra.mxu0 %v1239
  %1972 = vmatpush.bf16.msra.mxu0 %v1235
  %1973 = vmatpush.bf16.msra.mxu0 %v1231
  %1974 = vmatpush.bf16.msra.mxu0 %v1227
  %1975 = vmatpush.bf16.msra.mxu0 %v1223
  %1976 = vmatmul.bf16.gmra.mxu0 %v312
  %v1977 = vpop.f32.mrf.mxu0
  %v1978 = vadd.f32 %v1965, %v1977
  %v1979 = vpop.f32.mrf.mxu0
  %1980 = vdwg.mxu0
  %1981 = vmatpush.bf16.msra.mxu0 %v1283
  %1982 = vmatpush.bf16.msra.mxu0 %v1279
  %1983 = vmatpush.bf16.msra.mxu0 %v1275
  %1984 = vmatpush.bf16.msra.mxu0 %v1271
  %1985 = vmatpush.bf16.msra.mxu0 %v1267
  %1986 = vmatpush.bf16.msra.mxu0 %v1263
  %1987 = vmatpush.bf16.msra.mxu0 %v1259
  %1988 = vmatpush.bf16.msra.mxu0 %v1255
  %1989 = vmatmul.bf16.gmra.mxu0 %v313
  %v1990 = vpop.f32.mrf.mxu0
  %v1991 = vadd.f32 %v1978, %v1990
  %v1992 = vpop.f32.mrf.mxu0
  %1993 = vdwg.mxu0
  %1994 = vmatpush.bf16.msra.mxu0 %v1315
  %1995 = vmatpush.bf16.msra.mxu0 %v1311
  %1996 = vmatpush.bf16.msra.mxu0 %v1307
  %1997 = vmatpush.bf16.msra.mxu0 %v1303
  %1998 = vmatpush.bf16.msra.mxu0 %v1299
  %1999 = vmatpush.bf16.msra.mxu0 %v1295
  %2000 = vmatpush.bf16.msra.mxu0 %v1291
  %2001 = vmatpush.bf16.msra.mxu0 %v1287
  %2002 = vmatmul.bf16.gmra.mxu0 %v314
  %v2003 = vpop.f32.mrf.mxu0
  %v2004 = vadd.f32 %v1991, %v2003
  %v2005 = vpop.f32.mrf.mxu0
  %2006 = vdwg.mxu0
  %2007 = vmatpush.bf16.msra.mxu0 %v1347
  %2008 = vmatpush.bf16.msra.mxu0 %v1343
  %2009 = vmatpush.bf16.msra.mxu0 %v1339
  %2010 = vmatpush.bf16.msra.mxu0 %v1335
  %2011 = vmatpush.bf16.msra.mxu0 %v1331
  %2012 = vmatpush.bf16.msra.mxu0 %v1327
  %2013 = vmatpush.bf16.msra.mxu0 %v1323
  %2014 = vmatpush.bf16.msra.mxu0 %v1319
  %2015 = vmatmul.bf16.gmra.mxu0 %v315
  %v2016 = vpop.f32.mrf.mxu0
  %v2017 = vadd.f32 %v2004, %v2016
  %v2018 = vpop.f32.mrf.mxu0
  %2019 = vdwg.mxu0
  %v2020 = vmax.f32 %v1705, 0.0
  %v2021 = vmax.f32 %v1809, 0.0
  %v2022 = vmax.f32 %v1913, 0.0
  %v2023 = vmax.f32 %v2017, 0.0
  %v2024 = vpack.c.bf16 %v2020, %v2020
  %v2025 = vpack.c.bf16 %v2021, %v2021
  %v2026 = vpack.c.bf16 %v2022, %v2022
  %v2027 = vpack.c.bf16 %v2023, %v2023
  %v2028 = vld [vmem:[%s3] sm:$0xff]
  %v2029 = vld [vmem:[%s3 + $0x8] sm:$0xff]
  %v2030 = vld [vmem:[%s3 + $0x10] sm:$0xff]
  %v2031 = vld [vmem:[%s3 + $0x18] sm:$0xff]
  %v2032 = vld [vmem:[%s3 + $0x20] sm:$0xff]
  %v2033 = vld [vmem:[%s3 + $0x28] sm:$0xff]
  %v2034 = vld [vmem:[%s3 + $0x30] sm:$0xff]
  %v2035 = vld [vmem:[%s3 + $0x38] sm:$0xff]
  %v2036 = vld [vmem:[%s3 + $0x40] sm:$0xff]
  %v2037 = vld [vmem:[%s3 + $0x48] sm:$0xff]
  %v2038 = vld [vmem:[%s3 + $0x50] sm:$0xff]
  %v2039 = vld [vmem:[%s3 + $0x58] sm:$0xff]
  %v2040 = vld [vmem:[%s3 + $0x60] sm:$0xff]
  %v2041 = vld [vmem:[%s3 + $0x68] sm:$0xff]
  %v2042 = vld [vmem:[%s3 + $0x70] sm:$0xff]
  %v2043 = vld [vmem:[%s3 + $0x78] sm:$0xff]
  %v2044 = vld [vmem:[%s3 + $0x80] sm:$0xff]
  %v2045 = vld [vmem:[%s3 + $0x88] sm:$0xff]
  %v2046 = vld [vmem:[%s3 + $0x90] sm:$0xff]
  %v2047 = vld [vmem:[%s3 + $0x98] sm:$0xff]
  %v2048 = vld [vmem:[%s3 + $0xa0] sm:$0xff]
  %v2049 = vld [vmem:[%s3 + $0xa8] sm:$0xff]
  %v2050 = vld [vmem:[%s3 + $0xb0] sm:$0xff]
  %v2051 = vld [vmem:[%s3 + $0xb8] sm:$0xff]
  %v2052 = vld [vmem:[%s3 + $0xc0] sm:$0xff]
  %v2053 = vld [vmem:[%s3 + $0xc8] sm:$0xff]
  %v2054 = vld [vmem:[%s3 + $0xd0] sm:$0xff]
  %v2055 = vld [vmem:[%s3 + $0xd8] sm:$0xff]
  %v2056 = vld [vmem:[%s3 + $0xe0] sm:$0xff]
  %v2057 = vld [vmem:[%s3 + $0xe8] sm:$0xff]
  %v2058 = vld [vmem:[%s3 + $0xf0] sm:$0xff]
  %v2059 = vld [vmem:[%s3 + $0xf8] sm:$0xff]
  %v2060 = vld [vmem:[%s3 + $0x100] sm:$0xff]
  %v2061 = vld [vmem:[%s3 + $0x108] sm:$0xff]
  %v2062 = vld [vmem:[%s3 + $0x110] sm:$0xff]
  %v2063 = vld [vmem:[%s3 + $0x118] sm:$0xff]
  %v2064 = vld [vmem:[%s3 + $0x120] sm:$0xff]
  %v2065 = vld [vmem:[%s3 + $0x128] sm:$0xff]
  %v2066 = vld [vmem:[%s3 + $0x130] sm:$0xff]
  %v2067 = vld [vmem:[%s3 + $0x138] sm:$0xff]
  %v2068 = vld [vmem:[%s3 + $0x140] sm:$0xff]
  %v2069 = vld [vmem:[%s3 + $0x148] sm:$0xff]
  %v2070 = vld [vmem:[%s3 + $0x150] sm:$0xff]
  %v2071 = vld [vmem:[%s3 + $0x158] sm:$0xff]
  %v2072 = vld [vmem:[%s3 + $0x160] sm:$0xff]
  %v2073 = vld [vmem:[%s3 + $0x168] sm:$0xff]
  %v2074 = vld [vmem:[%s3 + $0x170] sm:$0xff]
  %v2075 = vld [vmem:[%s3 + $0x178] sm:$0xff]
  %v2076 = vld [vmem:[%s3 + $0x180] sm:$0xff]
  %v2077 = vld [vmem:[%s3 + $0x188] sm:$0xff]
  %v2078 = vld [vmem:[%s3 + $0x190] sm:$0xff]
  %v2079 = vld [vmem:[%s3 + $0x198] sm:$0xff]
  %v2080 = vld [vmem:[%s3 + $0x1a0] sm:$0xff]
  %v2081 = vld [vmem:[%s3 + $0x1a8] sm:$0xff]
  %v2082 = vld [vmem:[%s3 + $0x1b0] sm:$0xff]
  %v2083 = vld [vmem:[%s3 + $0x1b8] sm:$0xff]
  %v2084 = vld [vmem:[%s3 + $0x1c0] sm:$0xff]
  %v2085 = vld [vmem:[%s3 + $0x1c8] sm:$0xff]
  %v2086 = vld [vmem:[%s3 + $0x1d0] sm:$0xff]
  %v2087 = vld [vmem:[%s3 + $0x1d8] sm:$0xff]
  %v2088 = vld [vmem:[%s3 + $0x1e0] sm:$0xff]
  %v2089 = vld [vmem:[%s3 + $0x1e8] sm:$0xff]
  %v2090 = vld [vmem:[%s3 + $0x1f0] sm:$0xff]
  %v2091 = vld [vmem:[%s3 + $0x1f8] sm:$0xff]
  %v2092 = vld [vmem:[%s3 + $0x200] sm:$0xff]
  %v2093 = vld [vmem:[%s3 + $0x208] sm:$0xff]
  %v2094 = vld [vmem:[%s3 + $0x210] sm:$0xff]
  %v2095 = vld [vmem:[%s3 + $0x218] sm:$0xff]
  %v2096 = vld [vmem:[%s3 + $0x220] sm:$0xff]
  %v2097 = vld [vmem:[%s3 + $0x228] sm:$0xff]
  %v2098 = vld [vmem:[%s3 + $0x230] sm:$0xff]
  %v2099 = vld [vmem:[%s3 + $0x238] sm:$0xff]
  %v2100 = vld [vmem:[%s3 + $0x240] sm:$0xff]
  %v2101 = vld [vmem:[%s3 + $0x248] sm:$0xff]
  %v2102 = vld [vmem:[%s3 + $0x250] sm:$0xff]
  %v2103 = vld [vmem:[%s3 + $0x258] sm:$0xff]
  %v2104 = vld [vmem:[%s3 + $0x260] sm:$0xff]
  %v2105 = vld [vmem:[%s3 + $0x268] sm:$0xff]
  %v2106 = vld [vmem:[%s3 + $0x270] sm:$0xff]
  %v2107 = vld [vmem:[%s3 + $0x278] sm:$0xff]
  %v2108 = vld [vmem:[%s3 + $0x280] sm:$0xff]
  %v2109 = vld [vmem:[%s3 + $0x288] sm:$0xff]
  %v2110 = vld [vmem:[%s3 + $0x290] sm:$0xff]
  %v2111 = vld [vmem:[%s3 + $0x298] sm:$0xff]
  %v2112 = vld [vmem:[%s3 + $0x2a0] sm:$0xff]
  %v2113 = vld [vmem:[%s3 + $0x2a8] sm:$0xff]
  %v2114 = vld [vmem:[%s3 + $0x2b0] sm:$0xff]
  %v2115 = vld [vmem:[%s3 + $0x2b8] sm:$0xff]
  %v2116 = vld [vmem:[%s3 + $0x2c0] sm:$0xff]
  %v2117 = vld [vmem:[%s3 + $0x2c8] sm:$0xff]
  %v2118 = vld [vmem:[%s3 + $0x2d0] sm:$0xff]
  %v2119 = vld [vmem:[%s3 + $0x2d8] sm:$0xff]
  %v2120 = vld [vmem:[%s3 + $0x2e0] sm:$0xff]
  %v2121 = vld [vmem:[%s3 + $0x2e8] sm:$0xff]
  %v2122 = vld [vmem:[%s3 + $0x2f0] sm:$0xff]
  %v2123 = vld [vmem:[%s3 + $0x2f8] sm:$0xff]
  %v2124 = vld [vmem:[%s3 + $0x300] sm:$0xff]
  %v2125 = vld [vmem:[%s3 + $0x308] sm:$0xff]
  %v2126 = vld [vmem:[%s3 + $0x310] sm:$0xff]
  %v2127 = vld [vmem:[%s3 + $0x318] sm:$0xff]
  %v2128 = vld [vmem:[%s3 + $0x320] sm:$0xff]
  %v2129 = vld [vmem:[%s3 + $0x328] sm:$0xff]
  %v2130 = vld [vmem:[%s3 + $0x330] sm:$0xff]
  %v2131 = vld [vmem:[%s3 + $0x338] sm:$0xff]
  %v2132 = vld [vmem:[%s3 + $0x340] sm:$0xff]
  %v2133 = vld [vmem:[%s3 + $0x348] sm:$0xff]
  %v2134 = vld [vmem:[%s3 + $0x350] sm:$0xff]
  %v2135 = vld [vmem:[%s3 + $0x358] sm:$0xff]
  %v2136 = vld [vmem:[%s3 + $0x360] sm:$0xff]
  %v2137 = vld [vmem:[%s3 + $0x368] sm:$0xff]
  %v2138 = vld [vmem:[%s3 + $0x370] sm:$0xff]
  %v2139 = vld [vmem:[%s3 + $0x378] sm:$0xff]
  %v2140 = vld [vmem:[%s3 + $0x380] sm:$0xff]
  %v2141 = vld [vmem:[%s3 + $0x388] sm:$0xff]
  %v2142 = vld [vmem:[%s3 + $0x390] sm:$0xff]
  %v2143 = vld [vmem:[%s3 + $0x398] sm:$0xff]
  %v2144 = vld [vmem:[%s3 + $0x3a0] sm:$0xff]
  %v2145 = vld [vmem:[%s3 + $0x3a8] sm:$0xff]
  %v2146 = vld [vmem:[%s3 + $0x3b0] sm:$0xff]
  %v2147 = vld [vmem:[%s3 + $0x3b8] sm:$0xff]
  %v2148 = vld [vmem:[%s3 + $0x3c0] sm:$0xff]
  %v2149 = vld [vmem:[%s3 + $0x3c8] sm:$0xff]
  %v2150 = vld [vmem:[%s3 + $0x3d0] sm:$0xff]
  %v2151 = vld [vmem:[%s3 + $0x3d8] sm:$0xff]
  %v2152 = vld [vmem:[%s3 + $0x3e0] sm:$0xff]
  %v2153 = vld [vmem:[%s3 + $0x3e8] sm:$0xff]
  %v2154 = vld [vmem:[%s3 + $0x3f0] sm:$0xff]
  %v2155 = vld [vmem:[%s3 + $0x3f8] sm:$0xff]
  %v2156 = vld [vmem:[%s4] sm:$0xf]
  %v2158 = vperm.slane %v2156, 0
  %v2159 = vperm.slane %v2156, 1
  %v2160 = vperm.slane %v2156, 2
  %v2161 = vperm.slane %v2156, 3
  %v2294 = vunpack.c.l.b16 %v2028
  %v2295 = vunpack.c.h.b16 %v2028
  %v2296 = vunpack.c.l.b16 %v2029
  %v2297 = vunpack.c.h.b16 %v2029
  %v2298 = vunpack.c.l.b16 %v2030
  %v2299 = vunpack.c.h.b16 %v2030
  %v2300 = vunpack.c.l.b16 %v2031
  %v2301 = vunpack.c.h.b16 %v2031
  %v2302 = vunpack.c.l.b16 %v2032
  %v2303 = vunpack.c.h.b16 %v2032
  %v2304 = vunpack.c.l.b16 %v2033
  %v2305 = vunpack.c.h.b16 %v2033
  %v2306 = vunpack.c.l.b16 %v2034
  %v2307 = vunpack.c.h.b16 %v2034
  %v2308 = vunpack.c.l.b16 %v2035
  %v2309 = vunpack.c.h.b16 %v2035
  %v2310 = vunpack.c.l.b16 %v2036
  %v2311 = vunpack.c.h.b16 %v2036
  %v2312 = vunpack.c.l.b16 %v2037
  %v2313 = vunpack.c.h.b16 %v2037
  %v2314 = vunpack.c.l.b16 %v2038
  %v2315 = vunpack.c.h.b16 %v2038
  %v2316 = vunpack.c.l.b16 %v2039
  %v2317 = vunpack.c.h.b16 %v2039
  %v2318 = vunpack.c.l.b16 %v2040
  %v2319 = vunpack.c.h.b16 %v2040
  %v2320 = vunpack.c.l.b16 %v2041
  %v2321 = vunpack.c.h.b16 %v2041
  %v2322 = vunpack.c.l.b16 %v2042
  %v2323 = vunpack.c.h.b16 %v2042
  %v2324 = vunpack.c.l.b16 %v2043
  %v2325 = vunpack.c.h.b16 %v2043
  %v2326 = vunpack.c.l.b16 %v2044
  %v2327 = vunpack.c.h.b16 %v2044
  %v2328 = vunpack.c.l.b16 %v2045
  %v2329 = vunpack.c.h.b16 %v2045
  %v2330 = vunpack.c.l.b16 %v2046
  %v2331 = vunpack.c.h.b16 %v2046
  %v2332 = vunpack.c.l.b16 %v2047
  %v2333 = vunpack.c.h.b16 %v2047
  %v2334 = vunpack.c.l.b16 %v2048
  %v2335 = vunpack.c.h.b16 %v2048
  %v2336 = vunpack.c.l.b16 %v2049
  %v2337 = vunpack.c.h.b16 %v2049
  %v2338 = vunpack.c.l.b16 %v2050
  %v2339 = vunpack.c.h.b16 %v2050
  %v2340 = vunpack.c.l.b16 %v2051
  %v2341 = vunpack.c.h.b16 %v2051
  %v2342 = vunpack.c.l.b16 %v2052
  %v2343 = vunpack.c.h.b16 %v2052
  %v2344 = vunpack.c.l.b16 %v2053
  %v2345 = vunpack.c.h.b16 %v2053
  %v2346 = vunpack.c.l.b16 %v2054
  %v2347 = vunpack.c.h.b16 %v2054
  %v2348 = vunpack.c.l.b16 %v2055
  %v2349 = vunpack.c.h.b16 %v2055
  %v2350 = vunpack.c.l.b16 %v2056
  %v2351 = vunpack.c.h.b16 %v2056
  %v2352 = vunpack.c.l.b16 %v2057
  %v2353 = vunpack.c.h.b16 %v2057
  %v2354 = vunpack.c.l.b16 %v2058
  %v2355 = vunpack.c.h.b16 %v2058
  %v2356 = vunpack.c.l.b16 %v2059
  %v2357 = vunpack.c.h.b16 %v2059
  %v2358 = vunpack.c.l.b16 %v2060
  %v2359 = vunpack.c.h.b16 %v2060
  %v2360 = vunpack.c.l.b16 %v2061
  %v2361 = vunpack.c.h.b16 %v2061
  %v2362 = vunpack.c.l.b16 %v2062
  %v2363 = vunpack.c.h.b16 %v2062
  %v2364 = vunpack.c.l.b16 %v2063
  %v2365 = vunpack.c.h.b16 %v2063
  %v2366 = vunpack.c.l.b16 %v2064
  %v2367 = vunpack.c.h.b16 %v2064
  %v2368 = vunpack.c.l.b16 %v2065
  %v2369 = vunpack.c.h.b16 %v2065
  %v2370 = vunpack.c.l.b16 %v2066
  %v2371 = vunpack.c.h.b16 %v2066
  %v2372 = vunpack.c.l.b16 %v2067
  %v2373 = vunpack.c.h.b16 %v2067
  %v2374 = vunpack.c.l.b16 %v2068
  %v2375 = vunpack.c.h.b16 %v2068
  %v2376 = vunpack.c.l.b16 %v2069
  %v2377 = vunpack.c.h.b16 %v2069
  %v2378 = vunpack.c.l.b16 %v2070
  %v2379 = vunpack.c.h.b16 %v2070
  %v2380 = vunpack.c.l.b16 %v2071
  %v2381 = vunpack.c.h.b16 %v2071
  %v2382 = vunpack.c.l.b16 %v2072
  %v2383 = vunpack.c.h.b16 %v2072
  %v2384 = vunpack.c.l.b16 %v2073
  %v2385 = vunpack.c.h.b16 %v2073
  %v2386 = vunpack.c.l.b16 %v2074
  %v2387 = vunpack.c.h.b16 %v2074
  %v2388 = vunpack.c.l.b16 %v2075
  %v2389 = vunpack.c.h.b16 %v2075
  %v2390 = vunpack.c.l.b16 %v2076
  %v2391 = vunpack.c.h.b16 %v2076
  %v2392 = vunpack.c.l.b16 %v2077
  %v2393 = vunpack.c.h.b16 %v2077
  %v2394 = vunpack.c.l.b16 %v2078
  %v2395 = vunpack.c.h.b16 %v2078
  %v2396 = vunpack.c.l.b16 %v2079
  %v2397 = vunpack.c.h.b16 %v2079
  %v2398 = vunpack.c.l.b16 %v2080
  %v2399 = vunpack.c.h.b16 %v2080
  %v2400 = vunpack.c.l.b16 %v2081
  %v2401 = vunpack.c.h.b16 %v2081
  %v2402 = vunpack.c.l.b16 %v2082
  %v2403 = vunpack.c.h.b16 %v2082
  %v2404 = vunpack.c.l.b16 %v2083
  %v2405 = vunpack.c.h.b16 %v2083
  %v2406 = vunpack.c.l.b16 %v2084
  %v2407 = vunpack.c.h.b16 %v2084
  %v2408 = vunpack.c.l.b16 %v2085
  %v2409 = vunpack.c.h.b16 %v2085
  %v2410 = vunpack.c.l.b16 %v2086
  %v2411 = vunpack.c.h.b16 %v2086
  %v2412 = vunpack.c.l.b16 %v2087
  %v2413 = vunpack.c.h.b16 %v2087
  %v2414 = vunpack.c.l.b16 %v2088
  %v2415 = vunpack.c.h.b16 %v2088
  %v2416 = vunpack.c.l.b16 %v2089
  %v2417 = vunpack.c.h.b16 %v2089
  %v2418 = vunpack.c.l.b16 %v2090
  %v2419 = vunpack.c.h.b16 %v2090
  %v2420 = vunpack.c.l.b16 %v2091
  %v2421 = vunpack.c.h.b16 %v2091
  %v2422 = vunpack.c.l.b16 %v2092
  %v2423 = vunpack.c.h.b16 %v2092
  %v2424 = vunpack.c.l.b16 %v2093
  %v2425 = vunpack.c.h.b16 %v2093
  %v2426 = vunpack.c.l.b16 %v2094
  %v2427 = vunpack.c.h.b16 %v2094
  %v2428 = vunpack.c.l.b16 %v2095
  %v2429 = vunpack.c.h.b16 %v2095
  %v2430 = vunpack.c.l.b16 %v2096
  %v2431 = vunpack.c.h.b16 %v2096
  %v2432 = vunpack.c.l.b16 %v2097
  %v2433 = vunpack.c.h.b16 %v2097
  %v2434 = vunpack.c.l.b16 %v2098
  %v2435 = vunpack.c.h.b16 %v2098
  %v2436 = vunpack.c.l.b16 %v2099
  %v2437 = vunpack.c.h.b16 %v2099
  %v2438 = vunpack.c.l.b16 %v2100
  %v2439 = vunpack.c.h.b16 %v2100
  %v2440 = vunpack.c.l.b16 %v2101
  %v2441 = vunpack.c.h.b16 %v2101
  %v2442 = vunpack.c.l.b16 %v2102
  %v2443 = vunpack.c.h.b16 %v2102
  %v2444 = vunpack.c.l.b16 %v2103
  %v2445 = vunpack.c.h.b16 %v2103
  %v2446 = vunpack.c.l.b16 %v2104
  %v2447 = vunpack.c.h.b16 %v2104
  %v2448 = vunpack.c.l.b16 %v2105
  %v2449 = vunpack.c.h.b16 %v2105
  %v2450 = vunpack.c.l.b16 %v2106
  %v2451 = vunpack.c.h.b16 %v2106
  %v2452 = vunpack.c.l.b16 %v2107
  %v2453 = vunpack.c.h.b16 %v2107
  %v2454 = vunpack.c.l.b16 %v2108
  %v2455 = vunpack.c.h.b16 %v2108
  %v2456 = vunpack.c.l.b16 %v2109
  %v2457 = vunpack.c.h.b16 %v2109
  %v2458 = vunpack.c.l.b16 %v2110
  %v2459 = vunpack.c.h.b16 %v2110
  %v2460 = vunpack.c.l.b16 %v2111
  %v2461 = vunpack.c.h.b16 %v2111
  %v2462 = vunpack.c.l.b16 %v2112
  %v2463 = vunpack.c.h.b16 %v2112
  %v2464 = vunpack.c.l.b16 %v2113
  %v2465 = vunpack.c.h.b16 %v2113
  %v2466 = vunpack.c.l.b16 %v2114
  %v2467 = vunpack.c.h.b16 %v2114
  %v2468 = vunpack.c.l.b16 %v2115
  %v2469 = vunpack.c.h.b16 %v2115
  %v2470 = vunpack.c.l.b16 %v2116
  %v2471 = vunpack.c.h.b16 %v2116
  %v2472 = vunpack.c.l.b16 %v2117
  %v2473 = vunpack.c.h.b16 %v2117
  %v2474 = vunpack.c.l.b16 %v2118
  %v2475 = vunpack.c.h.b16 %v2118
  %v2476 = vunpack.c.l.b16 %v2119
  %v2477 = vunpack.c.h.b16 %v2119
  %v2478 = vunpack.c.l.b16 %v2120
  %v2479 = vunpack.c.h.b16 %v2120
  %v2480 = vunpack.c.l.b16 %v2121
  %v2481 = vunpack.c.h.b16 %v2121
  %v2482 = vunpack.c.l.b16 %v2122
  %v2483 = vunpack.c.h.b16 %v2122
  %v2484 = vunpack.c.l.b16 %v2123
  %v2485 = vunpack.c.h.b16 %v2123
  %v2486 = vunpack.c.l.b16 %v2124
  %v2487 = vunpack.c.h.b16 %v2124
  %v2488 = vunpack.c.l.b16 %v2125
  %v2489 = vunpack.c.h.b16 %v2125
  %v2490 = vunpack.c.l.b16 %v2126
  %v2491 = vunpack.c.h.b16 %v2126
  %v2492 = vunpack.c.l.b16 %v2127
  %v2493 = vunpack.c.h.b16 %v2127
  %v2494 = vunpack.c.l.b16 %v2128
  %v2495 = vunpack.c.h.b16 %v2128
  %v2496 = vunpack.c.l.b16 %v2129
  %v2497 = vunpack.c.h.b16 %v2129
  %v2498 = vunpack.c.l.b16 %v2130
  %v2499 = vunpack.c.h.b16 %v2130
  %v2500 = vunpack.c.l.b16 %v2131
  %v2501 = vunpack.c.h.b16 %v2131
  %v2502 = vunpack.c.l.b16 %v2132
  %v2503 = vunpack.c.h.b16 %v2132
  %v2504 = vunpack.c.l.b16 %v2133
  %v2505 = vunpack.c.h.b16 %v2133
  %v2506 = vunpack.c.l.b16 %v2134
  %v2507 = vunpack.c.h.b16 %v2134
  %v2508 = vunpack.c.l.b16 %v2135
  %v2509 = vunpack.c.h.b16 %v2135
  %v2510 = vunpack.c.l.b16 %v2136
  %v2511 = vunpack.c.h.b16 %v2136
  %v2512 = vunpack.c.l.b16 %v2137
  %v2513 = vunpack.c.h.b16 %v2137
  %v2514 = vunpack.c.l.b16 %v2138
  %v2515 = vunpack.c.h.b16 %v2138
  %v2516 = vunpack.c.l.b16 %v2139
  %v2517 = vunpack.c.h.b16 %v2139
  %v2518 = vunpack.c.l.b16 %v2140
  %v2519 = vunpack.c.h.b16 %v2140
  %v2520 = vunpack.c.l.b16 %v2141
  %v2521 = vunpack.c.h.b16 %v2141
  %v2522 = vunpack.c.l.b16 %v2142
  %v2523 = vunpack.c.h.b16 %v2142
  %v2524 = vunpack.c.l.b16 %v2143
  %v2525 = vunpack.c.h.b16 %v2143
  %v2526 = vunpack.c.l.b16 %v2144
  %v2527 = vunpack.c.h.b16 %v2144
  %v2528 = vunpack.c.l.b16 %v2145
  %v2529 = vunpack.c.h.b16 %v2145
  %v2530 = vunpack.c.l.b16 %v2146
  %v2531 = vunpack.c.h.b16 %v2146
  %v2532 = vunpack.c.l.b16 %v2147
  %v2533 = vunpack.c.h.b16 %v2147
  %v2534 = vunpack.c.l.b16 %v2148
  %v2535 = vunpack.c.h.b16 %v2148
  %v2536 = vunpack.c.l.b16 %v2149
  %v2537 = vunpack.c.h.b16 %v2149
  %v2538 = vunpack.c.l.b16 %v2150
  %v2539 = vunpack.c.h.b16 %v2150
  %v2540 = vunpack.c.l.b16 %v2151
  %v2541 = vunpack.c.h.b16 %v2151
  %v2542 = vunpack.c.l.b16 %v2152
  %v2543 = vunpack.c.h.b16 %v2152
  %v2544 = vunpack.c.l.b16 %v2153
  %v2545 = vunpack.c.h.b16 %v2153
  %v2546 = vunpack.c.l.b16 %v2154
  %v2547 = vunpack.c.h.b16 %v2154
  %v2548 = vunpack.c.l.b16 %v2155
  %v2549 = vunpack.c.h.b16 %v2155
  %v2550 = vpack.c.b16 %v2298, %v2294
  %v2551 = vpack.c.b16 %v2299, %v2295
  %v2552 = vpack.c.b16 %v2300, %v2296
  %v2553 = vpack.c.b16 %v2301, %v2297
  %v2554 = vpack.c.b16 %v2306, %v2302
  %v2555 = vpack.c.b16 %v2307, %v2303
  %v2556 = vpack.c.b16 %v2308, %v2304
  %v2557 = vpack.c.b16 %v2309, %v2305
  %v2558 = vpack.c.b16 %v2314, %v2310
  %v2559 = vpack.c.b16 %v2315, %v2311
  %v2560 = vpack.c.b16 %v2316, %v2312
  %v2561 = vpack.c.b16 %v2317, %v2313
  %v2562 = vpack.c.b16 %v2322, %v2318
  %v2563 = vpack.c.b16 %v2323, %v2319
  %v2564 = vpack.c.b16 %v2324, %v2320
  %v2565 = vpack.c.b16 %v2325, %v2321
  %v2566 = vpack.c.b16 %v2330, %v2326
  %v2567 = vpack.c.b16 %v2331, %v2327
  %v2568 = vpack.c.b16 %v2332, %v2328
  %v2569 = vpack.c.b16 %v2333, %v2329
  %v2570 = vpack.c.b16 %v2338, %v2334
  %v2571 = vpack.c.b16 %v2339, %v2335
  %v2572 = vpack.c.b16 %v2340, %v2336
  %v2573 = vpack.c.b16 %v2341, %v2337
  %v2574 = vpack.c.b16 %v2346, %v2342
  %v2575 = vpack.c.b16 %v2347, %v2343
  %v2576 = vpack.c.b16 %v2348, %v2344
  %v2577 = vpack.c.b16 %v2349, %v2345
  %v2578 = vpack.c.b16 %v2354, %v2350
  %v2579 = vpack.c.b16 %v2355, %v2351
  %v2580 = vpack.c.b16 %v2356, %v2352
  %v2581 = vpack.c.b16 %v2357, %v2353
  %v2582 = vpack.c.b16 %v2362, %v2358
  %v2583 = vpack.c.b16 %v2363, %v2359
  %v2584 = vpack.c.b16 %v2364, %v2360
  %v2585 = vpack.c.b16 %v2365, %v2361
  %v2586 = vpack.c.b16 %v2370, %v2366
  %v2587 = vpack.c.b16 %v2371, %v2367
  %v2588 = vpack.c.b16 %v2372, %v2368
  %v2589 = vpack.c.b16 %v2373, %v2369
  %v2590 = vpack.c.b16 %v2378, %v2374
  %v2591 = vpack.c.b16 %v2379, %v2375
  %v2592 = vpack.c.b16 %v2380, %v2376
  %v2593 = vpack.c.b16 %v2381, %v2377
  %v2594 = vpack.c.b16 %v2386, %v2382
  %v2595 = vpack.c.b16 %v2387, %v2383
  %v2596 = vpack.c.b16 %v2388, %v2384
  %v2597 = vpack.c.b16 %v2389, %v2385
  %v2598 = vpack.c.b16 %v2394, %v2390
  %v2599 = vpack.c.b16 %v2395, %v2391
  %v2600 = vpack.c.b16 %v2396, %v2392
  %v2601 = vpack.c.b16 %v2397, %v2393
  %v2602 = vpack.c.b16 %v2402, %v2398
  %v2603 = vpack.c.b16 %v2403, %v2399
  %v2604 = vpack.c.b16 %v2404, %v2400
  %v2605 = vpack.c.b16 %v2405, %v2401
  %v2606 = vpack.c.b16 %v2410, %v2406
  %v2607 = vpack.c.b16 %v2411, %v2407
  %v2608 = vpack.c.b16 %v2412, %v2408
  %v2609 = vpack.c.b16 %v2413, %v2409
  %v2610 = vpack.c.b16 %v2418, %v2414
  %v2611 = vpack.c.b16 %v2419, %v2415
  %v2612 = vpack.c.b16 %v2420, %v2416
  %v2613 = vpack.c.b16 %v2421, %v2417
  %v2614 = vpack.c.b16 %v2426, %v2422
  %v2615 = vpack.c.b16 %v2427, %v2423
  %v2616 = vpack.c.b16 %v2428, %v2424
  %v2617 = vpack.c.b16 %v2429, %v2425
  %v2618 = vpack.c.b16 %v2434, %v2430
  %v2619 = vpack.c.b16 %v2435, %v2431
  %v2620 = vpack.c.b16 %v2436, %v2432
  %v2621 = vpack.c.b16 %v2437, %v2433
  %v2622 = vpack.c.b16 %v2442, %v2438
  %v2623 = vpack.c.b16 %v2443, %v2439
  %v2624 = vpack.c.b16 %v2444, %v2440
  %v2625 = vpack.c.b16 %v2445, %v2441
  %v2626 = vpack.c.b16 %v2450, %v2446
  %v2627 = vpack.c.b16 %v2451, %v2447
  %v2628 = vpack.c.b16 %v2452, %v2448
  %v2629 = vpack.c.b16 %v2453, %v2449
  %v2630 = vpack.c.b16 %v2458, %v2454
  %v2631 = vpack.c.b16 %v2459, %v2455
  %v2632 = vpack.c.b16 %v2460, %v2456
  %v2633 = vpack.c.b16 %v2461, %v2457
  %v2634 = vpack.c.b16 %v2466, %v2462
  %v2635 = vpack.c.b16 %v2467, %v2463
  %v2636 = vpack.c.b16 %v2468, %v2464
  %v2637 = vpack.c.b16 %v2469, %v2465
  %v2638 = vpack.c.b16 %v2474, %v2470
  %v2639 = vpack.c.b16 %v2475, %v2471
  %v2640 = vpack.c.b16 %v2476, %v2472
  %v2641 = vpack.c.b16 %v2477, %v2473
  %v2642 = vpack.c.b16 %v2482, %v2478
  %v2643 = vpack.c.b16 %v2483, %v2479
  %v2644 = vpack.c.b16 %v2484, %v2480
  %v2645 = vpack.c.b16 %v2485, %v2481
  %v2646 = vpack.c.b16 %v2490, %v2486
  %v2647 = vpack.c.b16 %v2491, %v2487
  %v2648 = vpack.c.b16 %v2492, %v2488
  %v2649 = vpack.c.b16 %v2493, %v2489
  %v2650 = vpack.c.b16 %v2498, %v2494
  %v2651 = vpack.c.b16 %v2499, %v2495
  %v2652 = vpack.c.b16 %v2500, %v2496
  %v2653 = vpack.c.b16 %v2501, %v2497
  %v2654 = vpack.c.b16 %v2506, %v2502
  %v2655 = vpack.c.b16 %v2507, %v2503
  %v2656 = vpack.c.b16 %v2508, %v2504
  %v2657 = vpack.c.b16 %v2509, %v2505
  %v2658 = vpack.c.b16 %v2514, %v2510
  %v2659 = vpack.c.b16 %v2515, %v2511
  %v2660 = vpack.c.b16 %v2516, %v2512
  %v2661 = vpack.c.b16 %v2517, %v2513
  %v2662 = vpack.c.b16 %v2522, %v2518
  %v2663 = vpack.c.b16 %v2523, %v2519
  %v2664 = vpack.c.b16 %v2524, %v2520
  %v2665 = vpack.c.b16 %v2525, %v2521
  %v2666 = vpack.c.b16 %v2530, %v2526
  %v2667 = vpack.c.b16 %v2531, %v2527
  %v2668 = vpack.c.b16 %v2532, %v2528
  %v2669 = vpack.c.b16 %v2533, %v2529
  %v2670 = vpack.c.b16 %v2538, %v2534
  %v2671 = vpack.c.b16 %v2539, %v2535
  %v2672 = vpack.c.b16 %v2540, %v2536
  %v2673 = vpack.c.b16 %v2541, %v2537
  %v2674 = vpack.c.b16 %v2546, %v2542
  %v2675 = vpack.c.b16 %v2547, %v2543
  %v2676 = vpack.c.b16 %v2548, %v2544
  %v2677 = vpack.c.b16 %v2549, %v2545
  %2806 = vmatpush.bf16.msra.mxu0 %v2578
  %2807 = vmatpush.bf16.msra.mxu0 %v2574
  %2808 = vmatpush.bf16.msra.mxu0 %v2570
  %2809 = vmatpush.bf16.msra.mxu0 %v2566
  %2810 = vmatpush.bf16.msra.mxu0 %v2562
  %2811 = vmatpush.bf16.msra.mxu0 %v2558
  %2812 = vmatpush.bf16.msra.mxu0 %v2554
  %2813 = vmatpush.bf16.msra.mxu0 %v2550
  %2814 = vmatmul.bf16.gmra.mxu0 %v2024
  %v2815 = vpop.f32.mrf.mxu0
  %v2816 = vadd.f32 %v2158, %v2815
  %v2817 = vpop.f32.mrf.mxu0
  %2818 = vdwg.mxu0
  %2819 = vmatpush.bf16.msra.mxu0 %v2610
  %2820 = vmatpush.bf16.msra.mxu0 %v2606
  %2821 = vmatpush.bf16.msra.mxu0 %v2602
  %2822 = vmatpush.bf16.msra.mxu0 %v2598
  %2823 = vmatpush.bf16.msra.mxu0 %v2594
  %2824 = vmatpush.bf16.msra.mxu0 %v2590
  %2825 = vmatpush.bf16.msra.mxu0 %v2586
  %2826 = vmatpush.bf16.msra.mxu0 %v2582
  %2827 = vmatmul.bf16.gmra.mxu0 %v2025
  %v2828 = vpop.f32.mrf.mxu0
  %v2829 = vadd.f32 %v2816, %v2828
  %v2830 = vpop.f32.mrf.mxu0
  %2831 = vdwg.mxu0
  %2832 = vmatpush.bf16.msra.mxu0 %v2642
  %2833 = vmatpush.bf16.msra.mxu0 %v2638
  %2834 = vmatpush.bf16.msra.mxu0 %v2634
  %2835 = vmatpush.bf16.msra.mxu0 %v2630
  %2836 = vmatpush.bf16.msra.mxu0 %v2626
  %2837 = vmatpush.bf16.msra.mxu0 %v2622
  %2838 = vmatpush.bf16.msra.mxu0 %v2618
  %2839 = vmatpush.bf16.msra.mxu0 %v2614
  %2840 = vmatmul.bf16.gmra.mxu0 %v2026
  %v2841 = vpop.f32.mrf.mxu0
  %v2842 = vadd.f32 %v2829, %v2841
  %v2843 = vpop.f32.mrf.mxu0
  %2844 = vdwg.mxu0
  %2845 = vmatpush.bf16.msra.mxu0 %v2674
  %2846 = vmatpush.bf16.msra.mxu0 %v2670
  %2847 = vmatpush.bf16.msra.mxu0 %v2666
  %2848 = vmatpush.bf16.msra.mxu0 %v2662
  %2849 = vmatpush.bf16.msra.mxu0 %v2658
  %2850 = vmatpush.bf16.msra.mxu0 %v2654
  %2851 = vmatpush.bf16.msra.mxu0 %v2650
  %2852 = vmatpush.bf16.msra.mxu0 %v2646
  %2853 = vmatmul.bf16.gmra.mxu0 %v2027
  %v2854 = vpop.f32.mrf.mxu0
  %v2855 = vadd.f32 %v2842, %v2854
  %v2856 = vpop.f32.mrf.mxu0
  %2857 = vdwg.mxu0
  %2858 = vmatpush.bf16.msra.mxu0 %v2579
  %2859 = vmatpush.bf16.msra.mxu0 %v2575
  %2860 = vmatpush.bf16.msra.mxu0 %v2571
  %2861 = vmatpush.bf16.msra.mxu0 %v2567
  %2862 = vmatpush.bf16.msra.mxu0 %v2563
  %2863 = vmatpush.bf16.msra.mxu0 %v2559
  %2864 = vmatpush.bf16.msra.mxu0 %v2555
  %2865 = vmatpush.bf16.msra.mxu0 %v2551
  %2866 = vmatmul.bf16.gmra.mxu0 %v2024
  %v2867 = vpop.f32.mrf.mxu0
  %v2868 = vadd.f32 %v2159, %v2867
  %v2869 = vpop.f32.mrf.mxu0
  %2870 = vdwg.mxu0
  %2871 = vmatpush.bf16.msra.mxu0 %v2611
  %2872 = vmatpush.bf16.msra.mxu0 %v2607
  %2873 = vmatpush.bf16.msra.mxu0 %v2603
  %2874 = vmatpush.bf16.msra.mxu0 %v2599
  %2875 = vmatpush.bf16.msra.mxu0 %v2595
  %2876 = vmatpush.bf16.msra.mxu0 %v2591
  %2877 = vmatpush.bf16.msra.mxu0 %v2587
  %2878 = vmatpush.bf16.msra.mxu0 %v2583
  %2879 = vmatmul.bf16.gmra.mxu0 %v2025
  %v2880 = vpop.f32.mrf.mxu0
  %v2881 = vadd.f32 %v2868, %v2880
  %v2882 = vpop.f32.mrf.mxu0
  %2883 = vdwg.mxu0
  %2884 = vmatpush.bf16.msra.mxu0 %v2643
  %2885 = vmatpush.bf16.msra.mxu0 %v2639
  %2886 = vmatpush.bf16.msra.mxu0 %v2635
  %2887 = vmatpush.bf16.msra.mxu0 %v2631
  %2888 = vmatpush.bf16.msra.mxu0 %v2627
  %2889 = vmatpush.bf16.msra.mxu0 %v2623
  %2890 = vmatpush.bf16.msra.mxu0 %v2619
  %2891 = vmatpush.bf16.msra.mxu0 %v2615
  %2892 = vmatmul.bf16.gmra.mxu0 %v2026
  %v2893 = vpop.f32.mrf.mxu0
  %v2894 = vadd.f32 %v2881, %v2893
  %v2895 = vpop.f32.mrf.mxu0
  %2896 = vdwg.mxu0
  %2897 = vmatpush.bf16.msra.mxu0 %v2675
  %2898 = vmatpush.bf16.msra.mxu0 %v2671
  %2899 = vmatpush.bf16.msra.mxu0 %v2667
  %2900 = vmatpush.bf16.msra.mxu0 %v2663
  %2901 = vmatpush.bf16.msra.mxu0 %v2659
  %2902 = vmatpush.bf16.msra.mxu0 %v2655
  %2903 = vmatpush.bf16.msra.mxu0 %v2651
  %2904 = vmatpush.bf16.msra.mxu0 %v2647
  %2905 = vmatmul.bf16.gmra.mxu0 %v2027
  %v2906 = vpop.f32.mrf.mxu0
  %v2907 = vadd.f32 %v2894, %v2906
  %v2908 = vpop.f32.mrf.mxu0
  %2909 = vdwg.mxu0
  %2910 = vmatpush.bf16.msra.mxu0 %v2580
  %2911 = vmatpush.bf16.msra.mxu0 %v2576
  %2912 = vmatpush.bf16.msra.mxu0 %v2572
  %2913 = vmatpush.bf16.msra.mxu0 %v2568
  %2914 = vmatpush.bf16.msra.mxu0 %v2564
  %2915 = vmatpush.bf16.msra.mxu0 %v2560
  %2916 = vmatpush.bf16.msra.mxu0 %v2556
  %2917 = vmatpush.bf16.msra.mxu0 %v2552
  %2918 = vmatmul.bf16.gmra.mxu0 %v2024
  %v2919 = vpop.f32.mrf.mxu0
  %v2920 = vadd.f32 %v2160, %v2919
  %v2921 = vpop.f32.mrf.mxu0
  %2922 = vdwg.mxu0
  %2923 = vmatpush.bf16.msra.mxu0 %v2612
  %2924 = vmatpush.bf16.msra.mxu0 %v2608
  %2925 = vmatpush.bf16.msra.mxu0 %v2604
  %2926 = vmatpush.bf16.msra.mxu0 %v2600
  %2927 = vmatpush.bf16.msra.mxu0 %v2596
  %2928 = vmatpush.bf16.msra.mxu0 %v2592
  %2929 = vmatpush.bf16.msra.mxu0 %v2588
  %2930 = vmatpush.bf16.msra.mxu0 %v2584
  %2931 = vmatmul.bf16.gmra.mxu0 %v2025
  %v2932 = vpop.f32.mrf.mxu0
  %v2933 = vadd.f32 %v2920, %v2932
  %v2934 = vpop.f32.mrf.mxu0
  %2935 = vdwg.mxu0
  %2936 = vmatpush.bf16.msra.mxu0 %v2644
  %2937 = vmatpush.bf16.msra.mxu0 %v2640
  %2938 = vmatpush.bf16.msra.mxu0 %v2636
  %2939 = vmatpush.bf16.msra.mxu0 %v2632
  %2940 = vmatpush.bf16.msra.mxu0 %v2628
  %2941 = vmatpush.bf16.msra.mxu0 %v2624
  %2942 = vmatpush.bf16.msra.mxu0 %v2620
  %2943 = vmatpush.bf16.msra.mxu0 %v2616
  %2944 = vmatmul.bf16.gmra.mxu0 %v2026
  %v2945 = vpop.f32.mrf.mxu0
  %v2946 = vadd.f32 %v2933, %v2945
  %v2947 = vpop.f32.mrf.mxu0
  %2948 = vdwg.mxu0
  %2949 = vmatpush.bf16.msra.mxu0 %v2676
  %2950 = vmatpush.bf16.msra.mxu0 %v2672
  %2951 = vmatpush.bf16.msra.mxu0 %v2668
  %2952 = vmatpush.bf16.msra.mxu0 %v2664
  %2953 = vmatpush.bf16.msra.mxu0 %v2660
  %2954 = vmatpush.bf16.msra.mxu0 %v2656
  %2955 = vmatpush.bf16.msra.mxu0 %v2652
  %2956 = vmatpush.bf16.msra.mxu0 %v2648
  %2957 = vmatmul.bf16.gmra.mxu0 %v2027
  %v2958 = vpop.f32.mrf.mxu0
  %v2959 = vadd.f32 %v2946, %v2958
  %v2960 = vpop.f32.mrf.mxu0
  %2961 = vdwg.mxu0
  %2962 = vmatpush.bf16.msra.mxu0 %v2581
  %2963 = vmatpush.bf16.msra.mxu0 %v2577
  %2964 = vmatpush.bf16.msra.mxu0 %v2573
  %2965 = vmatpush.bf16.msra.mxu0 %v2569
  %2966 = vmatpush.bf16.msra.mxu0 %v2565
  %2967 = vmatpush.bf16.msra.mxu0 %v2561
  %2968 = vmatpush.bf16.msra.mxu0 %v2557
  %2969 = vmatpush.bf16.msra.mxu0 %v2553
  %2970 = vmatmul.bf16.gmra.mxu0 %v2024
  %v2971 = vpop.f32.mrf.mxu0
  %v2972 = vadd.f32 %v2161, %v2971
  %v2973 = vpop.f32.mrf.mxu0
  %2974 = vdwg.mxu0
  %2975 = vmatpush.bf16.msra.mxu0 %v2613
  %2976 = vmatpush.bf16.msra.mxu0 %v2609
  %2977 = vmatpush.bf16.msra.mxu0 %v2605
  %2978 = vmatpush.bf16.msra.mxu0 %v2601
  %2979 = vmatpush.bf16.msra.mxu0 %v2597
  %2980 = vmatpush.bf16.msra.mxu0 %v2593
  %2981 = vmatpush.bf16.msra.mxu0 %v2589
  %2982 = vmatpush.bf16.msra.mxu0 %v2585
  %2983 = vmatmul.bf16.gmra.mxu0 %v2025
  %v2984 = vpop.f32.mrf.mxu0
  %v2985 = vadd.f32 %v2972, %v2984
  %v2986 = vpop.f32.mrf.mxu0
  %2987 = vdwg.mxu0
  %2988 = vmatpush.bf16.msra.mxu0 %v2645
  %2989 = vmatpush.bf16.msra.mxu0 %v2641
  %2990 = vmatpush.bf16.msra.mxu0 %v2637
  %2991 = vmatpush.bf16.msra.mxu0 %v2633
  %2992 = vmatpush.bf16.msra.mxu0 %v2629
  %2993 = vmatpush.bf16.msra.mxu0 %v2625
  %2994 = vmatpush.bf16.msra.mxu0 %v2621
  %2995 = vmatpush.bf16.msra.mxu0 %v2617
  %2996 = vmatmul.bf16.gmra.mxu0 %v2026
  %v2997 = vpop.f32.mrf.mxu0
  %v2998 = vadd.f32 %v2985, %v2997
  %v2999 = vpop.f32.mrf.mxu0
  %3000 = vdwg.mxu0
  %3001 = vmatpush.bf16.msra.mxu0 %v2677
  %3002 = vmatpush.bf16.msra.mxu0 %v2673
  %3003 = vmatpush.bf16.msra.mxu0 %v2669
  %3004 = vmatpush.bf16.msra.mxu0 %v2665
  %3005 = vmatpush.bf16.msra.mxu0 %v2661
  %3006 = vmatpush.bf16.msra.mxu0 %v2657
  %3007 = vmatpush.bf16.msra.mxu0 %v2653
  %3008 = vmatpush.bf16.msra.mxu0 %v2649
  %3009 = vmatmul.bf16.gmra.mxu0 %v2027
  %v3010 = vpop.f32.mrf.mxu0
  %v3011 = vadd.f32 %v2998, %v3010
  %v3012 = vpop.f32.mrf.mxu0
  %3013 = vdwg.mxu0
  %v3014 = vmax.f32 %v2855, 0.0
  %v3015 = vmax.f32 %v2907, 0.0
  %v3016 = vmax.f32 %v2959, 0.0
  %v3017 = vmax.f32 %v3011, 0.0
  %v3018 = vpack.c.bf16 %v3014, %v3014
  %v3019 = vpack.c.bf16 %v3015, %v3015
  %v3020 = vpack.c.bf16 %v3016, %v3016
  %v3021 = vpack.c.bf16 %v3017, %v3017
  %v3022 = vld [vmem:[%s5] sm:$0xff]
  %v3023 = vld [vmem:[%s5 + $0x8] sm:$0xf]
  %v3024 = vld [vmem:[%s5 + $0xc] sm:$0xff]
  %v3025 = vld [vmem:[%s5 + $0x14] sm:$0xf]
  %v3026 = vld [vmem:[%s5 + $0x18] sm:$0xff]
  %v3027 = vld [vmem:[%s5 + $0x20] sm:$0xf]
  %v3028 = vld [vmem:[%s5 + $0x24] sm:$0xff]
  %v3029 = vld [vmem:[%s5 + $0x2c] sm:$0xf]
  %v3030 = vld [vmem:[%s5 + $0x30] sm:$0xff]
  %v3031 = vld [vmem:[%s5 + $0x38] sm:$0xf]
  %v3032 = vld [vmem:[%s5 + $0x3c] sm:$0xff]
  %v3033 = vld [vmem:[%s5 + $0x44] sm:$0xf]
  %v3034 = vld [vmem:[%s5 + $0x48] sm:$0xff]
  %v3035 = vld [vmem:[%s5 + $0x50] sm:$0xf]
  %v3036 = vld [vmem:[%s5 + $0x54] sm:$0xff]
  %v3037 = vld [vmem:[%s5 + $0x5c] sm:$0xf]
  %v3038 = vld [vmem:[%s5 + $0x60] sm:$0xff]
  %v3039 = vld [vmem:[%s5 + $0x68] sm:$0xf]
  %v3040 = vld [vmem:[%s5 + $0x6c] sm:$0xff]
  %v3041 = vld [vmem:[%s5 + $0x74] sm:$0xf]
  %v3042 = vld [vmem:[%s5 + $0x78] sm:$0xff]
  %v3043 = vld [vmem:[%s5 + $0x80] sm:$0xf]
  %v3044 = vld [vmem:[%s5 + $0x84] sm:$0xff]
  %v3045 = vld [vmem:[%s5 + $0x8c] sm:$0xf]
  %v3046 = vld [vmem:[%s5 + $0x90] sm:$0xff]
  %v3047 = vld [vmem:[%s5 + $0x98] sm:$0xf]
  %v3048 = vld [vmem:[%s5 + $0x9c] sm:$0xff]
  %v3049 = vld [vmem:[%s5 + $0xa4] sm:$0xf]
  %v3050 = vld [vmem:[%s5 + $0xa8] sm:$0xff]
  %v3051 = vld [vmem:[%s5 + $0xb0] sm:$0xf]
  %v3052 = vld [vmem:[%s5 + $0xb4] sm:$0xff]
  %v3053 = vld [vmem:[%s5 + $0xbc] sm:$0xf]
  %v3054 = vld [vmem:[%s5 + $0xc0] sm:$0xff]
  %v3055 = vld [vmem:[%s5 + $0xc8] sm:$0xf]
  %v3056 = vld [vmem:[%s5 + $0xcc] sm:$0xff]
  %v3057 = vld [vmem:[%s5 + $0xd4] sm:$0xf]
  %v3058 = vld [vmem:[%s5 + $0xd8] sm:$0xff]
  %v3059 = vld [vmem:[%s5 + $0xe0] sm:$0xf]
  %v3060 = vld [vmem:[%s5 + $0xe4] sm:$0xff]
  %v3061 = vld [vmem:[%s5 + $0xec] sm:$0xf]
  %v3062 = vld [vmem:[%s5 + $0xf0] sm:$0xff]
  %v3063 = vld [vmem:[%s5 + $0xf8] sm:$0xf]
  %v3064 = vld [vmem:[%s5 + $0xfc] sm:$0xff]
  %v3065 = vld [vmem:[%s5 + $0x104] sm:$0xf]
  %v3066 = vld [vmem:[%s5 + $0x108] sm:$0xff]
  %v3067 = vld [vmem:[%s5 + $0x110] sm:$0xf]
  %v3068 = vld [vmem:[%s5 + $0x114] sm:$0xff]
  %v3069 = vld [vmem:[%s5 + $0x11c] sm:$0xf]
  %v3070 = vld [vmem:[%s5 + $0x120] sm:$0xff]
  %v3071 = vld [vmem:[%s5 + $0x128] sm:$0xf]
  %v3072 = vld [vmem:[%s5 + $0x12c] sm:$0xff]
  %v3073 = vld [vmem:[%s5 + $0x134] sm:$0xf]
  %v3074 = vld [vmem:[%s5 + $0x138] sm:$0xff]
  %v3075 = vld [vmem:[%s5 + $0x140] sm:$0xf]
  %v3076 = vld [vmem:[%s5 + $0x144] sm:$0xff]
  %v3077 = vld [vmem:[%s5 + $0x14c] sm:$0xf]
  %v3078 = vld [vmem:[%s5 + $0x150] sm:$0xff]
  %v3079 = vld [vmem:[%s5 + $0x158] sm:$0xf]
  %v3080 = vld [vmem:[%s5 + $0x15c] sm:$0xff]
  %v3081 = vld [vmem:[%s5 + $0x164] sm:$0xf]
  %v3082 = vld [vmem:[%s5 + $0x168] sm:$0xff]
  %v3083 = vld [vmem:[%s5 + $0x170] sm:$0xf]
  %v3084 = vld [vmem:[%s5 + $0x174] sm:$0xff]
  %v3085 = vld [vmem:[%s5 + $0x17c] sm:$0xf]
  %v3086 = vld [vmem:[%s5 + $0x180] sm:$0xff]
  %v3087 = vld [vmem:[%s5 + $0x188] sm:$0xf]
  %v3088 = vld [vmem:[%s5 + $0x18c] sm:$0xff]
  %v3089 = vld [vmem:[%s5 + $0x194] sm:$0xf]
  %v3090 = vld [vmem:[%s5 + $0x198] sm:$0xff]
  %v3091 = vld [vmem:[%s5 + $0x1a0] sm:$0xf]
  %v3092 = vld [vmem:[%s5 + $0x1a4] sm:$0xff]
  %v3093 = vld [vmem:[%s5 + $0x1ac] sm:$0xf]
  %v3094 = vld [vmem:[%s5 + $0x1b0] sm:$0xff]
  %v3095 = vld [vmem:[%s5 + $0x1b8] sm:$0xf]
  %v3096 = vld [vmem:[%s5 + $0x1bc] sm:$0xff]
  %v3097 = vld [vmem:[%s5 + $0x1c4] sm:$0xf]
  %v3098 = vld [vmem:[%s5 + $0x1c8] sm:$0xff]
  %v3099 = vld [vmem:[%s5 + $0x1d0] sm:$0xf]
  %v3100 = vld [vmem:[%s5 + $0x1d4] sm:$0xff]
  %v3101 = vld [vmem:[%s5 + $0x1dc] sm:$0xf]
  %v3102 = vld [vmem:[%s5 + $0x1e0] sm:$0xff]
  %v3103 = vld [vmem:[%s5 + $0x1e8] sm:$0xf]
  %v3104 = vld [vmem:[%s5 + $0x1ec] sm:$0xff]
  %v3105 = vld [vmem:[%s5 + $0x1f4] sm:$0xf]
  %v3106 = vld [vmem:[%s5 + $0x1f8] sm:$0xff]
  %v3107 = vld [vmem:[%s5 + $0x200] sm:$0xf]
  %v3108 = vld [vmem:[%s5 + $0x204] sm:$0xff]
  %v3109 = vld [vmem:[%s5 + $0x20c] sm:$0xf]
  %v3110 = vld [vmem:[%s5 + $0x210] sm:$0xff]
  %v3111 = vld [vmem:[%s5 + $0x218] sm:$0xf]
  %v3112 = vld [vmem:[%s5 + $0x21c] sm:$0xff]
  %v3113 = vld [vmem:[%s5 + $0x224] sm:$0xf]
  %v3114 = vld [vmem:[%s5 + $0x228] sm:$0xff]
  %v3115 = vld [vmem:[%s5 + $0x230] sm:$0xf]
  %v3116 = vld [vmem:[%s5 + $0x234] sm:$0xff]
  %v3117 = vld [vmem:[%s5 + $0x23c] sm:$0xf]
  %v3118 = vld [vmem:[%s5 + $0x240] sm:$0xff]
  %v3119 = vld [vmem:[%s5 + $0x248] sm:$0xf]
  %v3120 = vld [vmem:[%s5 + $0x24c] sm:$0xff]
  %v3121 = vld [vmem:[%s5 + $0x254] sm:$0xf]
  %v3122 = vld [vmem:[%s5 + $0x258] sm:$0xff]
  %v3123 = vld [vmem:[%s5 + $0x260] sm:$0xf]
  %v3124 = vld [vmem:[%s5 + $0x264] sm:$0xff]
  %v3125 = vld [vmem:[%s5 + $0x26c] sm:$0xf]
  %v3126 = vld [vmem:[%s5 + $0x270] sm:$0xff]
  %v3127 = vld [vmem:[%s5 + $0x278] sm:$0xf]
  %v3128 = vld [vmem:[%s5 + $0x27c] sm:$0xff]
  %v3129 = vld [vmem:[%s5 + $0x284] sm:$0xf]
  %v3130 = vld [vmem:[%s5 + $0x288] sm:$0xff]
  %v3131 = vld [vmem:[%s5 + $0x290] sm:$0xf]
  %v3132 = vld [vmem:[%s5 + $0x294] sm:$0xff]
  %v3133 = vld [vmem:[%s5 + $0x29c] sm:$0xf]
  %v3134 = vld [vmem:[%s5 + $0x2a0] sm:$0xff]
  %v3135 = vld [vmem:[%s5 + $0x2a8] sm:$0xf]
  %v3136 = vld [vmem:[%s5 + $0x2ac] sm:$0xff]
  %v3137 = vld [vmem:[%s5 + $0x2b4] sm:$0xf]
  %v3138 = vld [vmem:[%s5 + $0x2b8] sm:$0xff]
  %v3139 = vld [vmem:[%s5 + $0x2c0] sm:$0xf]
  %v3140 = vld [vmem:[%s5 + $0x2c4] sm:$0xff]
  %v3141 = vld [vmem:[%s5 + $0x2cc] sm:$0xf]
  %v3142 = vld [vmem:[%s5 + $0x2d0] sm:$0xff]
  %v3143 = vld [vmem:[%s5 + $0x2d8] sm:$0xf]
  %v3144 = vld [vmem:[%s5 + $0x2dc] sm:$0xff]
  %v3145 = vld [vmem:[%s5 + $0x2e4] sm:$0xf]
  %v3146 = vld [vmem:[%s5 + $0x2e8] sm:$0xff]
  %v3147 = vld [vmem:[%s5 + $0x2f0] sm:$0xf]
  %v3148 = vld [vmem:[%s5 + $0x2f4] sm:$0xff]
  %v3149 = vld [vmem:[%s5 + $0x2fc] sm:$0xf]
  %v3150 = vld [vmem:[%s6] sm:$0x7]
  %v3152 = vperm.slane %v3150, 0
  %v3153 = vperm.slane %v3150, 1
  %v3154 = vperm.slane %v3150, 2
  %v3286 = vunpack.c.l.b16 %v3022
  %v3287 = vunpack.c.h.b16 %v3022
  %v3288 = vunpack.c.l.b16 %v3023
  %v3289 = vunpack.c.l.b16 %v3024
  %v3290 = vunpack.c.h.b16 %v3024
  %v3291 = vunpack.c.l.b16 %v3025
  %v3292 = vunpack.c.l.b16 %v3026
  %v3293 = vunpack.c.h.b16 %v3026
  %v3294 = vunpack.c.l.b16 %v3027
  %v3295 = vunpack.c.l.b16 %v3028
  %v3296 = vunpack.c.h.b16 %v3028
  %v3297 = vunpack.c.l.b16 %v3029
  %v3298 = vunpack.c.l.b16 %v3030
  %v3299 = vunpack.c.h.b16 %v3030
  %v3300 = vunpack.c.l.b16 %v3031
  %v3301 = vunpack.c.l.b16 %v3032
  %v3302 = vunpack.c.h.b16 %v3032
  %v3303 = vunpack.c.l.b16 %v3033
  %v3304 = vunpack.c.l.b16 %v3034
  %v3305 = vunpack.c.h.b16 %v3034
  %v3306 = vunpack.c.l.b16 %v3035
  %v3307 = vunpack.c.l.b16 %v3036
  %v3308 = vunpack.c.h.b16 %v3036
  %v3309 = vunpack.c.l.b16 %v3037
  %v3310 = vunpack.c.l.b16 %v3038
  %v3311 = vunpack.c.h.b16 %v3038
  %v3312 = vunpack.c.l.b16 %v3039
  %v3313 = vunpack.c.l.b16 %v3040
  %v3314 = vunpack.c.h.b16 %v3040
  %v3315 = vunpack.c.l.b16 %v3041
  %v3316 = vunpack.c.l.b16 %v3042
  %v3317 = vunpack.c.h.b16 %v3042
  %v3318 = vunpack.c.l.b16 %v3043
  %v3319 = vunpack.c.l.b16 %v3044
  %v3320 = vunpack.c.h.b16 %v3044
  %v3321 = vunpack.c.l.b16 %v3045
  %v3322 = vunpack.c.l.b16 %v3046
  %v3323 = vunpack.c.h.b16 %v3046
  %v3324 = vunpack.c.l.b16 %v3047
  %v3325 = vunpack.c.l.b16 %v3048
  %v3326 = vunpack.c.h.b16 %v3048
  %v3327 = vunpack.c.l.b16 %v3049
  %v3328 = vunpack.c.l.b16 %v3050
  %v3329 = vunpack.c.h.b16 %v3050
  %v3330 = vunpack.c.l.b16 %v3051
  %v3331 = vunpack.c.l.b16 %v3052
  %v3332 = vunpack.c.h.b16 %v3052
  %v3333 = vunpack.c.l.b16 %v3053
  %v3334 = vunpack.c.l.b16 %v3054
  %v3335 = vunpack.c.h.b16 %v3054
  %v3336 = vunpack.c.l.b16 %v3055
  %v3337 = vunpack.c.l.b16 %v3056
  %v3338 = vunpack.c.h.b16 %v3056
  %v3339 = vunpack.c.l.b16 %v3057
  %v3340 = vunpack.c.l.b16 %v3058
  %v3341 = vunpack.c.h.b16 %v3058
  %v3342 = vunpack.c.l.b16 %v3059
  %v3343 = vunpack.c.l.b16 %v3060
  %v3344 = vunpack.c.h.b16 %v3060
  %v3345 = vunpack.c.l.b16 %v3061
  %v3346 = vunpack.c.l.b16 %v3062
  %v3347 = vunpack.c.h.b16 %v3062
  %v3348 = vunpack.c.l.b16 %v3063
  %v3349 = vunpack.c.l.b16 %v3064
  %v3350 = vunpack.c.h.b16 %v3064
  %v3351 = vunpack.c.l.b16 %v3065
  %v3352 = vunpack.c.l.b16 %v3066
  %v3353 = vunpack.c.h.b16 %v3066
  %v3354 = vunpack.c.l.b16 %v3067
  %v3355 = vunpack.c.l.b16 %v3068
  %v3356 = vunpack.c.h.b16 %v3068
  %v3357 = vunpack.c.l.b16 %v3069
  %v3358 = vunpack.c.l.b16 %v3070
  %v3359 = vunpack.c.h.b16 %v3070
  %v3360 = vunpack.c.l.b16 %v3071
  %v3361 = vunpack.c.l.b16 %v3072
  %v3362 = vunpack.c.h.b16 %v3072
  %v3363 = vunpack.c.l.b16 %v3073
  %v3364 = vunpack.c.l.b16 %v3074
  %v3365 = vunpack.c.h.b16 %v3074
  %v3366 = vunpack.c.l.b16 %v3075
  %v3367 = vunpack.c.l.b16 %v3076
  %v3368 = vunpack.c.h.b16 %v3076
  %v3369 = vunpack.c.l.b16 %v3077
  %v3370 = vunpack.c.l.b16 %v3078
  %v3371 = vunpack.c.h.b16 %v3078
  %v3372 = vunpack.c.l.b16 %v3079
  %v3373 = vunpack.c.l.b16 %v3080
  %v3374 = vunpack.c.h.b16 %v3080
  %v3375 = vunpack.c.l.b16 %v3081
  %v3376 = vunpack.c.l.b16 %v3082
  %v3377 = vunpack.c.h.b16 %v3082
  %v3378 = vunpack.c.l.b16 %v3083
  %v3379 = vunpack.c.l.b16 %v3084
  %v3380 = vunpack.c.h.b16 %v3084
  %v3381 = vunpack.c.l.b16 %v3085
  %v3382 = vunpack.c.l.b16 %v3086
  %v3383 = vunpack.c.h.b16 %v3086
  %v3384 = vunpack.c.l.b16 %v3087
  %v3385 = vunpack.c.l.b16 %v3088
  %v3386 = vunpack.c.h.b16 %v3088
  %v3387 = vunpack.c.l.b16 %v3089
  %v3388 = vunpack.c.l.b16 %v3090
  %v3389 = vunpack.c.h.b16 %v3090
  %v3390 = vunpack.c.l.b16 %v3091
  %v3391 = vunpack.c.l.b16 %v3092
  %v3392 = vunpack.c.h.b16 %v3092
  %v3393 = vunpack.c.l.b16 %v3093
  %v3394 = vunpack.c.l.b16 %v3094
  %v3395 = vunpack.c.h.b16 %v3094
  %v3396 = vunpack.c.l.b16 %v3095
  %v3397 = vunpack.c.l.b16 %v3096
  %v3398 = vunpack.c.h.b16 %v3096
  %v3399 = vunpack.c.l.b16 %v3097
  %v3400 = vunpack.c.l.b16 %v3098
  %v3401 = vunpack.c.h.b16 %v3098
  %v3402 = vunpack.c.l.b16 %v3099
  %v3403 = vunpack.c.l.b16 %v3100
  %v3404 = vunpack.c.h.b16 %v3100
  %v3405 = vunpack.c.l.b16 %v3101
  %v3406 = vunpack.c.l.b16 %v3102
  %v3407 = vunpack.c.h.b16 %v3102
  %v3408 = vunpack.c.l.b16 %v3103
  %v3409 = vunpack.c.l.b16 %v3104
  %v3410 = vunpack.c.h.b16 %v3104
  %v3411 = vunpack.c.l.b16 %v3105
  %v3412 = vunpack.c.l.b16 %v3106
  %v3413 = vunpack.c.h.b16 %v3106
  %v3414 = vunpack.c.l.b16 %v3107
  %v3415 = vunpack.c.l.b16 %v3108
  %v3416 = vunpack.c.h.b16 %v3108
  %v3417 = vunpack.c.l.b16 %v3109
  %v3418 = vunpack.c.l.b16 %v3110
  %v3419 = vunpack.c.h.b16 %v3110
  %v3420 = vunpack.c.l.b16 %v3111
  %v3421 = vunpack.c.l.b16 %v3112
  %v3422 = vunpack.c.h.b16 %v3112
  %v3423 = vunpack.c.l.b16 %v3113
  %v3424 = vunpack.c.l.b16 %v3114
  %v3425 = vunpack.c.h.b16 %v3114
  %v3426 = vunpack.c.l.b16 %v3115
  %v3427 = vunpack.c.l.b16 %v3116
  %v3428 = vunpack.c.h.b16 %v3116
  %v3429 = vunpack.c.l.b16 %v3117
  %v3430 = vunpack.c.l.b16 %v3118
  %v3431 = vunpack.c.h.b16 %v3118
  %v3432 = vunpack.c.l.b16 %v3119
  %v3433 = vunpack.c.l.b16 %v3120
  %v3434 = vunpack.c.h.b16 %v3120
  %v3435 = vunpack.c.l.b16 %v3121
  %v3436 = vunpack.c.l.b16 %v3122
  %v3437 = vunpack.c.h.b16 %v3122
  %v3438 = vunpack.c.l.b16 %v3123
  %v3439 = vunpack.c.l.b16 %v3124
  %v3440 = vunpack.c.h.b16 %v3124
  %v3441 = vunpack.c.l.b16 %v3125
  %v3442 = vunpack.c.l.b16 %v3126
  %v3443 = vunpack.c.h.b16 %v3126
  %v3444 = vunpack.c.l.b16 %v3127
  %v3445 = vunpack.c.l.b16 %v3128
  %v3446 = vunpack.c.h.b16 %v3128
  %v3447 = vunpack.c.l.b16 %v3129
  %v3448 = vunpack.c.l.b16 %v3130
  %v3449 = vunpack.c.h.b16 %v3130
  %v3450 = vunpack.c.l.b16 %v3131
  %v3451 = vunpack.c.l.b16 %v3132
  %v3452 = vunpack.c.h.b16 %v3132
  %v3453 = vunpack.c.l.b16 %v3133
  %v3454 = vunpack.c.l.b16 %v3134
  %v3455 = vunpack.c.h.b16 %v3134
  %v3456 = vunpack.c.l.b16 %v3135
  %v3457 = vunpack.c.l.b16 %v3136
  %v3458 = vunpack.c.h.b16 %v3136
  %v3459 = vunpack.c.l.b16 %v3137
  %v3460 = vunpack.c.l.b16 %v3138
  %v3461 = vunpack.c.h.b16 %v3138
  %v3462 = vunpack.c.l.b16 %v3139
  %v3463 = vunpack.c.l.b16 %v3140
  %v3464 = vunpack.c.h.b16 %v3140
  %v3465 = vunpack.c.l.b16 %v3141
  %v3466 = vunpack.c.l.b16 %v3142
  %v3467 = vunpack.c.h.b16 %v3142
  %v3468 = vunpack.c.l.b16 %v3143
  %v3469 = vunpack.c.l.b16 %v3144
  %v3470 = vunpack.c.h.b16 %v3144
  %v3471 = vunpack.c.l.b16 %v3145
  %v3472 = vunpack.c.l.b16 %v3146
  %v3473 = vunpack.c.h.b16 %v3146
  %v3474 = vunpack.c.l.b16 %v3147
  %v3475 = vunpack.c.l.b16 %v3148
  %v3476 = vunpack.c.h.b16 %v3148
  %v3477 = vunpack.c.l.b16 %v3149
  %v3478 = vpack.c.b16 %v3289, %v3286
  %v3479 = vpack.c.b16 %v3290, %v3287
  %v3480 = vpack.c.b16 %v3291, %v3288
  %v3481 = vpack.c.b16 %v3295, %v3292
  %v3482 = vpack.c.b16 %v3296, %v3293
  %v3483 = vpack.c.b16 %v3297, %v3294
  %v3484 = vpack.c.b16 %v3301, %v3298
  %v3485 = vpack.c.b16 %v3302, %v3299
  %v3486 = vpack.c.b16 %v3303, %v3300
  %v3487 = vpack.c.b16 %v3307, %v3304
  %v3488 = vpack.c.b16 %v3308, %v3305
  %v3489 = vpack.c.b16 %v3309, %v3306
  %v3490 = vpack.c.b16 %v3313, %v3310
  %v3491 = vpack.c.b16 %v3314, %v3311
  %v3492 = vpack.c.b16 %v3315, %v3312
  %v3493 = vpack.c.b16 %v3319, %v3316
  %v3494 = vpack.c.b16 %v3320, %v3317
  %v3495 = vpack.c.b16 %v3321, %v3318
  %v3496 = vpack.c.b16 %v3325, %v3322
  %v3497 = vpack.c.b16 %v3326, %v3323
  %v3498 = vpack.c.b16 %v3327, %v3324
  %v3499 = vpack.c.b16 %v3331, %v3328
  %v3500 = vpack.c.b16 %v3332, %v3329
  %v3501 = vpack.c.b16 %v3333, %v3330
  %v3502 = vpack.c.b16 %v3337, %v3334
  %v3503 = vpack.c.b16 %v3338, %v3335
  %v3504 = vpack.c.b16 %v3339, %v3336
  %v3505 = vpack.c.b16 %v3343, %v3340
  %v3506 = vpack.c.b16 %v3344, %v3341
  %v3507 = vpack.c.b16 %v3345, %v3342
  %v3508 = vpack.c.b16 %v3349, %v3346
  %v3509 = vpack.c.b16 %v3350, %v3347
  %v3510 = vpack.c.b16 %v3351, %v3348
  %v3511 = vpack.c.b16 %v3355, %v3352
  %v3512 = vpack.c.b16 %v3356, %v3353
  %v3513 = vpack.c.b16 %v3357, %v3354
  %v3514 = vpack.c.b16 %v3361, %v3358
  %v3515 = vpack.c.b16 %v3362, %v3359
  %v3516 = vpack.c.b16 %v3363, %v3360
  %v3517 = vpack.c.b16 %v3367, %v3364
  %v3518 = vpack.c.b16 %v3368, %v3365
  %v3519 = vpack.c.b16 %v3369, %v3366
  %v3520 = vpack.c.b16 %v3373, %v3370
  %v3521 = vpack.c.b16 %v3374, %v3371
  %v3522 = vpack.c.b16 %v3375, %v3372
  %v3523 = vpack.c.b16 %v3379, %v3376
  %v3524 = vpack.c.b16 %v3380, %v3377
  %v3525 = vpack.c.b16 %v3381, %v3378
  %v3526 = vpack.c.b16 %v3385, %v3382
  %v3527 = vpack.c.b16 %v3386, %v3383
  %v3528 = vpack.c.b16 %v3387, %v3384
  %v3529 = vpack.c.b16 %v3391, %v3388
  %v3530 = vpack.c.b16 %v3392, %v3389
  %v3531 = vpack.c.b16 %v3393, %v3390
  %v3532 = vpack.c.b16 %v3397, %v3394
  %v3533 = vpack.c.b16 %v3398, %v3395
  %v3534 = vpack.c.b16 %v3399, %v3396
  %v3535 = vpack.c.b16 %v3403, %v3400
  %v3536 = vpack.c.b16 %v3404, %v3401
  %v3537 = vpack.c.b16 %v3405, %v3402
  %v3538 = vpack.c.b16 %v3409, %v3406
  %v3539 = vpack.c.b16 %v3410, %v3407
  %v3540 = vpack.c.b16 %v3411, %v3408
  %v3541 = vpack.c.b16 %v3415, %v3412
  %v3542 = vpack.c.b16 %v3416, %v3413
  %v3543 = vpack.c.b16 %v3417, %v3414
  %v3544 = vpack.c.b16 %v3421, %v3418
  %v3545 = vpack.c.b16 %v3422, %v3419
  %v3546 = vpack.c.b16 %v3423, %v3420
  %v3547 = vpack.c.b16 %v3427, %v3424
  %v3548 = vpack.c.b16 %v3428, %v3425
  %v3549 = vpack.c.b16 %v3429, %v3426
  %v3550 = vpack.c.b16 %v3433, %v3430
  %v3551 = vpack.c.b16 %v3434, %v3431
  %v3552 = vpack.c.b16 %v3435, %v3432
  %v3553 = vpack.c.b16 %v3439, %v3436
  %v3554 = vpack.c.b16 %v3440, %v3437
  %v3555 = vpack.c.b16 %v3441, %v3438
  %v3556 = vpack.c.b16 %v3445, %v3442
  %v3557 = vpack.c.b16 %v3446, %v3443
  %v3558 = vpack.c.b16 %v3447, %v3444
  %v3559 = vpack.c.b16 %v3451, %v3448
  %v3560 = vpack.c.b16 %v3452, %v3449
  %v3561 = vpack.c.b16 %v3453, %v3450
  %v3562 = vpack.c.b16 %v3457, %v3454
  %v3563 = vpack.c.b16 %v3458, %v3455
  %v3564 = vpack.c.b16 %v3459, %v3456
  %v3565 = vpack.c.b16 %v3463, %v3460
  %v3566 = vpack.c.b16 %v3464, %v3461
  %v3567 = vpack.c.b16 %v3465, %v3462
  %v3568 = vpack.c.b16 %v3469, %v3466
  %v3569 = vpack.c.b16 %v3470, %v3467
  %v3570 = vpack.c.b16 %v3471, %v3468
  %v3571 = vpack.c.b16 %v3475, %v3472
  %v3572 = vpack.c.b16 %v3476, %v3473
  %v3573 = vpack.c.b16 %v3477, %v3474
  %3670 = vmatpush.bf16.msra.mxu0 %v3499
  %3671 = vmatpush.bf16.msra.mxu0 %v3496
  %3672 = vmatpush.bf16.msra.mxu0 %v3493
  %3673 = vmatpush.bf16.msra.mxu0 %v3490
  %3674 = vmatpush.bf16.msra.mxu0 %v3487
  %3675 = vmatpush.bf16.msra.mxu0 %v3484
  %3676 = vmatpush.bf16.msra.mxu0 %v3481
  %3677 = vmatpush.bf16.msra.mxu0 %v3478
  %3678 = vmatmul.bf16.gmra.mxu0 %v3018
  %v3679 = vpop.f32.mrf.mxu0
  %v3680 = vadd.f32 %v3152, %v3679
  %v3681 = vpop.f32.mrf.mxu0
  %3682 = vdwg.mxu0
  %3683 = vmatpush.bf16.msra.mxu0 %v3523
  %3684 = vmatpush.bf16.msra.mxu0 %v3520
  %3685 = vmatpush.bf16.msra.mxu0 %v3517
  %3686 = vmatpush.bf16.msra.mxu0 %v3514
  %3687 = vmatpush.bf16.msra.mxu0 %v3511
  %3688 = vmatpush.bf16.msra.mxu0 %v3508
  %3689 = vmatpush.bf16.msra.mxu0 %v3505
  %3690 = vmatpush.bf16.msra.mxu0 %v3502
  %3691 = vmatmul.bf16.gmra.mxu0 %v3019
  %v3692 = vpop.f32.mrf.mxu0
  %v3693 = vadd.f32 %v3680, %v3692
  %v3694 = vpop.f32.mrf.mxu0
  %3695 = vdwg.mxu0
  %3696 = vmatpush.bf16.msra.mxu0 %v3547
  %3697 = vmatpush.bf16.msra.mxu0 %v3544
  %3698 = vmatpush.bf16.msra.mxu0 %v3541
  %3699 = vmatpush.bf16.msra.mxu0 %v3538
  %3700 = vmatpush.bf16.msra.mxu0 %v3535
  %3701 = vmatpush.bf16.msra.mxu0 %v3532
  %3702 = vmatpush.bf16.msra.mxu0 %v3529
  %3703 = vmatpush.bf16.msra.mxu0 %v3526
  %3704 = vmatmul.bf16.gmra.mxu0 %v3020
  %v3705 = vpop.f32.mrf.mxu0
  %v3706 = vadd.f32 %v3693, %v3705
  %v3707 = vpop.f32.mrf.mxu0
  %3708 = vdwg.mxu0
  %3709 = vmatpush.bf16.msra.mxu0 %v3571
  %3710 = vmatpush.bf16.msra.mxu0 %v3568
  %3711 = vmatpush.bf16.msra.mxu0 %v3565
  %3712 = vmatpush.bf16.msra.mxu0 %v3562
  %3713 = vmatpush.bf16.msra.mxu0 %v3559
  %3714 = vmatpush.bf16.msra.mxu0 %v3556
  %3715 = vmatpush.bf16.msra.mxu0 %v3553
  %3716 = vmatpush.bf16.msra.mxu0 %v3550
  %3717 = vmatmul.bf16.gmra.mxu0 %v3021
  %v3718 = vpop.f32.mrf.mxu0
  %v3719 = vadd.f32 %v3706, %v3718
  %v3720 = vpop.f32.mrf.mxu0
  %3721 = vdwg.mxu0
  %3722 = vmatpush.bf16.msra.mxu0 %v3500
  %3723 = vmatpush.bf16.msra.mxu0 %v3497
  %3724 = vmatpush.bf16.msra.mxu0 %v3494
  %3725 = vmatpush.bf16.msra.mxu0 %v3491
  %3726 = vmatpush.bf16.msra.mxu0 %v3488
  %3727 = vmatpush.bf16.msra.mxu0 %v3485
  %3728 = vmatpush.bf16.msra.mxu0 %v3482
  %3729 = vmatpush.bf16.msra.mxu0 %v3479
  %3730 = vmatmul.bf16.gmra.mxu0 %v3018
  %v3731 = vpop.f32.mrf.mxu0
  %v3732 = vadd.f32 %v3153, %v3731
  %v3733 = vpop.f32.mrf.mxu0
  %3734 = vdwg.mxu0
  %3735 = vmatpush.bf16.msra.mxu0 %v3524
  %3736 = vmatpush.bf16.msra.mxu0 %v3521
  %3737 = vmatpush.bf16.msra.mxu0 %v3518
  %3738 = vmatpush.bf16.msra.mxu0 %v3515
  %3739 = vmatpush.bf16.msra.mxu0 %v3512
  %3740 = vmatpush.bf16.msra.mxu0 %v3509
  %3741 = vmatpush.bf16.msra.mxu0 %v3506
  %3742 = vmatpush.bf16.msra.mxu0 %v3503
  %3743 = vmatmul.bf16.gmra.mxu0 %v3019
  %v3744 = vpop.f32.mrf.mxu0
  %v3745 = vadd.f32 %v3732, %v3744
  %v3746 = vpop.f32.mrf.mxu0
  %3747 = vdwg.mxu0
  %3748 = vmatpush.bf16.msra.mxu0 %v3548
  %3749 = vmatpush.bf16.msra.mxu0 %v3545
  %3750 = vmatpush.bf16.msra.mxu0 %v3542
  %3751 = vmatpush.bf16.msra.mxu0 %v3539
  %3752 = vmatpush.bf16.msra.mxu0 %v3536
  %3753 = vmatpush.bf16.msra.mxu0 %v3533
  %3754 = vmatpush.bf16.msra.mxu0 %v3530
  %3755 = vmatpush.bf16.msra.mxu0 %v3527
  %3756 = vmatmul.bf16.gmra.mxu0 %v3020
  %v3757 = vpop.f32.mrf.mxu0
  %v3758 = vadd.f32 %v3745, %v3757
  %v3759 = vpop.f32.mrf.mxu0
  %3760 = vdwg.mxu0
  %3761 = vmatpush.bf16.msra.mxu0 %v3572
  %3762 = vmatpush.bf16.msra.mxu0 %v3569
  %3763 = vmatpush.bf16.msra.mxu0 %v3566
  %3764 = vmatpush.bf16.msra.mxu0 %v3563
  %3765 = vmatpush.bf16.msra.mxu0 %v3560
  %3766 = vmatpush.bf16.msra.mxu0 %v3557
  %3767 = vmatpush.bf16.msra.mxu0 %v3554
  %3768 = vmatpush.bf16.msra.mxu0 %v3551
  %3769 = vmatmul.bf16.gmra.mxu0 %v3021
  %v3770 = vpop.f32.mrf.mxu0
  %v3771 = vadd.f32 %v3758, %v3770
  %v3772 = vpop.f32.mrf.mxu0
  %3773 = vdwg.mxu0
  %3774 = vmatpush.bf16.msra.mxu0 %v3501
  %3775 = vmatpush.bf16.msra.mxu0 %v3498
  %3776 = vmatpush.bf16.msra.mxu0 %v3495
  %3777 = vmatpush.bf16.msra.mxu0 %v3492
  %3778 = vmatpush.bf16.msra.mxu0 %v3489
  %3779 = vmatpush.bf16.msra.mxu0 %v3486
  %3780 = vmatpush.bf16.msra.mxu0 %v3483
  %3781 = vmatpush.bf16.msra.mxu0 %v3480
  %3782 = vmatmul.bf16.gmra.mxu0 %v3018
  %v3783 = vpop.f32.mrf.mxu0
  %v3784 = vadd.f32 %v3154, %v3783
  %v3785 = vpop.f32.mrf.mxu0
  %3786 = vdwg.mxu0
  %3787 = vmatpush.bf16.msra.mxu0 %v3525
  %3788 = vmatpush.bf16.msra.mxu0 %v3522
  %3789 = vmatpush.bf16.msra.mxu0 %v3519
  %3790 = vmatpush.bf16.msra.mxu0 %v3516
  %3791 = vmatpush.bf16.msra.mxu0 %v3513
  %3792 = vmatpush.bf16.msra.mxu0 %v3510
  %3793 = vmatpush.bf16.msra.mxu0 %v3507
  %3794 = vmatpush.bf16.msra.mxu0 %v3504
  %3795 = vmatmul.bf16.gmra.mxu0 %v3019
  %v3796 = vpop.f32.mrf.mxu0
  %v3797 = vadd.f32 %v3784, %v3796
  %v3798 = vpop.f32.mrf.mxu0
  %3799 = vdwg.mxu0
  %3800 = vmatpush.bf16.msra.mxu0 %v3549
  %3801 = vmatpush.bf16.msra.mxu0 %v3546
  %3802 = vmatpush.bf16.msra.mxu0 %v3543
  %3803 = vmatpush.bf16.msra.mxu0 %v3540
  %3804 = vmatpush.bf16.msra.mxu0 %v3537
  %3805 = vmatpush.bf16.msra.mxu0 %v3534
  %3806 = vmatpush.bf16.msra.mxu0 %v3531
  %3807 = vmatpush.bf16.msra.mxu0 %v3528
  %3808 = vmatmul.bf16.gmra.mxu0 %v3020
  %v3809 = vpop.f32.mrf.mxu0
  %v3810 = vadd.f32 %v3797, %v3809
  %v3811 = vpop.f32.mrf.mxu0
  %3812 = vdwg.mxu0
  %3813 = vmatpush.bf16.msra.mxu0 %v3573
  %3814 = vmatpush.bf16.msra.mxu0 %v3570
  %3815 = vmatpush.bf16.msra.mxu0 %v3567
  %3816 = vmatpush.bf16.msra.mxu0 %v3564
  %3817 = vmatpush.bf16.msra.mxu0 %v3561
  %3818 = vmatpush.bf16.msra.mxu0 %v3558
  %3819 = vmatpush.bf16.msra.mxu0 %v3555
  %3820 = vmatpush.bf16.msra.mxu0 %v3552
  %3821 = vmatmul.bf16.gmra.mxu0 %v3021
  %v3822 = vpop.f32.mrf.mxu0
  %v3823 = vadd.f32 %v3810, %v3822
  %v3824 = vpop.f32.mrf.mxu0
  %3825 = vdwg.mxu0
  %3826 = vst [vmem:[%s7] sm:$0xff] %v3719
  %3827 = vst [vmem:[%s7 + $0x8] sm:$0xff] %v3771
  %3828 = vst [vmem:[%s7 + $0x10] sm:$0xff] %v3823
  // Predicated region
  $region30: #{encoder_cnn_forward.10} parent=0 // pred_check
    _
  $region31: #{encoder_cnn_forward.10} parent=0 // pred_check_branch
    %3830 = sbr.rel (0) target = $region33
  $region32: #{encoder_cnn_forward.10} parent=0 // pred_region
    _
  $region33: #{encoder_cnn_forward.10} parent=0 // pred_fallthru
    _
  // Predicated region
  $region34: #{encoder_cnn_forward.10} parent=0 // pred_check
    _
  $region35: #{encoder_cnn_forward.10} parent=0 // pred_check_branch
    %3832 = sbr.rel (0) target = $region37
  $region36: #{encoder_cnn_forward.10} parent=0 // pred_region
    _
  $region37: #{encoder_cnn_forward.10} parent=0 // pred_fallthru
    _

</llo_original>
